<compile_context>
chip_gen: v7x
topology: tpu7x:2x2x1
jax: 0.10.0
libtpu: 0.0.40
codegen_flags: <defaults>
</compile_context>

<pallas_src>
import jax
import jax.numpy as jnp
from jax.experimental import pallas as pl
from jax.experimental.pallas import tpu as pltpu

TRAIN_PERIODS = 56
STEPS = 15
SEQ_LEN = TRAIN_PERIODS + STEPS                                   # 71
INPUT_DIM = 4 + 6 + 4 + 8 + 8 + 2 + 5 + 5 + 5 + 3 + 10 + 2 + 2    # 64

CNN_HIDDEN = 32
RNN_HIDDEN = 32
SKIP_HIDDEN = 16
SKIP = 7
CNN_KERNEL = 3
CNN_T = TRAIN_PERIODS - CNN_KERNEL + 1                            # 54
SKIP_SEQ_LEN = (TRAIN_PERIODS - CNN_KERNEL) // SKIP               # 7
WARMUP = CNN_T - SKIP_SEQ_LEN * SKIP                              # 5
DEC_FEATS = 7 * STEPS                                             # 105
OUT_IN = RNN_HIDDEN + SKIP * SKIP_HIDDEN + DEC_FEATS              # 249

VMEM_SPEC = pl.BlockSpec(memory_space=pltpu.MemorySpace.VMEM)


# ------------------------------ fused kernel --------------------------------

def _gru_step(h, gi, w_hh, b_hh_n, hidden):
    """One PyTorch-convention GRU step.

    gi already contains x@W_ih + b_ih + b_hh[r,z] (r/z hidden-bias folded in);
    only the n-gate hidden bias must stay inside the r* multiplication.
    """
    gh = jnp.dot(h, w_hh, preferred_element_type=jnp.float32)
    # single packed sigmoid for r and z (one EUP push over 2H lanes)
    rz = jax.nn.sigmoid(gi[:, :2 * hidden] + gh[:, :2 * hidden])
    r = rz[:, :hidden]
    z = rz[:, hidden:]
    n = jnp.tanh(gi[:, 2 * hidden:] + r * (gh[:, 2 * hidden:] + b_hh_n))
    return (1.0 - z) * n + z * h


def lstnet_fused_kernel(
        xcol_ref, dec_ref,
        cnn_w_ref, cnn_b_ref,
        rnn_wih_ref, rnn_whh_ref, rnn_gib_ref, rnn_bhn_ref,
        skip_wih_ref, skip_whh_ref, skip_gib_ref, skip_bhn_ref,
        w1_rnn_ref, w1_skip_ref, w1_dec_ref, b1_ref, w2_ref, b2_ref,
        o_ref,
        gi_rnn_sc, gi_skip_sc):
    B = o_ref.shape[0]

    # --- Conv1d(k=3) as im2col matmul + bias + ReLU; rows are time-major ----
    cnn = jnp.maximum(
        jnp.dot(xcol_ref[...], cnn_w_ref[...],
                preferred_element_type=jnp.float32) + cnn_b_ref[...], 0.0)

    # --- hoisted GRU input projections for ALL timesteps (one matmul each) --
    gi_rnn_sc[...] = (jnp.dot(cnn, rnn_wih_ref[...],
                              preferred_element_type=jnp.float32)
                      + rnn_gib_ref[...])
    gi_skip_sc[...] = (jnp.dot(cnn, skip_wih_ref[...],
                               preferred_element_type=jnp.float32)
                       + skip_gib_ref[...])

    rnn_whh = rnn_whh_ref[...]
    skip_whh = skip_whh_ref[...]
    # hoist bias broadcasts out of the recurrence (broadcasts are not CSE'd)
    rnn_bhn = jnp.broadcast_to(rnn_bhn_ref[...], (B, RNN_HIDDEN))
    skip_bhn = jnp.broadcast_to(skip_bhn_ref[...], (SKIP * B, SKIP_HIDDEN))

    h_rnn = jnp.zeros((B, RNN_HIDDEN), jnp.float32)
    h_skip = jnp.zeros((SKIP * B, SKIP_HIDDEN), jnp.float32)

    # warm-up main-GRU steps (t = 0 .. WARMUP-1), fully unrolled
    for t in range(WARMUP):
        gi = gi_rnn_sc[t * B:(t + 1) * B, :]
        h_rnn = _gru_step(h_rnn, gi, rnn_whh, rnn_bhn, RNN_HIDDEN)

    # interleave: each outer block = SKIP main-GRU steps + one independent
    # skip-GRU step (its inputs depend only on the precomputed gi_skip rows),
    # all with static slice offsets (fully unrolled).
    for s in range(SKIP_SEQ_LEN):
        base_t = WARMUP + SKIP * s
        for p in range(SKIP):
            t = base_t + p
            gi = gi_rnn_sc[t * B:(t + 1) * B, :]
            h_rnn = _gru_step(h_rnn, gi, rnn_whh, rnn_bhn, RNN_HIDDEN)
        # torch: skip_input[s, j] = cnn_out[WARMUP + SKIP*s + j//B, j%B]
        #      -> time-major rows [(WARMUP+SKIP*s)*B , +SKIP*B) in j-order
        row0 = base_t * B
        gi_s = gi_skip_sc[row0:row0 + SKIP * B, :]
        h_skip = _gru_step(h_skip, gi_s, skip_whh, skip_bhn, SKIP_HIDDEN)

    # skip_out reproduces torch's `skip_hidden.view(batch, -1)` EXACTLY:
    # row b = [h_skip[SKIP*b + 0], ..., h_skip[SKIP*b + SKIP-1]]
    rows = []
    for b in range(B):
        rows.append(jnp.concatenate(
            [h_skip[SKIP * b + k:SKIP * b + k + 1, :] for k in range(SKIP)],
            axis=1))
    skip_out = jnp.concatenate(rows, axis=0)          # (B, SKIP*SKIP_HIDDEN)

    # output MLP: Linear -> ReLU -> Linear (Dropout identity in eval mode).
    # First Linear split across the three reg_input segments, so reg_input is
    # never materialized / lane-concatenated.
    h1 = jnp.maximum(
        jnp.dot(h_rnn, w1_rnn_ref[...], preferred_element_type=jnp.float32)
        + jnp.dot(skip_out, w1_skip_ref[...], preferred_element_type=jnp.float32)
        + jnp.dot(dec_ref[...], w1_dec_ref[...], preferred_element_type=jnp.float32)
        + b1_ref[...], 0.0)
    o_ref[...] = (jnp.dot(h1, w2_ref[...], preferred_element_type=jnp.float32)
                  + b2_ref[...])


def lstnet_fused_call(params, xcol, dec_feats, batch):
    return pl.pallas_call(
        lstnet_fused_kernel,
        out_shape=jax.ShapeDtypeStruct((batch, STEPS + 1), jnp.float32),
        in_specs=[VMEM_SPEC] * 18,
        out_specs=VMEM_SPEC,
        scratch_shapes=[
            pltpu.VMEM((CNN_T * batch, 3 * RNN_HIDDEN), jnp.float32),
            pltpu.VMEM((CNN_T * batch, 3 * SKIP_HIDDEN), jnp.float32),
        ],
    )(xcol, dec_feats,
      params['cnn_w'], params['cnn_b'],
      params['rnn_w_ih'], params['rnn_w_hh'],
      params['rnn_gi_b'], params['rnn_b_hh_n'],
      params['skip_w_ih'], params['skip_w_hh'],
      params['skip_gi_b'], params['skip_b_hh_n'],
      params['out_w1_rnn'], params['out_w1_skip'], params['out_w1_dec'],
      params['out_b1'], params['out_w2'], params['out_b2'])


# ------------------------------- parameters ---------------------------------

def _fold_gru_biases(b_ih, b_hh, hidden):
    """GI bias = b_ih + b_hh on the r/z gates; n-gate hidden bias kept apart."""
    gi_b = b_ih + jnp.concatenate(
        [b_hh[:, :2 * hidden], jnp.zeros((1, hidden), jnp.float32)], axis=1)
    return gi_b, b_hh[:, 2 * hidden:]


def init_params(key):
    ks = jax.random.split(key, 20)

    def nrm(k, shape, scale=0.1):
        return scale * jax.random.normal(k, shape, jnp.float32)

    p = {}
    # embedding tables (max_norm renorm is a no-op at this init scale)
    p['item_class_em'] = nrm(ks[0], (337, 8))
    p['item_family_em'] = nrm(ks[1], (33, 8))
    p['store_type_em'] = nrm(ks[2], (5, 2))
    p['store_cluster_em'] = nrm(ks[3], (17, 5))
    p['store_city_em'] = nrm(ks[4], (22, 5))
    p['store_em'] = nrm(ks[5], (54, 5))
    p['weekday_em'] = nrm(ks[6], (7, 3))
    p['day_em'] = nrm(ks[7], (31, 10))
    p['month_em'] = nrm(ks[8], (6, 2))
    p['year_em'] = nrm(ks[9], (3, 2))
    # Conv1d weight (C_out, C_in, K) -> im2col layout (K*C_in, C_out)
    w_conv = nrm(ks[10], (CNN_HIDDEN, INPUT_DIM, CNN_KERNEL))
    p['cnn_w'] = jnp.transpose(w_conv, (2, 1, 0)).reshape(
        CNN_KERNEL * INPUT_DIM, CNN_HIDDEN)
    p['cnn_b'] = jnp.zeros((1, CNN_HIDDEN), jnp.float32)
    # main GRU (stored transposed: (in, 3H) / (H, 3H)); biases = 0 per init
    p['rnn_w_ih'] = nrm(ks[11], (CNN_HIDDEN, 3 * RNN_HIDDEN))
    p['rnn_w_hh'] = nrm(ks[12], (RNN_HIDDEN, 3 * RNN_HIDDEN))
    rnn_b_ih = jnp.zeros((1, 3 * RNN_HIDDEN), jnp.float32)
    rnn_b_hh = jnp.zeros((1, 3 * RNN_HIDDEN), jnp.float32)
    p['rnn_gi_b'], p['rnn_b_hh_n'] = _fold_gru_biases(
        rnn_b_ih, rnn_b_hh, RNN_HIDDEN)
    # skip GRU
    p['skip_w_ih'] = nrm(ks[13], (CNN_HIDDEN, 3 * SKIP_HIDDEN))
    p['skip_w_hh'] = nrm(ks[14], (SKIP_HIDDEN, 3 * SKIP_HIDDEN))
    skip_b_ih = jnp.zeros((1, 3 * SKIP_HIDDEN), jnp.float32)
    skip_b_hh = jnp.zeros((1, 3 * SKIP_HIDDEN), jnp.float32)
    p['skip_gi_b'], p['skip_b_hh_n'] = _fold_gru_biases(
        skip_b_ih, skip_b_hh, SKIP_HIDDEN)
    # output network: first Linear split over the reg_input segments
    out_w1 = nrm(ks[15], (OUT_IN, RNN_HIDDEN))                    # (249, 32)
    p['out_w1_rnn'] = out_w1[:RNN_HIDDEN, :]
    p['out_w1_skip'] = out_w1[RNN_HIDDEN:RNN_HIDDEN + SKIP * SKIP_HIDDEN, :]
    p['out_w1_dec'] = out_w1[RNN_HIDDEN + SKIP * SKIP_HIDDEN:, :]
    p['out_b1'] = jnp.zeros((1, RNN_HIDDEN), jnp.float32)
    p['out_w2'] = nrm(ks[16], (RNN_HIDDEN, STEPS + 1))
    p['out_b2'] = jnp.zeros((1, STEPS + 1), jnp.float32)
    return p


# ------------------------------ forward pass --------------------------------

def lstnet_forward(params, x, x_d, x_i):
    B = x.shape[0]
    xf = x.astype(jnp.float32)
    xif = x_i.astype(jnp.float32)
    idx = x_i[:, :, 4:14].astype(jnp.int32)

    # embedding gathers (order matches preprocess_x) -> (B, 71, 50)
    emb = jnp.concatenate([
        params['item_class_em'][idx[:, :, 0]],
        params['item_family_em'][idx[:, :, 1]],
        params['store_type_em'][idx[:, :, 2]],
        params['store_cluster_em'][idx[:, :, 3]],
        params['store_em'][idx[:, :, 4]],
        params['store_city_em'][idx[:, :, 5]],
        params['day_em'][idx[:, :, 6]],
        params['month_em'][idx[:, :, 7]],
        params['year_em'][idx[:, :, 8]],
        params['weekday_em'][idx[:, :, 9]],
    ], axis=2)

    # x_encode: (B, 56, 64)   (eval mode -> start = 0, no locked dropout)
    x_enc = jnp.concatenate([
        xf[:, :TRAIN_PERIODS, :2],
        xf[:, :TRAIN_PERIODS, 2:4],
        jnp.broadcast_to(x_d[:, None, :], (B, TRAIN_PERIODS, x_d.shape[1])),
        xif[:, :TRAIN_PERIODS, :2],
        xif[:, :TRAIN_PERIODS, 2:4],
        emb[:, :TRAIN_PERIODS, :],
    ], axis=2)

    # time-major im2col for Conv1d(k=3): rows ordered (t, b) so the conv
    # output inside the kernel is already time-major (no transpose between ops)
    x_tm = jnp.transpose(x_enc, (1, 0, 2))                        # (56, B, 64)
    cols = jnp.concatenate([x_tm[k:k + CNN_T] for k in range(CNN_KERNEL)],
                           axis=2)                                # (54, B, 192)
    xcol = cols.reshape(CNN_T * B, CNN_KERNEL * INPUT_DIM)

    # decode-window features for reg_input tail (pure input slicing) -> (B,105)
    dec_feats = jnp.concatenate([
        xf[:, TRAIN_PERIODS:, 1], xf[:, TRAIN_PERIODS:, 3],
        xf[:, TRAIN_PERIODS:, 5],
        xif[:, TRAIN_PERIODS:, 0], xif[:, TRAIN_PERIODS:, 1],
        xif[:, TRAIN_PERIODS:, 2], xif[:, TRAIN_PERIODS:, 3],
    ], axis=1)

    # TODO(synk): ar_window_size > 0 highway branch not implemented (the
    # module's default config is ar_window_size=0, so it is never taken here).
    return lstnet_fused_call(params, xcol, dec_feats, B)


# ----------------------------------- main ------------------------------------

if __name__ == "__main__":
    key = jax.random.PRNGKey(0)
    k_param, k_x, k_xd, k_xic, k_xii = jax.random.split(key, 5)

    params = init_params(k_param)

    B = 2
    x = jax.random.normal(k_x, (B, SEQ_LEN, 6), jnp.float32)
    x_d = jax.random.normal(k_xd, (B, 6), jnp.float32)

    # x_i: 4 continuous cols + 10 integer-index cols (stored as float like torch)
    xi_cont = jax.random.normal(k_xic, (B, SEQ_LEN, 4), jnp.float32)
    em_sizes = jnp.array([337, 33, 5, 17, 54, 22, 31, 6, 3, 7], jnp.float32)
    xi_idx = jnp.floor(
        jax.random.uniform(k_xii, (B, SEQ_LEN, 10)) * em_sizes).astype(jnp.float32)
    x_i = jnp.concatenate([xi_cont, xi_idx], axis=2)              # (B, 71, 14)

    forward = jax.jit(lstnet_forward)
    out = forward(params, x, x_d, x_i)
    out = jax.block_until_ready(out)
    assert out.shape == (B, STEPS + 1), out.shape
    print("KERNEL_OK")
</pallas_src>

<mosaic_0001>
module attributes {stable_mosaic.version = 11 : i64} {
  func.func @lstnet_fused_kernel(%arg0: memref<108x192xf32, #tpu.memory_space<vmem>>, %arg1: memref<2x105xf32, #tpu.memory_space<vmem>>, %arg2: memref<192x32xf32, #tpu.memory_space<vmem>>, %arg3: memref<1x32xf32, #tpu.memory_space<vmem>>, %arg4: memref<32x96xf32, #tpu.memory_space<vmem>>, %arg5: memref<32x96xf32, #tpu.memory_space<vmem>>, %arg6: memref<1x96xf32, #tpu.memory_space<vmem>>, %arg7: memref<1x32xf32, #tpu.memory_space<vmem>>, %arg8: memref<32x48xf32, #tpu.memory_space<vmem>>, %arg9: memref<16x48xf32, #tpu.memory_space<vmem>>, %arg10: memref<1x48xf32, #tpu.memory_space<vmem>>, %arg11: memref<1x16xf32, #tpu.memory_space<vmem>>, %arg12: memref<32x32xf32, #tpu.memory_space<vmem>>, %arg13: memref<112x32xf32, #tpu.memory_space<vmem>>, %arg14: memref<105x32xf32, #tpu.memory_space<vmem>>, %arg15: memref<1x32xf32, #tpu.memory_space<vmem>>, %arg16: memref<32x16xf32, #tpu.memory_space<vmem>>, %arg17: memref<1x16xf32, #tpu.memory_space<vmem>>, %arg18: memref<2x16xf32, #tpu.memory_space<vmem>>, %arg19: memref<108x96xf32, #tpu.memory_space<vmem>>, %arg20: memref<108x48xf32, #tpu.memory_space<vmem>>) attributes {dimension_semantics = [], scalar_prefetch = 0 : i64, scratch_operands = 2 : i64, tpu.core_type = #tpu.core_type<tc>} {
    %c0 = arith.constant 0 : index
    %c0_0 = arith.constant 0 : index
    %0 = vector.load %arg0[%c0, %c0_0] : memref<108x192xf32, #tpu.memory_space<vmem>>, vector<108x192xf32>
    %c0_1 = arith.constant 0 : index
    %c0_2 = arith.constant 0 : index
    %1 = vector.load %arg2[%c0_1, %c0_2] : memref<192x32xf32, #tpu.memory_space<vmem>>, vector<192x32xf32>
    %cst = arith.constant dense<0.000000e+00> : vector<108x32xf32>
    %2 = tpu.matmul %0, %1, %cst {dimension_numbers = #tpu.dot_dimension_numbers<[1], [0], [0], [1], [0, 0, 1, 1], [], []>} : vector<108x192xf32>, vector<192x32xf32>, vector<108x32xf32> -> vector<108x32xf32>
    %c0_3 = arith.constant 0 : index
    %c0_4 = arith.constant 0 : index
    %3 = vector.load %arg3[%c0_3, %c0_4] : memref<1x32xf32, #tpu.memory_space<vmem>>, vector<1x32xf32>
    %4 = vector.broadcast %3 : vector<1x32xf32> to vector<108x32xf32>
    %5 = arith.addf %2, %4 : vector<108x32xf32>
    %cst_5 = arith.constant 0.000000e+00 : f32
    %6 = vector.broadcast %cst_5 : f32 to vector<108x32xf32>
    %7 = arith.maximumf %5, %6 : vector<108x32xf32>
    %c0_6 = arith.constant 0 : index
    %c0_7 = arith.constant 0 : index
    %8 = vector.load %arg4[%c0_6, %c0_7] : memref<32x96xf32, #tpu.memory_space<vmem>>, vector<32x96xf32>
    %cst_8 = arith.constant dense<0.000000e+00> : vector<108x96xf32>
    %9 = tpu.matmul %7, %8, %cst_8 {dimension_numbers = #tpu.dot_dimension_numbers<[1], [0], [0], [1], [0, 0, 1, 1], [], []>} : vector<108x32xf32>, vector<32x96xf32>, vector<108x96xf32> -> vector<108x96xf32>
    %c0_9 = arith.constant 0 : index
    %c0_10 = arith.constant 0 : index
    %10 = vector.load %arg6[%c0_9, %c0_10] : memref<1x96xf32, #tpu.memory_space<vmem>>, vector<1x96xf32>
    %11 = vector.broadcast %10 : vector<1x96xf32> to vector<108x96xf32>
    %12 = arith.addf %9, %11 : vector<108x96xf32>
    %c0_11 = arith.constant 0 : index
    %c0_12 = arith.constant 0 : index
    %13 = vector.load %arg19[%c0_11, %c0_12] : memref<108x96xf32, #tpu.memory_space<vmem>>, vector<108x96xf32>
    tpu.vector_store %arg19[%c0_11, %c0_12], %12 {strides = array<i32>} : memref<108x96xf32, #tpu.memory_space<vmem>>, vector<108x96xf32>,
    %c0_13 = arith.constant 0 : index
    %c0_14 = arith.constant 0 : index
    %14 = vector.load %arg8[%c0_13, %c0_14] : memref<32x48xf32, #tpu.memory_space<vmem>>, vector<32x48xf32>
    %cst_15 = arith.constant dense<0.000000e+00> : vector<108x48xf32>
    %15 = tpu.matmul %7, %14, %cst_15 {dimension_numbers = #tpu.dot_dimension_numbers<[1], [0], [0], [1], [0, 0, 1, 1], [], []>} : vector<108x32xf32>, vector<32x48xf32>, vector<108x48xf32> -> vector<108x48xf32>
    %c0_16 = arith.constant 0 : index
    %c0_17 = arith.constant 0 : index
    %16 = vector.load %arg10[%c0_16, %c0_17] : memref<1x48xf32, #tpu.memory_space<vmem>>, vector<1x48xf32>
    %17 = vector.broadcast %16 : vector<1x48xf32> to vector<108x48xf32>
    %18 = arith.addf %15, %17 : vector<108x48xf32>
    %c0_18 = arith.constant 0 : index
    %c0_19 = arith.constant 0 : index
    %19 = vector.load %arg20[%c0_18, %c0_19] : memref<108x48xf32, #tpu.memory_space<vmem>>, vector<108x48xf32>
    tpu.vector_store %arg20[%c0_18, %c0_19], %18 {strides = array<i32>} : memref<108x48xf32, #tpu.memory_space<vmem>>, vector<108x48xf32>,
    %c0_20 = arith.constant 0 : index
    %c0_21 = arith.constant 0 : index
    %20 = vector.load %arg5[%c0_20, %c0_21] : memref<32x96xf32, #tpu.memory_space<vmem>>, vector<32x96xf32>
    %c0_22 = arith.constant 0 : index
    %c0_23 = arith.constant 0 : index
    %21 = vector.load %arg9[%c0_22, %c0_23] : memref<16x48xf32, #tpu.memory_space<vmem>>, vector<16x48xf32>
    %c0_24 = arith.constant 0 : index
    %c0_25 = arith.constant 0 : index
    %22 = vector.load %arg7[%c0_24, %c0_25] : memref<1x32xf32, #tpu.memory_space<vmem>>, vector<1x32xf32>
    %23 = vector.shape_cast %22 : vector<1x32xf32> to vector<1x32xf32>
    %24 = vector.broadcast %23 : vector<1x32xf32> to vector<2x32xf32>
    %c0_26 = arith.constant 0 : index
    %c0_27 = arith.constant 0 : index
    %25 = vector.load %arg11[%c0_26, %c0_27] : memref<1x16xf32, #tpu.memory_space<vmem>>, vector<1x16xf32>
    %26 = vector.shape_cast %25 : vector<1x16xf32> to vector<1x16xf32>
    %27 = vector.broadcast %26 : vector<1x16xf32> to vector<14x16xf32>
    %cst_28 = arith.constant 0.000000e+00 : f32
    %28 = vector.broadcast %cst_28 : f32 to vector<2x32xf32>
    %cst_29 = arith.constant 0.000000e+00 : f32
    %29 = vector.broadcast %cst_29 : f32 to vector<14x16xf32>
    %c0_30 = arith.constant 0 : index
    %c0_31 = arith.constant 0 : index
    %30 = vector.load %arg19[%c0_30, %c0_31] : memref<108x96xf32, #tpu.memory_space<vmem>>, vector<2x96xf32>
    %cst_32 = arith.constant dense<0.000000e+00> : vector<2x96xf32>
    %31 = tpu.matmul %28, %20, %cst_32 {dimension_numbers = #tpu.dot_dimension_numbers<[1], [0], [0], [1], [0, 0, 1, 1], [], []>} : vector<2x32xf32>, vector<32x96xf32>, vector<2x96xf32> -> vector<2x96xf32>
    %32 = vector.extract_strided_slice %30 {offsets = [0, 0], sizes = [2, 64], strides = [1, 1]} : vector<2x96xf32> to vector<2x64xf32>
    %33 = vector.extract_strided_slice %31 {offsets = [0, 0], sizes = [2, 64], strides = [1, 1]} : vector<2x96xf32> to vector<2x64xf32>
    %34 = arith.addf %32, %33 : vector<2x64xf32>
    %35 = arith.negf %34 : vector<2x64xf32>
    %36 = math.exp %35 : vector<2x64xf32>
    %cst_33 = arith.constant 1.000000e+00 : f32
    %37 = vector.broadcast %cst_33 : f32 to vector<2x64xf32>
    %38 = arith.addf %37, %36 : vector<2x64xf32>
    %39 = arith.divf %37, %38 : vector<2x64xf32>
    %40 = vector.extract_strided_slice %39 {offsets = [0, 0], sizes = [2, 32], strides = [1, 1]} : vector<2x64xf32> to vector<2x32xf32>
    %41 = vector.extract_strided_slice %39 {offsets = [0, 32], sizes = [2, 32], strides = [1, 1]} : vector<2x64xf32> to vector<2x32xf32>
    %42 = vector.extract_strided_slice %30 {offsets = [0, 64], sizes = [2, 32], strides = [1, 1]} : vector<2x96xf32> to vector<2x32xf32>
    %43 = vector.extract_strided_slice %31 {offsets = [0, 64], sizes = [2, 32], strides = [1, 1]} : vector<2x96xf32> to vector<2x32xf32>
    %44 = arith.addf %43, %24 : vector<2x32xf32>
    %45 = arith.mulf %40, %44 : vector<2x32xf32>
    %46 = arith.addf %42, %45 : vector<2x32xf32>
    %47 = math.tanh %46 : vector<2x32xf32>
    %cst_34 = arith.constant 1.000000e+00 : f32
    %48 = vector.broadcast %cst_34 : f32 to vector<2x32xf32>
    %49 = arith.subf %48, %41 : vector<2x32xf32>
    %50 = arith.mulf %49, %47 : vector<2x32xf32>
    %51 = arith.mulf %41, %28 : vector<2x32xf32>
    %52 = arith.addf %50, %51 : vector<2x32xf32>
    %c2 = arith.constant 2 : index
    %c0_35 = arith.constant 0 : index
    %53 = vector.load %arg19[%c2, %c0_35] : memref<108x96xf32, #tpu.memory_space<vmem>>, vector<2x96xf32>
    %cst_36 = arith.constant dense<0.000000e+00> : vector<2x96xf32>
    %54 = tpu.matmul %52, %20, %cst_36 {dimension_numbers = #tpu.dot_dimension_numbers<[1], [0], [0], [1], [0, 0, 1, 1], [], []>} : vector<2x32xf32>, vector<32x96xf32>, vector<2x96xf32> -> vector<2x96xf32>
    %55 = vector.extract_strided_slice %53 {offsets = [0, 0], sizes = [2, 64], strides = [1, 1]} : vector<2x96xf32> to vector<2x64xf32>
    %56 = vector.extract_strided_slice %54 {offsets = [0, 0], sizes = [2, 64], strides = [1, 1]} : vector<2x96xf32> to vector<2x64xf32>
    %57 = arith.addf %55, %56 : vector<2x64xf32>
    %58 = arith.negf %57 : vector<2x64xf32>
    %59 = math.exp %58 : vector<2x64xf32>
    %cst_37 = arith.constant 1.000000e+00 : f32
    %60 = vector.broadcast %cst_37 : f32 to vector<2x64xf32>
    %61 = arith.addf %60, %59 : vector<2x64xf32>
    %62 = arith.divf %60, %61 : vector<2x64xf32>
    %63 = vector.extract_strided_slice %62 {offsets = [0, 0], sizes = [2, 32], strides = [1, 1]} : vector<2x64xf32> to vector<2x32xf32>
    %64 = vector.extract_strided_slice %62 {offsets = [0, 32], sizes = [2, 32], strides = [1, 1]} : vector<2x64xf32> to vector<2x32xf32>
    %65 = vector.extract_strided_slice %53 {offsets = [0, 64], sizes = [2, 32], strides = [1, 1]} : vector<2x96xf32> to vector<2x32xf32>
    %66 = vector.extract_strided_slice %54 {offsets = [0, 64], sizes = [2, 32], strides = [1, 1]} : vector<2x96xf32> to vector<2x32xf32>
    %67 = arith.addf %66, %24 : vector<2x32xf32>
    %68 = arith.mulf %63, %67 : vector<2x32xf32>
    %69 = arith.addf %65, %68 : vector<2x32xf32>
    %70 = math.tanh %69 : vector<2x32xf32>
    %cst_38 = arith.constant 1.000000e+00 : f32
    %71 = vector.broadcast %cst_38 : f32 to vector<2x32xf32>
    %72 = arith.subf %71, %64 : vector<2x32xf32>
    %73 = arith.mulf %72, %70 : vector<2x32xf32>
    %74 = arith.mulf %64, %52 : vector<2x32xf32>
    %75 = arith.addf %73, %74 : vector<2x32xf32>
    %c4 = arith.constant 4 : index
    %c0_39 = arith.constant 0 : index
    %76 = vector.load %arg19[%c4, %c0_39] : memref<108x96xf32, #tpu.memory_space<vmem>>, vector<2x96xf32>
    %cst_40 = arith.constant dense<0.000000e+00> : vector<2x96xf32>
    %77 = tpu.matmul %75, %20, %cst_40 {dimension_numbers = #tpu.dot_dimension_numbers<[1], [0], [0], [1], [0, 0, 1, 1], [], []>} : vector<2x32xf32>, vector<32x96xf32>, vector<2x96xf32> -> vector<2x96xf32>
    %78 = vector.extract_strided_slice %76 {offsets = [0, 0], sizes = [2, 64], strides = [1, 1]} : vector<2x96xf32> to vector<2x64xf32>
    %79 = vector.extract_strided_slice %77 {offsets = [0, 0], sizes = [2, 64], strides = [1, 1]} : vector<2x96xf32> to vector<2x64xf32>
    %80 = arith.addf %78, %79 : vector<2x64xf32>
    %81 = arith.negf %80 : vector<2x64xf32>
    %82 = math.exp %81 : vector<2x64xf32>
    %cst_41 = arith.constant 1.000000e+00 : f32
    %83 = vector.broadcast %cst_41 : f32 to vector<2x64xf32>
    %84 = arith.addf %83, %82 : vector<2x64xf32>
    %85 = arith.divf %83, %84 : vector<2x64xf32>
    %86 = vector.extract_strided_slice %85 {offsets = [0, 0], sizes = [2, 32], strides = [1, 1]} : vector<2x64xf32> to vector<2x32xf32>
    %87 = vector.extract_strided_slice %85 {offsets = [0, 32], sizes = [2, 32], strides = [1, 1]} : vector<2x64xf32> to vector<2x32xf32>
    %88 = vector.extract_strided_slice %76 {offsets = [0, 64], sizes = [2, 32], strides = [1, 1]} : vector<2x96xf32> to vector<2x32xf32>
    %89 = vector.extract_strided_slice %77 {offsets = [0, 64], sizes = [2, 32], strides = [1, 1]} : vector<2x96xf32> to vector<2x32xf32>
    %90 = arith.addf %89, %24 : vector<2x32xf32>
    %91 = arith.mulf %86, %90 : vector<2x32xf32>
    %92 = arith.addf %88, %91 : vector<2x32xf32>
    %93 = math.tanh %92 : vector<2x32xf32>
    %cst_42 = arith.constant 1.000000e+00 : f32
    %94 = vector.broadcast %cst_42 : f32 to vector<2x32xf32>
    %95 = arith.subf %94, %87 : vector<2x32xf32>
    %96 = arith.mulf %95, %93 : vector<2x32xf32>
    %97 = arith.mulf %87, %75 : vector<2x32xf32>
    %98 = arith.addf %96, %97 : vector<2x32xf32>
    %c6 = arith.constant 6 : index
    %c0_43 = arith.constant 0 : index
    %99 = vector.load %arg19[%c6, %c0_43] : memref<108x96xf32, #tpu.memory_space<vmem>>, vector<2x96xf32>
    %cst_44 = arith.constant dense<0.000000e+00> : vector<2x96xf32>
    %100 = tpu.matmul %98, %20, %cst_44 {dimension_numbers = #tpu.dot_dimension_numbers<[1], [0], [0], [1], [0, 0, 1, 1], [], []>} : vector<2x32xf32>, vector<32x96xf32>, vector<2x96xf32> -> vector<2x96xf32>
    %101 = vector.extract_strided_slice %99 {offsets = [0, 0], sizes = [2, 64], strides = [1, 1]} : vector<2x96xf32> to vector<2x64xf32>
    %102 = vector.extract_strided_slice %100 {offsets = [0, 0], sizes = [2, 64], strides = [1, 1]} : vector<2x96xf32> to vector<2x64xf32>
    %103 = arith.addf %101, %102 : vector<2x64xf32>
    %104 = arith.negf %103 : vector<2x64xf32>
    %105 = math.exp %104 : vector<2x64xf32>
    %cst_45 = arith.constant 1.000000e+00 : f32
    %106 = vector.broadcast %cst_45 : f32 to vector<2x64xf32>
    %107 = arith.addf %106, %105 : vector<2x64xf32>
    %108 = arith.divf %106, %107 : vector<2x64xf32>
    %109 = vector.extract_strided_slice %108 {offsets = [0, 0], sizes = [2, 32], strides = [1, 1]} : vector<2x64xf32> to vector<2x32xf32>
    %110 = vector.extract_strided_slice %108 {offsets = [0, 32], sizes = [2, 32], strides = [1, 1]} : vector<2x64xf32> to vector<2x32xf32>
    %111 = vector.extract_strided_slice %99 {offsets = [0, 64], sizes = [2, 32], strides = [1, 1]} : vector<2x96xf32> to vector<2x32xf32>
    %112 = vector.extract_strided_slice %100 {offsets = [0, 64], sizes = [2, 32], strides = [1, 1]} : vector<2x96xf32> to vector<2x32xf32>
    %113 = arith.addf %112, %24 : vector<2x32xf32>
    %114 = arith.mulf %109, %113 : vector<2x32xf32>
    %115 = arith.addf %111, %114 : vector<2x32xf32>
    %116 = math.tanh %115 : vector<2x32xf32>
    %cst_46 = arith.constant 1.000000e+00 : f32
    %117 = vector.broadcast %cst_46 : f32 to vector<2x32xf32>
    %118 = arith.subf %117, %110 : vector<2x32xf32>
    %119 = arith.mulf %118, %116 : vector<2x32xf32>
    %120 = arith.mulf %110, %98 : vector<2x32xf32>
    %121 = arith.addf %119, %120 : vector<2x32xf32>
    %c8 = arith.constant 8 : index
    %c0_47 = arith.constant 0 : index
    %122 = vector.load %arg19[%c8, %c0_47] : memref<108x96xf32, #tpu.memory_space<vmem>>, vector<2x96xf32>
    %cst_48 = arith.constant dense<0.000000e+00> : vector<2x96xf32>
    %123 = tpu.matmul %121, %20, %cst_48 {dimension_numbers = #tpu.dot_dimension_numbers<[1], [0], [0], [1], [0, 0, 1, 1], [], []>} : vector<2x32xf32>, vector<32x96xf32>, vector<2x96xf32> -> vector<2x96xf32>
    %124 = vector.extract_strided_slice %122 {offsets = [0, 0], sizes = [2, 64], strides = [1, 1]} : vector<2x96xf32> to vector<2x64xf32>
    %125 = vector.extract_strided_slice %123 {offsets = [0, 0], sizes = [2, 64], strides = [1, 1]} : vector<2x96xf32> to vector<2x64xf32>
    %126 = arith.addf %124, %125 : vector<2x64xf32>
    %127 = arith.negf %126 : vector<2x64xf32>
    %128 = math.exp %127 : vector<2x64xf32>
    %cst_49 = arith.constant 1.000000e+00 : f32
    %129 = vector.broadcast %cst_49 : f32 to vector<2x64xf32>
    %130 = arith.addf %129, %128 : vector<2x64xf32>
    %131 = arith.divf %129, %130 : vector<2x64xf32>
    %132 = vector.extract_strided_slice %131 {offsets = [0, 0], sizes = [2, 32], strides = [1, 1]} : vector<2x64xf32> to vector<2x32xf32>
    %133 = vector.extract_strided_slice %131 {offsets = [0, 32], sizes = [2, 32], strides = [1, 1]} : vector<2x64xf32> to vector<2x32xf32>
    %134 = vector.extract_strided_slice %122 {offsets = [0, 64], sizes = [2, 32], strides = [1, 1]} : vector<2x96xf32> to vector<2x32xf32>
    %135 = vector.extract_strided_slice %123 {offsets = [0, 64], sizes = [2, 32], strides = [1, 1]} : vector<2x96xf32> to vector<2x32xf32>
    %136 = arith.addf %135, %24 : vector<2x32xf32>
    %137 = arith.mulf %132, %136 : vector<2x32xf32>
    %138 = arith.addf %134, %137 : vector<2x32xf32>
    %139 = math.tanh %138 : vector<2x32xf32>
    %cst_50 = arith.constant 1.000000e+00 : f32
    %140 = vector.broadcast %cst_50 : f32 to vector<2x32xf32>
    %141 = arith.subf %140, %133 : vector<2x32xf32>
    %142 = arith.mulf %141, %139 : vector<2x32xf32>
    %143 = arith.mulf %133, %121 : vector<2x32xf32>
    %144 = arith.addf %142, %143 : vector<2x32xf32>
    %c10 = arith.constant 10 : index
    %c0_51 = arith.constant 0 : index
    %145 = vector.load %arg19[%c10, %c0_51] : memref<108x96xf32, #tpu.memory_space<vmem>>, vector<2x96xf32>
    %cst_52 = arith.constant dense<0.000000e+00> : vector<2x96xf32>
    %146 = tpu.matmul %144, %20, %cst_52 {dimension_numbers = #tpu.dot_dimension_numbers<[1], [0], [0], [1], [0, 0, 1, 1], [], []>} : vector<2x32xf32>, vector<32x96xf32>, vector<2x96xf32> -> vector<2x96xf32>
    %147 = vector.extract_strided_slice %145 {offsets = [0, 0], sizes = [2, 64], strides = [1, 1]} : vector<2x96xf32> to vector<2x64xf32>
    %148 = vector.extract_strided_slice %146 {offsets = [0, 0], sizes = [2, 64], strides = [1, 1]} : vector<2x96xf32> to vector<2x64xf32>
    %149 = arith.addf %147, %148 : vector<2x64xf32>
    %150 = arith.negf %149 : vector<2x64xf32>
    %151 = math.exp %150 : vector<2x64xf32>
    %cst_53 = arith.constant 1.000000e+00 : f32
    %152 = vector.broadcast %cst_53 : f32 to vector<2x64xf32>
    %153 = arith.addf %152, %151 : vector<2x64xf32>
    %154 = arith.divf %152, %153 : vector<2x64xf32>
    %155 = vector.extract_strided_slice %154 {offsets = [0, 0], sizes = [2, 32], strides = [1, 1]} : vector<2x64xf32> to vector<2x32xf32>
    %156 = vector.extract_strided_slice %154 {offsets = [0, 32], sizes = [2, 32], strides = [1, 1]} : vector<2x64xf32> to vector<2x32xf32>
    %157 = vector.extract_strided_slice %145 {offsets = [0, 64], sizes = [2, 32], strides = [1, 1]} : vector<2x96xf32> to vector<2x32xf32>
    %158 = vector.extract_strided_slice %146 {offsets = [0, 64], sizes = [2, 32], strides = [1, 1]} : vector<2x96xf32> to vector<2x32xf32>
    %159 = arith.addf %158, %24 : vector<2x32xf32>
    %160 = arith.mulf %155, %159 : vector<2x32xf32>
    %161 = arith.addf %157, %160 : vector<2x32xf32>
    %162 = math.tanh %161 : vector<2x32xf32>
    %cst_54 = arith.constant 1.000000e+00 : f32
    %163 = vector.broadcast %cst_54 : f32 to vector<2x32xf32>
    %164 = arith.subf %163, %156 : vector<2x32xf32>
    %165 = arith.mulf %164, %162 : vector<2x32xf32>
    %166 = arith.mulf %156, %144 : vector<2x32xf32>
    %167 = arith.addf %165, %166 : vector<2x32xf32>
    %c12 = arith.constant 12 : index
    %c0_55 = arith.constant 0 : index
    %168 = vector.load %arg19[%c12, %c0_55] : memref<108x96xf32, #tpu.memory_space<vmem>>, vector<2x96xf32>
    %cst_56 = arith.constant dense<0.000000e+00> : vector<2x96xf32>
    %169 = tpu.matmul %167, %20, %cst_56 {dimension_numbers = #tpu.dot_dimension_numbers<[1], [0], [0], [1], [0, 0, 1, 1], [], []>} : vector<2x32xf32>, vector<32x96xf32>, vector<2x96xf32> -> vector<2x96xf32>
    %170 = vector.extract_strided_slice %168 {offsets = [0, 0], sizes = [2, 64], strides = [1, 1]} : vector<2x96xf32> to vector<2x64xf32>
    %171 = vector.extract_strided_slice %169 {offsets = [0, 0], sizes = [2, 64], strides = [1, 1]} : vector<2x96xf32> to vector<2x64xf32>
    %172 = arith.addf %170, %171 : vector<2x64xf32>
    %173 = arith.negf %172 : vector<2x64xf32>
    %174 = math.exp %173 : vector<2x64xf32>
    %cst_57 = arith.constant 1.000000e+00 : f32
    %175 = vector.broadcast %cst_57 : f32 to vector<2x64xf32>
    %176 = arith.addf %175, %174 : vector<2x64xf32>
    %177 = arith.divf %175, %176 : vector<2x64xf32>
    %178 = vector.extract_strided_slice %177 {offsets = [0, 0], sizes = [2, 32], strides = [1, 1]} : vector<2x64xf32> to vector<2x32xf32>
    %179 = vector.extract_strided_slice %177 {offsets = [0, 32], sizes = [2, 32], strides = [1, 1]} : vector<2x64xf32> to vector<2x32xf32>
    %180 = vector.extract_strided_slice %168 {offsets = [0, 64], sizes = [2, 32], strides = [1, 1]} : vector<2x96xf32> to vector<2x32xf32>
    %181 = vector.extract_strided_slice %169 {offsets = [0, 64], sizes = [2, 32], strides = [1, 1]} : vector<2x96xf32> to vector<2x32xf32>
    %182 = arith.addf %181, %24 : vector<2x32xf32>
    %183 = arith.mulf %178, %182 : vector<2x32xf32>
    %184 = arith.addf %180, %183 : vector<2x32xf32>
    %185 = math.tanh %184 : vector<2x32xf32>
    %cst_58 = arith.constant 1.000000e+00 : f32
    %186 = vector.broadcast %cst_58 : f32 to vector<2x32xf32>
    %187 = arith.subf %186, %179 : vector<2x32xf32>
    %188 = arith.mulf %187, %185 : vector<2x32xf32>
    %189 = arith.mulf %179, %167 : vector<2x32xf32>
    %190 = arith.addf %188, %189 : vector<2x32xf32>
    %c14 = arith.constant 14 : index
    %c0_59 = arith.constant 0 : index
    %191 = vector.load %arg19[%c14, %c0_59] : memref<108x96xf32, #tpu.memory_space<vmem>>, vector<2x96xf32>
    %cst_60 = arith.constant dense<0.000000e+00> : vector<2x96xf32>
    %192 = tpu.matmul %190, %20, %cst_60 {dimension_numbers = #tpu.dot_dimension_numbers<[1], [0], [0], [1], [0, 0, 1, 1], [], []>} : vector<2x32xf32>, vector<32x96xf32>, vector<2x96xf32> -> vector<2x96xf32>
    %193 = vector.extract_strided_slice %191 {offsets = [0, 0], sizes = [2, 64], strides = [1, 1]} : vector<2x96xf32> to vector<2x64xf32>
    %194 = vector.extract_strided_slice %192 {offsets = [0, 0], sizes = [2, 64], strides = [1, 1]} : vector<2x96xf32> to vector<2x64xf32>
    %195 = arith.addf %193, %194 : vector<2x64xf32>
    %196 = arith.negf %195 : vector<2x64xf32>
    %197 = math.exp %196 : vector<2x64xf32>
    %cst_61 = arith.constant 1.000000e+00 : f32
    %198 = vector.broadcast %cst_61 : f32 to vector<2x64xf32>
    %199 = arith.addf %198, %197 : vector<2x64xf32>
    %200 = arith.divf %198, %199 : vector<2x64xf32>
    %201 = vector.extract_strided_slice %200 {offsets = [0, 0], sizes = [2, 32], strides = [1, 1]} : vector<2x64xf32> to vector<2x32xf32>
    %202 = vector.extract_strided_slice %200 {offsets = [0, 32], sizes = [2, 32], strides = [1, 1]} : vector<2x64xf32> to vector<2x32xf32>
    %203 = vector.extract_strided_slice %191 {offsets = [0, 64], sizes = [2, 32], strides = [1, 1]} : vector<2x96xf32> to vector<2x32xf32>
    %204 = vector.extract_strided_slice %192 {offsets = [0, 64], sizes = [2, 32], strides = [1, 1]} : vector<2x96xf32> to vector<2x32xf32>
    %205 = arith.addf %204, %24 : vector<2x32xf32>
    %206 = arith.mulf %201, %205 : vector<2x32xf32>
    %207 = arith.addf %203, %206 : vector<2x32xf32>
    %208 = math.tanh %207 : vector<2x32xf32>
    %cst_62 = arith.constant 1.000000e+00 : f32
    %209 = vector.broadcast %cst_62 : f32 to vector<2x32xf32>
    %210 = arith.subf %209, %202 : vector<2x32xf32>
    %211 = arith.mulf %210, %208 : vector<2x32xf32>
    %212 = arith.mulf %202, %190 : vector<2x32xf32>
    %213 = arith.addf %211, %212 : vector<2x32xf32>
    %c16 = arith.constant 16 : index
    %c0_63 = arith.constant 0 : index
    %214 = vector.load %arg19[%c16, %c0_63] : memref<108x96xf32, #tpu.memory_space<vmem>>, vector<2x96xf32>
    %cst_64 = arith.constant dense<0.000000e+00> : vector<2x96xf32>
    %215 = tpu.matmul %213, %20, %cst_64 {dimension_numbers = #tpu.dot_dimension_numbers<[1], [0], [0], [1], [0, 0, 1, 1], [], []>} : vector<2x32xf32>, vector<32x96xf32>, vector<2x96xf32> -> vector<2x96xf32>
    %216 = vector.extract_strided_slice %214 {offsets = [0, 0], sizes = [2, 64], strides = [1, 1]} : vector<2x96xf32> to vector<2x64xf32>
    %217 = vector.extract_strided_slice %215 {offsets = [0, 0], sizes = [2, 64], strides = [1, 1]} : vector<2x96xf32> to vector<2x64xf32>
    %218 = arith.addf %216, %217 : vector<2x64xf32>
    %219 = arith.negf %218 : vector<2x64xf32>
    %220 = math.exp %219 : vector<2x64xf32>
    %cst_65 = arith.constant 1.000000e+00 : f32
    %221 = vector.broadcast %cst_65 : f32 to vector<2x64xf32>
    %222 = arith.addf %221, %220 : vector<2x64xf32>
    %223 = arith.divf %221, %222 : vector<2x64xf32>
    %224 = vector.extract_strided_slice %223 {offsets = [0, 0], sizes = [2, 32], strides = [1, 1]} : vector<2x64xf32> to vector<2x32xf32>
    %225 = vector.extract_strided_slice %223 {offsets = [0, 32], sizes = [2, 32], strides = [1, 1]} : vector<2x64xf32> to vector<2x32xf32>
    %226 = vector.extract_strided_slice %214 {offsets = [0, 64], sizes = [2, 32], strides = [1, 1]} : vector<2x96xf32> to vector<2x32xf32>
    %227 = vector.extract_strided_slice %215 {offsets = [0, 64], sizes = [2, 32], strides = [1, 1]} : vector<2x96xf32> to vector<2x32xf32>
    %228 = arith.addf %227, %24 : vector<2x32xf32>
    %229 = arith.mulf %224, %228 : vector<2x32xf32>
    %230 = arith.addf %226, %229 : vector<2x32xf32>
    %231 = math.tanh %230 : vector<2x32xf32>
    %cst_66 = arith.constant 1.000000e+00 : f32
    %232 = vector.broadcast %cst_66 : f32 to vector<2x32xf32>
    %233 = arith.subf %232, %225 : vector<2x32xf32>
    %234 = arith.mulf %233, %231 : vector<2x32xf32>
    %235 = arith.mulf %225, %213 : vector<2x32xf32>
    %236 = arith.addf %234, %235 : vector<2x32xf32>
    %c18 = arith.constant 18 : index
    %c0_67 = arith.constant 0 : index
    %237 = vector.load %arg19[%c18, %c0_67] : memref<108x96xf32, #tpu.memory_space<vmem>>, vector<2x96xf32>
    %cst_68 = arith.constant dense<0.000000e+00> : vector<2x96xf32>
    %238 = tpu.matmul %236, %20, %cst_68 {dimension_numbers = #tpu.dot_dimension_numbers<[1], [0], [0], [1], [0, 0, 1, 1], [], []>} : vector<2x32xf32>, vector<32x96xf32>, vector<2x96xf32> -> vector<2x96xf32>
    %239 = vector.extract_strided_slice %237 {offsets = [0, 0], sizes = [2, 64], strides = [1, 1]} : vector<2x96xf32> to vector<2x64xf32>
    %240 = vector.extract_strided_slice %238 {offsets = [0, 0], sizes = [2, 64], strides = [1, 1]} : vector<2x96xf32> to vector<2x64xf32>
    %241 = arith.addf %239, %240 : vector<2x64xf32>
    %242 = arith.negf %241 : vector<2x64xf32>
    %243 = math.exp %242 : vector<2x64xf32>
    %cst_69 = arith.constant 1.000000e+00 : f32
    %244 = vector.broadcast %cst_69 : f32 to vector<2x64xf32>
    %245 = arith.addf %244, %243 : vector<2x64xf32>
    %246 = arith.divf %244, %245 : vector<2x64xf32>
    %247 = vector.extract_strided_slice %246 {offsets = [0, 0], sizes = [2, 32], strides = [1, 1]} : vector<2x64xf32> to vector<2x32xf32>
    %248 = vector.extract_strided_slice %246 {offsets = [0, 32], sizes = [2, 32], strides = [1, 1]} : vector<2x64xf32> to vector<2x32xf32>
    %249 = vector.extract_strided_slice %237 {offsets = [0, 64], sizes = [2, 32], strides = [1, 1]} : vector<2x96xf32> to vector<2x32xf32>
    %250 = vector.extract_strided_slice %238 {offsets = [0, 64], sizes = [2, 32], strides = [1, 1]} : vector<2x96xf32> to vector<2x32xf32>
    %251 = arith.addf %250, %24 : vector<2x32xf32>
    %252 = arith.mulf %247, %251 : vector<2x32xf32>
    %253 = arith.addf %249, %252 : vector<2x32xf32>
    %254 = math.tanh %253 : vector<2x32xf32>
    %cst_70 = arith.constant 1.000000e+00 : f32
    %255 = vector.broadcast %cst_70 : f32 to vector<2x32xf32>
    %256 = arith.subf %255, %248 : vector<2x32xf32>
    %257 = arith.mulf %256, %254 : vector<2x32xf32>
    %258 = arith.mulf %248, %236 : vector<2x32xf32>
    %259 = arith.addf %257, %258 : vector<2x32xf32>
    %c20 = arith.constant 20 : index
    %c0_71 = arith.constant 0 : index
    %260 = vector.load %arg19[%c20, %c0_71] : memref<108x96xf32, #tpu.memory_space<vmem>>, vector<2x96xf32>
    %cst_72 = arith.constant dense<0.000000e+00> : vector<2x96xf32>
    %261 = tpu.matmul %259, %20, %cst_72 {dimension_numbers = #tpu.dot_dimension_numbers<[1], [0], [0], [1], [0, 0, 1, 1], [], []>} : vector<2x32xf32>, vector<32x96xf32>, vector<2x96xf32> -> vector<2x96xf32>
    %262 = vector.extract_strided_slice %260 {offsets = [0, 0], sizes = [2, 64], strides = [1, 1]} : vector<2x96xf32> to vector<2x64xf32>
    %263 = vector.extract_strided_slice %261 {offsets = [0, 0], sizes = [2, 64], strides = [1, 1]} : vector<2x96xf32> to vector<2x64xf32>
    %264 = arith.addf %262, %263 : vector<2x64xf32>
    %265 = arith.negf %264 : vector<2x64xf32>
    %266 = math.exp %265 : vector<2x64xf32>
    %cst_73 = arith.constant 1.000000e+00 : f32
    %267 = vector.broadcast %cst_73 : f32 to vector<2x64xf32>
    %268 = arith.addf %267, %266 : vector<2x64xf32>
    %269 = arith.divf %267, %268 : vector<2x64xf32>
    %270 = vector.extract_strided_slice %269 {offsets = [0, 0], sizes = [2, 32], strides = [1, 1]} : vector<2x64xf32> to vector<2x32xf32>
    %271 = vector.extract_strided_slice %269 {offsets = [0, 32], sizes = [2, 32], strides = [1, 1]} : vector<2x64xf32> to vector<2x32xf32>
    %272 = vector.extract_strided_slice %260 {offsets = [0, 64], sizes = [2, 32], strides = [1, 1]} : vector<2x96xf32> to vector<2x32xf32>
    %273 = vector.extract_strided_slice %261 {offsets = [0, 64], sizes = [2, 32], strides = [1, 1]} : vector<2x96xf32> to vector<2x32xf32>
    %274 = arith.addf %273, %24 : vector<2x32xf32>
    %275 = arith.mulf %270, %274 : vector<2x32xf32>
    %276 = arith.addf %272, %275 : vector<2x32xf32>
    %277 = math.tanh %276 : vector<2x32xf32>
    %cst_74 = arith.constant 1.000000e+00 : f32
    %278 = vector.broadcast %cst_74 : f32 to vector<2x32xf32>
    %279 = arith.subf %278, %271 : vector<2x32xf32>
    %280 = arith.mulf %279, %277 : vector<2x32xf32>
    %281 = arith.mulf %271, %259 : vector<2x32xf32>
    %282 = arith.addf %280, %281 : vector<2x32xf32>
    %c22 = arith.constant 22 : index
    %c0_75 = arith.constant 0 : index
    %283 = vector.load %arg19[%c22, %c0_75] : memref<108x96xf32, #tpu.memory_space<vmem>>, vector<2x96xf32>
    %cst_76 = arith.constant dense<0.000000e+00> : vector<2x96xf32>
    %284 = tpu.matmul %282, %20, %cst_76 {dimension_numbers = #tpu.dot_dimension_numbers<[1], [0], [0], [1], [0, 0, 1, 1], [], []>} : vector<2x32xf32>, vector<32x96xf32>, vector<2x96xf32> -> vector<2x96xf32>
    %285 = vector.extract_strided_slice %283 {offsets = [0, 0], sizes = [2, 64], strides = [1, 1]} : vector<2x96xf32> to vector<2x64xf32>
    %286 = vector.extract_strided_slice %284 {offsets = [0, 0], sizes = [2, 64], strides = [1, 1]} : vector<2x96xf32> to vector<2x64xf32>
    %287 = arith.addf %285, %286 : vector<2x64xf32>
    %288 = arith.negf %287 : vector<2x64xf32>
    %289 = math.exp %288 : vector<2x64xf32>
    %cst_77 = arith.constant 1.000000e+00 : f32
    %290 = vector.broadcast %cst_77 : f32 to vector<2x64xf32>
    %291 = arith.addf %290, %289 : vector<2x64xf32>
    %292 = arith.divf %290, %291 : vector<2x64xf32>
    %293 = vector.extract_strided_slice %292 {offsets = [0, 0], sizes = [2, 32], strides = [1, 1]} : vector<2x64xf32> to vector<2x32xf32>
    %294 = vector.extract_strided_slice %292 {offsets = [0, 32], sizes = [2, 32], strides = [1, 1]} : vector<2x64xf32> to vector<2x32xf32>
    %295 = vector.extract_strided_slice %283 {offsets = [0, 64], sizes = [2, 32], strides = [1, 1]} : vector<2x96xf32> to vector<2x32xf32>
    %296 = vector.extract_strided_slice %284 {offsets = [0, 64], sizes = [2, 32], strides = [1, 1]} : vector<2x96xf32> to vector<2x32xf32>
    %297 = arith.addf %296, %24 : vector<2x32xf32>
    %298 = arith.mulf %293, %297 : vector<2x32xf32>
    %299 = arith.addf %295, %298 : vector<2x32xf32>
    %300 = math.tanh %299 : vector<2x32xf32>
    %cst_78 = arith.constant 1.000000e+00 : f32
    %301 = vector.broadcast %cst_78 : f32 to vector<2x32xf32>
    %302 = arith.subf %301, %294 : vector<2x32xf32>
    %303 = arith.mulf %302, %300 : vector<2x32xf32>
    %304 = arith.mulf %294, %282 : vector<2x32xf32>
    %305 = arith.addf %303, %304 : vector<2x32xf32>
    %c10_79 = arith.constant 10 : index
    %c0_80 = arith.constant 0 : index
    %306 = vector.load %arg20[%c10_79, %c0_80] : memref<108x48xf32, #tpu.memory_space<vmem>>, vector<14x48xf32>
    %cst_81 = arith.constant dense<0.000000e+00> : vector<14x48xf32>
    %307 = tpu.matmul %29, %21, %cst_81 {dimension_numbers = #tpu.dot_dimension_numbers<[1], [0], [0], [1], [0, 0, 1, 1], [], []>} : vector<14x16xf32>, vector<16x48xf32>, vector<14x48xf32> -> vector<14x48xf32>
    %308 = vector.extract_strided_slice %306 {offsets = [0, 0], sizes = [14, 32], strides = [1, 1]} : vector<14x48xf32> to vector<14x32xf32>
    %309 = vector.extract_strided_slice %307 {offsets = [0, 0], sizes = [14, 32], strides = [1, 1]} : vector<14x48xf32> to vector<14x32xf32>
    %310 = arith.addf %308, %309 : vector<14x32xf32>
    %311 = arith.negf %310 : vector<14x32xf32>
    %312 = math.exp %311 : vector<14x32xf32>
    %cst_82 = arith.constant 1.000000e+00 : f32
    %313 = vector.broadcast %cst_82 : f32 to vector<14x32xf32>
    %314 = arith.addf %313, %312 : vector<14x32xf32>
    %315 = arith.divf %313, %314 : vector<14x32xf32>
    %316 = vector.extract_strided_slice %315 {offsets = [0, 0], sizes = [14, 16], strides = [1, 1]} : vector<14x32xf32> to vector<14x16xf32>
    %317 = vector.extract_strided_slice %315 {offsets = [0, 16], sizes = [14, 16], strides = [1, 1]} : vector<14x32xf32> to vector<14x16xf32>
    %318 = vector.extract_strided_slice %306 {offsets = [0, 32], sizes = [14, 16], strides = [1, 1]} : vector<14x48xf32> to vector<14x16xf32>
    %319 = vector.extract_strided_slice %307 {offsets = [0, 32], sizes = [14, 16], strides = [1, 1]} : vector<14x48xf32> to vector<14x16xf32>
    %320 = arith.addf %319, %27 : vector<14x16xf32>
    %321 = arith.mulf %316, %320 : vector<14x16xf32>
    %322 = arith.addf %318, %321 : vector<14x16xf32>
    %323 = math.tanh %322 : vector<14x16xf32>
    %cst_83 = arith.constant 1.000000e+00 : f32
    %324 = vector.broadcast %cst_83 : f32 to vector<14x16xf32>
    %325 = arith.subf %324, %317 : vector<14x16xf32>
    %326 = arith.mulf %325, %323 : vector<14x16xf32>
    %327 = arith.mulf %317, %29 : vector<14x16xf32>
    %328 = arith.addf %326, %327 : vector<14x16xf32>
    %c24 = arith.constant 24 : index
    %c0_84 = arith.constant 0 : index
    %329 = vector.load %arg19[%c24, %c0_84] : memref<108x96xf32, #tpu.memory_space<vmem>>, vector<2x96xf32>
    %cst_85 = arith.constant dense<0.000000e+00> : vector<2x96xf32>
    %330 = tpu.matmul %305, %20, %cst_85 {dimension_numbers = #tpu.dot_dimension_numbers<[1], [0], [0], [1], [0, 0, 1, 1], [], []>} : vector<2x32xf32>, vector<32x96xf32>, vector<2x96xf32> -> vector<2x96xf32>
    %331 = vector.extract_strided_slice %329 {offsets = [0, 0], sizes = [2, 64], strides = [1, 1]} : vector<2x96xf32> to vector<2x64xf32>
    %332 = vector.extract_strided_slice %330 {offsets = [0, 0], sizes = [2, 64], strides = [1, 1]} : vector<2x96xf32> to vector<2x64xf32>
    %333 = arith.addf %331, %332 : vector<2x64xf32>
    %334 = arith.negf %333 : vector<2x64xf32>
    %335 = math.exp %334 : vector<2x64xf32>
    %cst_86 = arith.constant 1.000000e+00 : f32
    %336 = vector.broadcast %cst_86 : f32 to vector<2x64xf32>
    %337 = arith.addf %336, %335 : vector<2x64xf32>
    %338 = arith.divf %336, %337 : vector<2x64xf32>
    %339 = vector.extract_strided_slice %338 {offsets = [0, 0], sizes = [2, 32], strides = [1, 1]} : vector<2x64xf32> to vector<2x32xf32>
    %340 = vector.extract_strided_slice %338 {offsets = [0, 32], sizes = [2, 32], strides = [1, 1]} : vector<2x64xf32> to vector<2x32xf32>
    %341 = vector.extract_strided_slice %329 {offsets = [0, 64], sizes = [2, 32], strides = [1, 1]} : vector<2x96xf32> to vector<2x32xf32>
    %342 = vector.extract_strided_slice %330 {offsets = [0, 64], sizes = [2, 32], strides = [1, 1]} : vector<2x96xf32> to vector<2x32xf32>
    %343 = arith.addf %342, %24 : vector<2x32xf32>
    %344 = arith.mulf %339, %343 : vector<2x32xf32>
    %345 = arith.addf %341, %344 : vector<2x32xf32>
    %346 = math.tanh %345 : vector<2x32xf32>
    %cst_87 = arith.constant 1.000000e+00 : f32
    %347 = vector.broadcast %cst_87 : f32 to vector<2x32xf32>
    %348 = arith.subf %347, %340 : vector<2x32xf32>
    %349 = arith.mulf %348, %346 : vector<2x32xf32>
    %350 = arith.mulf %340, %305 : vector<2x32xf32>
    %351 = arith.addf %349, %350 : vector<2x32xf32>
    %c26 = arith.constant 26 : index
    %c0_88 = arith.constant 0 : index
    %352 = vector.load %arg19[%c26, %c0_88] : memref<108x96xf32, #tpu.memory_space<vmem>>, vector<2x96xf32>
    %cst_89 = arith.constant dense<0.000000e+00> : vector<2x96xf32>
    %353 = tpu.matmul %351, %20, %cst_89 {dimension_numbers = #tpu.dot_dimension_numbers<[1], [0], [0], [1], [0, 0, 1, 1], [], []>} : vector<2x32xf32>, vector<32x96xf32>, vector<2x96xf32> -> vector<2x96xf32>
    %354 = vector.extract_strided_slice %352 {offsets = [0, 0], sizes = [2, 64], strides = [1, 1]} : vector<2x96xf32> to vector<2x64xf32>
    %355 = vector.extract_strided_slice %353 {offsets = [0, 0], sizes = [2, 64], strides = [1, 1]} : vector<2x96xf32> to vector<2x64xf32>
    %356 = arith.addf %354, %355 : vector<2x64xf32>
    %357 = arith.negf %356 : vector<2x64xf32>
    %358 = math.exp %357 : vector<2x64xf32>
    %cst_90 = arith.constant 1.000000e+00 : f32
    %359 = vector.broadcast %cst_90 : f32 to vector<2x64xf32>
    %360 = arith.addf %359, %358 : vector<2x64xf32>
    %361 = arith.divf %359, %360 : vector<2x64xf32>
    %362 = vector.extract_strided_slice %361 {offsets = [0, 0], sizes = [2, 32], strides = [1, 1]} : vector<2x64xf32> to vector<2x32xf32>
    %363 = vector.extract_strided_slice %361 {offsets = [0, 32], sizes = [2, 32], strides = [1, 1]} : vector<2x64xf32> to vector<2x32xf32>
    %364 = vector.extract_strided_slice %352 {offsets = [0, 64], sizes = [2, 32], strides = [1, 1]} : vector<2x96xf32> to vector<2x32xf32>
    %365 = vector.extract_strided_slice %353 {offsets = [0, 64], sizes = [2, 32], strides = [1, 1]} : vector<2x96xf32> to vector<2x32xf32>
    %366 = arith.addf %365, %24 : vector<2x32xf32>
    %367 = arith.mulf %362, %366 : vector<2x32xf32>
    %368 = arith.addf %364, %367 : vector<2x32xf32>
    %369 = math.tanh %368 : vector<2x32xf32>
    %cst_91 = arith.constant 1.000000e+00 : f32
    %370 = vector.broadcast %cst_91 : f32 to vector<2x32xf32>
    %371 = arith.subf %370, %363 : vector<2x32xf32>
    %372 = arith.mulf %371, %369 : vector<2x32xf32>
    %373 = arith.mulf %363, %351 : vector<2x32xf32>
    %374 = arith.addf %372, %373 : vector<2x32xf32>
    %c28 = arith.constant 28 : index
    %c0_92 = arith.constant 0 : index
    %375 = vector.load %arg19[%c28, %c0_92] : memref<108x96xf32, #tpu.memory_space<vmem>>, vector<2x96xf32>
    %cst_93 = arith.constant dense<0.000000e+00> : vector<2x96xf32>
    %376 = tpu.matmul %374, %20, %cst_93 {dimension_numbers = #tpu.dot_dimension_numbers<[1], [0], [0], [1], [0, 0, 1, 1], [], []>} : vector<2x32xf32>, vector<32x96xf32>, vector<2x96xf32> -> vector<2x96xf32>
    %377 = vector.extract_strided_slice %375 {offsets = [0, 0], sizes = [2, 64], strides = [1, 1]} : vector<2x96xf32> to vector<2x64xf32>
    %378 = vector.extract_strided_slice %376 {offsets = [0, 0], sizes = [2, 64], strides = [1, 1]} : vector<2x96xf32> to vector<2x64xf32>
    %379 = arith.addf %377, %378 : vector<2x64xf32>
    %380 = arith.negf %379 : vector<2x64xf32>
    %381 = math.exp %380 : vector<2x64xf32>
    %cst_94 = arith.constant 1.000000e+00 : f32
    %382 = vector.broadcast %cst_94 : f32 to vector<2x64xf32>
    %383 = arith.addf %382, %381 : vector<2x64xf32>
    %384 = arith.divf %382, %383 : vector<2x64xf32>
    %385 = vector.extract_strided_slice %384 {offsets = [0, 0], sizes = [2, 32], strides = [1, 1]} : vector<2x64xf32> to vector<2x32xf32>
    %386 = vector.extract_strided_slice %384 {offsets = [0, 32], sizes = [2, 32], strides = [1, 1]} : vector<2x64xf32> to vector<2x32xf32>
    %387 = vector.extract_strided_slice %375 {offsets = [0, 64], sizes = [2, 32], strides = [1, 1]} : vector<2x96xf32> to vector<2x32xf32>
    %388 = vector.extract_strided_slice %376 {offsets = [0, 64], sizes = [2, 32], strides = [1, 1]} : vector<2x96xf32> to vector<2x32xf32>
    %389 = arith.addf %388, %24 : vector<2x32xf32>
    %390 = arith.mulf %385, %389 : vector<2x32xf32>
    %391 = arith.addf %387, %390 : vector<2x32xf32>
    %392 = math.tanh %391 : vector<2x32xf32>
    %cst_95 = arith.constant 1.000000e+00 : f32
    %393 = vector.broadcast %cst_95 : f32 to vector<2x32xf32>
    %394 = arith.subf %393, %386 : vector<2x32xf32>
    %395 = arith.mulf %394, %392 : vector<2x32xf32>
    %396 = arith.mulf %386, %374 : vector<2x32xf32>
    %397 = arith.addf %395, %396 : vector<2x32xf32>
    %c30 = arith.constant 30 : index
    %c0_96 = arith.constant 0 : index
    %398 = vector.load %arg19[%c30, %c0_96] : memref<108x96xf32, #tpu.memory_space<vmem>>, vector<2x96xf32>
    %cst_97 = arith.constant dense<0.000000e+00> : vector<2x96xf32>
    %399 = tpu.matmul %397, %20, %cst_97 {dimension_numbers = #tpu.dot_dimension_numbers<[1], [0], [0], [1], [0, 0, 1, 1], [], []>} : vector<2x32xf32>, vector<32x96xf32>, vector<2x96xf32> -> vector<2x96xf32>
    %400 = vector.extract_strided_slice %398 {offsets = [0, 0], sizes = [2, 64], strides = [1, 1]} : vector<2x96xf32> to vector<2x64xf32>
    %401 = vector.extract_strided_slice %399 {offsets = [0, 0], sizes = [2, 64], strides = [1, 1]} : vector<2x96xf32> to vector<2x64xf32>
    %402 = arith.addf %400, %401 : vector<2x64xf32>
    %403 = arith.negf %402 : vector<2x64xf32>
    %404 = math.exp %403 : vector<2x64xf32>
    %cst_98 = arith.constant 1.000000e+00 : f32
    %405 = vector.broadcast %cst_98 : f32 to vector<2x64xf32>
    %406 = arith.addf %405, %404 : vector<2x64xf32>
    %407 = arith.divf %405, %406 : vector<2x64xf32>
    %408 = vector.extract_strided_slice %407 {offsets = [0, 0], sizes = [2, 32], strides = [1, 1]} : vector<2x64xf32> to vector<2x32xf32>
    %409 = vector.extract_strided_slice %407 {offsets = [0, 32], sizes = [2, 32], strides = [1, 1]} : vector<2x64xf32> to vector<2x32xf32>
    %410 = vector.extract_strided_slice %398 {offsets = [0, 64], sizes = [2, 32], strides = [1, 1]} : vector<2x96xf32> to vector<2x32xf32>
    %411 = vector.extract_strided_slice %399 {offsets = [0, 64], sizes = [2, 32], strides = [1, 1]} : vector<2x96xf32> to vector<2x32xf32>
    %412 = arith.addf %411, %24 : vector<2x32xf32>
    %413 = arith.mulf %408, %412 : vector<2x32xf32>
    %414 = arith.addf %410, %413 : vector<2x32xf32>
    %415 = math.tanh %414 : vector<2x32xf32>
    %cst_99 = arith.constant 1.000000e+00 : f32
    %416 = vector.broadcast %cst_99 : f32 to vector<2x32xf32>
    %417 = arith.subf %416, %409 : vector<2x32xf32>
    %418 = arith.mulf %417, %415 : vector<2x32xf32>
    %419 = arith.mulf %409, %397 : vector<2x32xf32>
    %420 = arith.addf %418, %419 : vector<2x32xf32>
    %c32 = arith.constant 32 : index
    %c0_100 = arith.constant 0 : index
    %421 = vector.load %arg19[%c32, %c0_100] : memref<108x96xf32, #tpu.memory_space<vmem>>, vector<2x96xf32>
    %cst_101 = arith.constant dense<0.000000e+00> : vector<2x96xf32>
    %422 = tpu.matmul %420, %20, %cst_101 {dimension_numbers = #tpu.dot_dimension_numbers<[1], [0], [0], [1], [0, 0, 1, 1], [], []>} : vector<2x32xf32>, vector<32x96xf32>, vector<2x96xf32> -> vector<2x96xf32>
    %423 = vector.extract_strided_slice %421 {offsets = [0, 0], sizes = [2, 64], strides = [1, 1]} : vector<2x96xf32> to vector<2x64xf32>
    %424 = vector.extract_strided_slice %422 {offsets = [0, 0], sizes = [2, 64], strides = [1, 1]} : vector<2x96xf32> to vector<2x64xf32>
    %425 = arith.addf %423, %424 : vector<2x64xf32>
    %426 = arith.negf %425 : vector<2x64xf32>
    %427 = math.exp %426 : vector<2x64xf32>
    %cst_102 = arith.constant 1.000000e+00 : f32
    %428 = vector.broadcast %cst_102 : f32 to vector<2x64xf32>
    %429 = arith.addf %428, %427 : vector<2x64xf32>
    %430 = arith.divf %428, %429 : vector<2x64xf32>
    %431 = vector.extract_strided_slice %430 {offsets = [0, 0], sizes = [2, 32], strides = [1, 1]} : vector<2x64xf32> to vector<2x32xf32>
    %432 = vector.extract_strided_slice %430 {offsets = [0, 32], sizes = [2, 32], strides = [1, 1]} : vector<2x64xf32> to vector<2x32xf32>
    %433 = vector.extract_strided_slice %421 {offsets = [0, 64], sizes = [2, 32], strides = [1, 1]} : vector<2x96xf32> to vector<2x32xf32>
    %434 = vector.extract_strided_slice %422 {offsets = [0, 64], sizes = [2, 32], strides = [1, 1]} : vector<2x96xf32> to vector<2x32xf32>
    %435 = arith.addf %434, %24 : vector<2x32xf32>
    %436 = arith.mulf %431, %435 : vector<2x32xf32>
    %437 = arith.addf %433, %436 : vector<2x32xf32>
    %438 = math.tanh %437 : vector<2x32xf32>
    %cst_103 = arith.constant 1.000000e+00 : f32
    %439 = vector.broadcast %cst_103 : f32 to vector<2x32xf32>
    %440 = arith.subf %439, %432 : vector<2x32xf32>
    %441 = arith.mulf %440, %438 : vector<2x32xf32>
    %442 = arith.mulf %432, %420 : vector<2x32xf32>
    %443 = arith.addf %441, %442 : vector<2x32xf32>
    %c34 = arith.constant 34 : index
    %c0_104 = arith.constant 0 : index
    %444 = vector.load %arg19[%c34, %c0_104] : memref<108x96xf32, #tpu.memory_space<vmem>>, vector<2x96xf32>
    %cst_105 = arith.constant dense<0.000000e+00> : vector<2x96xf32>
    %445 = tpu.matmul %443, %20, %cst_105 {dimension_numbers = #tpu.dot_dimension_numbers<[1], [0], [0], [1], [0, 0, 1, 1], [], []>} : vector<2x32xf32>, vector<32x96xf32>, vector<2x96xf32> -> vector<2x96xf32>
    %446 = vector.extract_strided_slice %444 {offsets = [0, 0], sizes = [2, 64], strides = [1, 1]} : vector<2x96xf32> to vector<2x64xf32>
    %447 = vector.extract_strided_slice %445 {offsets = [0, 0], sizes = [2, 64], strides = [1, 1]} : vector<2x96xf32> to vector<2x64xf32>
    %448 = arith.addf %446, %447 : vector<2x64xf32>
    %449 = arith.negf %448 : vector<2x64xf32>
    %450 = math.exp %449 : vector<2x64xf32>
    %cst_106 = arith.constant 1.000000e+00 : f32
    %451 = vector.broadcast %cst_106 : f32 to vector<2x64xf32>
    %452 = arith.addf %451, %450 : vector<2x64xf32>
    %453 = arith.divf %451, %452 : vector<2x64xf32>
    %454 = vector.extract_strided_slice %453 {offsets = [0, 0], sizes = [2, 32], strides = [1, 1]} : vector<2x64xf32> to vector<2x32xf32>
    %455 = vector.extract_strided_slice %453 {offsets = [0, 32], sizes = [2, 32], strides = [1, 1]} : vector<2x64xf32> to vector<2x32xf32>
    %456 = vector.extract_strided_slice %444 {offsets = [0, 64], sizes = [2, 32], strides = [1, 1]} : vector<2x96xf32> to vector<2x32xf32>
    %457 = vector.extract_strided_slice %445 {offsets = [0, 64], sizes = [2, 32], strides = [1, 1]} : vector<2x96xf32> to vector<2x32xf32>
    %458 = arith.addf %457, %24 : vector<2x32xf32>
    %459 = arith.mulf %454, %458 : vector<2x32xf32>
    %460 = arith.addf %456, %459 : vector<2x32xf32>
    %461 = math.tanh %460 : vector<2x32xf32>
    %cst_107 = arith.constant 1.000000e+00 : f32
    %462 = vector.broadcast %cst_107 : f32 to vector<2x32xf32>
    %463 = arith.subf %462, %455 : vector<2x32xf32>
    %464 = arith.mulf %463, %461 : vector<2x32xf32>
    %465 = arith.mulf %455, %443 : vector<2x32xf32>
    %466 = arith.addf %464, %465 : vector<2x32xf32>
    %c36 = arith.constant 36 : index
    %c0_108 = arith.constant 0 : index
    %467 = vector.load %arg19[%c36, %c0_108] : memref<108x96xf32, #tpu.memory_space<vmem>>, vector<2x96xf32>
    %cst_109 = arith.constant dense<0.000000e+00> : vector<2x96xf32>
    %468 = tpu.matmul %466, %20, %cst_109 {dimension_numbers = #tpu.dot_dimension_numbers<[1], [0], [0], [1], [0, 0, 1, 1], [], []>} : vector<2x32xf32>, vector<32x96xf32>, vector<2x96xf32> -> vector<2x96xf32>
    %469 = vector.extract_strided_slice %467 {offsets = [0, 0], sizes = [2, 64], strides = [1, 1]} : vector<2x96xf32> to vector<2x64xf32>
    %470 = vector.extract_strided_slice %468 {offsets = [0, 0], sizes = [2, 64], strides = [1, 1]} : vector<2x96xf32> to vector<2x64xf32>
    %471 = arith.addf %469, %470 : vector<2x64xf32>
    %472 = arith.negf %471 : vector<2x64xf32>
    %473 = math.exp %472 : vector<2x64xf32>
    %cst_110 = arith.constant 1.000000e+00 : f32
    %474 = vector.broadcast %cst_110 : f32 to vector<2x64xf32>
    %475 = arith.addf %474, %473 : vector<2x64xf32>
    %476 = arith.divf %474, %475 : vector<2x64xf32>
    %477 = vector.extract_strided_slice %476 {offsets = [0, 0], sizes = [2, 32], strides = [1, 1]} : vector<2x64xf32> to vector<2x32xf32>
    %478 = vector.extract_strided_slice %476 {offsets = [0, 32], sizes = [2, 32], strides = [1, 1]} : vector<2x64xf32> to vector<2x32xf32>
    %479 = vector.extract_strided_slice %467 {offsets = [0, 64], sizes = [2, 32], strides = [1, 1]} : vector<2x96xf32> to vector<2x32xf32>
    %480 = vector.extract_strided_slice %468 {offsets = [0, 64], sizes = [2, 32], strides = [1, 1]} : vector<2x96xf32> to vector<2x32xf32>
    %481 = arith.addf %480, %24 : vector<2x32xf32>
    %482 = arith.mulf %477, %481 : vector<2x32xf32>
    %483 = arith.addf %479, %482 : vector<2x32xf32>
    %484 = math.tanh %483 : vector<2x32xf32>
    %cst_111 = arith.constant 1.000000e+00 : f32
    %485 = vector.broadcast %cst_111 : f32 to vector<2x32xf32>
    %486 = arith.subf %485, %478 : vector<2x32xf32>
    %487 = arith.mulf %486, %484 : vector<2x32xf32>
    %488 = arith.mulf %478, %466 : vector<2x32xf32>
    %489 = arith.addf %487, %488 : vector<2x32xf32>
    %c24_112 = arith.constant 24 : index
    %c0_113 = arith.constant 0 : index
    %490 = vector.load %arg20[%c24_112, %c0_113] : memref<108x48xf32, #tpu.memory_space<vmem>>, vector<14x48xf32>
    %cst_114 = arith.constant dense<0.000000e+00> : vector<14x48xf32>
    %491 = tpu.matmul %328, %21, %cst_114 {dimension_numbers = #tpu.dot_dimension_numbers<[1], [0], [0], [1], [0, 0, 1, 1], [], []>} : vector<14x16xf32>, vector<16x48xf32>, vector<14x48xf32> -> vector<14x48xf32>
    %492 = vector.extract_strided_slice %490 {offsets = [0, 0], sizes = [14, 32], strides = [1, 1]} : vector<14x48xf32> to vector<14x32xf32>
    %493 = vector.extract_strided_slice %491 {offsets = [0, 0], sizes = [14, 32], strides = [1, 1]} : vector<14x48xf32> to vector<14x32xf32>
    %494 = arith.addf %492, %493 : vector<14x32xf32>
    %495 = arith.negf %494 : vector<14x32xf32>
    %496 = math.exp %495 : vector<14x32xf32>
    %cst_115 = arith.constant 1.000000e+00 : f32
    %497 = vector.broadcast %cst_115 : f32 to vector<14x32xf32>
    %498 = arith.addf %497, %496 : vector<14x32xf32>
    %499 = arith.divf %497, %498 : vector<14x32xf32>
    %500 = vector.extract_strided_slice %499 {offsets = [0, 0], sizes = [14, 16], strides = [1, 1]} : vector<14x32xf32> to vector<14x16xf32>
    %501 = vector.extract_strided_slice %499 {offsets = [0, 16], sizes = [14, 16], strides = [1, 1]} : vector<14x32xf32> to vector<14x16xf32>
    %502 = vector.extract_strided_slice %490 {offsets = [0, 32], sizes = [14, 16], strides = [1, 1]} : vector<14x48xf32> to vector<14x16xf32>
    %503 = vector.extract_strided_slice %491 {offsets = [0, 32], sizes = [14, 16], strides = [1, 1]} : vector<14x48xf32> to vector<14x16xf32>
    %504 = arith.addf %503, %27 : vector<14x16xf32>
    %505 = arith.mulf %500, %504 : vector<14x16xf32>
    %506 = arith.addf %502, %505 : vector<14x16xf32>
    %507 = math.tanh %506 : vector<14x16xf32>
    %cst_116 = arith.constant 1.000000e+00 : f32
    %508 = vector.broadcast %cst_116 : f32 to vector<14x16xf32>
    %509 = arith.subf %508, %501 : vector<14x16xf32>
    %510 = arith.mulf %509, %507 : vector<14x16xf32>
    %511 = arith.mulf %501, %328 : vector<14x16xf32>
    %512 = arith.addf %510, %511 : vector<14x16xf32>
    %c38 = arith.constant 38 : index
    %c0_117 = arith.constant 0 : index
    %513 = vector.load %arg19[%c38, %c0_117] : memref<108x96xf32, #tpu.memory_space<vmem>>, vector<2x96xf32>
    %cst_118 = arith.constant dense<0.000000e+00> : vector<2x96xf32>
    %514 = tpu.matmul %489, %20, %cst_118 {dimension_numbers = #tpu.dot_dimension_numbers<[1], [0], [0], [1], [0, 0, 1, 1], [], []>} : vector<2x32xf32>, vector<32x96xf32>, vector<2x96xf32> -> vector<2x96xf32>
    %515 = vector.extract_strided_slice %513 {offsets = [0, 0], sizes = [2, 64], strides = [1, 1]} : vector<2x96xf32> to vector<2x64xf32>
    %516 = vector.extract_strided_slice %514 {offsets = [0, 0], sizes = [2, 64], strides = [1, 1]} : vector<2x96xf32> to vector<2x64xf32>
    %517 = arith.addf %515, %516 : vector<2x64xf32>
    %518 = arith.negf %517 : vector<2x64xf32>
    %519 = math.exp %518 : vector<2x64xf32>
    %cst_119 = arith.constant 1.000000e+00 : f32
    %520 = vector.broadcast %cst_119 : f32 to vector<2x64xf32>
    %521 = arith.addf %520, %519 : vector<2x64xf32>
    %522 = arith.divf %520, %521 : vector<2x64xf32>
    %523 = vector.extract_strided_slice %522 {offsets = [0, 0], sizes = [2, 32], strides = [1, 1]} : vector<2x64xf32> to vector<2x32xf32>
    %524 = vector.extract_strided_slice %522 {offsets = [0, 32], sizes = [2, 32], strides = [1, 1]} : vector<2x64xf32> to vector<2x32xf32>
    %525 = vector.extract_strided_slice %513 {offsets = [0, 64], sizes = [2, 32], strides = [1, 1]} : vector<2x96xf32> to vector<2x32xf32>
    %526 = vector.extract_strided_slice %514 {offsets = [0, 64], sizes = [2, 32], strides = [1, 1]} : vector<2x96xf32> to vector<2x32xf32>
    %527 = arith.addf %526, %24 : vector<2x32xf32>
    %528 = arith.mulf %523, %527 : vector<2x32xf32>
    %529 = arith.addf %525, %528 : vector<2x32xf32>
    %530 = math.tanh %529 : vector<2x32xf32>
    %cst_120 = arith.constant 1.000000e+00 : f32
    %531 = vector.broadcast %cst_120 : f32 to vector<2x32xf32>
    %532 = arith.subf %531, %524 : vector<2x32xf32>
    %533 = arith.mulf %532, %530 : vector<2x32xf32>
    %534 = arith.mulf %524, %489 : vector<2x32xf32>
    %535 = arith.addf %533, %534 : vector<2x32xf32>
    %c40 = arith.constant 40 : index
    %c0_121 = arith.constant 0 : index
    %536 = vector.load %arg19[%c40, %c0_121] : memref<108x96xf32, #tpu.memory_space<vmem>>, vector<2x96xf32>
    %cst_122 = arith.constant dense<0.000000e+00> : vector<2x96xf32>
    %537 = tpu.matmul %535, %20, %cst_122 {dimension_numbers = #tpu.dot_dimension_numbers<[1], [0], [0], [1], [0, 0, 1, 1], [], []>} : vector<2x32xf32>, vector<32x96xf32>, vector<2x96xf32> -> vector<2x96xf32>
    %538 = vector.extract_strided_slice %536 {offsets = [0, 0], sizes = [2, 64], strides = [1, 1]} : vector<2x96xf32> to vector<2x64xf32>
    %539 = vector.extract_strided_slice %537 {offsets = [0, 0], sizes = [2, 64], strides = [1, 1]} : vector<2x96xf32> to vector<2x64xf32>
    %540 = arith.addf %538, %539 : vector<2x64xf32>
    %541 = arith.negf %540 : vector<2x64xf32>
    %542 = math.exp %541 : vector<2x64xf32>
    %cst_123 = arith.constant 1.000000e+00 : f32
    %543 = vector.broadcast %cst_123 : f32 to vector<2x64xf32>
    %544 = arith.addf %543, %542 : vector<2x64xf32>
    %545 = arith.divf %543, %544 : vector<2x64xf32>
    %546 = vector.extract_strided_slice %545 {offsets = [0, 0], sizes = [2, 32], strides = [1, 1]} : vector<2x64xf32> to vector<2x32xf32>
    %547 = vector.extract_strided_slice %545 {offsets = [0, 32], sizes = [2, 32], strides = [1, 1]} : vector<2x64xf32> to vector<2x32xf32>
    %548 = vector.extract_strided_slice %536 {offsets = [0, 64], sizes = [2, 32], strides = [1, 1]} : vector<2x96xf32> to vector<2x32xf32>
    %549 = vector.extract_strided_slice %537 {offsets = [0, 64], sizes = [2, 32], strides = [1, 1]} : vector<2x96xf32> to vector<2x32xf32>
    %550 = arith.addf %549, %24 : vector<2x32xf32>
    %551 = arith.mulf %546, %550 : vector<2x32xf32>
    %552 = arith.addf %548, %551 : vector<2x32xf32>
    %553 = math.tanh %552 : vector<2x32xf32>
    %cst_124 = arith.constant 1.000000e+00 : f32
    %554 = vector.broadcast %cst_124 : f32 to vector<2x32xf32>
    %555 = arith.subf %554, %547 : vector<2x32xf32>
    %556 = arith.mulf %555, %553 : vector<2x32xf32>
    %557 = arith.mulf %547, %535 : vector<2x32xf32>
    %558 = arith.addf %556, %557 : vector<2x32xf32>
    %c42 = arith.constant 42 : index
    %c0_125 = arith.constant 0 : index
    %559 = vector.load %arg19[%c42, %c0_125] : memref<108x96xf32, #tpu.memory_space<vmem>>, vector<2x96xf32>
    %cst_126 = arith.constant dense<0.000000e+00> : vector<2x96xf32>
    %560 = tpu.matmul %558, %20, %cst_126 {dimension_numbers = #tpu.dot_dimension_numbers<[1], [0], [0], [1], [0, 0, 1, 1], [], []>} : vector<2x32xf32>, vector<32x96xf32>, vector<2x96xf32> -> vector<2x96xf32>
    %561 = vector.extract_strided_slice %559 {offsets = [0, 0], sizes = [2, 64], strides = [1, 1]} : vector<2x96xf32> to vector<2x64xf32>
    %562 = vector.extract_strided_slice %560 {offsets = [0, 0], sizes = [2, 64], strides = [1, 1]} : vector<2x96xf32> to vector<2x64xf32>
    %563 = arith.addf %561, %562 : vector<2x64xf32>
    %564 = arith.negf %563 : vector<2x64xf32>
    %565 = math.exp %564 : vector<2x64xf32>
    %cst_127 = arith.constant 1.000000e+00 : f32
    %566 = vector.broadcast %cst_127 : f32 to vector<2x64xf32>
    %567 = arith.addf %566, %565 : vector<2x64xf32>
    %568 = arith.divf %566, %567 : vector<2x64xf32>
    %569 = vector.extract_strided_slice %568 {offsets = [0, 0], sizes = [2, 32], strides = [1, 1]} : vector<2x64xf32> to vector<2x32xf32>
    %570 = vector.extract_strided_slice %568 {offsets = [0, 32], sizes = [2, 32], strides = [1, 1]} : vector<2x64xf32> to vector<2x32xf32>
    %571 = vector.extract_strided_slice %559 {offsets = [0, 64], sizes = [2, 32], strides = [1, 1]} : vector<2x96xf32> to vector<2x32xf32>
    %572 = vector.extract_strided_slice %560 {offsets = [0, 64], sizes = [2, 32], strides = [1, 1]} : vector<2x96xf32> to vector<2x32xf32>
    %573 = arith.addf %572, %24 : vector<2x32xf32>
    %574 = arith.mulf %569, %573 : vector<2x32xf32>
    %575 = arith.addf %571, %574 : vector<2x32xf32>
    %576 = math.tanh %575 : vector<2x32xf32>
    %cst_128 = arith.constant 1.000000e+00 : f32
    %577 = vector.broadcast %cst_128 : f32 to vector<2x32xf32>
    %578 = arith.subf %577, %570 : vector<2x32xf32>
    %579 = arith.mulf %578, %576 : vector<2x32xf32>
    %580 = arith.mulf %570, %558 : vector<2x32xf32>
    %581 = arith.addf %579, %580 : vector<2x32xf32>
    %c44 = arith.constant 44 : index
    %c0_129 = arith.constant 0 : index
    %582 = vector.load %arg19[%c44, %c0_129] : memref<108x96xf32, #tpu.memory_space<vmem>>, vector<2x96xf32>
    %cst_130 = arith.constant dense<0.000000e+00> : vector<2x96xf32>
    %583 = tpu.matmul %581, %20, %cst_130 {dimension_numbers = #tpu.dot_dimension_numbers<[1], [0], [0], [1], [0, 0, 1, 1], [], []>} : vector<2x32xf32>, vector<32x96xf32>, vector<2x96xf32> -> vector<2x96xf32>
    %584 = vector.extract_strided_slice %582 {offsets = [0, 0], sizes = [2, 64], strides = [1, 1]} : vector<2x96xf32> to vector<2x64xf32>
    %585 = vector.extract_strided_slice %583 {offsets = [0, 0], sizes = [2, 64], strides = [1, 1]} : vector<2x96xf32> to vector<2x64xf32>
    %586 = arith.addf %584, %585 : vector<2x64xf32>
    %587 = arith.negf %586 : vector<2x64xf32>
    %588 = math.exp %587 : vector<2x64xf32>
    %cst_131 = arith.constant 1.000000e+00 : f32
    %589 = vector.broadcast %cst_131 : f32 to vector<2x64xf32>
    %590 = arith.addf %589, %588 : vector<2x64xf32>
    %591 = arith.divf %589, %590 : vector<2x64xf32>
    %592 = vector.extract_strided_slice %591 {offsets = [0, 0], sizes = [2, 32], strides = [1, 1]} : vector<2x64xf32> to vector<2x32xf32>
    %593 = vector.extract_strided_slice %591 {offsets = [0, 32], sizes = [2, 32], strides = [1, 1]} : vector<2x64xf32> to vector<2x32xf32>
    %594 = vector.extract_strided_slice %582 {offsets = [0, 64], sizes = [2, 32], strides = [1, 1]} : vector<2x96xf32> to vector<2x32xf32>
    %595 = vector.extract_strided_slice %583 {offsets = [0, 64], sizes = [2, 32], strides = [1, 1]} : vector<2x96xf32> to vector<2x32xf32>
    %596 = arith.addf %595, %24 : vector<2x32xf32>
    %597 = arith.mulf %592, %596 : vector<2x32xf32>
    %598 = arith.addf %594, %597 : vector<2x32xf32>
    %599 = math.tanh %598 : vector<2x32xf32>
    %cst_132 = arith.constant 1.000000e+00 : f32
    %600 = vector.broadcast %cst_132 : f32 to vector<2x32xf32>
    %601 = arith.subf %600, %593 : vector<2x32xf32>
    %602 = arith.mulf %601, %599 : vector<2x32xf32>
    %603 = arith.mulf %593, %581 : vector<2x32xf32>
    %604 = arith.addf %602, %603 : vector<2x32xf32>
    %c46 = arith.constant 46 : index
    %c0_133 = arith.constant 0 : index
    %605 = vector.load %arg19[%c46, %c0_133] : memref<108x96xf32, #tpu.memory_space<vmem>>, vector<2x96xf32>
    %cst_134 = arith.constant dense<0.000000e+00> : vector<2x96xf32>
    %606 = tpu.matmul %604, %20, %cst_134 {dimension_numbers = #tpu.dot_dimension_numbers<[1], [0], [0], [1], [0, 0, 1, 1], [], []>} : vector<2x32xf32>, vector<32x96xf32>, vector<2x96xf32> -> vector<2x96xf32>
    %607 = vector.extract_strided_slice %605 {offsets = [0, 0], sizes = [2, 64], strides = [1, 1]} : vector<2x96xf32> to vector<2x64xf32>
    %608 = vector.extract_strided_slice %606 {offsets = [0, 0], sizes = [2, 64], strides = [1, 1]} : vector<2x96xf32> to vector<2x64xf32>
    %609 = arith.addf %607, %608 : vector<2x64xf32>
    %610 = arith.negf %609 : vector<2x64xf32>
    %611 = math.exp %610 : vector<2x64xf32>
    %cst_135 = arith.constant 1.000000e+00 : f32
    %612 = vector.broadcast %cst_135 : f32 to vector<2x64xf32>
    %613 = arith.addf %612, %611 : vector<2x64xf32>
    %614 = arith.divf %612, %613 : vector<2x64xf32>
    %615 = vector.extract_strided_slice %614 {offsets = [0, 0], sizes = [2, 32], strides = [1, 1]} : vector<2x64xf32> to vector<2x32xf32>
    %616 = vector.extract_strided_slice %614 {offsets = [0, 32], sizes = [2, 32], strides = [1, 1]} : vector<2x64xf32> to vector<2x32xf32>
    %617 = vector.extract_strided_slice %605 {offsets = [0, 64], sizes = [2, 32], strides = [1, 1]} : vector<2x96xf32> to vector<2x32xf32>
    %618 = vector.extract_strided_slice %606 {offsets = [0, 64], sizes = [2, 32], strides = [1, 1]} : vector<2x96xf32> to vector<2x32xf32>
    %619 = arith.addf %618, %24 : vector<2x32xf32>
    %620 = arith.mulf %615, %619 : vector<2x32xf32>
    %621 = arith.addf %617, %620 : vector<2x32xf32>
    %622 = math.tanh %621 : vector<2x32xf32>
    %cst_136 = arith.constant 1.000000e+00 : f32
    %623 = vector.broadcast %cst_136 : f32 to vector<2x32xf32>
    %624 = arith.subf %623, %616 : vector<2x32xf32>
    %625 = arith.mulf %624, %622 : vector<2x32xf32>
    %626 = arith.mulf %616, %604 : vector<2x32xf32>
    %627 = arith.addf %625, %626 : vector<2x32xf32>
    %c48 = arith.constant 48 : index
    %c0_137 = arith.constant 0 : index
    %628 = vector.load %arg19[%c48, %c0_137] : memref<108x96xf32, #tpu.memory_space<vmem>>, vector<2x96xf32>
    %cst_138 = arith.constant dense<0.000000e+00> : vector<2x96xf32>
    %629 = tpu.matmul %627, %20, %cst_138 {dimension_numbers = #tpu.dot_dimension_numbers<[1], [0], [0], [1], [0, 0, 1, 1], [], []>} : vector<2x32xf32>, vector<32x96xf32>, vector<2x96xf32> -> vector<2x96xf32>
    %630 = vector.extract_strided_slice %628 {offsets = [0, 0], sizes = [2, 64], strides = [1, 1]} : vector<2x96xf32> to vector<2x64xf32>
    %631 = vector.extract_strided_slice %629 {offsets = [0, 0], sizes = [2, 64], strides = [1, 1]} : vector<2x96xf32> to vector<2x64xf32>
    %632 = arith.addf %630, %631 : vector<2x64xf32>
    %633 = arith.negf %632 : vector<2x64xf32>
    %634 = math.exp %633 : vector<2x64xf32>
    %cst_139 = arith.constant 1.000000e+00 : f32
    %635 = vector.broadcast %cst_139 : f32 to vector<2x64xf32>
    %636 = arith.addf %635, %634 : vector<2x64xf32>
    %637 = arith.divf %635, %636 : vector<2x64xf32>
    %638 = vector.extract_strided_slice %637 {offsets = [0, 0], sizes = [2, 32], strides = [1, 1]} : vector<2x64xf32> to vector<2x32xf32>
    %639 = vector.extract_strided_slice %637 {offsets = [0, 32], sizes = [2, 32], strides = [1, 1]} : vector<2x64xf32> to vector<2x32xf32>
    %640 = vector.extract_strided_slice %628 {offsets = [0, 64], sizes = [2, 32], strides = [1, 1]} : vector<2x96xf32> to vector<2x32xf32>
    %641 = vector.extract_strided_slice %629 {offsets = [0, 64], sizes = [2, 32], strides = [1, 1]} : vector<2x96xf32> to vector<2x32xf32>
    %642 = arith.addf %641, %24 : vector<2x32xf32>
    %643 = arith.mulf %638, %642 : vector<2x32xf32>
    %644 = arith.addf %640, %643 : vector<2x32xf32>
    %645 = math.tanh %644 : vector<2x32xf32>
    %cst_140 = arith.constant 1.000000e+00 : f32
    %646 = vector.broadcast %cst_140 : f32 to vector<2x32xf32>
    %647 = arith.subf %646, %639 : vector<2x32xf32>
    %648 = arith.mulf %647, %645 : vector<2x32xf32>
    %649 = arith.mulf %639, %627 : vector<2x32xf32>
    %650 = arith.addf %648, %649 : vector<2x32xf32>
    %c50 = arith.constant 50 : index
    %c0_141 = arith.constant 0 : index
    %651 = vector.load %arg19[%c50, %c0_141] : memref<108x96xf32, #tpu.memory_space<vmem>>, vector<2x96xf32>
    %cst_142 = arith.constant dense<0.000000e+00> : vector<2x96xf32>
    %652 = tpu.matmul %650, %20, %cst_142 {dimension_numbers = #tpu.dot_dimension_numbers<[1], [0], [0], [1], [0, 0, 1, 1], [], []>} : vector<2x32xf32>, vector<32x96xf32>, vector<2x96xf32> -> vector<2x96xf32>
    %653 = vector.extract_strided_slice %651 {offsets = [0, 0], sizes = [2, 64], strides = [1, 1]} : vector<2x96xf32> to vector<2x64xf32>
    %654 = vector.extract_strided_slice %652 {offsets = [0, 0], sizes = [2, 64], strides = [1, 1]} : vector<2x96xf32> to vector<2x64xf32>
    %655 = arith.addf %653, %654 : vector<2x64xf32>
    %656 = arith.negf %655 : vector<2x64xf32>
    %657 = math.exp %656 : vector<2x64xf32>
    %cst_143 = arith.constant 1.000000e+00 : f32
    %658 = vector.broadcast %cst_143 : f32 to vector<2x64xf32>
    %659 = arith.addf %658, %657 : vector<2x64xf32>
    %660 = arith.divf %658, %659 : vector<2x64xf32>
    %661 = vector.extract_strided_slice %660 {offsets = [0, 0], sizes = [2, 32], strides = [1, 1]} : vector<2x64xf32> to vector<2x32xf32>
    %662 = vector.extract_strided_slice %660 {offsets = [0, 32], sizes = [2, 32], strides = [1, 1]} : vector<2x64xf32> to vector<2x32xf32>
    %663 = vector.extract_strided_slice %651 {offsets = [0, 64], sizes = [2, 32], strides = [1, 1]} : vector<2x96xf32> to vector<2x32xf32>
    %664 = vector.extract_strided_slice %652 {offsets = [0, 64], sizes = [2, 32], strides = [1, 1]} : vector<2x96xf32> to vector<2x32xf32>
    %665 = arith.addf %664, %24 : vector<2x32xf32>
    %666 = arith.mulf %661, %665 : vector<2x32xf32>
    %667 = arith.addf %663, %666 : vector<2x32xf32>
    %668 = math.tanh %667 : vector<2x32xf32>
    %cst_144 = arith.constant 1.000000e+00 : f32
    %669 = vector.broadcast %cst_144 : f32 to vector<2x32xf32>
    %670 = arith.subf %669, %662 : vector<2x32xf32>
    %671 = arith.mulf %670, %668 : vector<2x32xf32>
    %672 = arith.mulf %662, %650 : vector<2x32xf32>
    %673 = arith.addf %671, %672 : vector<2x32xf32>
    %c38_145 = arith.constant 38 : index
    %c0_146 = arith.constant 0 : index
    %674 = vector.load %arg20[%c38_145, %c0_146] : memref<108x48xf32, #tpu.memory_space<vmem>>, vector<14x48xf32>
    %cst_147 = arith.constant dense<0.000000e+00> : vector<14x48xf32>
    %675 = tpu.matmul %512, %21, %cst_147 {dimension_numbers = #tpu.dot_dimension_numbers<[1], [0], [0], [1], [0, 0, 1, 1], [], []>} : vector<14x16xf32>, vector<16x48xf32>, vector<14x48xf32> -> vector<14x48xf32>
    %676 = vector.extract_strided_slice %674 {offsets = [0, 0], sizes = [14, 32], strides = [1, 1]} : vector<14x48xf32> to vector<14x32xf32>
    %677 = vector.extract_strided_slice %675 {offsets = [0, 0], sizes = [14, 32], strides = [1, 1]} : vector<14x48xf32> to vector<14x32xf32>
    %678 = arith.addf %676, %677 : vector<14x32xf32>
    %679 = arith.negf %678 : vector<14x32xf32>
    %680 = math.exp %679 : vector<14x32xf32>
    %cst_148 = arith.constant 1.000000e+00 : f32
    %681 = vector.broadcast %cst_148 : f32 to vector<14x32xf32>
    %682 = arith.addf %681, %680 : vector<14x32xf32>
    %683 = arith.divf %681, %682 : vector<14x32xf32>
    %684 = vector.extract_strided_slice %683 {offsets = [0, 0], sizes = [14, 16], strides = [1, 1]} : vector<14x32xf32> to vector<14x16xf32>
    %685 = vector.extract_strided_slice %683 {offsets = [0, 16], sizes = [14, 16], strides = [1, 1]} : vector<14x32xf32> to vector<14x16xf32>
    %686 = vector.extract_strided_slice %674 {offsets = [0, 32], sizes = [14, 16], strides = [1, 1]} : vector<14x48xf32> to vector<14x16xf32>
    %687 = vector.extract_strided_slice %675 {offsets = [0, 32], sizes = [14, 16], strides = [1, 1]} : vector<14x48xf32> to vector<14x16xf32>
    %688 = arith.addf %687, %27 : vector<14x16xf32>
    %689 = arith.mulf %684, %688 : vector<14x16xf32>
    %690 = arith.addf %686, %689 : vector<14x16xf32>
    %691 = math.tanh %690 : vector<14x16xf32>
    %cst_149 = arith.constant 1.000000e+00 : f32
    %692 = vector.broadcast %cst_149 : f32 to vector<14x16xf32>
    %693 = arith.subf %692, %685 : vector<14x16xf32>
    %694 = arith.mulf %693, %691 : vector<14x16xf32>
    %695 = arith.mulf %685, %512 : vector<14x16xf32>
    %696 = arith.addf %694, %695 : vector<14x16xf32>
    %c52 = arith.constant 52 : index
    %c0_150 = arith.constant 0 : index
    %697 = vector.load %arg19[%c52, %c0_150] : memref<108x96xf32, #tpu.memory_space<vmem>>, vector<2x96xf32>
    %cst_151 = arith.constant dense<0.000000e+00> : vector<2x96xf32>
    %698 = tpu.matmul %673, %20, %cst_151 {dimension_numbers = #tpu.dot_dimension_numbers<[1], [0], [0], [1], [0, 0, 1, 1], [], []>} : vector<2x32xf32>, vector<32x96xf32>, vector<2x96xf32> -> vector<2x96xf32>
    %699 = vector.extract_strided_slice %697 {offsets = [0, 0], sizes = [2, 64], strides = [1, 1]} : vector<2x96xf32> to vector<2x64xf32>
    %700 = vector.extract_strided_slice %698 {offsets = [0, 0], sizes = [2, 64], strides = [1, 1]} : vector<2x96xf32> to vector<2x64xf32>
    %701 = arith.addf %699, %700 : vector<2x64xf32>
    %702 = arith.negf %701 : vector<2x64xf32>
    %703 = math.exp %702 : vector<2x64xf32>
    %cst_152 = arith.constant 1.000000e+00 : f32
    %704 = vector.broadcast %cst_152 : f32 to vector<2x64xf32>
    %705 = arith.addf %704, %703 : vector<2x64xf32>
    %706 = arith.divf %704, %705 : vector<2x64xf32>
    %707 = vector.extract_strided_slice %706 {offsets = [0, 0], sizes = [2, 32], strides = [1, 1]} : vector<2x64xf32> to vector<2x32xf32>
    %708 = vector.extract_strided_slice %706 {offsets = [0, 32], sizes = [2, 32], strides = [1, 1]} : vector<2x64xf32> to vector<2x32xf32>
    %709 = vector.extract_strided_slice %697 {offsets = [0, 64], sizes = [2, 32], strides = [1, 1]} : vector<2x96xf32> to vector<2x32xf32>
    %710 = vector.extract_strided_slice %698 {offsets = [0, 64], sizes = [2, 32], strides = [1, 1]} : vector<2x96xf32> to vector<2x32xf32>
    %711 = arith.addf %710, %24 : vector<2x32xf32>
    %712 = arith.mulf %707, %711 : vector<2x32xf32>
    %713 = arith.addf %709, %712 : vector<2x32xf32>
    %714 = math.tanh %713 : vector<2x32xf32>
    %cst_153 = arith.constant 1.000000e+00 : f32
    %715 = vector.broadcast %cst_153 : f32 to vector<2x32xf32>
    %716 = arith.subf %715, %708 : vector<2x32xf32>
    %717 = arith.mulf %716, %714 : vector<2x32xf32>
    %718 = arith.mulf %708, %673 : vector<2x32xf32>
    %719 = arith.addf %717, %718 : vector<2x32xf32>
    %c54 = arith.constant 54 : index
    %c0_154 = arith.constant 0 : index
    %720 = vector.load %arg19[%c54, %c0_154] : memref<108x96xf32, #tpu.memory_space<vmem>>, vector<2x96xf32>
    %cst_155 = arith.constant dense<0.000000e+00> : vector<2x96xf32>
    %721 = tpu.matmul %719, %20, %cst_155 {dimension_numbers = #tpu.dot_dimension_numbers<[1], [0], [0], [1], [0, 0, 1, 1], [], []>} : vector<2x32xf32>, vector<32x96xf32>, vector<2x96xf32> -> vector<2x96xf32>
    %722 = vector.extract_strided_slice %720 {offsets = [0, 0], sizes = [2, 64], strides = [1, 1]} : vector<2x96xf32> to vector<2x64xf32>
    %723 = vector.extract_strided_slice %721 {offsets = [0, 0], sizes = [2, 64], strides = [1, 1]} : vector<2x96xf32> to vector<2x64xf32>
    %724 = arith.addf %722, %723 : vector<2x64xf32>
    %725 = arith.negf %724 : vector<2x64xf32>
    %726 = math.exp %725 : vector<2x64xf32>
    %cst_156 = arith.constant 1.000000e+00 : f32
    %727 = vector.broadcast %cst_156 : f32 to vector<2x64xf32>
    %728 = arith.addf %727, %726 : vector<2x64xf32>
    %729 = arith.divf %727, %728 : vector<2x64xf32>
    %730 = vector.extract_strided_slice %729 {offsets = [0, 0], sizes = [2, 32], strides = [1, 1]} : vector<2x64xf32> to vector<2x32xf32>
    %731 = vector.extract_strided_slice %729 {offsets = [0, 32], sizes = [2, 32], strides = [1, 1]} : vector<2x64xf32> to vector<2x32xf32>
    %732 = vector.extract_strided_slice %720 {offsets = [0, 64], sizes = [2, 32], strides = [1, 1]} : vector<2x96xf32> to vector<2x32xf32>
    %733 = vector.extract_strided_slice %721 {offsets = [0, 64], sizes = [2, 32], strides = [1, 1]} : vector<2x96xf32> to vector<2x32xf32>
    %734 = arith.addf %733, %24 : vector<2x32xf32>
    %735 = arith.mulf %730, %734 : vector<2x32xf32>
    %736 = arith.addf %732, %735 : vector<2x32xf32>
    %737 = math.tanh %736 : vector<2x32xf32>
    %cst_157 = arith.constant 1.000000e+00 : f32
    %738 = vector.broadcast %cst_157 : f32 to vector<2x32xf32>
    %739 = arith.subf %738, %731 : vector<2x32xf32>
    %740 = arith.mulf %739, %737 : vector<2x32xf32>
    %741 = arith.mulf %731, %719 : vector<2x32xf32>
    %742 = arith.addf %740, %741 : vector<2x32xf32>
    %c56 = arith.constant 56 : index
    %c0_158 = arith.constant 0 : index
    %743 = vector.load %arg19[%c56, %c0_158] : memref<108x96xf32, #tpu.memory_space<vmem>>, vector<2x96xf32>
    %cst_159 = arith.constant dense<0.000000e+00> : vector<2x96xf32>
    %744 = tpu.matmul %742, %20, %cst_159 {dimension_numbers = #tpu.dot_dimension_numbers<[1], [0], [0], [1], [0, 0, 1, 1], [], []>} : vector<2x32xf32>, vector<32x96xf32>, vector<2x96xf32> -> vector<2x96xf32>
    %745 = vector.extract_strided_slice %743 {offsets = [0, 0], sizes = [2, 64], strides = [1, 1]} : vector<2x96xf32> to vector<2x64xf32>
    %746 = vector.extract_strided_slice %744 {offsets = [0, 0], sizes = [2, 64], strides = [1, 1]} : vector<2x96xf32> to vector<2x64xf32>
    %747 = arith.addf %745, %746 : vector<2x64xf32>
    %748 = arith.negf %747 : vector<2x64xf32>
    %749 = math.exp %748 : vector<2x64xf32>
    %cst_160 = arith.constant 1.000000e+00 : f32
    %750 = vector.broadcast %cst_160 : f32 to vector<2x64xf32>
    %751 = arith.addf %750, %749 : vector<2x64xf32>
    %752 = arith.divf %750, %751 : vector<2x64xf32>
    %753 = vector.extract_strided_slice %752 {offsets = [0, 0], sizes = [2, 32], strides = [1, 1]} : vector<2x64xf32> to vector<2x32xf32>
    %754 = vector.extract_strided_slice %752 {offsets = [0, 32], sizes = [2, 32], strides = [1, 1]} : vector<2x64xf32> to vector<2x32xf32>
    %755 = vector.extract_strided_slice %743 {offsets = [0, 64], sizes = [2, 32], strides = [1, 1]} : vector<2x96xf32> to vector<2x32xf32>
    %756 = vector.extract_strided_slice %744 {offsets = [0, 64], sizes = [2, 32], strides = [1, 1]} : vector<2x96xf32> to vector<2x32xf32>
    %757 = arith.addf %756, %24 : vector<2x32xf32>
    %758 = arith.mulf %753, %757 : vector<2x32xf32>
    %759 = arith.addf %755, %758 : vector<2x32xf32>
    %760 = math.tanh %759 : vector<2x32xf32>
    %cst_161 = arith.constant 1.000000e+00 : f32
    %761 = vector.broadcast %cst_161 : f32 to vector<2x32xf32>
    %762 = arith.subf %761, %754 : vector<2x32xf32>
    %763 = arith.mulf %762, %760 : vector<2x32xf32>
    %764 = arith.mulf %754, %742 : vector<2x32xf32>
    %765 = arith.addf %763, %764 : vector<2x32xf32>
    %c58 = arith.constant 58 : index
    %c0_162 = arith.constant 0 : index
    %766 = vector.load %arg19[%c58, %c0_162] : memref<108x96xf32, #tpu.memory_space<vmem>>, vector<2x96xf32>
    %cst_163 = arith.constant dense<0.000000e+00> : vector<2x96xf32>
    %767 = tpu.matmul %765, %20, %cst_163 {dimension_numbers = #tpu.dot_dimension_numbers<[1], [0], [0], [1], [0, 0, 1, 1], [], []>} : vector<2x32xf32>, vector<32x96xf32>, vector<2x96xf32> -> vector<2x96xf32>
    %768 = vector.extract_strided_slice %766 {offsets = [0, 0], sizes = [2, 64], strides = [1, 1]} : vector<2x96xf32> to vector<2x64xf32>
    %769 = vector.extract_strided_slice %767 {offsets = [0, 0], sizes = [2, 64], strides = [1, 1]} : vector<2x96xf32> to vector<2x64xf32>
    %770 = arith.addf %768, %769 : vector<2x64xf32>
    %771 = arith.negf %770 : vector<2x64xf32>
    %772 = math.exp %771 : vector<2x64xf32>
    %cst_164 = arith.constant 1.000000e+00 : f32
    %773 = vector.broadcast %cst_164 : f32 to vector<2x64xf32>
    %774 = arith.addf %773, %772 : vector<2x64xf32>
    %775 = arith.divf %773, %774 : vector<2x64xf32>
    %776 = vector.extract_strided_slice %775 {offsets = [0, 0], sizes = [2, 32], strides = [1, 1]} : vector<2x64xf32> to vector<2x32xf32>
    %777 = vector.extract_strided_slice %775 {offsets = [0, 32], sizes = [2, 32], strides = [1, 1]} : vector<2x64xf32> to vector<2x32xf32>
    %778 = vector.extract_strided_slice %766 {offsets = [0, 64], sizes = [2, 32], strides = [1, 1]} : vector<2x96xf32> to vector<2x32xf32>
    %779 = vector.extract_strided_slice %767 {offsets = [0, 64], sizes = [2, 32], strides = [1, 1]} : vector<2x96xf32> to vector<2x32xf32>
    %780 = arith.addf %779, %24 : vector<2x32xf32>
    %781 = arith.mulf %776, %780 : vector<2x32xf32>
    %782 = arith.addf %778, %781 : vector<2x32xf32>
    %783 = math.tanh %782 : vector<2x32xf32>
    %cst_165 = arith.constant 1.000000e+00 : f32
    %784 = vector.broadcast %cst_165 : f32 to vector<2x32xf32>
    %785 = arith.subf %784, %777 : vector<2x32xf32>
    %786 = arith.mulf %785, %783 : vector<2x32xf32>
    %787 = arith.mulf %777, %765 : vector<2x32xf32>
    %788 = arith.addf %786, %787 : vector<2x32xf32>
    %c60 = arith.constant 60 : index
    %c0_166 = arith.constant 0 : index
    %789 = vector.load %arg19[%c60, %c0_166] : memref<108x96xf32, #tpu.memory_space<vmem>>, vector<2x96xf32>
    %cst_167 = arith.constant dense<0.000000e+00> : vector<2x96xf32>
    %790 = tpu.matmul %788, %20, %cst_167 {dimension_numbers = #tpu.dot_dimension_numbers<[1], [0], [0], [1], [0, 0, 1, 1], [], []>} : vector<2x32xf32>, vector<32x96xf32>, vector<2x96xf32> -> vector<2x96xf32>
    %791 = vector.extract_strided_slice %789 {offsets = [0, 0], sizes = [2, 64], strides = [1, 1]} : vector<2x96xf32> to vector<2x64xf32>
    %792 = vector.extract_strided_slice %790 {offsets = [0, 0], sizes = [2, 64], strides = [1, 1]} : vector<2x96xf32> to vector<2x64xf32>
    %793 = arith.addf %791, %792 : vector<2x64xf32>
    %794 = arith.negf %793 : vector<2x64xf32>
    %795 = math.exp %794 : vector<2x64xf32>
    %cst_168 = arith.constant 1.000000e+00 : f32
    %796 = vector.broadcast %cst_168 : f32 to vector<2x64xf32>
    %797 = arith.addf %796, %795 : vector<2x64xf32>
    %798 = arith.divf %796, %797 : vector<2x64xf32>
    %799 = vector.extract_strided_slice %798 {offsets = [0, 0], sizes = [2, 32], strides = [1, 1]} : vector<2x64xf32> to vector<2x32xf32>
    %800 = vector.extract_strided_slice %798 {offsets = [0, 32], sizes = [2, 32], strides = [1, 1]} : vector<2x64xf32> to vector<2x32xf32>
    %801 = vector.extract_strided_slice %789 {offsets = [0, 64], sizes = [2, 32], strides = [1, 1]} : vector<2x96xf32> to vector<2x32xf32>
    %802 = vector.extract_strided_slice %790 {offsets = [0, 64], sizes = [2, 32], strides = [1, 1]} : vector<2x96xf32> to vector<2x32xf32>
    %803 = arith.addf %802, %24 : vector<2x32xf32>
    %804 = arith.mulf %799, %803 : vector<2x32xf32>
    %805 = arith.addf %801, %804 : vector<2x32xf32>
    %806 = math.tanh %805 : vector<2x32xf32>
    %cst_169 = arith.constant 1.000000e+00 : f32
    %807 = vector.broadcast %cst_169 : f32 to vector<2x32xf32>
    %808 = arith.subf %807, %800 : vector<2x32xf32>
    %809 = arith.mulf %808, %806 : vector<2x32xf32>
    %810 = arith.mulf %800, %788 : vector<2x32xf32>
    %811 = arith.addf %809, %810 : vector<2x32xf32>
    %c62 = arith.constant 62 : index
    %c0_170 = arith.constant 0 : index
    %812 = vector.load %arg19[%c62, %c0_170] : memref<108x96xf32, #tpu.memory_space<vmem>>, vector<2x96xf32>
    %cst_171 = arith.constant dense<0.000000e+00> : vector<2x96xf32>
    %813 = tpu.matmul %811, %20, %cst_171 {dimension_numbers = #tpu.dot_dimension_numbers<[1], [0], [0], [1], [0, 0, 1, 1], [], []>} : vector<2x32xf32>, vector<32x96xf32>, vector<2x96xf32> -> vector<2x96xf32>
    %814 = vector.extract_strided_slice %812 {offsets = [0, 0], sizes = [2, 64], strides = [1, 1]} : vector<2x96xf32> to vector<2x64xf32>
    %815 = vector.extract_strided_slice %813 {offsets = [0, 0], sizes = [2, 64], strides = [1, 1]} : vector<2x96xf32> to vector<2x64xf32>
    %816 = arith.addf %814, %815 : vector<2x64xf32>
    %817 = arith.negf %816 : vector<2x64xf32>
    %818 = math.exp %817 : vector<2x64xf32>
    %cst_172 = arith.constant 1.000000e+00 : f32
    %819 = vector.broadcast %cst_172 : f32 to vector<2x64xf32>
    %820 = arith.addf %819, %818 : vector<2x64xf32>
    %821 = arith.divf %819, %820 : vector<2x64xf32>
    %822 = vector.extract_strided_slice %821 {offsets = [0, 0], sizes = [2, 32], strides = [1, 1]} : vector<2x64xf32> to vector<2x32xf32>
    %823 = vector.extract_strided_slice %821 {offsets = [0, 32], sizes = [2, 32], strides = [1, 1]} : vector<2x64xf32> to vector<2x32xf32>
    %824 = vector.extract_strided_slice %812 {offsets = [0, 64], sizes = [2, 32], strides = [1, 1]} : vector<2x96xf32> to vector<2x32xf32>
    %825 = vector.extract_strided_slice %813 {offsets = [0, 64], sizes = [2, 32], strides = [1, 1]} : vector<2x96xf32> to vector<2x32xf32>
    %826 = arith.addf %825, %24 : vector<2x32xf32>
    %827 = arith.mulf %822, %826 : vector<2x32xf32>
    %828 = arith.addf %824, %827 : vector<2x32xf32>
    %829 = math.tanh %828 : vector<2x32xf32>
    %cst_173 = arith.constant 1.000000e+00 : f32
    %830 = vector.broadcast %cst_173 : f32 to vector<2x32xf32>
    %831 = arith.subf %830, %823 : vector<2x32xf32>
    %832 = arith.mulf %831, %829 : vector<2x32xf32>
    %833 = arith.mulf %823, %811 : vector<2x32xf32>
    %834 = arith.addf %832, %833 : vector<2x32xf32>
    %c64 = arith.constant 64 : index
    %c0_174 = arith.constant 0 : index
    %835 = vector.load %arg19[%c64, %c0_174] : memref<108x96xf32, #tpu.memory_space<vmem>>, vector<2x96xf32>
    %cst_175 = arith.constant dense<0.000000e+00> : vector<2x96xf32>
    %836 = tpu.matmul %834, %20, %cst_175 {dimension_numbers = #tpu.dot_dimension_numbers<[1], [0], [0], [1], [0, 0, 1, 1], [], []>} : vector<2x32xf32>, vector<32x96xf32>, vector<2x96xf32> -> vector<2x96xf32>
    %837 = vector.extract_strided_slice %835 {offsets = [0, 0], sizes = [2, 64], strides = [1, 1]} : vector<2x96xf32> to vector<2x64xf32>
    %838 = vector.extract_strided_slice %836 {offsets = [0, 0], sizes = [2, 64], strides = [1, 1]} : vector<2x96xf32> to vector<2x64xf32>
    %839 = arith.addf %837, %838 : vector<2x64xf32>
    %840 = arith.negf %839 : vector<2x64xf32>
    %841 = math.exp %840 : vector<2x64xf32>
    %cst_176 = arith.constant 1.000000e+00 : f32
    %842 = vector.broadcast %cst_176 : f32 to vector<2x64xf32>
    %843 = arith.addf %842, %841 : vector<2x64xf32>
    %844 = arith.divf %842, %843 : vector<2x64xf32>
    %845 = vector.extract_strided_slice %844 {offsets = [0, 0], sizes = [2, 32], strides = [1, 1]} : vector<2x64xf32> to vector<2x32xf32>
    %846 = vector.extract_strided_slice %844 {offsets = [0, 32], sizes = [2, 32], strides = [1, 1]} : vector<2x64xf32> to vector<2x32xf32>
    %847 = vector.extract_strided_slice %835 {offsets = [0, 64], sizes = [2, 32], strides = [1, 1]} : vector<2x96xf32> to vector<2x32xf32>
    %848 = vector.extract_strided_slice %836 {offsets = [0, 64], sizes = [2, 32], strides = [1, 1]} : vector<2x96xf32> to vector<2x32xf32>
    %849 = arith.addf %848, %24 : vector<2x32xf32>
    %850 = arith.mulf %845, %849 : vector<2x32xf32>
    %851 = arith.addf %847, %850 : vector<2x32xf32>
    %852 = math.tanh %851 : vector<2x32xf32>
    %cst_177 = arith.constant 1.000000e+00 : f32
    %853 = vector.broadcast %cst_177 : f32 to vector<2x32xf32>
    %854 = arith.subf %853, %846 : vector<2x32xf32>
    %855 = arith.mulf %854, %852 : vector<2x32xf32>
    %856 = arith.mulf %846, %834 : vector<2x32xf32>
    %857 = arith.addf %855, %856 : vector<2x32xf32>
    %c52_178 = arith.constant 52 : index
    %c0_179 = arith.constant 0 : index
    %858 = vector.load %arg20[%c52_178, %c0_179] : memref<108x48xf32, #tpu.memory_space<vmem>>, vector<14x48xf32>
    %cst_180 = arith.constant dense<0.000000e+00> : vector<14x48xf32>
    %859 = tpu.matmul %696, %21, %cst_180 {dimension_numbers = #tpu.dot_dimension_numbers<[1], [0], [0], [1], [0, 0, 1, 1], [], []>} : vector<14x16xf32>, vector<16x48xf32>, vector<14x48xf32> -> vector<14x48xf32>
    %860 = vector.extract_strided_slice %858 {offsets = [0, 0], sizes = [14, 32], strides = [1, 1]} : vector<14x48xf32> to vector<14x32xf32>
    %861 = vector.extract_strided_slice %859 {offsets = [0, 0], sizes = [14, 32], strides = [1, 1]} : vector<14x48xf32> to vector<14x32xf32>
    %862 = arith.addf %860, %861 : vector<14x32xf32>
    %863 = arith.negf %862 : vector<14x32xf32>
    %864 = math.exp %863 : vector<14x32xf32>
    %cst_181 = arith.constant 1.000000e+00 : f32
    %865 = vector.broadcast %cst_181 : f32 to vector<14x32xf32>
    %866 = arith.addf %865, %864 : vector<14x32xf32>
    %867 = arith.divf %865, %866 : vector<14x32xf32>
    %868 = vector.extract_strided_slice %867 {offsets = [0, 0], sizes = [14, 16], strides = [1, 1]} : vector<14x32xf32> to vector<14x16xf32>
    %869 = vector.extract_strided_slice %867 {offsets = [0, 16], sizes = [14, 16], strides = [1, 1]} : vector<14x32xf32> to vector<14x16xf32>
    %870 = vector.extract_strided_slice %858 {offsets = [0, 32], sizes = [14, 16], strides = [1, 1]} : vector<14x48xf32> to vector<14x16xf32>
    %871 = vector.extract_strided_slice %859 {offsets = [0, 32], sizes = [14, 16], strides = [1, 1]} : vector<14x48xf32> to vector<14x16xf32>
    %872 = arith.addf %871, %27 : vector<14x16xf32>
    %873 = arith.mulf %868, %872 : vector<14x16xf32>
    %874 = arith.addf %870, %873 : vector<14x16xf32>
    %875 = math.tanh %874 : vector<14x16xf32>
    %cst_182 = arith.constant 1.000000e+00 : f32
    %876 = vector.broadcast %cst_182 : f32 to vector<14x16xf32>
    %877 = arith.subf %876, %869 : vector<14x16xf32>
    %878 = arith.mulf %877, %875 : vector<14x16xf32>
    %879 = arith.mulf %869, %696 : vector<14x16xf32>
    %880 = arith.addf %878, %879 : vector<14x16xf32>
    %c66 = arith.constant 66 : index
    %c0_183 = arith.constant 0 : index
    %881 = vector.load %arg19[%c66, %c0_183] : memref<108x96xf32, #tpu.memory_space<vmem>>, vector<2x96xf32>
    %cst_184 = arith.constant dense<0.000000e+00> : vector<2x96xf32>
    %882 = tpu.matmul %857, %20, %cst_184 {dimension_numbers = #tpu.dot_dimension_numbers<[1], [0], [0], [1], [0, 0, 1, 1], [], []>} : vector<2x32xf32>, vector<32x96xf32>, vector<2x96xf32> -> vector<2x96xf32>
    %883 = vector.extract_strided_slice %881 {offsets = [0, 0], sizes = [2, 64], strides = [1, 1]} : vector<2x96xf32> to vector<2x64xf32>
    %884 = vector.extract_strided_slice %882 {offsets = [0, 0], sizes = [2, 64], strides = [1, 1]} : vector<2x96xf32> to vector<2x64xf32>
    %885 = arith.addf %883, %884 : vector<2x64xf32>
    %886 = arith.negf %885 : vector<2x64xf32>
    %887 = math.exp %886 : vector<2x64xf32>
    %cst_185 = arith.constant 1.000000e+00 : f32
    %888 = vector.broadcast %cst_185 : f32 to vector<2x64xf32>
    %889 = arith.addf %888, %887 : vector<2x64xf32>
    %890 = arith.divf %888, %889 : vector<2x64xf32>
    %891 = vector.extract_strided_slice %890 {offsets = [0, 0], sizes = [2, 32], strides = [1, 1]} : vector<2x64xf32> to vector<2x32xf32>
    %892 = vector.extract_strided_slice %890 {offsets = [0, 32], sizes = [2, 32], strides = [1, 1]} : vector<2x64xf32> to vector<2x32xf32>
    %893 = vector.extract_strided_slice %881 {offsets = [0, 64], sizes = [2, 32], strides = [1, 1]} : vector<2x96xf32> to vector<2x32xf32>
    %894 = vector.extract_strided_slice %882 {offsets = [0, 64], sizes = [2, 32], strides = [1, 1]} : vector<2x96xf32> to vector<2x32xf32>
    %895 = arith.addf %894, %24 : vector<2x32xf32>
    %896 = arith.mulf %891, %895 : vector<2x32xf32>
    %897 = arith.addf %893, %896 : vector<2x32xf32>
    %898 = math.tanh %897 : vector<2x32xf32>
    %cst_186 = arith.constant 1.000000e+00 : f32
    %899 = vector.broadcast %cst_186 : f32 to vector<2x32xf32>
    %900 = arith.subf %899, %892 : vector<2x32xf32>
    %901 = arith.mulf %900, %898 : vector<2x32xf32>
    %902 = arith.mulf %892, %857 : vector<2x32xf32>
    %903 = arith.addf %901, %902 : vector<2x32xf32>
    %c68 = arith.constant 68 : index
    %c0_187 = arith.constant 0 : index
    %904 = vector.load %arg19[%c68, %c0_187] : memref<108x96xf32, #tpu.memory_space<vmem>>, vector<2x96xf32>
    %cst_188 = arith.constant dense<0.000000e+00> : vector<2x96xf32>
    %905 = tpu.matmul %903, %20, %cst_188 {dimension_numbers = #tpu.dot_dimension_numbers<[1], [0], [0], [1], [0, 0, 1, 1], [], []>} : vector<2x32xf32>, vector<32x96xf32>, vector<2x96xf32> -> vector<2x96xf32>
    %906 = vector.extract_strided_slice %904 {offsets = [0, 0], sizes = [2, 64], strides = [1, 1]} : vector<2x96xf32> to vector<2x64xf32>
    %907 = vector.extract_strided_slice %905 {offsets = [0, 0], sizes = [2, 64], strides = [1, 1]} : vector<2x96xf32> to vector<2x64xf32>
    %908 = arith.addf %906, %907 : vector<2x64xf32>
    %909 = arith.negf %908 : vector<2x64xf32>
    %910 = math.exp %909 : vector<2x64xf32>
    %cst_189 = arith.constant 1.000000e+00 : f32
    %911 = vector.broadcast %cst_189 : f32 to vector<2x64xf32>
    %912 = arith.addf %911, %910 : vector<2x64xf32>
    %913 = arith.divf %911, %912 : vector<2x64xf32>
    %914 = vector.extract_strided_slice %913 {offsets = [0, 0], sizes = [2, 32], strides = [1, 1]} : vector<2x64xf32> to vector<2x32xf32>
    %915 = vector.extract_strided_slice %913 {offsets = [0, 32], sizes = [2, 32], strides = [1, 1]} : vector<2x64xf32> to vector<2x32xf32>
    %916 = vector.extract_strided_slice %904 {offsets = [0, 64], sizes = [2, 32], strides = [1, 1]} : vector<2x96xf32> to vector<2x32xf32>
    %917 = vector.extract_strided_slice %905 {offsets = [0, 64], sizes = [2, 32], strides = [1, 1]} : vector<2x96xf32> to vector<2x32xf32>
    %918 = arith.addf %917, %24 : vector<2x32xf32>
    %919 = arith.mulf %914, %918 : vector<2x32xf32>
    %920 = arith.addf %916, %919 : vector<2x32xf32>
    %921 = math.tanh %920 : vector<2x32xf32>
    %cst_190 = arith.constant 1.000000e+00 : f32
    %922 = vector.broadcast %cst_190 : f32 to vector<2x32xf32>
    %923 = arith.subf %922, %915 : vector<2x32xf32>
    %924 = arith.mulf %923, %921 : vector<2x32xf32>
    %925 = arith.mulf %915, %903 : vector<2x32xf32>
    %926 = arith.addf %924, %925 : vector<2x32xf32>
    %c70 = arith.constant 70 : index
    %c0_191 = arith.constant 0 : index
    %927 = vector.load %arg19[%c70, %c0_191] : memref<108x96xf32, #tpu.memory_space<vmem>>, vector<2x96xf32>
    %cst_192 = arith.constant dense<0.000000e+00> : vector<2x96xf32>
    %928 = tpu.matmul %926, %20, %cst_192 {dimension_numbers = #tpu.dot_dimension_numbers<[1], [0], [0], [1], [0, 0, 1, 1], [], []>} : vector<2x32xf32>, vector<32x96xf32>, vector<2x96xf32> -> vector<2x96xf32>
    %929 = vector.extract_strided_slice %927 {offsets = [0, 0], sizes = [2, 64], strides = [1, 1]} : vector<2x96xf32> to vector<2x64xf32>
    %930 = vector.extract_strided_slice %928 {offsets = [0, 0], sizes = [2, 64], strides = [1, 1]} : vector<2x96xf32> to vector<2x64xf32>
    %931 = arith.addf %929, %930 : vector<2x64xf32>
    %932 = arith.negf %931 : vector<2x64xf32>
    %933 = math.exp %932 : vector<2x64xf32>
    %cst_193 = arith.constant 1.000000e+00 : f32
    %934 = vector.broadcast %cst_193 : f32 to vector<2x64xf32>
    %935 = arith.addf %934, %933 : vector<2x64xf32>
    %936 = arith.divf %934, %935 : vector<2x64xf32>
    %937 = vector.extract_strided_slice %936 {offsets = [0, 0], sizes = [2, 32], strides = [1, 1]} : vector<2x64xf32> to vector<2x32xf32>
    %938 = vector.extract_strided_slice %936 {offsets = [0, 32], sizes = [2, 32], strides = [1, 1]} : vector<2x64xf32> to vector<2x32xf32>
    %939 = vector.extract_strided_slice %927 {offsets = [0, 64], sizes = [2, 32], strides = [1, 1]} : vector<2x96xf32> to vector<2x32xf32>
    %940 = vector.extract_strided_slice %928 {offsets = [0, 64], sizes = [2, 32], strides = [1, 1]} : vector<2x96xf32> to vector<2x32xf32>
    %941 = arith.addf %940, %24 : vector<2x32xf32>
    %942 = arith.mulf %937, %941 : vector<2x32xf32>
    %943 = arith.addf %939, %942 : vector<2x32xf32>
    %944 = math.tanh %943 : vector<2x32xf32>
    %cst_194 = arith.constant 1.000000e+00 : f32
    %945 = vector.broadcast %cst_194 : f32 to vector<2x32xf32>
    %946 = arith.subf %945, %938 : vector<2x32xf32>
    %947 = arith.mulf %946, %944 : vector<2x32xf32>
    %948 = arith.mulf %938, %926 : vector<2x32xf32>
    %949 = arith.addf %947, %948 : vector<2x32xf32>
    %c72 = arith.constant 72 : index
    %c0_195 = arith.constant 0 : index
    %950 = vector.load %arg19[%c72, %c0_195] : memref<108x96xf32, #tpu.memory_space<vmem>>, vector<2x96xf32>
    %cst_196 = arith.constant dense<0.000000e+00> : vector<2x96xf32>
    %951 = tpu.matmul %949, %20, %cst_196 {dimension_numbers = #tpu.dot_dimension_numbers<[1], [0], [0], [1], [0, 0, 1, 1], [], []>} : vector<2x32xf32>, vector<32x96xf32>, vector<2x96xf32> -> vector<2x96xf32>
    %952 = vector.extract_strided_slice %950 {offsets = [0, 0], sizes = [2, 64], strides = [1, 1]} : vector<2x96xf32> to vector<2x64xf32>
    %953 = vector.extract_strided_slice %951 {offsets = [0, 0], sizes = [2, 64], strides = [1, 1]} : vector<2x96xf32> to vector<2x64xf32>
    %954 = arith.addf %952, %953 : vector<2x64xf32>
    %955 = arith.negf %954 : vector<2x64xf32>
    %956 = math.exp %955 : vector<2x64xf32>
    %cst_197 = arith.constant 1.000000e+00 : f32
    %957 = vector.broadcast %cst_197 : f32 to vector<2x64xf32>
    %958 = arith.addf %957, %956 : vector<2x64xf32>
    %959 = arith.divf %957, %958 : vector<2x64xf32>
    %960 = vector.extract_strided_slice %959 {offsets = [0, 0], sizes = [2, 32], strides = [1, 1]} : vector<2x64xf32> to vector<2x32xf32>
    %961 = vector.extract_strided_slice %959 {offsets = [0, 32], sizes = [2, 32], strides = [1, 1]} : vector<2x64xf32> to vector<2x32xf32>
    %962 = vector.extract_strided_slice %950 {offsets = [0, 64], sizes = [2, 32], strides = [1, 1]} : vector<2x96xf32> to vector<2x32xf32>
    %963 = vector.extract_strided_slice %951 {offsets = [0, 64], sizes = [2, 32], strides = [1, 1]} : vector<2x96xf32> to vector<2x32xf32>
    %964 = arith.addf %963, %24 : vector<2x32xf32>
    %965 = arith.mulf %960, %964 : vector<2x32xf32>
    %966 = arith.addf %962, %965 : vector<2x32xf32>
    %967 = math.tanh %966 : vector<2x32xf32>
    %cst_198 = arith.constant 1.000000e+00 : f32
    %968 = vector.broadcast %cst_198 : f32 to vector<2x32xf32>
    %969 = arith.subf %968, %961 : vector<2x32xf32>
    %970 = arith.mulf %969, %967 : vector<2x32xf32>
    %971 = arith.mulf %961, %949 : vector<2x32xf32>
    %972 = arith.addf %970, %971 : vector<2x32xf32>
    %c74 = arith.constant 74 : index
    %c0_199 = arith.constant 0 : index
    %973 = vector.load %arg19[%c74, %c0_199] : memref<108x96xf32, #tpu.memory_space<vmem>>, vector<2x96xf32>
    %cst_200 = arith.constant dense<0.000000e+00> : vector<2x96xf32>
    %974 = tpu.matmul %972, %20, %cst_200 {dimension_numbers = #tpu.dot_dimension_numbers<[1], [0], [0], [1], [0, 0, 1, 1], [], []>} : vector<2x32xf32>, vector<32x96xf32>, vector<2x96xf32> -> vector<2x96xf32>
    %975 = vector.extract_strided_slice %973 {offsets = [0, 0], sizes = [2, 64], strides = [1, 1]} : vector<2x96xf32> to vector<2x64xf32>
    %976 = vector.extract_strided_slice %974 {offsets = [0, 0], sizes = [2, 64], strides = [1, 1]} : vector<2x96xf32> to vector<2x64xf32>
    %977 = arith.addf %975, %976 : vector<2x64xf32>
    %978 = arith.negf %977 : vector<2x64xf32>
    %979 = math.exp %978 : vector<2x64xf32>
    %cst_201 = arith.constant 1.000000e+00 : f32
    %980 = vector.broadcast %cst_201 : f32 to vector<2x64xf32>
    %981 = arith.addf %980, %979 : vector<2x64xf32>
    %982 = arith.divf %980, %981 : vector<2x64xf32>
    %983 = vector.extract_strided_slice %982 {offsets = [0, 0], sizes = [2, 32], strides = [1, 1]} : vector<2x64xf32> to vector<2x32xf32>
    %984 = vector.extract_strided_slice %982 {offsets = [0, 32], sizes = [2, 32], strides = [1, 1]} : vector<2x64xf32> to vector<2x32xf32>
    %985 = vector.extract_strided_slice %973 {offsets = [0, 64], sizes = [2, 32], strides = [1, 1]} : vector<2x96xf32> to vector<2x32xf32>
    %986 = vector.extract_strided_slice %974 {offsets = [0, 64], sizes = [2, 32], strides = [1, 1]} : vector<2x96xf32> to vector<2x32xf32>
    %987 = arith.addf %986, %24 : vector<2x32xf32>
    %988 = arith.mulf %983, %987 : vector<2x32xf32>
    %989 = arith.addf %985, %988 : vector<2x32xf32>
    %990 = math.tanh %989 : vector<2x32xf32>
    %cst_202 = arith.constant 1.000000e+00 : f32
    %991 = vector.broadcast %cst_202 : f32 to vector<2x32xf32>
    %992 = arith.subf %991, %984 : vector<2x32xf32>
    %993 = arith.mulf %992, %990 : vector<2x32xf32>
    %994 = arith.mulf %984, %972 : vector<2x32xf32>
    %995 = arith.addf %993, %994 : vector<2x32xf32>
    %c76 = arith.constant 76 : index
    %c0_203 = arith.constant 0 : index
    %996 = vector.load %arg19[%c76, %c0_203] : memref<108x96xf32, #tpu.memory_space<vmem>>, vector<2x96xf32>
    %cst_204 = arith.constant dense<0.000000e+00> : vector<2x96xf32>
    %997 = tpu.matmul %995, %20, %cst_204 {dimension_numbers = #tpu.dot_dimension_numbers<[1], [0], [0], [1], [0, 0, 1, 1], [], []>} : vector<2x32xf32>, vector<32x96xf32>, vector<2x96xf32> -> vector<2x96xf32>
    %998 = vector.extract_strided_slice %996 {offsets = [0, 0], sizes = [2, 64], strides = [1, 1]} : vector<2x96xf32> to vector<2x64xf32>
    %999 = vector.extract_strided_slice %997 {offsets = [0, 0], sizes = [2, 64], strides = [1, 1]} : vector<2x96xf32> to vector<2x64xf32>
    %1000 = arith.addf %998, %999 : vector<2x64xf32>
    %1001 = arith.negf %1000 : vector<2x64xf32>
    %1002 = math.exp %1001 : vector<2x64xf32>
    %cst_205 = arith.constant 1.000000e+00 : f32
    %1003 = vector.broadcast %cst_205 : f32 to vector<2x64xf32>
    %1004 = arith.addf %1003, %1002 : vector<2x64xf32>
    %1005 = arith.divf %1003, %1004 : vector<2x64xf32>
    %1006 = vector.extract_strided_slice %1005 {offsets = [0, 0], sizes = [2, 32], strides = [1, 1]} : vector<2x64xf32> to vector<2x32xf32>
    %1007 = vector.extract_strided_slice %1005 {offsets = [0, 32], sizes = [2, 32], strides = [1, 1]} : vector<2x64xf32> to vector<2x32xf32>
    %1008 = vector.extract_strided_slice %996 {offsets = [0, 64], sizes = [2, 32], strides = [1, 1]} : vector<2x96xf32> to vector<2x32xf32>
    %1009 = vector.extract_strided_slice %997 {offsets = [0, 64], sizes = [2, 32], strides = [1, 1]} : vector<2x96xf32> to vector<2x32xf32>
    %1010 = arith.addf %1009, %24 : vector<2x32xf32>
    %1011 = arith.mulf %1006, %1010 : vector<2x32xf32>
    %1012 = arith.addf %1008, %1011 : vector<2x32xf32>
    %1013 = math.tanh %1012 : vector<2x32xf32>
    %cst_206 = arith.constant 1.000000e+00 : f32
    %1014 = vector.broadcast %cst_206 : f32 to vector<2x32xf32>
    %1015 = arith.subf %1014, %1007 : vector<2x32xf32>
    %1016 = arith.mulf %1015, %1013 : vector<2x32xf32>
    %1017 = arith.mulf %1007, %995 : vector<2x32xf32>
    %1018 = arith.addf %1016, %1017 : vector<2x32xf32>
    %c78 = arith.constant 78 : index
    %c0_207 = arith.constant 0 : index
    %1019 = vector.load %arg19[%c78, %c0_207] : memref<108x96xf32, #tpu.memory_space<vmem>>, vector<2x96xf32>
    %cst_208 = arith.constant dense<0.000000e+00> : vector<2x96xf32>
    %1020 = tpu.matmul %1018, %20, %cst_208 {dimension_numbers = #tpu.dot_dimension_numbers<[1], [0], [0], [1], [0, 0, 1, 1], [], []>} : vector<2x32xf32>, vector<32x96xf32>, vector<2x96xf32> -> vector<2x96xf32>
    %1021 = vector.extract_strided_slice %1019 {offsets = [0, 0], sizes = [2, 64], strides = [1, 1]} : vector<2x96xf32> to vector<2x64xf32>
    %1022 = vector.extract_strided_slice %1020 {offsets = [0, 0], sizes = [2, 64], strides = [1, 1]} : vector<2x96xf32> to vector<2x64xf32>
    %1023 = arith.addf %1021, %1022 : vector<2x64xf32>
    %1024 = arith.negf %1023 : vector<2x64xf32>
    %1025 = math.exp %1024 : vector<2x64xf32>
    %cst_209 = arith.constant 1.000000e+00 : f32
    %1026 = vector.broadcast %cst_209 : f32 to vector<2x64xf32>
    %1027 = arith.addf %1026, %1025 : vector<2x64xf32>
    %1028 = arith.divf %1026, %1027 : vector<2x64xf32>
    %1029 = vector.extract_strided_slice %1028 {offsets = [0, 0], sizes = [2, 32], strides = [1, 1]} : vector<2x64xf32> to vector<2x32xf32>
    %1030 = vector.extract_strided_slice %1028 {offsets = [0, 32], sizes = [2, 32], strides = [1, 1]} : vector<2x64xf32> to vector<2x32xf32>
    %1031 = vector.extract_strided_slice %1019 {offsets = [0, 64], sizes = [2, 32], strides = [1, 1]} : vector<2x96xf32> to vector<2x32xf32>
    %1032 = vector.extract_strided_slice %1020 {offsets = [0, 64], sizes = [2, 32], strides = [1, 1]} : vector<2x96xf32> to vector<2x32xf32>
    %1033 = arith.addf %1032, %24 : vector<2x32xf32>
    %1034 = arith.mulf %1029, %1033 : vector<2x32xf32>
    %1035 = arith.addf %1031, %1034 : vector<2x32xf32>
    %1036 = math.tanh %1035 : vector<2x32xf32>
    %cst_210 = arith.constant 1.000000e+00 : f32
    %1037 = vector.broadcast %cst_210 : f32 to vector<2x32xf32>
    %1038 = arith.subf %1037, %1030 : vector<2x32xf32>
    %1039 = arith.mulf %1038, %1036 : vector<2x32xf32>
    %1040 = arith.mulf %1030, %1018 : vector<2x32xf32>
    %1041 = arith.addf %1039, %1040 : vector<2x32xf32>
    %c66_211 = arith.constant 66 : index
    %c0_212 = arith.constant 0 : index
    %1042 = vector.load %arg20[%c66_211, %c0_212] : memref<108x48xf32, #tpu.memory_space<vmem>>, vector<14x48xf32>
    %cst_213 = arith.constant dense<0.000000e+00> : vector<14x48xf32>
    %1043 = tpu.matmul %880, %21, %cst_213 {dimension_numbers = #tpu.dot_dimension_numbers<[1], [0], [0], [1], [0, 0, 1, 1], [], []>} : vector<14x16xf32>, vector<16x48xf32>, vector<14x48xf32> -> vector<14x48xf32>
    %1044 = vector.extract_strided_slice %1042 {offsets = [0, 0], sizes = [14, 32], strides = [1, 1]} : vector<14x48xf32> to vector<14x32xf32>
    %1045 = vector.extract_strided_slice %1043 {offsets = [0, 0], sizes = [14, 32], strides = [1, 1]} : vector<14x48xf32> to vector<14x32xf32>
    %1046 = arith.addf %1044, %1045 : vector<14x32xf32>
    %1047 = arith.negf %1046 : vector<14x32xf32>
    %1048 = math.exp %1047 : vector<14x32xf32>
    %cst_214 = arith.constant 1.000000e+00 : f32
    %1049 = vector.broadcast %cst_214 : f32 to vector<14x32xf32>
    %1050 = arith.addf %1049, %1048 : vector<14x32xf32>
    %1051 = arith.divf %1049, %1050 : vector<14x32xf32>
    %1052 = vector.extract_strided_slice %1051 {offsets = [0, 0], sizes = [14, 16], strides = [1, 1]} : vector<14x32xf32> to vector<14x16xf32>
    %1053 = vector.extract_strided_slice %1051 {offsets = [0, 16], sizes = [14, 16], strides = [1, 1]} : vector<14x32xf32> to vector<14x16xf32>
    %1054 = vector.extract_strided_slice %1042 {offsets = [0, 32], sizes = [14, 16], strides = [1, 1]} : vector<14x48xf32> to vector<14x16xf32>
    %1055 = vector.extract_strided_slice %1043 {offsets = [0, 32], sizes = [14, 16], strides = [1, 1]} : vector<14x48xf32> to vector<14x16xf32>
    %1056 = arith.addf %1055, %27 : vector<14x16xf32>
    %1057 = arith.mulf %1052, %1056 : vector<14x16xf32>
    %1058 = arith.addf %1054, %1057 : vector<14x16xf32>
    %1059 = math.tanh %1058 : vector<14x16xf32>
    %cst_215 = arith.constant 1.000000e+00 : f32
    %1060 = vector.broadcast %cst_215 : f32 to vector<14x16xf32>
    %1061 = arith.subf %1060, %1053 : vector<14x16xf32>
    %1062 = arith.mulf %1061, %1059 : vector<14x16xf32>
    %1063 = arith.mulf %1053, %880 : vector<14x16xf32>
    %1064 = arith.addf %1062, %1063 : vector<14x16xf32>
    %c80 = arith.constant 80 : index
    %c0_216 = arith.constant 0 : index
    %1065 = vector.load %arg19[%c80, %c0_216] : memref<108x96xf32, #tpu.memory_space<vmem>>, vector<2x96xf32>
    %cst_217 = arith.constant dense<0.000000e+00> : vector<2x96xf32>
    %1066 = tpu.matmul %1041, %20, %cst_217 {dimension_numbers = #tpu.dot_dimension_numbers<[1], [0], [0], [1], [0, 0, 1, 1], [], []>} : vector<2x32xf32>, vector<32x96xf32>, vector<2x96xf32> -> vector<2x96xf32>
    %1067 = vector.extract_strided_slice %1065 {offsets = [0, 0], sizes = [2, 64], strides = [1, 1]} : vector<2x96xf32> to vector<2x64xf32>
    %1068 = vector.extract_strided_slice %1066 {offsets = [0, 0], sizes = [2, 64], strides = [1, 1]} : vector<2x96xf32> to vector<2x64xf32>
    %1069 = arith.addf %1067, %1068 : vector<2x64xf32>
    %1070 = arith.negf %1069 : vector<2x64xf32>
    %1071 = math.exp %1070 : vector<2x64xf32>
    %cst_218 = arith.constant 1.000000e+00 : f32
    %1072 = vector.broadcast %cst_218 : f32 to vector<2x64xf32>
    %1073 = arith.addf %1072, %1071 : vector<2x64xf32>
    %1074 = arith.divf %1072, %1073 : vector<2x64xf32>
    %1075 = vector.extract_strided_slice %1074 {offsets = [0, 0], sizes = [2, 32], strides = [1, 1]} : vector<2x64xf32> to vector<2x32xf32>
    %1076 = vector.extract_strided_slice %1074 {offsets = [0, 32], sizes = [2, 32], strides = [1, 1]} : vector<2x64xf32> to vector<2x32xf32>
    %1077 = vector.extract_strided_slice %1065 {offsets = [0, 64], sizes = [2, 32], strides = [1, 1]} : vector<2x96xf32> to vector<2x32xf32>
    %1078 = vector.extract_strided_slice %1066 {offsets = [0, 64], sizes = [2, 32], strides = [1, 1]} : vector<2x96xf32> to vector<2x32xf32>
    %1079 = arith.addf %1078, %24 : vector<2x32xf32>
    %1080 = arith.mulf %1075, %1079 : vector<2x32xf32>
    %1081 = arith.addf %1077, %1080 : vector<2x32xf32>
    %1082 = math.tanh %1081 : vector<2x32xf32>
    %cst_219 = arith.constant 1.000000e+00 : f32
    %1083 = vector.broadcast %cst_219 : f32 to vector<2x32xf32>
    %1084 = arith.subf %1083, %1076 : vector<2x32xf32>
    %1085 = arith.mulf %1084, %1082 : vector<2x32xf32>
    %1086 = arith.mulf %1076, %1041 : vector<2x32xf32>
    %1087 = arith.addf %1085, %1086 : vector<2x32xf32>
    %c82 = arith.constant 82 : index
    %c0_220 = arith.constant 0 : index
    %1088 = vector.load %arg19[%c82, %c0_220] : memref<108x96xf32, #tpu.memory_space<vmem>>, vector<2x96xf32>
    %cst_221 = arith.constant dense<0.000000e+00> : vector<2x96xf32>
    %1089 = tpu.matmul %1087, %20, %cst_221 {dimension_numbers = #tpu.dot_dimension_numbers<[1], [0], [0], [1], [0, 0, 1, 1], [], []>} : vector<2x32xf32>, vector<32x96xf32>, vector<2x96xf32> -> vector<2x96xf32>
    %1090 = vector.extract_strided_slice %1088 {offsets = [0, 0], sizes = [2, 64], strides = [1, 1]} : vector<2x96xf32> to vector<2x64xf32>
    %1091 = vector.extract_strided_slice %1089 {offsets = [0, 0], sizes = [2, 64], strides = [1, 1]} : vector<2x96xf32> to vector<2x64xf32>
    %1092 = arith.addf %1090, %1091 : vector<2x64xf32>
    %1093 = arith.negf %1092 : vector<2x64xf32>
    %1094 = math.exp %1093 : vector<2x64xf32>
    %cst_222 = arith.constant 1.000000e+00 : f32
    %1095 = vector.broadcast %cst_222 : f32 to vector<2x64xf32>
    %1096 = arith.addf %1095, %1094 : vector<2x64xf32>
    %1097 = arith.divf %1095, %1096 : vector<2x64xf32>
    %1098 = vector.extract_strided_slice %1097 {offsets = [0, 0], sizes = [2, 32], strides = [1, 1]} : vector<2x64xf32> to vector<2x32xf32>
    %1099 = vector.extract_strided_slice %1097 {offsets = [0, 32], sizes = [2, 32], strides = [1, 1]} : vector<2x64xf32> to vector<2x32xf32>
    %1100 = vector.extract_strided_slice %1088 {offsets = [0, 64], sizes = [2, 32], strides = [1, 1]} : vector<2x96xf32> to vector<2x32xf32>
    %1101 = vector.extract_strided_slice %1089 {offsets = [0, 64], sizes = [2, 32], strides = [1, 1]} : vector<2x96xf32> to vector<2x32xf32>
    %1102 = arith.addf %1101, %24 : vector<2x32xf32>
    %1103 = arith.mulf %1098, %1102 : vector<2x32xf32>
    %1104 = arith.addf %1100, %1103 : vector<2x32xf32>
    %1105 = math.tanh %1104 : vector<2x32xf32>
    %cst_223 = arith.constant 1.000000e+00 : f32
    %1106 = vector.broadcast %cst_223 : f32 to vector<2x32xf32>
    %1107 = arith.subf %1106, %1099 : vector<2x32xf32>
    %1108 = arith.mulf %1107, %1105 : vector<2x32xf32>
    %1109 = arith.mulf %1099, %1087 : vector<2x32xf32>
    %1110 = arith.addf %1108, %1109 : vector<2x32xf32>
    %c84 = arith.constant 84 : index
    %c0_224 = arith.constant 0 : index
    %1111 = vector.load %arg19[%c84, %c0_224] : memref<108x96xf32, #tpu.memory_space<vmem>>, vector<2x96xf32>
    %cst_225 = arith.constant dense<0.000000e+00> : vector<2x96xf32>
    %1112 = tpu.matmul %1110, %20, %cst_225 {dimension_numbers = #tpu.dot_dimension_numbers<[1], [0], [0], [1], [0, 0, 1, 1], [], []>} : vector<2x32xf32>, vector<32x96xf32>, vector<2x96xf32> -> vector<2x96xf32>
    %1113 = vector.extract_strided_slice %1111 {offsets = [0, 0], sizes = [2, 64], strides = [1, 1]} : vector<2x96xf32> to vector<2x64xf32>
    %1114 = vector.extract_strided_slice %1112 {offsets = [0, 0], sizes = [2, 64], strides = [1, 1]} : vector<2x96xf32> to vector<2x64xf32>
    %1115 = arith.addf %1113, %1114 : vector<2x64xf32>
    %1116 = arith.negf %1115 : vector<2x64xf32>
    %1117 = math.exp %1116 : vector<2x64xf32>
    %cst_226 = arith.constant 1.000000e+00 : f32
    %1118 = vector.broadcast %cst_226 : f32 to vector<2x64xf32>
    %1119 = arith.addf %1118, %1117 : vector<2x64xf32>
    %1120 = arith.divf %1118, %1119 : vector<2x64xf32>
    %1121 = vector.extract_strided_slice %1120 {offsets = [0, 0], sizes = [2, 32], strides = [1, 1]} : vector<2x64xf32> to vector<2x32xf32>
    %1122 = vector.extract_strided_slice %1120 {offsets = [0, 32], sizes = [2, 32], strides = [1, 1]} : vector<2x64xf32> to vector<2x32xf32>
    %1123 = vector.extract_strided_slice %1111 {offsets = [0, 64], sizes = [2, 32], strides = [1, 1]} : vector<2x96xf32> to vector<2x32xf32>
    %1124 = vector.extract_strided_slice %1112 {offsets = [0, 64], sizes = [2, 32], strides = [1, 1]} : vector<2x96xf32> to vector<2x32xf32>
    %1125 = arith.addf %1124, %24 : vector<2x32xf32>
    %1126 = arith.mulf %1121, %1125 : vector<2x32xf32>
    %1127 = arith.addf %1123, %1126 : vector<2x32xf32>
    %1128 = math.tanh %1127 : vector<2x32xf32>
    %cst_227 = arith.constant 1.000000e+00 : f32
    %1129 = vector.broadcast %cst_227 : f32 to vector<2x32xf32>
    %1130 = arith.subf %1129, %1122 : vector<2x32xf32>
    %1131 = arith.mulf %1130, %1128 : vector<2x32xf32>
    %1132 = arith.mulf %1122, %1110 : vector<2x32xf32>
    %1133 = arith.addf %1131, %1132 : vector<2x32xf32>
    %c86 = arith.constant 86 : index
    %c0_228 = arith.constant 0 : index
    %1134 = vector.load %arg19[%c86, %c0_228] : memref<108x96xf32, #tpu.memory_space<vmem>>, vector<2x96xf32>
    %cst_229 = arith.constant dense<0.000000e+00> : vector<2x96xf32>
    %1135 = tpu.matmul %1133, %20, %cst_229 {dimension_numbers = #tpu.dot_dimension_numbers<[1], [0], [0], [1], [0, 0, 1, 1], [], []>} : vector<2x32xf32>, vector<32x96xf32>, vector<2x96xf32> -> vector<2x96xf32>
    %1136 = vector.extract_strided_slice %1134 {offsets = [0, 0], sizes = [2, 64], strides = [1, 1]} : vector<2x96xf32> to vector<2x64xf32>
    %1137 = vector.extract_strided_slice %1135 {offsets = [0, 0], sizes = [2, 64], strides = [1, 1]} : vector<2x96xf32> to vector<2x64xf32>
    %1138 = arith.addf %1136, %1137 : vector<2x64xf32>
    %1139 = arith.negf %1138 : vector<2x64xf32>
    %1140 = math.exp %1139 : vector<2x64xf32>
    %cst_230 = arith.constant 1.000000e+00 : f32
    %1141 = vector.broadcast %cst_230 : f32 to vector<2x64xf32>
    %1142 = arith.addf %1141, %1140 : vector<2x64xf32>
    %1143 = arith.divf %1141, %1142 : vector<2x64xf32>
    %1144 = vector.extract_strided_slice %1143 {offsets = [0, 0], sizes = [2, 32], strides = [1, 1]} : vector<2x64xf32> to vector<2x32xf32>
    %1145 = vector.extract_strided_slice %1143 {offsets = [0, 32], sizes = [2, 32], strides = [1, 1]} : vector<2x64xf32> to vector<2x32xf32>
    %1146 = vector.extract_strided_slice %1134 {offsets = [0, 64], sizes = [2, 32], strides = [1, 1]} : vector<2x96xf32> to vector<2x32xf32>
    %1147 = vector.extract_strided_slice %1135 {offsets = [0, 64], sizes = [2, 32], strides = [1, 1]} : vector<2x96xf32> to vector<2x32xf32>
    %1148 = arith.addf %1147, %24 : vector<2x32xf32>
    %1149 = arith.mulf %1144, %1148 : vector<2x32xf32>
    %1150 = arith.addf %1146, %1149 : vector<2x32xf32>
    %1151 = math.tanh %1150 : vector<2x32xf32>
    %cst_231 = arith.constant 1.000000e+00 : f32
    %1152 = vector.broadcast %cst_231 : f32 to vector<2x32xf32>
    %1153 = arith.subf %1152, %1145 : vector<2x32xf32>
    %1154 = arith.mulf %1153, %1151 : vector<2x32xf32>
    %1155 = arith.mulf %1145, %1133 : vector<2x32xf32>
    %1156 = arith.addf %1154, %1155 : vector<2x32xf32>
    %c88 = arith.constant 88 : index
    %c0_232 = arith.constant 0 : index
    %1157 = vector.load %arg19[%c88, %c0_232] : memref<108x96xf32, #tpu.memory_space<vmem>>, vector<2x96xf32>
    %cst_233 = arith.constant dense<0.000000e+00> : vector<2x96xf32>
    %1158 = tpu.matmul %1156, %20, %cst_233 {dimension_numbers = #tpu.dot_dimension_numbers<[1], [0], [0], [1], [0, 0, 1, 1], [], []>} : vector<2x32xf32>, vector<32x96xf32>, vector<2x96xf32> -> vector<2x96xf32>
    %1159 = vector.extract_strided_slice %1157 {offsets = [0, 0], sizes = [2, 64], strides = [1, 1]} : vector<2x96xf32> to vector<2x64xf32>
    %1160 = vector.extract_strided_slice %1158 {offsets = [0, 0], sizes = [2, 64], strides = [1, 1]} : vector<2x96xf32> to vector<2x64xf32>
    %1161 = arith.addf %1159, %1160 : vector<2x64xf32>
    %1162 = arith.negf %1161 : vector<2x64xf32>
    %1163 = math.exp %1162 : vector<2x64xf32>
    %cst_234 = arith.constant 1.000000e+00 : f32
    %1164 = vector.broadcast %cst_234 : f32 to vector<2x64xf32>
    %1165 = arith.addf %1164, %1163 : vector<2x64xf32>
    %1166 = arith.divf %1164, %1165 : vector<2x64xf32>
    %1167 = vector.extract_strided_slice %1166 {offsets = [0, 0], sizes = [2, 32], strides = [1, 1]} : vector<2x64xf32> to vector<2x32xf32>
    %1168 = vector.extract_strided_slice %1166 {offsets = [0, 32], sizes = [2, 32], strides = [1, 1]} : vector<2x64xf32> to vector<2x32xf32>
    %1169 = vector.extract_strided_slice %1157 {offsets = [0, 64], sizes = [2, 32], strides = [1, 1]} : vector<2x96xf32> to vector<2x32xf32>
    %1170 = vector.extract_strided_slice %1158 {offsets = [0, 64], sizes = [2, 32], strides = [1, 1]} : vector<2x96xf32> to vector<2x32xf32>
    %1171 = arith.addf %1170, %24 : vector<2x32xf32>
    %1172 = arith.mulf %1167, %1171 : vector<2x32xf32>
    %1173 = arith.addf %1169, %1172 : vector<2x32xf32>
    %1174 = math.tanh %1173 : vector<2x32xf32>
    %cst_235 = arith.constant 1.000000e+00 : f32
    %1175 = vector.broadcast %cst_235 : f32 to vector<2x32xf32>
    %1176 = arith.subf %1175, %1168 : vector<2x32xf32>
    %1177 = arith.mulf %1176, %1174 : vector<2x32xf32>
    %1178 = arith.mulf %1168, %1156 : vector<2x32xf32>
    %1179 = arith.addf %1177, %1178 : vector<2x32xf32>
    %c90 = arith.constant 90 : index
    %c0_236 = arith.constant 0 : index
    %1180 = vector.load %arg19[%c90, %c0_236] : memref<108x96xf32, #tpu.memory_space<vmem>>, vector<2x96xf32>
    %cst_237 = arith.constant dense<0.000000e+00> : vector<2x96xf32>
    %1181 = tpu.matmul %1179, %20, %cst_237 {dimension_numbers = #tpu.dot_dimension_numbers<[1], [0], [0], [1], [0, 0, 1, 1], [], []>} : vector<2x32xf32>, vector<32x96xf32>, vector<2x96xf32> -> vector<2x96xf32>
    %1182 = vector.extract_strided_slice %1180 {offsets = [0, 0], sizes = [2, 64], strides = [1, 1]} : vector<2x96xf32> to vector<2x64xf32>
    %1183 = vector.extract_strided_slice %1181 {offsets = [0, 0], sizes = [2, 64], strides = [1, 1]} : vector<2x96xf32> to vector<2x64xf32>
    %1184 = arith.addf %1182, %1183 : vector<2x64xf32>
    %1185 = arith.negf %1184 : vector<2x64xf32>
    %1186 = math.exp %1185 : vector<2x64xf32>
    %cst_238 = arith.constant 1.000000e+00 : f32
    %1187 = vector.broadcast %cst_238 : f32 to vector<2x64xf32>
    %1188 = arith.addf %1187, %1186 : vector<2x64xf32>
    %1189 = arith.divf %1187, %1188 : vector<2x64xf32>
    %1190 = vector.extract_strided_slice %1189 {offsets = [0, 0], sizes = [2, 32], strides = [1, 1]} : vector<2x64xf32> to vector<2x32xf32>
    %1191 = vector.extract_strided_slice %1189 {offsets = [0, 32], sizes = [2, 32], strides = [1, 1]} : vector<2x64xf32> to vector<2x32xf32>
    %1192 = vector.extract_strided_slice %1180 {offsets = [0, 64], sizes = [2, 32], strides = [1, 1]} : vector<2x96xf32> to vector<2x32xf32>
    %1193 = vector.extract_strided_slice %1181 {offsets = [0, 64], sizes = [2, 32], strides = [1, 1]} : vector<2x96xf32> to vector<2x32xf32>
    %1194 = arith.addf %1193, %24 : vector<2x32xf32>
    %1195 = arith.mulf %1190, %1194 : vector<2x32xf32>
    %1196 = arith.addf %1192, %1195 : vector<2x32xf32>
    %1197 = math.tanh %1196 : vector<2x32xf32>
    %cst_239 = arith.constant 1.000000e+00 : f32
    %1198 = vector.broadcast %cst_239 : f32 to vector<2x32xf32>
    %1199 = arith.subf %1198, %1191 : vector<2x32xf32>
    %1200 = arith.mulf %1199, %1197 : vector<2x32xf32>
    %1201 = arith.mulf %1191, %1179 : vector<2x32xf32>
    %1202 = arith.addf %1200, %1201 : vector<2x32xf32>
    %c92 = arith.constant 92 : index
    %c0_240 = arith.constant 0 : index
    %1203 = vector.load %arg19[%c92, %c0_240] : memref<108x96xf32, #tpu.memory_space<vmem>>, vector<2x96xf32>
    %cst_241 = arith.constant dense<0.000000e+00> : vector<2x96xf32>
    %1204 = tpu.matmul %1202, %20, %cst_241 {dimension_numbers = #tpu.dot_dimension_numbers<[1], [0], [0], [1], [0, 0, 1, 1], [], []>} : vector<2x32xf32>, vector<32x96xf32>, vector<2x96xf32> -> vector<2x96xf32>
    %1205 = vector.extract_strided_slice %1203 {offsets = [0, 0], sizes = [2, 64], strides = [1, 1]} : vector<2x96xf32> to vector<2x64xf32>
    %1206 = vector.extract_strided_slice %1204 {offsets = [0, 0], sizes = [2, 64], strides = [1, 1]} : vector<2x96xf32> to vector<2x64xf32>
    %1207 = arith.addf %1205, %1206 : vector<2x64xf32>
    %1208 = arith.negf %1207 : vector<2x64xf32>
    %1209 = math.exp %1208 : vector<2x64xf32>
    %cst_242 = arith.constant 1.000000e+00 : f32
    %1210 = vector.broadcast %cst_242 : f32 to vector<2x64xf32>
    %1211 = arith.addf %1210, %1209 : vector<2x64xf32>
    %1212 = arith.divf %1210, %1211 : vector<2x64xf32>
    %1213 = vector.extract_strided_slice %1212 {offsets = [0, 0], sizes = [2, 32], strides = [1, 1]} : vector<2x64xf32> to vector<2x32xf32>
    %1214 = vector.extract_strided_slice %1212 {offsets = [0, 32], sizes = [2, 32], strides = [1, 1]} : vector<2x64xf32> to vector<2x32xf32>
    %1215 = vector.extract_strided_slice %1203 {offsets = [0, 64], sizes = [2, 32], strides = [1, 1]} : vector<2x96xf32> to vector<2x32xf32>
    %1216 = vector.extract_strided_slice %1204 {offsets = [0, 64], sizes = [2, 32], strides = [1, 1]} : vector<2x96xf32> to vector<2x32xf32>
    %1217 = arith.addf %1216, %24 : vector<2x32xf32>
    %1218 = arith.mulf %1213, %1217 : vector<2x32xf32>
    %1219 = arith.addf %1215, %1218 : vector<2x32xf32>
    %1220 = math.tanh %1219 : vector<2x32xf32>
    %cst_243 = arith.constant 1.000000e+00 : f32
    %1221 = vector.broadcast %cst_243 : f32 to vector<2x32xf32>
    %1222 = arith.subf %1221, %1214 : vector<2x32xf32>
    %1223 = arith.mulf %1222, %1220 : vector<2x32xf32>
    %1224 = arith.mulf %1214, %1202 : vector<2x32xf32>
    %1225 = arith.addf %1223, %1224 : vector<2x32xf32>
    %c80_244 = arith.constant 80 : index
    %c0_245 = arith.constant 0 : index
    %1226 = vector.load %arg20[%c80_244, %c0_245] : memref<108x48xf32, #tpu.memory_space<vmem>>, vector<14x48xf32>
    %cst_246 = arith.constant dense<0.000000e+00> : vector<14x48xf32>
    %1227 = tpu.matmul %1064, %21, %cst_246 {dimension_numbers = #tpu.dot_dimension_numbers<[1], [0], [0], [1], [0, 0, 1, 1], [], []>} : vector<14x16xf32>, vector<16x48xf32>, vector<14x48xf32> -> vector<14x48xf32>
    %1228 = vector.extract_strided_slice %1226 {offsets = [0, 0], sizes = [14, 32], strides = [1, 1]} : vector<14x48xf32> to vector<14x32xf32>
    %1229 = vector.extract_strided_slice %1227 {offsets = [0, 0], sizes = [14, 32], strides = [1, 1]} : vector<14x48xf32> to vector<14x32xf32>
    %1230 = arith.addf %1228, %1229 : vector<14x32xf32>
    %1231 = arith.negf %1230 : vector<14x32xf32>
    %1232 = math.exp %1231 : vector<14x32xf32>
    %cst_247 = arith.constant 1.000000e+00 : f32
    %1233 = vector.broadcast %cst_247 : f32 to vector<14x32xf32>
    %1234 = arith.addf %1233, %1232 : vector<14x32xf32>
    %1235 = arith.divf %1233, %1234 : vector<14x32xf32>
    %1236 = vector.extract_strided_slice %1235 {offsets = [0, 0], sizes = [14, 16], strides = [1, 1]} : vector<14x32xf32> to vector<14x16xf32>
    %1237 = vector.extract_strided_slice %1235 {offsets = [0, 16], sizes = [14, 16], strides = [1, 1]} : vector<14x32xf32> to vector<14x16xf32>
    %1238 = vector.extract_strided_slice %1226 {offsets = [0, 32], sizes = [14, 16], strides = [1, 1]} : vector<14x48xf32> to vector<14x16xf32>
    %1239 = vector.extract_strided_slice %1227 {offsets = [0, 32], sizes = [14, 16], strides = [1, 1]} : vector<14x48xf32> to vector<14x16xf32>
    %1240 = arith.addf %1239, %27 : vector<14x16xf32>
    %1241 = arith.mulf %1236, %1240 : vector<14x16xf32>
    %1242 = arith.addf %1238, %1241 : vector<14x16xf32>
    %1243 = math.tanh %1242 : vector<14x16xf32>
    %cst_248 = arith.constant 1.000000e+00 : f32
    %1244 = vector.broadcast %cst_248 : f32 to vector<14x16xf32>
    %1245 = arith.subf %1244, %1237 : vector<14x16xf32>
    %1246 = arith.mulf %1245, %1243 : vector<14x16xf32>
    %1247 = arith.mulf %1237, %1064 : vector<14x16xf32>
    %1248 = arith.addf %1246, %1247 : vector<14x16xf32>
    %c94 = arith.constant 94 : index
    %c0_249 = arith.constant 0 : index
    %1249 = vector.load %arg19[%c94, %c0_249] : memref<108x96xf32, #tpu.memory_space<vmem>>, vector<2x96xf32>
    %cst_250 = arith.constant dense<0.000000e+00> : vector<2x96xf32>
    %1250 = tpu.matmul %1225, %20, %cst_250 {dimension_numbers = #tpu.dot_dimension_numbers<[1], [0], [0], [1], [0, 0, 1, 1], [], []>} : vector<2x32xf32>, vector<32x96xf32>, vector<2x96xf32> -> vector<2x96xf32>
    %1251 = vector.extract_strided_slice %1249 {offsets = [0, 0], sizes = [2, 64], strides = [1, 1]} : vector<2x96xf32> to vector<2x64xf32>
    %1252 = vector.extract_strided_slice %1250 {offsets = [0, 0], sizes = [2, 64], strides = [1, 1]} : vector<2x96xf32> to vector<2x64xf32>
    %1253 = arith.addf %1251, %1252 : vector<2x64xf32>
    %1254 = arith.negf %1253 : vector<2x64xf32>
    %1255 = math.exp %1254 : vector<2x64xf32>
    %cst_251 = arith.constant 1.000000e+00 : f32
    %1256 = vector.broadcast %cst_251 : f32 to vector<2x64xf32>
    %1257 = arith.addf %1256, %1255 : vector<2x64xf32>
    %1258 = arith.divf %1256, %1257 : vector<2x64xf32>
    %1259 = vector.extract_strided_slice %1258 {offsets = [0, 0], sizes = [2, 32], strides = [1, 1]} : vector<2x64xf32> to vector<2x32xf32>
    %1260 = vector.extract_strided_slice %1258 {offsets = [0, 32], sizes = [2, 32], strides = [1, 1]} : vector<2x64xf32> to vector<2x32xf32>
    %1261 = vector.extract_strided_slice %1249 {offsets = [0, 64], sizes = [2, 32], strides = [1, 1]} : vector<2x96xf32> to vector<2x32xf32>
    %1262 = vector.extract_strided_slice %1250 {offsets = [0, 64], sizes = [2, 32], strides = [1, 1]} : vector<2x96xf32> to vector<2x32xf32>
    %1263 = arith.addf %1262, %24 : vector<2x32xf32>
    %1264 = arith.mulf %1259, %1263 : vector<2x32xf32>
    %1265 = arith.addf %1261, %1264 : vector<2x32xf32>
    %1266 = math.tanh %1265 : vector<2x32xf32>
    %cst_252 = arith.constant 1.000000e+00 : f32
    %1267 = vector.broadcast %cst_252 : f32 to vector<2x32xf32>
    %1268 = arith.subf %1267, %1260 : vector<2x32xf32>
    %1269 = arith.mulf %1268, %1266 : vector<2x32xf32>
    %1270 = arith.mulf %1260, %1225 : vector<2x32xf32>
    %1271 = arith.addf %1269, %1270 : vector<2x32xf32>
    %c96 = arith.constant 96 : index
    %c0_253 = arith.constant 0 : index
    %1272 = vector.load %arg19[%c96, %c0_253] : memref<108x96xf32, #tpu.memory_space<vmem>>, vector<2x96xf32>
    %cst_254 = arith.constant dense<0.000000e+00> : vector<2x96xf32>
    %1273 = tpu.matmul %1271, %20, %cst_254 {dimension_numbers = #tpu.dot_dimension_numbers<[1], [0], [0], [1], [0, 0, 1, 1], [], []>} : vector<2x32xf32>, vector<32x96xf32>, vector<2x96xf32> -> vector<2x96xf32>
    %1274 = vector.extract_strided_slice %1272 {offsets = [0, 0], sizes = [2, 64], strides = [1, 1]} : vector<2x96xf32> to vector<2x64xf32>
    %1275 = vector.extract_strided_slice %1273 {offsets = [0, 0], sizes = [2, 64], strides = [1, 1]} : vector<2x96xf32> to vector<2x64xf32>
    %1276 = arith.addf %1274, %1275 : vector<2x64xf32>
    %1277 = arith.negf %1276 : vector<2x64xf32>
    %1278 = math.exp %1277 : vector<2x64xf32>
    %cst_255 = arith.constant 1.000000e+00 : f32
    %1279 = vector.broadcast %cst_255 : f32 to vector<2x64xf32>
    %1280 = arith.addf %1279, %1278 : vector<2x64xf32>
    %1281 = arith.divf %1279, %1280 : vector<2x64xf32>
    %1282 = vector.extract_strided_slice %1281 {offsets = [0, 0], sizes = [2, 32], strides = [1, 1]} : vector<2x64xf32> to vector<2x32xf32>
    %1283 = vector.extract_strided_slice %1281 {offsets = [0, 32], sizes = [2, 32], strides = [1, 1]} : vector<2x64xf32> to vector<2x32xf32>
    %1284 = vector.extract_strided_slice %1272 {offsets = [0, 64], sizes = [2, 32], strides = [1, 1]} : vector<2x96xf32> to vector<2x32xf32>
    %1285 = vector.extract_strided_slice %1273 {offsets = [0, 64], sizes = [2, 32], strides = [1, 1]} : vector<2x96xf32> to vector<2x32xf32>
    %1286 = arith.addf %1285, %24 : vector<2x32xf32>
    %1287 = arith.mulf %1282, %1286 : vector<2x32xf32>
    %1288 = arith.addf %1284, %1287 : vector<2x32xf32>
    %1289 = math.tanh %1288 : vector<2x32xf32>
    %cst_256 = arith.constant 1.000000e+00 : f32
    %1290 = vector.broadcast %cst_256 : f32 to vector<2x32xf32>
    %1291 = arith.subf %1290, %1283 : vector<2x32xf32>
    %1292 = arith.mulf %1291, %1289 : vector<2x32xf32>
    %1293 = arith.mulf %1283, %1271 : vector<2x32xf32>
    %1294 = arith.addf %1292, %1293 : vector<2x32xf32>
    %c98 = arith.constant 98 : index
    %c0_257 = arith.constant 0 : index
    %1295 = vector.load %arg19[%c98, %c0_257] : memref<108x96xf32, #tpu.memory_space<vmem>>, vector<2x96xf32>
    %cst_258 = arith.constant dense<0.000000e+00> : vector<2x96xf32>
    %1296 = tpu.matmul %1294, %20, %cst_258 {dimension_numbers = #tpu.dot_dimension_numbers<[1], [0], [0], [1], [0, 0, 1, 1], [], []>} : vector<2x32xf32>, vector<32x96xf32>, vector<2x96xf32> -> vector<2x96xf32>
    %1297 = vector.extract_strided_slice %1295 {offsets = [0, 0], sizes = [2, 64], strides = [1, 1]} : vector<2x96xf32> to vector<2x64xf32>
    %1298 = vector.extract_strided_slice %1296 {offsets = [0, 0], sizes = [2, 64], strides = [1, 1]} : vector<2x96xf32> to vector<2x64xf32>
    %1299 = arith.addf %1297, %1298 : vector<2x64xf32>
    %1300 = arith.negf %1299 : vector<2x64xf32>
    %1301 = math.exp %1300 : vector<2x64xf32>
    %cst_259 = arith.constant 1.000000e+00 : f32
    %1302 = vector.broadcast %cst_259 : f32 to vector<2x64xf32>
    %1303 = arith.addf %1302, %1301 : vector<2x64xf32>
    %1304 = arith.divf %1302, %1303 : vector<2x64xf32>
    %1305 = vector.extract_strided_slice %1304 {offsets = [0, 0], sizes = [2, 32], strides = [1, 1]} : vector<2x64xf32> to vector<2x32xf32>
    %1306 = vector.extract_strided_slice %1304 {offsets = [0, 32], sizes = [2, 32], strides = [1, 1]} : vector<2x64xf32> to vector<2x32xf32>
    %1307 = vector.extract_strided_slice %1295 {offsets = [0, 64], sizes = [2, 32], strides = [1, 1]} : vector<2x96xf32> to vector<2x32xf32>
    %1308 = vector.extract_strided_slice %1296 {offsets = [0, 64], sizes = [2, 32], strides = [1, 1]} : vector<2x96xf32> to vector<2x32xf32>
    %1309 = arith.addf %1308, %24 : vector<2x32xf32>
    %1310 = arith.mulf %1305, %1309 : vector<2x32xf32>
    %1311 = arith.addf %1307, %1310 : vector<2x32xf32>
    %1312 = math.tanh %1311 : vector<2x32xf32>
    %cst_260 = arith.constant 1.000000e+00 : f32
    %1313 = vector.broadcast %cst_260 : f32 to vector<2x32xf32>
    %1314 = arith.subf %1313, %1306 : vector<2x32xf32>
    %1315 = arith.mulf %1314, %1312 : vector<2x32xf32>
    %1316 = arith.mulf %1306, %1294 : vector<2x32xf32>
    %1317 = arith.addf %1315, %1316 : vector<2x32xf32>
    %c100 = arith.constant 100 : index
    %c0_261 = arith.constant 0 : index
    %1318 = vector.load %arg19[%c100, %c0_261] : memref<108x96xf32, #tpu.memory_space<vmem>>, vector<2x96xf32>
    %cst_262 = arith.constant dense<0.000000e+00> : vector<2x96xf32>
    %1319 = tpu.matmul %1317, %20, %cst_262 {dimension_numbers = #tpu.dot_dimension_numbers<[1], [0], [0], [1], [0, 0, 1, 1], [], []>} : vector<2x32xf32>, vector<32x96xf32>, vector<2x96xf32> -> vector<2x96xf32>
    %1320 = vector.extract_strided_slice %1318 {offsets = [0, 0], sizes = [2, 64], strides = [1, 1]} : vector<2x96xf32> to vector<2x64xf32>
    %1321 = vector.extract_strided_slice %1319 {offsets = [0, 0], sizes = [2, 64], strides = [1, 1]} : vector<2x96xf32> to vector<2x64xf32>
    %1322 = arith.addf %1320, %1321 : vector<2x64xf32>
    %1323 = arith.negf %1322 : vector<2x64xf32>
    %1324 = math.exp %1323 : vector<2x64xf32>
    %cst_263 = arith.constant 1.000000e+00 : f32
    %1325 = vector.broadcast %cst_263 : f32 to vector<2x64xf32>
    %1326 = arith.addf %1325, %1324 : vector<2x64xf32>
    %1327 = arith.divf %1325, %1326 : vector<2x64xf32>
    %1328 = vector.extract_strided_slice %1327 {offsets = [0, 0], sizes = [2, 32], strides = [1, 1]} : vector<2x64xf32> to vector<2x32xf32>
    %1329 = vector.extract_strided_slice %1327 {offsets = [0, 32], sizes = [2, 32], strides = [1, 1]} : vector<2x64xf32> to vector<2x32xf32>
    %1330 = vector.extract_strided_slice %1318 {offsets = [0, 64], sizes = [2, 32], strides = [1, 1]} : vector<2x96xf32> to vector<2x32xf32>
    %1331 = vector.extract_strided_slice %1319 {offsets = [0, 64], sizes = [2, 32], strides = [1, 1]} : vector<2x96xf32> to vector<2x32xf32>
    %1332 = arith.addf %1331, %24 : vector<2x32xf32>
    %1333 = arith.mulf %1328, %1332 : vector<2x32xf32>
    %1334 = arith.addf %1330, %1333 : vector<2x32xf32>
    %1335 = math.tanh %1334 : vector<2x32xf32>
    %cst_264 = arith.constant 1.000000e+00 : f32
    %1336 = vector.broadcast %cst_264 : f32 to vector<2x32xf32>
    %1337 = arith.subf %1336, %1329 : vector<2x32xf32>
    %1338 = arith.mulf %1337, %1335 : vector<2x32xf32>
    %1339 = arith.mulf %1329, %1317 : vector<2x32xf32>
    %1340 = arith.addf %1338, %1339 : vector<2x32xf32>
    %c102 = arith.constant 102 : index
    %c0_265 = arith.constant 0 : index
    %1341 = vector.load %arg19[%c102, %c0_265] : memref<108x96xf32, #tpu.memory_space<vmem>>, vector<2x96xf32>
    %cst_266 = arith.constant dense<0.000000e+00> : vector<2x96xf32>
    %1342 = tpu.matmul %1340, %20, %cst_266 {dimension_numbers = #tpu.dot_dimension_numbers<[1], [0], [0], [1], [0, 0, 1, 1], [], []>} : vector<2x32xf32>, vector<32x96xf32>, vector<2x96xf32> -> vector<2x96xf32>
    %1343 = vector.extract_strided_slice %1341 {offsets = [0, 0], sizes = [2, 64], strides = [1, 1]} : vector<2x96xf32> to vector<2x64xf32>
    %1344 = vector.extract_strided_slice %1342 {offsets = [0, 0], sizes = [2, 64], strides = [1, 1]} : vector<2x96xf32> to vector<2x64xf32>
    %1345 = arith.addf %1343, %1344 : vector<2x64xf32>
    %1346 = arith.negf %1345 : vector<2x64xf32>
    %1347 = math.exp %1346 : vector<2x64xf32>
    %cst_267 = arith.constant 1.000000e+00 : f32
    %1348 = vector.broadcast %cst_267 : f32 to vector<2x64xf32>
    %1349 = arith.addf %1348, %1347 : vector<2x64xf32>
    %1350 = arith.divf %1348, %1349 : vector<2x64xf32>
    %1351 = vector.extract_strided_slice %1350 {offsets = [0, 0], sizes = [2, 32], strides = [1, 1]} : vector<2x64xf32> to vector<2x32xf32>
    %1352 = vector.extract_strided_slice %1350 {offsets = [0, 32], sizes = [2, 32], strides = [1, 1]} : vector<2x64xf32> to vector<2x32xf32>
    %1353 = vector.extract_strided_slice %1341 {offsets = [0, 64], sizes = [2, 32], strides = [1, 1]} : vector<2x96xf32> to vector<2x32xf32>
    %1354 = vector.extract_strided_slice %1342 {offsets = [0, 64], sizes = [2, 32], strides = [1, 1]} : vector<2x96xf32> to vector<2x32xf32>
    %1355 = arith.addf %1354, %24 : vector<2x32xf32>
    %1356 = arith.mulf %1351, %1355 : vector<2x32xf32>
    %1357 = arith.addf %1353, %1356 : vector<2x32xf32>
    %1358 = math.tanh %1357 : vector<2x32xf32>
    %cst_268 = arith.constant 1.000000e+00 : f32
    %1359 = vector.broadcast %cst_268 : f32 to vector<2x32xf32>
    %1360 = arith.subf %1359, %1352 : vector<2x32xf32>
    %1361 = arith.mulf %1360, %1358 : vector<2x32xf32>
    %1362 = arith.mulf %1352, %1340 : vector<2x32xf32>
    %1363 = arith.addf %1361, %1362 : vector<2x32xf32>
    %c104 = arith.constant 104 : index
    %c0_269 = arith.constant 0 : index
    %1364 = vector.load %arg19[%c104, %c0_269] : memref<108x96xf32, #tpu.memory_space<vmem>>, vector<2x96xf32>
    %cst_270 = arith.constant dense<0.000000e+00> : vector<2x96xf32>
    %1365 = tpu.matmul %1363, %20, %cst_270 {dimension_numbers = #tpu.dot_dimension_numbers<[1], [0], [0], [1], [0, 0, 1, 1], [], []>} : vector<2x32xf32>, vector<32x96xf32>, vector<2x96xf32> -> vector<2x96xf32>
    %1366 = vector.extract_strided_slice %1364 {offsets = [0, 0], sizes = [2, 64], strides = [1, 1]} : vector<2x96xf32> to vector<2x64xf32>
    %1367 = vector.extract_strided_slice %1365 {offsets = [0, 0], sizes = [2, 64], strides = [1, 1]} : vector<2x96xf32> to vector<2x64xf32>
    %1368 = arith.addf %1366, %1367 : vector<2x64xf32>
    %1369 = arith.negf %1368 : vector<2x64xf32>
    %1370 = math.exp %1369 : vector<2x64xf32>
    %cst_271 = arith.constant 1.000000e+00 : f32
    %1371 = vector.broadcast %cst_271 : f32 to vector<2x64xf32>
    %1372 = arith.addf %1371, %1370 : vector<2x64xf32>
    %1373 = arith.divf %1371, %1372 : vector<2x64xf32>
    %1374 = vector.extract_strided_slice %1373 {offsets = [0, 0], sizes = [2, 32], strides = [1, 1]} : vector<2x64xf32> to vector<2x32xf32>
    %1375 = vector.extract_strided_slice %1373 {offsets = [0, 32], sizes = [2, 32], strides = [1, 1]} : vector<2x64xf32> to vector<2x32xf32>
    %1376 = vector.extract_strided_slice %1364 {offsets = [0, 64], sizes = [2, 32], strides = [1, 1]} : vector<2x96xf32> to vector<2x32xf32>
    %1377 = vector.extract_strided_slice %1365 {offsets = [0, 64], sizes = [2, 32], strides = [1, 1]} : vector<2x96xf32> to vector<2x32xf32>
    %1378 = arith.addf %1377, %24 : vector<2x32xf32>
    %1379 = arith.mulf %1374, %1378 : vector<2x32xf32>
    %1380 = arith.addf %1376, %1379 : vector<2x32xf32>
    %1381 = math.tanh %1380 : vector<2x32xf32>
    %cst_272 = arith.constant 1.000000e+00 : f32
    %1382 = vector.broadcast %cst_272 : f32 to vector<2x32xf32>
    %1383 = arith.subf %1382, %1375 : vector<2x32xf32>
    %1384 = arith.mulf %1383, %1381 : vector<2x32xf32>
    %1385 = arith.mulf %1375, %1363 : vector<2x32xf32>
    %1386 = arith.addf %1384, %1385 : vector<2x32xf32>
    %c106 = arith.constant 106 : index
    %c0_273 = arith.constant 0 : index
    %1387 = vector.load %arg19[%c106, %c0_273] : memref<108x96xf32, #tpu.memory_space<vmem>>, vector<2x96xf32>
    %cst_274 = arith.constant dense<0.000000e+00> : vector<2x96xf32>
    %1388 = tpu.matmul %1386, %20, %cst_274 {dimension_numbers = #tpu.dot_dimension_numbers<[1], [0], [0], [1], [0, 0, 1, 1], [], []>} : vector<2x32xf32>, vector<32x96xf32>, vector<2x96xf32> -> vector<2x96xf32>
    %1389 = vector.extract_strided_slice %1387 {offsets = [0, 0], sizes = [2, 64], strides = [1, 1]} : vector<2x96xf32> to vector<2x64xf32>
    %1390 = vector.extract_strided_slice %1388 {offsets = [0, 0], sizes = [2, 64], strides = [1, 1]} : vector<2x96xf32> to vector<2x64xf32>
    %1391 = arith.addf %1389, %1390 : vector<2x64xf32>
    %1392 = arith.negf %1391 : vector<2x64xf32>
    %1393 = math.exp %1392 : vector<2x64xf32>
    %cst_275 = arith.constant 1.000000e+00 : f32
    %1394 = vector.broadcast %cst_275 : f32 to vector<2x64xf32>
    %1395 = arith.addf %1394, %1393 : vector<2x64xf32>
    %1396 = arith.divf %1394, %1395 : vector<2x64xf32>
    %1397 = vector.extract_strided_slice %1396 {offsets = [0, 0], sizes = [2, 32], strides = [1, 1]} : vector<2x64xf32> to vector<2x32xf32>
    %1398 = vector.extract_strided_slice %1396 {offsets = [0, 32], sizes = [2, 32], strides = [1, 1]} : vector<2x64xf32> to vector<2x32xf32>
    %1399 = vector.extract_strided_slice %1387 {offsets = [0, 64], sizes = [2, 32], strides = [1, 1]} : vector<2x96xf32> to vector<2x32xf32>
    %1400 = vector.extract_strided_slice %1388 {offsets = [0, 64], sizes = [2, 32], strides = [1, 1]} : vector<2x96xf32> to vector<2x32xf32>
    %1401 = arith.addf %1400, %24 : vector<2x32xf32>
    %1402 = arith.mulf %1397, %1401 : vector<2x32xf32>
    %1403 = arith.addf %1399, %1402 : vector<2x32xf32>
    %1404 = math.tanh %1403 : vector<2x32xf32>
    %cst_276 = arith.constant 1.000000e+00 : f32
    %1405 = vector.broadcast %cst_276 : f32 to vector<2x32xf32>
    %1406 = arith.subf %1405, %1398 : vector<2x32xf32>
    %1407 = arith.mulf %1406, %1404 : vector<2x32xf32>
    %1408 = arith.mulf %1398, %1386 : vector<2x32xf32>
    %1409 = arith.addf %1407, %1408 : vector<2x32xf32>
    %c94_277 = arith.constant 94 : index
    %c0_278 = arith.constant 0 : index
    %1410 = vector.load %arg20[%c94_277, %c0_278] : memref<108x48xf32, #tpu.memory_space<vmem>>, vector<14x48xf32>
    %cst_279 = arith.constant dense<0.000000e+00> : vector<14x48xf32>
    %1411 = tpu.matmul %1248, %21, %cst_279 {dimension_numbers = #tpu.dot_dimension_numbers<[1], [0], [0], [1], [0, 0, 1, 1], [], []>} : vector<14x16xf32>, vector<16x48xf32>, vector<14x48xf32> -> vector<14x48xf32>
    %1412 = vector.extract_strided_slice %1410 {offsets = [0, 0], sizes = [14, 32], strides = [1, 1]} : vector<14x48xf32> to vector<14x32xf32>
    %1413 = vector.extract_strided_slice %1411 {offsets = [0, 0], sizes = [14, 32], strides = [1, 1]} : vector<14x48xf32> to vector<14x32xf32>
    %1414 = arith.addf %1412, %1413 : vector<14x32xf32>
    %1415 = arith.negf %1414 : vector<14x32xf32>
    %1416 = math.exp %1415 : vector<14x32xf32>
    %cst_280 = arith.constant 1.000000e+00 : f32
    %1417 = vector.broadcast %cst_280 : f32 to vector<14x32xf32>
    %1418 = arith.addf %1417, %1416 : vector<14x32xf32>
    %1419 = arith.divf %1417, %1418 : vector<14x32xf32>
    %1420 = vector.extract_strided_slice %1419 {offsets = [0, 0], sizes = [14, 16], strides = [1, 1]} : vector<14x32xf32> to vector<14x16xf32>
    %1421 = vector.extract_strided_slice %1419 {offsets = [0, 16], sizes = [14, 16], strides = [1, 1]} : vector<14x32xf32> to vector<14x16xf32>
    %1422 = vector.extract_strided_slice %1410 {offsets = [0, 32], sizes = [14, 16], strides = [1, 1]} : vector<14x48xf32> to vector<14x16xf32>
    %1423 = vector.extract_strided_slice %1411 {offsets = [0, 32], sizes = [14, 16], strides = [1, 1]} : vector<14x48xf32> to vector<14x16xf32>
    %1424 = arith.addf %1423, %27 : vector<14x16xf32>
    %1425 = arith.mulf %1420, %1424 : vector<14x16xf32>
    %1426 = arith.addf %1422, %1425 : vector<14x16xf32>
    %1427 = math.tanh %1426 : vector<14x16xf32>
    %cst_281 = arith.constant 1.000000e+00 : f32
    %1428 = vector.broadcast %cst_281 : f32 to vector<14x16xf32>
    %1429 = arith.subf %1428, %1421 : vector<14x16xf32>
    %1430 = arith.mulf %1429, %1427 : vector<14x16xf32>
    %1431 = arith.mulf %1421, %1248 : vector<14x16xf32>
    %1432 = arith.addf %1430, %1431 : vector<14x16xf32>
    %1433 = vector.extract_strided_slice %1432 {offsets = [0, 0], sizes = [1, 16], strides = [1, 1]} : vector<14x16xf32> to vector<1x16xf32>
    %1434 = vector.extract_strided_slice %1432 {offsets = [1, 0], sizes = [1, 16], strides = [1, 1]} : vector<14x16xf32> to vector<1x16xf32>
    %1435 = vector.extract_strided_slice %1432 {offsets = [2, 0], sizes = [1, 16], strides = [1, 1]} : vector<14x16xf32> to vector<1x16xf32>
    %1436 = vector.extract_strided_slice %1432 {offsets = [3, 0], sizes = [1, 16], strides = [1, 1]} : vector<14x16xf32> to vector<1x16xf32>
    %1437 = vector.extract_strided_slice %1432 {offsets = [4, 0], sizes = [1, 16], strides = [1, 1]} : vector<14x16xf32> to vector<1x16xf32>
    %1438 = vector.extract_strided_slice %1432 {offsets = [5, 0], sizes = [1, 16], strides = [1, 1]} : vector<14x16xf32> to vector<1x16xf32>
    %1439 = vector.extract_strided_slice %1432 {offsets = [6, 0], sizes = [1, 16], strides = [1, 1]} : vector<14x16xf32> to vector<1x16xf32>
    %1440 = tpu.concatenate %1433, %1434, %1435, %1436, %1437, %1438, %1439 in 1 : vector<1x16xf32>, vector<1x16xf32>, vector<1x16xf32>, vector<1x16xf32>, vector<1x16xf32>, vector<1x16xf32>, vector<1x16xf32> -> vector<1x112xf32>
    %1441 = vector.extract_strided_slice %1432 {offsets = [7, 0], sizes = [1, 16], strides = [1, 1]} : vector<14x16xf32> to vector<1x16xf32>
    %1442 = vector.extract_strided_slice %1432 {offsets = [8, 0], sizes = [1, 16], strides = [1, 1]} : vector<14x16xf32> to vector<1x16xf32>
    %1443 = vector.extract_strided_slice %1432 {offsets = [9, 0], sizes = [1, 16], strides = [1, 1]} : vector<14x16xf32> to vector<1x16xf32>
    %1444 = vector.extract_strided_slice %1432 {offsets = [10, 0], sizes = [1, 16], strides = [1, 1]} : vector<14x16xf32> to vector<1x16xf32>
    %1445 = vector.extract_strided_slice %1432 {offsets = [11, 0], sizes = [1, 16], strides = [1, 1]} : vector<14x16xf32> to vector<1x16xf32>
    %1446 = vector.extract_strided_slice %1432 {offsets = [12, 0], sizes = [1, 16], strides = [1, 1]} : vector<14x16xf32> to vector<1x16xf32>
    %1447 = vector.extract_strided_slice %1432 {offsets = [13, 0], sizes = [1, 16], strides = [1, 1]} : vector<14x16xf32> to vector<1x16xf32>
    %1448 = tpu.concatenate %1441, %1442, %1443, %1444, %1445, %1446, %1447 in 1 : vector<1x16xf32>, vector<1x16xf32>, vector<1x16xf32>, vector<1x16xf32>, vector<1x16xf32>, vector<1x16xf32>, vector<1x16xf32> -> vector<1x112xf32>
    %1449 = tpu.concatenate %1440, %1448 in 0 : vector<1x112xf32>, vector<1x112xf32> -> vector<2x112xf32>
    %c0_282 = arith.constant 0 : index
    %c0_283 = arith.constant 0 : index
    %1450 = vector.load %arg12[%c0_282, %c0_283] : memref<32x32xf32, #tpu.memory_space<vmem>>, vector<32x32xf32>
    %cst_284 = arith.constant dense<0.000000e+00> : vector<2x32xf32>
    %1451 = tpu.matmul %1409, %1450, %cst_284 {dimension_numbers = #tpu.dot_dimension_numbers<[1], [0], [0], [1], [0, 0, 1, 1], [], []>} : vector<2x32xf32>, vector<32x32xf32>, vector<2x32xf32> -> vector<2x32xf32>
    %c0_285 = arith.constant 0 : index
    %c0_286 = arith.constant 0 : index
    %1452 = vector.load %arg13[%c0_285, %c0_286] : memref<112x32xf32, #tpu.memory_space<vmem>>, vector<112x32xf32>
    %cst_287 = arith.constant dense<0.000000e+00> : vector<2x32xf32>
    %1453 = tpu.matmul %1449, %1452, %cst_287 {dimension_numbers = #tpu.dot_dimension_numbers<[1], [0], [0], [1], [0, 0, 1, 1], [], []>} : vector<2x112xf32>, vector<112x32xf32>, vector<2x32xf32> -> vector<2x32xf32>
    %1454 = arith.addf %1451, %1453 : vector<2x32xf32>
    %c0_288 = arith.constant 0 : index
    %c0_289 = arith.constant 0 : index
    %1455 = vector.load %arg1[%c0_288, %c0_289] : memref<2x105xf32, #tpu.memory_space<vmem>>, vector<2x105xf32>
    %c0_290 = arith.constant 0 : index
    %c0_291 = arith.constant 0 : index
    %1456 = vector.load %arg14[%c0_290, %c0_291] : memref<105x32xf32, #tpu.memory_space<vmem>>, vector<105x32xf32>
    %cst_292 = arith.constant dense<0.000000e+00> : vector<2x32xf32>
    %1457 = tpu.matmul %1455, %1456, %cst_292 {dimension_numbers = #tpu.dot_dimension_numbers<[1], [0], [0], [1], [0, 0, 1, 1], [], []>} : vector<2x105xf32>, vector<105x32xf32>, vector<2x32xf32> -> vector<2x32xf32>
    %1458 = arith.addf %1454, %1457 : vector<2x32xf32>
    %c0_293 = arith.constant 0 : index
    %c0_294 = arith.constant 0 : index
    %1459 = vector.load %arg15[%c0_293, %c0_294] : memref<1x32xf32, #tpu.memory_space<vmem>>, vector<1x32xf32>
    %1460 = vector.broadcast %1459 : vector<1x32xf32> to vector<2x32xf32>
    %1461 = arith.addf %1458, %1460 : vector<2x32xf32>
    %cst_295 = arith.constant 0.000000e+00 : f32
    %1462 = vector.broadcast %cst_295 : f32 to vector<2x32xf32>
    %1463 = arith.maximumf %1461, %1462 : vector<2x32xf32>
    %c0_296 = arith.constant 0 : index
    %c0_297 = arith.constant 0 : index
    %1464 = vector.load %arg16[%c0_296, %c0_297] : memref<32x16xf32, #tpu.memory_space<vmem>>, vector<32x16xf32>
    %cst_298 = arith.constant dense<0.000000e+00> : vector<2x16xf32>
    %1465 = tpu.matmul %1463, %1464, %cst_298 {dimension_numbers = #tpu.dot_dimension_numbers<[1], [0], [0], [1], [0, 0, 1, 1], [], []>} : vector<2x32xf32>, vector<32x16xf32>, vector<2x16xf32> -> vector<2x16xf32>
    %c0_299 = arith.constant 0 : index
    %c0_300 = arith.constant 0 : index
    %1466 = vector.load %arg17[%c0_299, %c0_300] : memref<1x16xf32, #tpu.memory_space<vmem>>, vector<1x16xf32>
    %1467 = vector.broadcast %1466 : vector<1x16xf32> to vector<2x16xf32>
    %1468 = arith.addf %1465, %1467 : vector<2x16xf32>
    %c0_301 = arith.constant 0 : index
    %c0_302 = arith.constant 0 : index
    %1469 = vector.load %arg18[%c0_301, %c0_302] : memref<2x16xf32, #tpu.memory_space<vmem>>, vector<2x16xf32>
    tpu.vector_store %arg18[%c0_301, %c0_302], %1468 {strides = array<i32>} : memref<2x16xf32, #tpu.memory_space<vmem>>, vector<2x16xf32>,
    return
  }
}

</mosaic_0001>

<llo_original>
// kernel: lstnet_forward.1
$region0: #{lstnet_forward.1}
  #allocation0 [shape = 'u32[]', space=smem, size = 0x4, offset = 0x4, fixed_abs, tag = 'smem constant byte address 0x4 - core index']
  #allocation1 [shape = 'u32[144,128]{1,0:T(1,128)}', space=vmem, size = 0x12000, scoped, tag = 'internal scratch']
  #allocation2 [shape = 'f32[108,96]{1,0:T(8,128)}', space=vmem, size = 0xe000, scoped, tag = 'scratch operand']
  #allocation3 [shape = 'f32[108,48]{1,0:T(8,128)}', space=vmem, size = 0xe000, scoped, tag = 'scratch operand']
  %s0 = inlined_call_operand.vmem [shape: f32[108,192], index: 0, kind: input, shape index: {}]
  %s1 = inlined_call_operand.vmem [shape: f32[2,105], index: 1, kind: input, shape index: {}]
  %s2 = inlined_call_operand.vmem [shape: f32[192,32], index: 2, kind: input, shape index: {}]
  %s3 = inlined_call_operand.vmem [shape: f32[1,32], index: 3, kind: input, shape index: {}]
  %s4 = inlined_call_operand.vmem [shape: f32[32,96], index: 4, kind: input, shape index: {}]
  %s5 = inlined_call_operand.vmem [shape: f32[32,96], index: 5, kind: input, shape index: {}]
  %s6 = inlined_call_operand.vmem [shape: f32[1,96], index: 6, kind: input, shape index: {}]
  %s7 = inlined_call_operand.vmem [shape: f32[1,32], index: 7, kind: input, shape index: {}]
  %s8 = inlined_call_operand.vmem [shape: f32[32,48], index: 8, kind: input, shape index: {}]
  %s9 = inlined_call_operand.vmem [shape: f32[16,48], index: 9, kind: input, shape index: {}]
  %s10 = inlined_call_operand.vmem [shape: f32[1,48], index: 10, kind: input, shape index: {}]
  %s11 = inlined_call_operand.vmem [shape: f32[1,16], index: 11, kind: input, shape index: {}]
  %s12 = inlined_call_operand.vmem [shape: f32[32,32], index: 12, kind: input, shape index: {}]
  %s13 = inlined_call_operand.vmem [shape: f32[112,32], index: 13, kind: input, shape index: {}]
  %s14 = inlined_call_operand.vmem [shape: f32[105,32], index: 14, kind: input, shape index: {}]
  %s15 = inlined_call_operand.vmem [shape: f32[1,32], index: 15, kind: input, shape index: {}]
  %s16 = inlined_call_operand.vmem [shape: f32[32,16], index: 16, kind: input, shape index: {}]
  %s17 = inlined_call_operand.vmem [shape: f32[1,16], index: 17, kind: input, shape index: {}]
  %s18 = inlined_call_operand.hbm [shape: f32[2,16], index: 18, kind: output, shape index: {}]
  %s19 = sld [smem:[#allocation0]]
  $region82: #{lstnet_forward.1} parent=0
    _
  %s21 = ssub.s32 1, %s19
  %s22 = scalar_select 0, %s21, %s19
  $region1: #{lstnet_forward.1} parent=0
    #allocation4 [shape = 'u8[1024]{0}', space=vmem, size = 0x400, scoped, tag = 'output window, operand 0, single buffered']
    #allocation5 [shape = 's32[1]{0}', space=sflag, size = 0x4, scoped, tag = 'scoped memory for lstnet_forward.1']
    %23 = vsyncpa [#allocation5], 0
    // Predicated region
    $region2: #{lstnet_forward.1} parent=1 // pred_check
      _
    $region3: #{lstnet_forward.1} parent=1 // pred_check_branch
      %25 = sbr.rel (0) target = $region5
    $region4: #{lstnet_forward.1} parent=1 // pred_region
      _
    $region5: #{lstnet_forward.1} parent=1 // pred_fallthru
      _
    // Predicated region
    $region6: #{lstnet_forward.1} parent=1 // pred_check
      _
    $region7: #{lstnet_forward.1} parent=1 // pred_check_branch
      %27 = sbr.rel (0) target = $region9
    $region8: #{lstnet_forward.1} parent=1 // pred_region
      _
    $region9: #{lstnet_forward.1} parent=1 // pred_fallthru
      _
    // Predicated region
    $region10: #{lstnet_forward.1} parent=1 // pred_check
      _
    $region11: #{lstnet_forward.1} parent=1 // pred_check_branch
      %29 = sbr.rel (0) target = $region13
    $region12: #{lstnet_forward.1} parent=1 // pred_region
      _
    $region13: #{lstnet_forward.1} parent=1 // pred_fallthru
      _
    // Predicated region
    $region14: #{lstnet_forward.1} parent=1 // pred_check
      _
    $region15: #{lstnet_forward.1} parent=1 // pred_check_branch
      %31 = sbr.rel (0) target = $region17
    $region16: #{lstnet_forward.1} parent=1 // pred_region
      _
    $region17: #{lstnet_forward.1} parent=1 // pred_fallthru
      _
    // Predicated region
    $region18: #{lstnet_forward.1} parent=1 // pred_check
      _
    $region19: #{lstnet_forward.1} parent=1 // pred_check_branch
      %33 = sbr.rel (0) target = $region21
    $region20: #{lstnet_forward.1} parent=1 // pred_region
      _
    $region21: #{lstnet_forward.1} parent=1 // pred_fallthru
      _
    // Predicated region
    $region22: #{lstnet_forward.1} parent=1 // pred_check
      _
    $region23: #{lstnet_forward.1} parent=1 // pred_check_branch
      %35 = sbr.rel (0) target = $region25
    $region24: #{lstnet_forward.1} parent=1 // pred_region
      _
    $region25: #{lstnet_forward.1} parent=1 // pred_fallthru
      _
    // Predicated region
    $region26: #{lstnet_forward.1} parent=1 // pred_check
      _
    $region27: #{lstnet_forward.1} parent=1 // pred_check_branch
      %37 = sbr.rel (0) target = $region29
    $region28: #{lstnet_forward.1} parent=1 // pred_region
      _
    $region29: #{lstnet_forward.1} parent=1 // pred_fallthru
      _
    // Predicated region
    $region30: #{lstnet_forward.1} parent=1 // pred_check
      _
    $region31: #{lstnet_forward.1} parent=1 // pred_check_branch
      %39 = sbr.rel (0) target = $region33
    $region32: #{lstnet_forward.1} parent=1 // pred_region
      _
    $region33: #{lstnet_forward.1} parent=1 // pred_fallthru
      _
    // Predicated region
    $region34: #{lstnet_forward.1} parent=1 // pred_check
      _
    $region35: #{lstnet_forward.1} parent=1 // pred_check_branch
      %41 = sbr.rel (0) target = $region37
    $region36: #{lstnet_forward.1} parent=1 // pred_region
      _
    $region37: #{lstnet_forward.1} parent=1 // pred_fallthru
      _
    // Predicated region
    $region38: #{lstnet_forward.1} parent=1 // pred_check
      _
    $region39: #{lstnet_forward.1} parent=1 // pred_check_branch
      %43 = sbr.rel (0) target = $region41
    $region40: #{lstnet_forward.1} parent=1 // pred_region
      _
    $region41: #{lstnet_forward.1} parent=1 // pred_fallthru
      _
    // Predicated region
    $region42: #{lstnet_forward.1} parent=1 // pred_check
      _
    $region43: #{lstnet_forward.1} parent=1 // pred_check_branch
      %45 = sbr.rel (0) target = $region45
    $region44: #{lstnet_forward.1} parent=1 // pred_region
      _
    $region45: #{lstnet_forward.1} parent=1 // pred_fallthru
      _
    // Predicated region
    $region46: #{lstnet_forward.1} parent=1 // pred_check
      _
    $region47: #{lstnet_forward.1} parent=1 // pred_check_branch
      %47 = sbr.rel (0) target = $region49
    $region48: #{lstnet_forward.1} parent=1 // pred_region
      _
    $region49: #{lstnet_forward.1} parent=1 // pred_fallthru
      _
    // Predicated region
    $region50: #{lstnet_forward.1} parent=1 // pred_check
      _
    $region51: #{lstnet_forward.1} parent=1 // pred_check_branch
      %49 = sbr.rel (0) target = $region53
    $region52: #{lstnet_forward.1} parent=1 // pred_region
      _
    $region53: #{lstnet_forward.1} parent=1 // pred_fallthru
      _
    // Predicated region
    $region54: #{lstnet_forward.1} parent=1 // pred_check
      _
    $region55: #{lstnet_forward.1} parent=1 // pred_check_branch
      %51 = sbr.rel (0) target = $region57
    $region56: #{lstnet_forward.1} parent=1 // pred_region
      _
    $region57: #{lstnet_forward.1} parent=1 // pred_fallthru
      _
    // Predicated region
    $region58: #{lstnet_forward.1} parent=1 // pred_check
      _
    $region59: #{lstnet_forward.1} parent=1 // pred_check_branch
      %53 = sbr.rel (0) target = $region61
    $region60: #{lstnet_forward.1} parent=1 // pred_region
      _
    $region61: #{lstnet_forward.1} parent=1 // pred_fallthru
      _
    // Predicated region
    $region62: #{lstnet_forward.1} parent=1 // pred_check
      _
    $region63: #{lstnet_forward.1} parent=1 // pred_check_branch
      %55 = sbr.rel (0) target = $region65
    $region64: #{lstnet_forward.1} parent=1 // pred_region
      _
    $region65: #{lstnet_forward.1} parent=1 // pred_fallthru
      _
    // Predicated region
    $region66: #{lstnet_forward.1} parent=1 // pred_check
      _
    $region67: #{lstnet_forward.1} parent=1 // pred_check_branch
      %57 = sbr.rel (0) target = $region69
    $region68: #{lstnet_forward.1} parent=1 // pred_region
      _
    $region69: #{lstnet_forward.1} parent=1 // pred_fallthru
      _
    // Predicated region
    $region70: #{lstnet_forward.1} parent=1 // pred_check
      _
    $region71: #{lstnet_forward.1} parent=1 // pred_check_branch
      %59 = sbr.rel (0) target = $region73
    $region72: #{lstnet_forward.1} parent=1 // pred_region
      _
    $region73: #{lstnet_forward.1} parent=1 // pred_fallthru
      _
    %v60 = vld [vmem:[%s0] sm:$0xff]
    %v61 = vld [vmem:[%s0 + $0x8] sm:$0xff]
    %v62 = vld [vmem:[%s0 + $0x10] sm:$0xff]
    %v63 = vld [vmem:[%s0 + $0x18] sm:$0xff]
    %v64 = vld [vmem:[%s0 + $0x20] sm:$0xff]
    %v65 = vld [vmem:[%s0 + $0x28] sm:$0xff]
    %v66 = vld [vmem:[%s0 + $0x30] sm:$0xff]
    %v67 = vld [vmem:[%s0 + $0x38] sm:$0xff]
    %v68 = vld [vmem:[%s0 + $0x40] sm:$0xff]
    %v69 = vld [vmem:[%s0 + $0x48] sm:$0xff]
    %v70 = vld [vmem:[%s0 + $0x50] sm:$0xff]
    %v71 = vld [vmem:[%s0 + $0x58] sm:$0xff]
    %v72 = vld [vmem:[%s0 + $0x60] sm:$0xff]
    %v73 = vld [vmem:[%s0 + $0x68] sm:$0xff]
    %v74 = vld [vmem:[%s0 + $0x70] sm:$0xff]
    %v75 = vld [vmem:[%s0 + $0x78] sm:$0xff]
    %v76 = vld [vmem:[%s0 + $0x80] sm:$0xff]
    %v77 = vld [vmem:[%s0 + $0x88] sm:$0xff]
    %v78 = vld [vmem:[%s0 + $0x90] sm:$0xff]
    %v79 = vld [vmem:[%s0 + $0x98] sm:$0xff]
    %v80 = vld [vmem:[%s0 + $0xa0] sm:$0xff]
    %v81 = vld [vmem:[%s0 + $0xa8] sm:$0xff]
    %v82 = vld [vmem:[%s0 + $0xb0] sm:$0xff]
    %v83 = vld [vmem:[%s0 + $0xb8] sm:$0xff]
    %v84 = vld [vmem:[%s0 + $0xc0] sm:$0xff]
    %v85 = vld [vmem:[%s0 + $0xc8] sm:$0xff]
    %v86 = vld [vmem:[%s0 + $0xd0] sm:$0xf]
    %v87 = vld [vmem:[%s0 + $0xd8] sm:$0xf]
    %v88 = vld [vmem:[%s2] sm:$0xff]
    %v89 = vld [vmem:[%s2 + $0x8] sm:$0xff]
    %v90 = vld [vmem:[%s2 + $0x10] sm:$0xff]
    %v91 = vld [vmem:[%s2 + $0x18] sm:$0xff]
    %v92 = vld [vmem:[%s2 + $0x20] sm:$0xff]
    %v93 = vld [vmem:[%s2 + $0x28] sm:$0xff]
    %v94 = vld [vmem:[%s2 + $0x30] sm:$0xff]
    %v95 = vld [vmem:[%s2 + $0x38] sm:$0xff]
    %v96 = vld [vmem:[%s2 + $0x40] sm:$0xff]
    %v97 = vld [vmem:[%s2 + $0x48] sm:$0xff]
    %v98 = vld [vmem:[%s2 + $0x50] sm:$0xff]
    %v99 = vld [vmem:[%s2 + $0x58] sm:$0xff]
    %v100 = vld [vmem:[%s2 + $0x60] sm:$0xff]
    %v101 = vld [vmem:[%s2 + $0x68] sm:$0xff]
    %v102 = vld [vmem:[%s2 + $0x70] sm:$0xff]
    %v103 = vld [vmem:[%s2 + $0x78] sm:$0xff]
    %v104 = vld [vmem:[%s2 + $0x80] sm:$0xff]
    %v105 = vld [vmem:[%s2 + $0x88] sm:$0xff]
    %v106 = vld [vmem:[%s2 + $0x90] sm:$0xff]
    %v107 = vld [vmem:[%s2 + $0x98] sm:$0xff]
    %v108 = vld [vmem:[%s2 + $0xa0] sm:$0xff]
    %v109 = vld [vmem:[%s2 + $0xa8] sm:$0xff]
    %v110 = vld [vmem:[%s2 + $0xb0] sm:$0xff]
    %v111 = vld [vmem:[%s2 + $0xb8] sm:$0xff]
    %v112 = vld [vmem:[%s3] sm:$0x1]
    %v114 = vlaneseq
    %v115 = vshrl.u32 %v114, 7
    %v116 = vsub.s32 0, %v115
    %v117 = vrot.slane %v112, %v116
    %vm119 = vcmask 523264
    %v121 = vsel %vm119, %v61, 0
    %v124 = vsel %vm119, %v63, 0
    %v127 = vsel %vm119, %v65, 0
    %v130 = vsel %vm119, %v67, 0
    %v133 = vsel %vm119, %v69, 0
    %v136 = vsel %vm119, %v71, 0
    %v139 = vsel %vm119, %v73, 0
    %v142 = vsel %vm119, %v75, 0
    %v145 = vsel %vm119, %v77, 0
    %v148 = vsel %vm119, %v79, 0
    %v151 = vsel %vm119, %v81, 0
    %v154 = vsel %vm119, %v83, 0
    %v157 = vsel %vm119, %v85, 0
    %v160 = vsel %vm119, %v87, 0
    %162 = vmatprep.subr.mxu0 0.0
    %163 = vmatpush1.msra.mxu0 %v88
    %164 = vmatprep.subr.mxu0 0.0
    %165 = vmatpush1.msra.mxu0 %v89
    %166 = vmatprep.subr.mxu0 0.0
    %167 = vmatpush1.msra.mxu0 %v90
    %168 = vmatprep.subr.mxu0 0.0
    %169 = vmatpush1.msra.mxu0 %v91
    %170 = vmatprep.subr.mxu0 0.0
    %171 = vmatpush1.msra.mxu0 %v92
    %172 = vmatprep.subr.mxu0 0.0
    %173 = vmatpush1.msra.mxu0 %v93
    %174 = vmatprep.subr.mxu0 0.0
    %175 = vmatpush1.msra.mxu0 %v94
    %176 = vmatprep.subr.mxu0 0.0
    %177 = vmatpush1.msra.mxu0 %v95
    %178 = vmatprep.subr.mxu0 0.0
    %179 = vmatpush1.msra.mxu0 %v96
    %180 = vmatprep.subr.mxu0 0.0
    %181 = vmatpush1.msra.mxu0 %v97
    %182 = vmatprep.subr.mxu0 0.0
    %183 = vmatpush1.msra.mxu0 %v98
    %184 = vmatprep.subr.mxu0 0.0
    %185 = vmatpush1.msra.mxu0 %v99
    %186 = vmatprep.subr.mxu0 0.0
    %187 = vmatpush1.msra.mxu0 %v100
    %188 = vmatprep.subr.mxu0 0.0
    %189 = vmatpush1.msra.mxu0 %v101
    %190 = vmatprep.subr.mxu0 0.0
    %191 = vmatpush1.msra.mxu0 %v102
    %192 = vmatprep.subr.mxu0 0.0
    %193 = vmatpush1.msra.mxu0 %v103
    %194 = vmatprep.subr.mxu0 0.0
    %195 = vmatpush1.msra.mxu0 %v104
    %196 = vmatprep.subr.mxu0 0.0
    %197 = vmatpush1.msra.mxu0 %v105
    %198 = vmatprep.subr.mxu0 0.0
    %199 = vmatpush1.msra.mxu0 %v106
    %200 = vmatprep.subr.mxu0 0.0
    %201 = vmatpush1.msra.mxu0 %v107
    %202 = vmatprep.subr.mxu0 0.0
    %203 = vmatpush1.msra.mxu0 %v108
    %204 = vmatprep.subr.mxu0 0.0
    %205 = vmatpush1.msra.mxu0 %v109
    %206 = vmatprep.subr.mxu0 0.0
    %207 = vmatpush1.msra.mxu0 %v110
    %208 = vmatprep.subr.mxu0 0.0
    %209 = vmatpush1.msra.mxu0 %v111
    %210 = vmatprep.subr.mxu0 0.0
    %211 = vmatpush1.msra.mxu0 0.0
    %212 = vmatprep.subr.mxu0 0.0
    %213 = vmatpush1.msra.mxu0 0.0
    %214 = vmatprep.subr.mxu0 0.0
    %215 = vmatpush1.msra.mxu0 0.0
    %216 = vmatprep.subr.mxu0 0.0
    %217 = vmatpush1.msra.mxu0 0.0
    %218 = vmatprep.subr.mxu0 0.0
    %219 = vmatpush1.msra.mxu0 0.0
    %220 = vmatprep.subr.mxu0 0.0
    %221 = vmatpush1.msra.mxu0 0.0
    %222 = vmatprep.subr.mxu0 0.0
    %223 = vmatpush1.msra.mxu0 0.0
    %224 = vmatprep.subr.mxu0 0.0
    %225 = vmatpush1.msra.mxu0 0.0
    %226 = vmatprep.mubr.f32.mxu0 %v121
    %227 = vmatmul.mubr.f32.gmra.mrb[0].mxu0 %v60
    %v228 = vpop.f32.mrb[0].mxu0
    %v229 = vadd.f32 %v117, %v228
    %v230 = vpop.f32.mrb[0].mxu0
    %231 = vmatprep.mubr.f32.mxu0 %v124
    %232 = vmatmul.mubr.f32.gmra.mrb[0].mxu0 %v62
    %v233 = vpop.f32.mrb[0].mxu0
    %v234 = vadd.f32 %v117, %v233
    %v235 = vpop.f32.mrb[0].mxu0
    %236 = vmatprep.mubr.f32.mxu0 %v127
    %237 = vmatmul.mubr.f32.gmra.mrb[0].mxu0 %v64
    %v238 = vpop.f32.mrb[0].mxu0
    %v239 = vadd.f32 %v117, %v238
    %v240 = vpop.f32.mrb[0].mxu0
    %241 = vmatprep.mubr.f32.mxu0 %v130
    %242 = vmatmul.mubr.f32.gmra.mrb[0].mxu0 %v66
    %v243 = vpop.f32.mrb[0].mxu0
    %v244 = vadd.f32 %v117, %v243
    %v245 = vpop.f32.mrb[0].mxu0
    %246 = vmatprep.mubr.f32.mxu0 %v133
    %247 = vmatmul.mubr.f32.gmra.mrb[0].mxu0 %v68
    %v248 = vpop.f32.mrb[0].mxu0
    %v249 = vadd.f32 %v117, %v248
    %v250 = vpop.f32.mrb[0].mxu0
    %251 = vmatprep.mubr.f32.mxu0 %v136
    %252 = vmatmul.mubr.f32.gmra.mrb[0].mxu0 %v70
    %v253 = vpop.f32.mrb[0].mxu0
    %v254 = vadd.f32 %v117, %v253
    %v255 = vpop.f32.mrb[0].mxu0
    %256 = vmatprep.mubr.f32.mxu0 %v139
    %257 = vmatmul.mubr.f32.gmra.mrb[0].mxu0 %v72
    %v258 = vpop.f32.mrb[0].mxu0
    %v259 = vadd.f32 %v117, %v258
    %v260 = vpop.f32.mrb[0].mxu0
    %261 = vmatprep.mubr.f32.mxu0 %v142
    %262 = vmatmul.mubr.f32.gmra.mrb[0].mxu0 %v74
    %v263 = vpop.f32.mrb[0].mxu0
    %v264 = vadd.f32 %v117, %v263
    %v265 = vpop.f32.mrb[0].mxu0
    %266 = vmatprep.mubr.f32.mxu0 %v145
    %267 = vmatmul.mubr.f32.gmra.mrb[0].mxu0 %v76
    %v268 = vpop.f32.mrb[0].mxu0
    %v269 = vadd.f32 %v117, %v268
    %v270 = vpop.f32.mrb[0].mxu0
    %271 = vmatprep.mubr.f32.mxu0 %v148
    %272 = vmatmul.mubr.f32.gmra.mrb[0].mxu0 %v78
    %v273 = vpop.f32.mrb[0].mxu0
    %v274 = vadd.f32 %v117, %v273
    %v275 = vpop.f32.mrb[0].mxu0
    %276 = vmatprep.mubr.f32.mxu0 %v151
    %277 = vmatmul.mubr.f32.gmra.mrb[0].mxu0 %v80
    %v278 = vpop.f32.mrb[0].mxu0
    %v279 = vadd.f32 %v117, %v278
    %v280 = vpop.f32.mrb[0].mxu0
    %281 = vmatprep.mubr.f32.mxu0 %v154
    %282 = vmatmul.mubr.f32.gmra.mrb[0].mxu0 %v82
    %v283 = vpop.f32.mrb[0].mxu0
    %v284 = vadd.f32 %v117, %v283
    %v285 = vpop.f32.mrb[0].mxu0
    %286 = vmatprep.mubr.f32.mxu0 %v157
    %287 = vmatmul.mubr.f32.gmra.mrb[0].mxu0 %v84
    %v288 = vpop.f32.mrb[0].mxu0
    %v289 = vadd.f32 %v117, %v288
    %v290 = vpop.f32.mrb[0].mxu0
    %291 = vmatprep.mubr.f32.mxu0 %v160
    %292 = vmatmul.mubr.f32.gmra.mrb[0].mxu0 %v86
    %v293 = vpop.f32.mrb[0].mxu0
    %v294 = vadd.f32 %v117, %v293
    %v295 = vpop.f32.mrb[0].mxu0
    %296 = vdwg.mxu0
    %v297 = vmax.f32 %v229, 0.0
    %v298 = vmax.f32 %v234, 0.0
    %v299 = vmax.f32 %v239, 0.0
    %v300 = vmax.f32 %v244, 0.0
    %v301 = vmax.f32 %v249, 0.0
    %v302 = vmax.f32 %v254, 0.0
    %v303 = vmax.f32 %v259, 0.0
    %v304 = vmax.f32 %v264, 0.0
    %v305 = vmax.f32 %v269, 0.0
    %v306 = vmax.f32 %v274, 0.0
    %v307 = vmax.f32 %v279, 0.0
    %v308 = vmax.f32 %v284, 0.0
    %v309 = vmax.f32 %v289, 0.0
    %v310 = vmax.f32 %v294, 0.0
    %v311 = vld [vmem:[%s4] sm:$0xff]
    %v312 = vld [vmem:[%s4 + $0x8] sm:$0xff]
    %v313 = vld [vmem:[%s4 + $0x10] sm:$0xff]
    %v314 = vld [vmem:[%s4 + $0x18] sm:$0xff]
    %v315 = vld [vmem:[%s6] sm:$0x1]
    %v317 = vlaneseq
    %v318 = vshrl.u32 %v317, 7
    %v319 = vsub.s32 0, %v318
    %v320 = vrot.slane %v315, %v319
    %vm322 = vcmask 261120
    %v324 = vsel %vm322, %v297, 0
    %v327 = vsel %vm322, %v298, 0
    %v330 = vsel %vm322, %v299, 0
    %v333 = vsel %vm322, %v300, 0
    %v336 = vsel %vm322, %v301, 0
    %v339 = vsel %vm322, %v302, 0
    %v342 = vsel %vm322, %v303, 0
    %v345 = vsel %vm322, %v304, 0
    %v348 = vsel %vm322, %v305, 0
    %v351 = vsel %vm322, %v306, 0
    %v354 = vsel %vm322, %v307, 0
    %v357 = vsel %vm322, %v308, 0
    %v360 = vsel %vm322, %v309, 0
    %v363 = vsel %vm322, %v310, 0
    %365 = vmatprep.subr.mxu0 0.0
    %366 = vmatpush1.msra.mxu0 %v311
    %367 = vmatprep.subr.mxu0 0.0
    %368 = vmatpush1.msra.mxu0 %v312
    %369 = vmatprep.subr.mxu0 0.0
    %370 = vmatpush1.msra.mxu0 %v313
    %371 = vmatprep.subr.mxu0 0.0
    %372 = vmatpush1.msra.mxu0 %v314
    %373 = vmatprep.subr.mxu0 0.0
    %374 = vmatpush1.msra.mxu0 0.0
    %375 = vmatprep.subr.mxu0 0.0
    %376 = vmatpush1.msra.mxu0 0.0
    %377 = vmatprep.subr.mxu0 0.0
    %378 = vmatpush1.msra.mxu0 0.0
    %379 = vmatprep.subr.mxu0 0.0
    %380 = vmatpush1.msra.mxu0 0.0
    %381 = vmatprep.subr.mxu0 0.0
    %382 = vmatpush1.msra.mxu0 0.0
    %383 = vmatprep.subr.mxu0 0.0
    %384 = vmatpush1.msra.mxu0 0.0
    %385 = vmatprep.subr.mxu0 0.0
    %386 = vmatpush1.msra.mxu0 0.0
    %387 = vmatprep.subr.mxu0 0.0
    %388 = vmatpush1.msra.mxu0 0.0
    %389 = vmatprep.subr.mxu0 0.0
    %390 = vmatpush1.msra.mxu0 0.0
    %391 = vmatprep.subr.mxu0 0.0
    %392 = vmatpush1.msra.mxu0 0.0
    %393 = vmatprep.subr.mxu0 0.0
    %394 = vmatpush1.msra.mxu0 0.0
    %395 = vmatprep.subr.mxu0 0.0
    %396 = vmatpush1.msra.mxu0 0.0
    %397 = vmatprep.subr.mxu0 0.0
    %398 = vmatpush1.msra.mxu0 0.0
    %399 = vmatprep.subr.mxu0 0.0
    %400 = vmatpush1.msra.mxu0 0.0
    %401 = vmatprep.subr.mxu0 0.0
    %402 = vmatpush1.msra.mxu0 0.0
    %403 = vmatprep.subr.mxu0 0.0
    %404 = vmatpush1.msra.mxu0 0.0
    %405 = vmatprep.subr.mxu0 0.0
    %406 = vmatpush1.msra.mxu0 0.0
    %407 = vmatprep.subr.mxu0 0.0
    %408 = vmatpush1.msra.mxu0 0.0
    %409 = vmatprep.subr.mxu0 0.0
    %410 = vmatpush1.msra.mxu0 0.0
    %411 = vmatprep.subr.mxu0 0.0
    %412 = vmatpush1.msra.mxu0 0.0
    %413 = vmatprep.subr.mxu0 0.0
    %414 = vmatpush1.msra.mxu0 0.0
    %415 = vmatprep.subr.mxu0 0.0
    %416 = vmatpush1.msra.mxu0 0.0
    %417 = vmatprep.subr.mxu0 0.0
    %418 = vmatpush1.msra.mxu0 0.0
    %419 = vmatprep.subr.mxu0 0.0
    %420 = vmatpush1.msra.mxu0 0.0
    %421 = vmatprep.subr.mxu0 0.0
    %422 = vmatpush1.msra.mxu0 0.0
    %423 = vmatprep.subr.mxu0 0.0
    %424 = vmatpush1.msra.mxu0 0.0
    %425 = vmatprep.subr.mxu0 0.0
    %426 = vmatpush1.msra.mxu0 0.0
    %427 = vmatprep.subr.mxu0 0.0
    %428 = vmatpush1.msra.mxu0 0.0
    %429 = vmatprep.mubr.f32.mxu0 0.0
    %430 = vmatmul.mubr.f32.gmra.mrb[0].mxu0 %v324
    %v431 = vpop.f32.mrb[0].mxu0
    %v432 = vadd.f32 %v320, %v431
    %v433 = vpop.f32.mrb[0].mxu0
    %434 = vmatprep.mubr.f32.mxu0 0.0
    %435 = vmatmul.mubr.f32.gmra.mrb[0].mxu0 %v327
    %v436 = vpop.f32.mrb[0].mxu0
    %v437 = vadd.f32 %v320, %v436
    %v438 = vpop.f32.mrb[0].mxu0
    %439 = vmatprep.mubr.f32.mxu0 0.0
    %440 = vmatmul.mubr.f32.gmra.mrb[0].mxu0 %v330
    %v441 = vpop.f32.mrb[0].mxu0
    %v442 = vadd.f32 %v320, %v441
    %v443 = vpop.f32.mrb[0].mxu0
    %444 = vmatprep.mubr.f32.mxu0 0.0
    %445 = vmatmul.mubr.f32.gmra.mrb[0].mxu0 %v333
    %v446 = vpop.f32.mrb[0].mxu0
    %v447 = vadd.f32 %v320, %v446
    %v448 = vpop.f32.mrb[0].mxu0
    %449 = vmatprep.mubr.f32.mxu0 0.0
    %450 = vmatmul.mubr.f32.gmra.mrb[0].mxu0 %v336
    %v451 = vpop.f32.mrb[0].mxu0
    %v452 = vadd.f32 %v320, %v451
    %v453 = vpop.f32.mrb[0].mxu0
    %454 = vmatprep.mubr.f32.mxu0 0.0
    %455 = vmatmul.mubr.f32.gmra.mrb[0].mxu0 %v339
    %v456 = vpop.f32.mrb[0].mxu0
    %v457 = vadd.f32 %v320, %v456
    %v458 = vpop.f32.mrb[0].mxu0
    %459 = vmatprep.mubr.f32.mxu0 0.0
    %460 = vmatmul.mubr.f32.gmra.mrb[0].mxu0 %v342
    %v461 = vpop.f32.mrb[0].mxu0
    %v462 = vadd.f32 %v320, %v461
    %v463 = vpop.f32.mrb[0].mxu0
    %464 = vmatprep.mubr.f32.mxu0 0.0
    %465 = vmatmul.mubr.f32.gmra.mrb[0].mxu0 %v345
    %v466 = vpop.f32.mrb[0].mxu0
    %v467 = vadd.f32 %v320, %v466
    %v468 = vpop.f32.mrb[0].mxu0
    %469 = vmatprep.mubr.f32.mxu0 0.0
    %470 = vmatmul.mubr.f32.gmra.mrb[0].mxu0 %v348
    %v471 = vpop.f32.mrb[0].mxu0
    %v472 = vadd.f32 %v320, %v471
    %v473 = vpop.f32.mrb[0].mxu0
    %474 = vmatprep.mubr.f32.mxu0 0.0
    %475 = vmatmul.mubr.f32.gmra.mrb[0].mxu0 %v351
    %v476 = vpop.f32.mrb[0].mxu0
    %v477 = vadd.f32 %v320, %v476
    %v478 = vpop.f32.mrb[0].mxu0
    %479 = vmatprep.mubr.f32.mxu0 0.0
    %480 = vmatmul.mubr.f32.gmra.mrb[0].mxu0 %v354
    %v481 = vpop.f32.mrb[0].mxu0
    %v482 = vadd.f32 %v320, %v481
    %v483 = vpop.f32.mrb[0].mxu0
    %484 = vmatprep.mubr.f32.mxu0 0.0
    %485 = vmatmul.mubr.f32.gmra.mrb[0].mxu0 %v357
    %v486 = vpop.f32.mrb[0].mxu0
    %v487 = vadd.f32 %v320, %v486
    %v488 = vpop.f32.mrb[0].mxu0
    %489 = vmatprep.mubr.f32.mxu0 0.0
    %490 = vmatmul.mubr.f32.gmra.mrb[0].mxu0 %v360
    %v491 = vpop.f32.mrb[0].mxu0
    %v492 = vadd.f32 %v320, %v491
    %v493 = vpop.f32.mrb[0].mxu0
    %494 = vmatprep.mubr.f32.mxu0 0.0
    %495 = vmatmul.mubr.f32.gmra.mrb[0].mxu0 %v363
    %v496 = vpop.f32.mrb[0].mxu0
    %v497 = vadd.f32 %v320, %v496
    %v498 = vpop.f32.mrb[0].mxu0
    %499 = vdwg.mxu0
    %vm500 = vcmask 785408
    %501 = vst.msk [vmem:[#allocation2] sm:$0xff] %vm500, %v432
    %502 = vst.msk [vmem:[#allocation2 + $0x8] sm:$0xff] %vm500, %v437
    %503 = vst.msk [vmem:[#allocation2 + $0x10] sm:$0xff] %vm500, %v442
    %504 = vst.msk [vmem:[#allocation2 + $0x18] sm:$0xff] %vm500, %v447
    %505 = vst.msk [vmem:[#allocation2 + $0x20] sm:$0xff] %vm500, %v452
    %506 = vst.msk [vmem:[#allocation2 + $0x28] sm:$0xff] %vm500, %v457
    %507 = vst.msk [vmem:[#allocation2 + $0x30] sm:$0xff] %vm500, %v462
    %508 = vst.msk [vmem:[#allocation2 + $0x38] sm:$0xff] %vm500, %v467
    %509 = vst.msk [vmem:[#allocation2 + $0x40] sm:$0xff] %vm500, %v472
    %510 = vst.msk [vmem:[#allocation2 + $0x48] sm:$0xff] %vm500, %v477
    %511 = vst.msk [vmem:[#allocation2 + $0x50] sm:$0xff] %vm500, %v482
    %512 = vst.msk [vmem:[#allocation2 + $0x58] sm:$0xff] %vm500, %v487
    %513 = vst.msk [vmem:[#allocation2 + $0x60] sm:$0xff] %vm500, %v492
    %vm514 = vcmask 781312
    %515 = vst.msk [vmem:[#allocation2 + $0x68] sm:$0xf] %vm514, %v497
    %v516 = vld [vmem:[%s8] sm:$0xff]
    %v517 = vld [vmem:[%s8 + $0x8] sm:$0xff]
    %v518 = vld [vmem:[%s8 + $0x10] sm:$0xff]
    %v519 = vld [vmem:[%s8 + $0x18] sm:$0xff]
    %v520 = vld [vmem:[%s10] sm:$0x1]
    %v522 = vlaneseq
    %v523 = vshrl.u32 %v522, 7
    %v524 = vsub.s32 0, %v523
    %v525 = vrot.slane %v520, %v524
    %527 = vmatprep.subr.mxu0 0.0
    %528 = vmatpush1.msra.mxu0 %v516
    %529 = vmatprep.subr.mxu0 0.0
    %530 = vmatpush1.msra.mxu0 %v517
    %531 = vmatprep.subr.mxu0 0.0
    %532 = vmatpush1.msra.mxu0 %v518
    %533 = vmatprep.subr.mxu0 0.0
    %534 = vmatpush1.msra.mxu0 %v519
    %535 = vmatprep.subr.mxu0 0.0
    %536 = vmatpush1.msra.mxu0 0.0
    %537 = vmatprep.subr.mxu0 0.0
    %538 = vmatpush1.msra.mxu0 0.0
    %539 = vmatprep.subr.mxu0 0.0
    %540 = vmatpush1.msra.mxu0 0.0
    %541 = vmatprep.subr.mxu0 0.0
    %542 = vmatpush1.msra.mxu0 0.0
    %543 = vmatprep.subr.mxu0 0.0
    %544 = vmatpush1.msra.mxu0 0.0
    %545 = vmatprep.subr.mxu0 0.0
    %546 = vmatpush1.msra.mxu0 0.0
    %547 = vmatprep.subr.mxu0 0.0
    %548 = vmatpush1.msra.mxu0 0.0
    %549 = vmatprep.subr.mxu0 0.0
    %550 = vmatpush1.msra.mxu0 0.0
    %551 = vmatprep.subr.mxu0 0.0
    %552 = vmatpush1.msra.mxu0 0.0
    %553 = vmatprep.subr.mxu0 0.0
    %554 = vmatpush1.msra.mxu0 0.0
    %555 = vmatprep.subr.mxu0 0.0
    %556 = vmatpush1.msra.mxu0 0.0
    %557 = vmatprep.subr.mxu0 0.0
    %558 = vmatpush1.msra.mxu0 0.0
    %559 = vmatprep.subr.mxu0 0.0
    %560 = vmatpush1.msra.mxu0 0.0
    %561 = vmatprep.subr.mxu0 0.0
    %562 = vmatpush1.msra.mxu0 0.0
    %563 = vmatprep.subr.mxu0 0.0
    %564 = vmatpush1.msra.mxu0 0.0
    %565 = vmatprep.subr.mxu0 0.0
    %566 = vmatpush1.msra.mxu0 0.0
    %567 = vmatprep.subr.mxu0 0.0
    %568 = vmatpush1.msra.mxu0 0.0
    %569 = vmatprep.subr.mxu0 0.0
    %570 = vmatpush1.msra.mxu0 0.0
    %571 = vmatprep.subr.mxu0 0.0
    %572 = vmatpush1.msra.mxu0 0.0
    %573 = vmatprep.subr.mxu0 0.0
    %574 = vmatpush1.msra.mxu0 0.0
    %575 = vmatprep.subr.mxu0 0.0
    %576 = vmatpush1.msra.mxu0 0.0
    %577 = vmatprep.subr.mxu0 0.0
    %578 = vmatpush1.msra.mxu0 0.0
    %579 = vmatprep.subr.mxu0 0.0
    %580 = vmatpush1.msra.mxu0 0.0
    %581 = vmatprep.subr.mxu0 0.0
    %582 = vmatpush1.msra.mxu0 0.0
    %583 = vmatprep.subr.mxu0 0.0
    %584 = vmatpush1.msra.mxu0 0.0
    %585 = vmatprep.subr.mxu0 0.0
    %586 = vmatpush1.msra.mxu0 0.0
    %587 = vmatprep.subr.mxu0 0.0
    %588 = vmatpush1.msra.mxu0 0.0
    %589 = vmatprep.subr.mxu0 0.0
    %590 = vmatpush1.msra.mxu0 0.0
    %591 = vmatprep.mubr.f32.mxu0 0.0
    %592 = vmatmul.mubr.f32.gmra.mrb[0].mxu0 %v324
    %v593 = vpop.f32.mrb[0].mxu0
    %v594 = vadd.f32 %v525, %v593
    %v595 = vpop.f32.mrb[0].mxu0
    %596 = vmatprep.mubr.f32.mxu0 0.0
    %597 = vmatmul.mubr.f32.gmra.mrb[0].mxu0 %v327
    %v598 = vpop.f32.mrb[0].mxu0
    %v599 = vadd.f32 %v525, %v598
    %v600 = vpop.f32.mrb[0].mxu0
    %601 = vmatprep.mubr.f32.mxu0 0.0
    %602 = vmatmul.mubr.f32.gmra.mrb[0].mxu0 %v330
    %v603 = vpop.f32.mrb[0].mxu0
    %v604 = vadd.f32 %v525, %v603
    %v605 = vpop.f32.mrb[0].mxu0
    %606 = vmatprep.mubr.f32.mxu0 0.0
    %607 = vmatmul.mubr.f32.gmra.mrb[0].mxu0 %v333
    %v608 = vpop.f32.mrb[0].mxu0
    %v609 = vadd.f32 %v525, %v608
    %v610 = vpop.f32.mrb[0].mxu0
    %611 = vmatprep.mubr.f32.mxu0 0.0
    %612 = vmatmul.mubr.f32.gmra.mrb[0].mxu0 %v336
    %v613 = vpop.f32.mrb[0].mxu0
    %v614 = vadd.f32 %v525, %v613
    %v615 = vpop.f32.mrb[0].mxu0
    %616 = vmatprep.mubr.f32.mxu0 0.0
    %617 = vmatmul.mubr.f32.gmra.mrb[0].mxu0 %v339
    %v618 = vpop.f32.mrb[0].mxu0
    %v619 = vadd.f32 %v525, %v618
    %v620 = vpop.f32.mrb[0].mxu0
    %621 = vmatprep.mubr.f32.mxu0 0.0
    %622 = vmatmul.mubr.f32.gmra.mrb[0].mxu0 %v342
    %v623 = vpop.f32.mrb[0].mxu0
    %v624 = vadd.f32 %v525, %v623
    %v625 = vpop.f32.mrb[0].mxu0
    %626 = vmatprep.mubr.f32.mxu0 0.0
    %627 = vmatmul.mubr.f32.gmra.mrb[0].mxu0 %v345
    %v628 = vpop.f32.mrb[0].mxu0
    %v629 = vadd.f32 %v525, %v628
    %v630 = vpop.f32.mrb[0].mxu0
    %631 = vmatprep.mubr.f32.mxu0 0.0
    %632 = vmatmul.mubr.f32.gmra.mrb[0].mxu0 %v348
    %v633 = vpop.f32.mrb[0].mxu0
    %v634 = vadd.f32 %v525, %v633
    %v635 = vpop.f32.mrb[0].mxu0
    %636 = vmatprep.mubr.f32.mxu0 0.0
    %637 = vmatmul.mubr.f32.gmra.mrb[0].mxu0 %v351
    %v638 = vpop.f32.mrb[0].mxu0
    %v639 = vadd.f32 %v525, %v638
    %v640 = vpop.f32.mrb[0].mxu0
    %641 = vmatprep.mubr.f32.mxu0 0.0
    %642 = vmatmul.mubr.f32.gmra.mrb[0].mxu0 %v354
    %v643 = vpop.f32.mrb[0].mxu0
    %v644 = vadd.f32 %v525, %v643
    %v645 = vpop.f32.mrb[0].mxu0
    %646 = vmatprep.mubr.f32.mxu0 0.0
    %647 = vmatmul.mubr.f32.gmra.mrb[0].mxu0 %v357
    %v648 = vpop.f32.mrb[0].mxu0
    %v649 = vadd.f32 %v525, %v648
    %v650 = vpop.f32.mrb[0].mxu0
    %651 = vmatprep.mubr.f32.mxu0 0.0
    %652 = vmatmul.mubr.f32.gmra.mrb[0].mxu0 %v360
    %v653 = vpop.f32.mrb[0].mxu0
    %v654 = vadd.f32 %v525, %v653
    %v655 = vpop.f32.mrb[0].mxu0
    %656 = vmatprep.mubr.f32.mxu0 0.0
    %657 = vmatmul.mubr.f32.gmra.mrb[0].mxu0 %v363
    %v658 = vpop.f32.mrb[0].mxu0
    %v659 = vadd.f32 %v525, %v658
    %v660 = vpop.f32.mrb[0].mxu0
    %661 = vdwg.mxu0
    %vm662 = vcmask 392192
    %663 = vst.msk [vmem:[#allocation3] sm:$0xff] %vm662, %v594
    %664 = vst.msk [vmem:[#allocation3 + $0x8] sm:$0xff] %vm662, %v599
    %665 = vst.msk [vmem:[#allocation3 + $0x10] sm:$0xff] %vm662, %v604
    %666 = vst.msk [vmem:[#allocation3 + $0x18] sm:$0xff] %vm662, %v609
    %667 = vst.msk [vmem:[#allocation3 + $0x20] sm:$0xff] %vm662, %v614
    %668 = vst.msk [vmem:[#allocation3 + $0x28] sm:$0xff] %vm662, %v619
    %669 = vst.msk [vmem:[#allocation3 + $0x30] sm:$0xff] %vm662, %v624
    %670 = vst.msk [vmem:[#allocation3 + $0x38] sm:$0xff] %vm662, %v629
    %671 = vst.msk [vmem:[#allocation3 + $0x40] sm:$0xff] %vm662, %v634
    %672 = vst.msk [vmem:[#allocation3 + $0x48] sm:$0xff] %vm662, %v639
    %673 = vst.msk [vmem:[#allocation3 + $0x50] sm:$0xff] %vm662, %v644
    %674 = vst.msk [vmem:[#allocation3 + $0x58] sm:$0xff] %vm662, %v649
    %675 = vst.msk [vmem:[#allocation3 + $0x60] sm:$0xff] %vm662, %v654
    %vm676 = vcmask 388096
    %677 = vst.msk [vmem:[#allocation3 + $0x68] sm:$0xf] %vm676, %v659
    %v678 = vld [vmem:[%s5] sm:$0xff]
    %v679 = vld [vmem:[%s5 + $0x8] sm:$0xff]
    %v680 = vld [vmem:[%s5 + $0x10] sm:$0xff]
    %v681 = vld [vmem:[%s5 + $0x18] sm:$0xff]
    %v682 = vld [vmem:[%s9] sm:$0xff]
    %v683 = vld [vmem:[%s9 + $0x8] sm:$0xff]
    %v684 = vld [vmem:[%s7] sm:$0x1]
    %v686 = vlaneseq
    %v687 = vshrl.u32 %v686, 7
    %v688 = vsub.s32 0, %v687
    %v689 = vrot.slane %v684, %v688
    %v690 = vld [vmem:[%s11] sm:$0x1]
    %v692 = vlaneseq
    %v693 = vshrl.u32 %v692, 7
    %v694 = vsub.s32 0, %v693
    %v695 = vrot.slane %v690, %v694
    %v696 = vld [vmem:[#allocation2] sm:$0x3]
    %v698 = vsel %vm322, 0.0, 0
    %700 = vmatprep.subr.mxu0 0.0
    %701 = vmatpush1.msra.mxu0 %v678
    %702 = vmatprep.subr.mxu0 0.0
    %703 = vmatpush1.msra.mxu0 %v679
    %704 = vmatprep.subr.mxu0 0.0
    %705 = vmatpush1.msra.mxu0 %v680
    %706 = vmatprep.subr.mxu0 0.0
    %707 = vmatpush1.msra.mxu0 %v681
    %708 = vmatprep.subr.mxu0 0.0
    %709 = vmatpush1.msra.mxu0 0.0
    %710 = vmatprep.subr.mxu0 0.0
    %711 = vmatpush1.msra.mxu0 0.0
    %712 = vmatprep.subr.mxu0 0.0
    %713 = vmatpush1.msra.mxu0 0.0
    %714 = vmatprep.subr.mxu0 0.0
    %715 = vmatpush1.msra.mxu0 0.0
    %716 = vmatprep.subr.mxu0 0.0
    %717 = vmatpush1.msra.mxu0 0.0
    %718 = vmatprep.subr.mxu0 0.0
    %719 = vmatpush1.msra.mxu0 0.0
    %720 = vmatprep.subr.mxu0 0.0
    %721 = vmatpush1.msra.mxu0 0.0
    %722 = vmatprep.subr.mxu0 0.0
    %723 = vmatpush1.msra.mxu0 0.0
    %724 = vmatprep.subr.mxu0 0.0
    %725 = vmatpush1.msra.mxu0 0.0
    %726 = vmatprep.subr.mxu0 0.0
    %727 = vmatpush1.msra.mxu0 0.0
    %728 = vmatprep.subr.mxu0 0.0
    %729 = vmatpush1.msra.mxu0 0.0
    %730 = vmatprep.subr.mxu0 0.0
    %731 = vmatpush1.msra.mxu0 0.0
    %732 = vmatprep.subr.mxu0 0.0
    %733 = vmatpush1.msra.mxu0 0.0
    %734 = vmatprep.subr.mxu0 0.0
    %735 = vmatpush1.msra.mxu0 0.0
    %736 = vmatprep.subr.mxu0 0.0
    %737 = vmatpush1.msra.mxu0 0.0
    %738 = vmatprep.subr.mxu0 0.0
    %739 = vmatpush1.msra.mxu0 0.0
    %740 = vmatprep.subr.mxu0 0.0
    %741 = vmatpush1.msra.mxu0 0.0
    %742 = vmatprep.subr.mxu0 0.0
    %743 = vmatpush1.msra.mxu0 0.0
    %744 = vmatprep.subr.mxu0 0.0
    %745 = vmatpush1.msra.mxu0 0.0
    %746 = vmatprep.subr.mxu0 0.0
    %747 = vmatpush1.msra.mxu0 0.0
    %748 = vmatprep.subr.mxu0 0.0
    %749 = vmatpush1.msra.mxu0 0.0
    %750 = vmatprep.subr.mxu0 0.0
    %751 = vmatpush1.msra.mxu0 0.0
    %752 = vmatprep.subr.mxu0 0.0
    %753 = vmatpush1.msra.mxu0 0.0
    %754 = vmatprep.subr.mxu0 0.0
    %755 = vmatpush1.msra.mxu0 0.0
    %756 = vmatprep.subr.mxu0 0.0
    %757 = vmatpush1.msra.mxu0 0.0
    %758 = vmatprep.subr.mxu0 0.0
    %759 = vmatpush1.msra.mxu0 0.0
    %760 = vmatprep.subr.mxu0 0.0
    %761 = vmatpush1.msra.mxu0 0.0
    %762 = vmatprep.subr.mxu0 0.0
    %763 = vmatpush1.msra.mxu0 0.0
    %764 = vmatprep.mubr.f32.mxu0 0.0
    %765 = vmatmul.mubr.f32.gmra.mrb[0].mxu0 %v698
    %v766 = vpop.f32.mrb[0].mxu0
    %v767 = vadd.f32 0.0, %v766
    %v768 = vpop.f32.mrb[0].mxu0
    %769 = vdwg.mxu0
    %v770 = vadd.f32 %v696, %v767
    %v771 = vxor.u32 %v770, 2147483648
    %v772 = vmul.f32 %v771, 1.442695
    %v773 = vpow.pop %v772
    %v774 = vadd.f32 %v773, 1.0
    %v775 = vrcp.pop %v774
    %v776 = vmul.f32 1.0, %v775
    %777 = vrot.lane.b32.xlu0 %v689, 64
    %v778 = vpop.permute.xlu0 %777
    %v780 = vadd.f32 %v767, %v778
    %782 = vrot.lane.b32.xlu0 %v780, 64
    %v783 = vpop.permute.xlu0 %782
    %v785 = vmul.f32 %v776, %v783
    %787 = vrot.lane.b32.xlu0 %v785, 64
    %v788 = vpop.permute.xlu0 %787
    %v790 = vadd.f32 %v696, %v788
    %v791 = vtanh.pop %v790
    %v792 = vsub.f32 1.0, %v776
    %794 = vrot.lane.b32.xlu0 %v791, 96
    %v795 = vpop.permute.xlu0 %794
    %v797 = vmul.f32 %v792, %v795
    %v798 = vmul.f32 %v776, 0.0
    %v799 = vadd.f32 %v797, %v798
    %v800 = vld [vmem:[#allocation2 + $0x2] sm:$0x3]
    %802 = vrot.lane.b32.xlu0 %v799, 96
    %v803 = vpop.permute.xlu0 %802
    %v804 = vsel %vm322, %v803, 0
    %806 = vmatprep.subr.mxu0 0.0
    %807 = vmatpush1.msra.mxu0 %v678
    %808 = vmatprep.subr.mxu0 0.0
    %809 = vmatpush1.msra.mxu0 %v679
    %810 = vmatprep.subr.mxu0 0.0
    %811 = vmatpush1.msra.mxu0 %v680
    %812 = vmatprep.subr.mxu0 0.0
    %813 = vmatpush1.msra.mxu0 %v681
    %814 = vmatprep.subr.mxu0 0.0
    %815 = vmatpush1.msra.mxu0 0.0
    %816 = vmatprep.subr.mxu0 0.0
    %817 = vmatpush1.msra.mxu0 0.0
    %818 = vmatprep.subr.mxu0 0.0
    %819 = vmatpush1.msra.mxu0 0.0
    %820 = vmatprep.subr.mxu0 0.0
    %821 = vmatpush1.msra.mxu0 0.0
    %822 = vmatprep.subr.mxu0 0.0
    %823 = vmatpush1.msra.mxu0 0.0
    %824 = vmatprep.subr.mxu0 0.0
    %825 = vmatpush1.msra.mxu0 0.0
    %826 = vmatprep.subr.mxu0 0.0
    %827 = vmatpush1.msra.mxu0 0.0
    %828 = vmatprep.subr.mxu0 0.0
    %829 = vmatpush1.msra.mxu0 0.0
    %830 = vmatprep.subr.mxu0 0.0
    %831 = vmatpush1.msra.mxu0 0.0
    %832 = vmatprep.subr.mxu0 0.0
    %833 = vmatpush1.msra.mxu0 0.0
    %834 = vmatprep.subr.mxu0 0.0
    %835 = vmatpush1.msra.mxu0 0.0
    %836 = vmatprep.subr.mxu0 0.0
    %837 = vmatpush1.msra.mxu0 0.0
    %838 = vmatprep.subr.mxu0 0.0
    %839 = vmatpush1.msra.mxu0 0.0
    %840 = vmatprep.subr.mxu0 0.0
    %841 = vmatpush1.msra.mxu0 0.0
    %842 = vmatprep.subr.mxu0 0.0
    %843 = vmatpush1.msra.mxu0 0.0
    %844 = vmatprep.subr.mxu0 0.0
    %845 = vmatpush1.msra.mxu0 0.0
    %846 = vmatprep.subr.mxu0 0.0
    %847 = vmatpush1.msra.mxu0 0.0
    %848 = vmatprep.subr.mxu0 0.0
    %849 = vmatpush1.msra.mxu0 0.0
    %850 = vmatprep.subr.mxu0 0.0
    %851 = vmatpush1.msra.mxu0 0.0
    %852 = vmatprep.subr.mxu0 0.0
    %853 = vmatpush1.msra.mxu0 0.0
    %854 = vmatprep.subr.mxu0 0.0
    %855 = vmatpush1.msra.mxu0 0.0
    %856 = vmatprep.subr.mxu0 0.0
    %857 = vmatpush1.msra.mxu0 0.0
    %858 = vmatprep.subr.mxu0 0.0
    %859 = vmatpush1.msra.mxu0 0.0
    %860 = vmatprep.subr.mxu0 0.0
    %861 = vmatpush1.msra.mxu0 0.0
    %862 = vmatprep.subr.mxu0 0.0
    %863 = vmatpush1.msra.mxu0 0.0
    %864 = vmatprep.subr.mxu0 0.0
    %865 = vmatpush1.msra.mxu0 0.0
    %866 = vmatprep.subr.mxu0 0.0
    %867 = vmatpush1.msra.mxu0 0.0
    %868 = vmatprep.subr.mxu0 0.0
    %869 = vmatpush1.msra.mxu0 0.0
    %870 = vmatprep.mubr.f32.mxu0 0.0
    %871 = vmatmul.mubr.f32.gmra.mrb[0].mxu0 %v804
    %v872 = vpop.f32.mrb[0].mxu0
    %v873 = vadd.f32 0.0, %v872
    %v874 = vpop.f32.mrb[0].mxu0
    %875 = vdwg.mxu0
    %v876 = vadd.f32 %v800, %v873
    %v877 = vxor.u32 %v876, 2147483648
    %v878 = vmul.f32 %v877, 1.442695
    %v879 = vpow.pop %v878
    %v880 = vadd.f32 %v879, 1.0
    %v881 = vrcp.pop %v880
    %v882 = vmul.f32 1.0, %v881
    %v883 = vadd.f32 %v873, %v778
    %885 = vrot.lane.b32.xlu0 %v883, 64
    %v886 = vpop.permute.xlu0 %885
    %v888 = vmul.f32 %v882, %v886
    %890 = vrot.lane.b32.xlu0 %v888, 64
    %v891 = vpop.permute.xlu0 %890
    %v893 = vadd.f32 %v800, %v891
    %v894 = vtanh.pop %v893
    %v895 = vsub.f32 1.0, %v882
    %897 = vrot.lane.b32.xlu0 %v894, 96
    %v898 = vpop.permute.xlu0 %897
    %v900 = vmul.f32 %v895, %v898
    %v901 = vmul.f32 %v882, %v799
    %v902 = vadd.f32 %v900, %v901
    %v903 = vld [vmem:[#allocation2 + $0x4] sm:$0x3]
    %905 = vrot.lane.b32.xlu0 %v902, 96
    %v906 = vpop.permute.xlu0 %905
    %v907 = vsel %vm322, %v906, 0
    %909 = vmatprep.subr.mxu0 0.0
    %910 = vmatpush1.msra.mxu0 %v678
    %911 = vmatprep.subr.mxu0 0.0
    %912 = vmatpush1.msra.mxu0 %v679
    %913 = vmatprep.subr.mxu0 0.0
    %914 = vmatpush1.msra.mxu0 %v680
    %915 = vmatprep.subr.mxu0 0.0
    %916 = vmatpush1.msra.mxu0 %v681
    %917 = vmatprep.subr.mxu0 0.0
    %918 = vmatpush1.msra.mxu0 0.0
    %919 = vmatprep.subr.mxu0 0.0
    %920 = vmatpush1.msra.mxu0 0.0
    %921 = vmatprep.subr.mxu0 0.0
    %922 = vmatpush1.msra.mxu0 0.0
    %923 = vmatprep.subr.mxu0 0.0
    %924 = vmatpush1.msra.mxu0 0.0
    %925 = vmatprep.subr.mxu0 0.0
    %926 = vmatpush1.msra.mxu0 0.0
    %927 = vmatprep.subr.mxu0 0.0
    %928 = vmatpush1.msra.mxu0 0.0
    %929 = vmatprep.subr.mxu0 0.0
    %930 = vmatpush1.msra.mxu0 0.0
    %931 = vmatprep.subr.mxu0 0.0
    %932 = vmatpush1.msra.mxu0 0.0
    %933 = vmatprep.subr.mxu0 0.0
    %934 = vmatpush1.msra.mxu0 0.0
    %935 = vmatprep.subr.mxu0 0.0
    %936 = vmatpush1.msra.mxu0 0.0
    %937 = vmatprep.subr.mxu0 0.0
    %938 = vmatpush1.msra.mxu0 0.0
    %939 = vmatprep.subr.mxu0 0.0
    %940 = vmatpush1.msra.mxu0 0.0
    %941 = vmatprep.subr.mxu0 0.0
    %942 = vmatpush1.msra.mxu0 0.0
    %943 = vmatprep.subr.mxu0 0.0
    %944 = vmatpush1.msra.mxu0 0.0
    %945 = vmatprep.subr.mxu0 0.0
    %946 = vmatpush1.msra.mxu0 0.0
    %947 = vmatprep.subr.mxu0 0.0
    %948 = vmatpush1.msra.mxu0 0.0
    %949 = vmatprep.subr.mxu0 0.0
    %950 = vmatpush1.msra.mxu0 0.0
    %951 = vmatprep.subr.mxu0 0.0
    %952 = vmatpush1.msra.mxu0 0.0
    %953 = vmatprep.subr.mxu0 0.0
    %954 = vmatpush1.msra.mxu0 0.0
    %955 = vmatprep.subr.mxu0 0.0
    %956 = vmatpush1.msra.mxu0 0.0
    %957 = vmatprep.subr.mxu0 0.0
    %958 = vmatpush1.msra.mxu0 0.0
    %959 = vmatprep.subr.mxu0 0.0
    %960 = vmatpush1.msra.mxu0 0.0
    %961 = vmatprep.subr.mxu0 0.0
    %962 = vmatpush1.msra.mxu0 0.0
    %963 = vmatprep.subr.mxu0 0.0
    %964 = vmatpush1.msra.mxu0 0.0
    %965 = vmatprep.subr.mxu0 0.0
    %966 = vmatpush1.msra.mxu0 0.0
    %967 = vmatprep.subr.mxu0 0.0
    %968 = vmatpush1.msra.mxu0 0.0
    %969 = vmatprep.subr.mxu0 0.0
    %970 = vmatpush1.msra.mxu0 0.0
    %971 = vmatprep.subr.mxu0 0.0
    %972 = vmatpush1.msra.mxu0 0.0
    %973 = vmatprep.mubr.f32.mxu0 0.0
    %974 = vmatmul.mubr.f32.gmra.mrb[0].mxu0 %v907
    %v975 = vpop.f32.mrb[0].mxu0
    %v976 = vadd.f32 0.0, %v975
    %v977 = vpop.f32.mrb[0].mxu0
    %978 = vdwg.mxu0
    %v979 = vadd.f32 %v903, %v976
    %v980 = vxor.u32 %v979, 2147483648
    %v981 = vmul.f32 %v980, 1.442695
    %v982 = vpow.pop %v981
    %v983 = vadd.f32 %v982, 1.0
    %v984 = vrcp.pop %v983
    %v985 = vmul.f32 1.0, %v984
    %v986 = vadd.f32 %v976, %v778
    %988 = vrot.lane.b32.xlu0 %v986, 64
    %v989 = vpop.permute.xlu0 %988
    %v991 = vmul.f32 %v985, %v989
    %993 = vrot.lane.b32.xlu0 %v991, 64
    %v994 = vpop.permute.xlu0 %993
    %v996 = vadd.f32 %v903, %v994
    %v997 = vtanh.pop %v996
    %v998 = vsub.f32 1.0, %v985
    %1000 = vrot.lane.b32.xlu0 %v997, 96
    %v1001 = vpop.permute.xlu0 %1000
    %v1003 = vmul.f32 %v998, %v1001
    %v1004 = vmul.f32 %v985, %v902
    %v1005 = vadd.f32 %v1003, %v1004
    %v1006 = vld [vmem:[#allocation2 + $0x6] sm:$0x3]
    %1008 = vrot.lane.b32.xlu0 %v1005, 96
    %v1009 = vpop.permute.xlu0 %1008
    %v1010 = vsel %vm322, %v1009, 0
    %1012 = vmatprep.subr.mxu0 0.0
    %1013 = vmatpush1.msra.mxu0 %v678
    %1014 = vmatprep.subr.mxu0 0.0
    %1015 = vmatpush1.msra.mxu0 %v679
    %1016 = vmatprep.subr.mxu0 0.0
    %1017 = vmatpush1.msra.mxu0 %v680
    %1018 = vmatprep.subr.mxu0 0.0
    %1019 = vmatpush1.msra.mxu0 %v681
    %1020 = vmatprep.subr.mxu0 0.0
    %1021 = vmatpush1.msra.mxu0 0.0
    %1022 = vmatprep.subr.mxu0 0.0
    %1023 = vmatpush1.msra.mxu0 0.0
    %1024 = vmatprep.subr.mxu0 0.0
    %1025 = vmatpush1.msra.mxu0 0.0
    %1026 = vmatprep.subr.mxu0 0.0
    %1027 = vmatpush1.msra.mxu0 0.0
    %1028 = vmatprep.subr.mxu0 0.0
    %1029 = vmatpush1.msra.mxu0 0.0
    %1030 = vmatprep.subr.mxu0 0.0
    %1031 = vmatpush1.msra.mxu0 0.0
    %1032 = vmatprep.subr.mxu0 0.0
    %1033 = vmatpush1.msra.mxu0 0.0
    %1034 = vmatprep.subr.mxu0 0.0
    %1035 = vmatpush1.msra.mxu0 0.0
    %1036 = vmatprep.subr.mxu0 0.0
    %1037 = vmatpush1.msra.mxu0 0.0
    %1038 = vmatprep.subr.mxu0 0.0
    %1039 = vmatpush1.msra.mxu0 0.0
    %1040 = vmatprep.subr.mxu0 0.0
    %1041 = vmatpush1.msra.mxu0 0.0
    %1042 = vmatprep.subr.mxu0 0.0
    %1043 = vmatpush1.msra.mxu0 0.0
    %1044 = vmatprep.subr.mxu0 0.0
    %1045 = vmatpush1.msra.mxu0 0.0
    %1046 = vmatprep.subr.mxu0 0.0
    %1047 = vmatpush1.msra.mxu0 0.0
    %1048 = vmatprep.subr.mxu0 0.0
    %1049 = vmatpush1.msra.mxu0 0.0
    %1050 = vmatprep.subr.mxu0 0.0
    %1051 = vmatpush1.msra.mxu0 0.0
    %1052 = vmatprep.subr.mxu0 0.0
    %1053 = vmatpush1.msra.mxu0 0.0
    %1054 = vmatprep.subr.mxu0 0.0
    %1055 = vmatpush1.msra.mxu0 0.0
    %1056 = vmatprep.subr.mxu0 0.0
    %1057 = vmatpush1.msra.mxu0 0.0
    %1058 = vmatprep.subr.mxu0 0.0
    %1059 = vmatpush1.msra.mxu0 0.0
    %1060 = vmatprep.subr.mxu0 0.0
    %1061 = vmatpush1.msra.mxu0 0.0
    %1062 = vmatprep.subr.mxu0 0.0
    %1063 = vmatpush1.msra.mxu0 0.0
    %1064 = vmatprep.subr.mxu0 0.0
    %1065 = vmatpush1.msra.mxu0 0.0
    %1066 = vmatprep.subr.mxu0 0.0
    %1067 = vmatpush1.msra.mxu0 0.0
    %1068 = vmatprep.subr.mxu0 0.0
    %1069 = vmatpush1.msra.mxu0 0.0
    %1070 = vmatprep.subr.mxu0 0.0
    %1071 = vmatpush1.msra.mxu0 0.0
    %1072 = vmatprep.subr.mxu0 0.0
    %1073 = vmatpush1.msra.mxu0 0.0
    %1074 = vmatprep.subr.mxu0 0.0
    %1075 = vmatpush1.msra.mxu0 0.0
    %1076 = vmatprep.mubr.f32.mxu0 0.0
    %1077 = vmatmul.mubr.f32.gmra.mrb[0].mxu0 %v1010
    %v1078 = vpop.f32.mrb[0].mxu0
    %v1079 = vadd.f32 0.0, %v1078
    %v1080 = vpop.f32.mrb[0].mxu0
    %1081 = vdwg.mxu0
    %v1082 = vadd.f32 %v1006, %v1079
    %v1083 = vxor.u32 %v1082, 2147483648
    %v1084 = vmul.f32 %v1083, 1.442695
    %v1085 = vpow.pop %v1084
    %v1086 = vadd.f32 %v1085, 1.0
    %v1087 = vrcp.pop %v1086
    %v1088 = vmul.f32 1.0, %v1087
    %v1089 = vadd.f32 %v1079, %v778
    %1091 = vrot.lane.b32.xlu0 %v1089, 64
    %v1092 = vpop.permute.xlu0 %1091
    %v1094 = vmul.f32 %v1088, %v1092
    %1096 = vrot.lane.b32.xlu0 %v1094, 64
    %v1097 = vpop.permute.xlu0 %1096
    %v1099 = vadd.f32 %v1006, %v1097
    %v1100 = vtanh.pop %v1099
    %v1101 = vsub.f32 1.0, %v1088
    %1103 = vrot.lane.b32.xlu0 %v1100, 96
    %v1104 = vpop.permute.xlu0 %1103
    %v1106 = vmul.f32 %v1101, %v1104
    %v1107 = vmul.f32 %v1088, %v1005
    %v1108 = vadd.f32 %v1106, %v1107
    %v1109 = vld [vmem:[#allocation2 + $0x8] sm:$0x3]
    %1111 = vrot.lane.b32.xlu0 %v1108, 96
    %v1112 = vpop.permute.xlu0 %1111
    %v1113 = vsel %vm322, %v1112, 0
    %1115 = vmatprep.subr.mxu0 0.0
    %1116 = vmatpush1.msra.mxu0 %v678
    %1117 = vmatprep.subr.mxu0 0.0
    %1118 = vmatpush1.msra.mxu0 %v679
    %1119 = vmatprep.subr.mxu0 0.0
    %1120 = vmatpush1.msra.mxu0 %v680
    %1121 = vmatprep.subr.mxu0 0.0
    %1122 = vmatpush1.msra.mxu0 %v681
    %1123 = vmatprep.subr.mxu0 0.0
    %1124 = vmatpush1.msra.mxu0 0.0
    %1125 = vmatprep.subr.mxu0 0.0
    %1126 = vmatpush1.msra.mxu0 0.0
    %1127 = vmatprep.subr.mxu0 0.0
    %1128 = vmatpush1.msra.mxu0 0.0
    %1129 = vmatprep.subr.mxu0 0.0
    %1130 = vmatpush1.msra.mxu0 0.0
    %1131 = vmatprep.subr.mxu0 0.0
    %1132 = vmatpush1.msra.mxu0 0.0
    %1133 = vmatprep.subr.mxu0 0.0
    %1134 = vmatpush1.msra.mxu0 0.0
    %1135 = vmatprep.subr.mxu0 0.0
    %1136 = vmatpush1.msra.mxu0 0.0
    %1137 = vmatprep.subr.mxu0 0.0
    %1138 = vmatpush1.msra.mxu0 0.0
    %1139 = vmatprep.subr.mxu0 0.0
    %1140 = vmatpush1.msra.mxu0 0.0
    %1141 = vmatprep.subr.mxu0 0.0
    %1142 = vmatpush1.msra.mxu0 0.0
    %1143 = vmatprep.subr.mxu0 0.0
    %1144 = vmatpush1.msra.mxu0 0.0
    %1145 = vmatprep.subr.mxu0 0.0
    %1146 = vmatpush1.msra.mxu0 0.0
    %1147 = vmatprep.subr.mxu0 0.0
    %1148 = vmatpush1.msra.mxu0 0.0
    %1149 = vmatprep.subr.mxu0 0.0
    %1150 = vmatpush1.msra.mxu0 0.0
    %1151 = vmatprep.subr.mxu0 0.0
    %1152 = vmatpush1.msra.mxu0 0.0
    %1153 = vmatprep.subr.mxu0 0.0
    %1154 = vmatpush1.msra.mxu0 0.0
    %1155 = vmatprep.subr.mxu0 0.0
    %1156 = vmatpush1.msra.mxu0 0.0
    %1157 = vmatprep.subr.mxu0 0.0
    %1158 = vmatpush1.msra.mxu0 0.0
    %1159 = vmatprep.subr.mxu0 0.0
    %1160 = vmatpush1.msra.mxu0 0.0
    %1161 = vmatprep.subr.mxu0 0.0
    %1162 = vmatpush1.msra.mxu0 0.0
    %1163 = vmatprep.subr.mxu0 0.0
    %1164 = vmatpush1.msra.mxu0 0.0
    %1165 = vmatprep.subr.mxu0 0.0
    %1166 = vmatpush1.msra.mxu0 0.0
    %1167 = vmatprep.subr.mxu0 0.0
    %1168 = vmatpush1.msra.mxu0 0.0
    %1169 = vmatprep.subr.mxu0 0.0
    %1170 = vmatpush1.msra.mxu0 0.0
    %1171 = vmatprep.subr.mxu0 0.0
    %1172 = vmatpush1.msra.mxu0 0.0
    %1173 = vmatprep.subr.mxu0 0.0
    %1174 = vmatpush1.msra.mxu0 0.0
    %1175 = vmatprep.subr.mxu0 0.0
    %1176 = vmatpush1.msra.mxu0 0.0
    %1177 = vmatprep.subr.mxu0 0.0
    %1178 = vmatpush1.msra.mxu0 0.0
    %1179 = vmatprep.mubr.f32.mxu0 0.0
    %1180 = vmatmul.mubr.f32.gmra.mrb[0].mxu0 %v1113
    %v1181 = vpop.f32.mrb[0].mxu0
    %v1182 = vadd.f32 0.0, %v1181
    %v1183 = vpop.f32.mrb[0].mxu0
    %1184 = vdwg.mxu0
    %v1185 = vadd.f32 %v1109, %v1182
    %v1186 = vxor.u32 %v1185, 2147483648
    %v1187 = vmul.f32 %v1186, 1.442695
    %v1188 = vpow.pop %v1187
    %v1189 = vadd.f32 %v1188, 1.0
    %v1190 = vrcp.pop %v1189
    %v1191 = vmul.f32 1.0, %v1190
    %v1192 = vadd.f32 %v1182, %v778
    %1194 = vrot.lane.b32.xlu0 %v1192, 64
    %v1195 = vpop.permute.xlu0 %1194
    %v1197 = vmul.f32 %v1191, %v1195
    %1199 = vrot.lane.b32.xlu0 %v1197, 64
    %v1200 = vpop.permute.xlu0 %1199
    %v1202 = vadd.f32 %v1109, %v1200
    %v1203 = vtanh.pop %v1202
    %v1204 = vsub.f32 1.0, %v1191
    %1206 = vrot.lane.b32.xlu0 %v1203, 96
    %v1207 = vpop.permute.xlu0 %1206
    %v1209 = vmul.f32 %v1204, %v1207
    %v1210 = vmul.f32 %v1191, %v1108
    %v1211 = vadd.f32 %v1209, %v1210
    %v1212 = vld [vmem:[#allocation2 + $0xa] sm:$0x3]
    %1214 = vrot.lane.b32.xlu0 %v1211, 96
    %v1215 = vpop.permute.xlu0 %1214
    %v1216 = vsel %vm322, %v1215, 0
    %1218 = vmatprep.subr.mxu0 0.0
    %1219 = vmatpush1.msra.mxu0 %v678
    %1220 = vmatprep.subr.mxu0 0.0
    %1221 = vmatpush1.msra.mxu0 %v679
    %1222 = vmatprep.subr.mxu0 0.0
    %1223 = vmatpush1.msra.mxu0 %v680
    %1224 = vmatprep.subr.mxu0 0.0
    %1225 = vmatpush1.msra.mxu0 %v681
    %1226 = vmatprep.subr.mxu0 0.0
    %1227 = vmatpush1.msra.mxu0 0.0
    %1228 = vmatprep.subr.mxu0 0.0
    %1229 = vmatpush1.msra.mxu0 0.0
    %1230 = vmatprep.subr.mxu0 0.0
    %1231 = vmatpush1.msra.mxu0 0.0
    %1232 = vmatprep.subr.mxu0 0.0
    %1233 = vmatpush1.msra.mxu0 0.0
    %1234 = vmatprep.subr.mxu0 0.0
    %1235 = vmatpush1.msra.mxu0 0.0
    %1236 = vmatprep.subr.mxu0 0.0
    %1237 = vmatpush1.msra.mxu0 0.0
    %1238 = vmatprep.subr.mxu0 0.0
    %1239 = vmatpush1.msra.mxu0 0.0
    %1240 = vmatprep.subr.mxu0 0.0
    %1241 = vmatpush1.msra.mxu0 0.0
    %1242 = vmatprep.subr.mxu0 0.0
    %1243 = vmatpush1.msra.mxu0 0.0
    %1244 = vmatprep.subr.mxu0 0.0
    %1245 = vmatpush1.msra.mxu0 0.0
    %1246 = vmatprep.subr.mxu0 0.0
    %1247 = vmatpush1.msra.mxu0 0.0
    %1248 = vmatprep.subr.mxu0 0.0
    %1249 = vmatpush1.msra.mxu0 0.0
    %1250 = vmatprep.subr.mxu0 0.0
    %1251 = vmatpush1.msra.mxu0 0.0
    %1252 = vmatprep.subr.mxu0 0.0
    %1253 = vmatpush1.msra.mxu0 0.0
    %1254 = vmatprep.subr.mxu0 0.0
    %1255 = vmatpush1.msra.mxu0 0.0
    %1256 = vmatprep.subr.mxu0 0.0
    %1257 = vmatpush1.msra.mxu0 0.0
    %1258 = vmatprep.subr.mxu0 0.0
    %1259 = vmatpush1.msra.mxu0 0.0
    %1260 = vmatprep.subr.mxu0 0.0
    %1261 = vmatpush1.msra.mxu0 0.0
    %1262 = vmatprep.subr.mxu0 0.0
    %1263 = vmatpush1.msra.mxu0 0.0
    %1264 = vmatprep.subr.mxu0 0.0
    %1265 = vmatpush1.msra.mxu0 0.0
    %1266 = vmatprep.subr.mxu0 0.0
    %1267 = vmatpush1.msra.mxu0 0.0
    %1268 = vmatprep.subr.mxu0 0.0
    %1269 = vmatpush1.msra.mxu0 0.0
    %1270 = vmatprep.subr.mxu0 0.0
    %1271 = vmatpush1.msra.mxu0 0.0
    %1272 = vmatprep.subr.mxu0 0.0
    %1273 = vmatpush1.msra.mxu0 0.0
    %1274 = vmatprep.subr.mxu0 0.0
    %1275 = vmatpush1.msra.mxu0 0.0
    %1276 = vmatprep.subr.mxu0 0.0
    %1277 = vmatpush1.msra.mxu0 0.0
    %1278 = vmatprep.subr.mxu0 0.0
    %1279 = vmatpush1.msra.mxu0 0.0
    %1280 = vmatprep.subr.mxu0 0.0
    %1281 = vmatpush1.msra.mxu0 0.0
    %1282 = vmatprep.mubr.f32.mxu0 0.0
    %1283 = vmatmul.mubr.f32.gmra.mrb[0].mxu0 %v1216
    %v1284 = vpop.f32.mrb[0].mxu0
    %v1285 = vadd.f32 0.0, %v1284
    %v1286 = vpop.f32.mrb[0].mxu0
    %1287 = vdwg.mxu0
    %v1288 = vadd.f32 %v1212, %v1285
    %v1289 = vxor.u32 %v1288, 2147483648
    %v1290 = vmul.f32 %v1289, 1.442695
    %v1291 = vpow.pop %v1290
    %v1292 = vadd.f32 %v1291, 1.0
    %v1293 = vrcp.pop %v1292
    %v1294 = vmul.f32 1.0, %v1293
    %v1295 = vadd.f32 %v1285, %v778
    %1297 = vrot.lane.b32.xlu0 %v1295, 64
    %v1298 = vpop.permute.xlu0 %1297
    %v1300 = vmul.f32 %v1294, %v1298
    %1302 = vrot.lane.b32.xlu0 %v1300, 64
    %v1303 = vpop.permute.xlu0 %1302
    %v1305 = vadd.f32 %v1212, %v1303
    %v1306 = vtanh.pop %v1305
    %v1307 = vsub.f32 1.0, %v1294
    %1309 = vrot.lane.b32.xlu0 %v1306, 96
    %v1310 = vpop.permute.xlu0 %1309
    %v1312 = vmul.f32 %v1307, %v1310
    %v1313 = vmul.f32 %v1294, %v1211
    %v1314 = vadd.f32 %v1312, %v1313
    %v1315 = vld [vmem:[#allocation2 + $0xc] sm:$0x3]
    %1317 = vrot.lane.b32.xlu0 %v1314, 96
    %v1318 = vpop.permute.xlu0 %1317
    %v1319 = vsel %vm322, %v1318, 0
    %1321 = vmatprep.subr.mxu0 0.0
    %1322 = vmatpush1.msra.mxu0 %v678
    %1323 = vmatprep.subr.mxu0 0.0
    %1324 = vmatpush1.msra.mxu0 %v679
    %1325 = vmatprep.subr.mxu0 0.0
    %1326 = vmatpush1.msra.mxu0 %v680
    %1327 = vmatprep.subr.mxu0 0.0
    %1328 = vmatpush1.msra.mxu0 %v681
    %1329 = vmatprep.subr.mxu0 0.0
    %1330 = vmatpush1.msra.mxu0 0.0
    %1331 = vmatprep.subr.mxu0 0.0
    %1332 = vmatpush1.msra.mxu0 0.0
    %1333 = vmatprep.subr.mxu0 0.0
    %1334 = vmatpush1.msra.mxu0 0.0
    %1335 = vmatprep.subr.mxu0 0.0
    %1336 = vmatpush1.msra.mxu0 0.0
    %1337 = vmatprep.subr.mxu0 0.0
    %1338 = vmatpush1.msra.mxu0 0.0
    %1339 = vmatprep.subr.mxu0 0.0
    %1340 = vmatpush1.msra.mxu0 0.0
    %1341 = vmatprep.subr.mxu0 0.0
    %1342 = vmatpush1.msra.mxu0 0.0
    %1343 = vmatprep.subr.mxu0 0.0
    %1344 = vmatpush1.msra.mxu0 0.0
    %1345 = vmatprep.subr.mxu0 0.0
    %1346 = vmatpush1.msra.mxu0 0.0
    %1347 = vmatprep.subr.mxu0 0.0
    %1348 = vmatpush1.msra.mxu0 0.0
    %1349 = vmatprep.subr.mxu0 0.0
    %1350 = vmatpush1.msra.mxu0 0.0
    %1351 = vmatprep.subr.mxu0 0.0
    %1352 = vmatpush1.msra.mxu0 0.0
    %1353 = vmatprep.subr.mxu0 0.0
    %1354 = vmatpush1.msra.mxu0 0.0
    %1355 = vmatprep.subr.mxu0 0.0
    %1356 = vmatpush1.msra.mxu0 0.0
    %1357 = vmatprep.subr.mxu0 0.0
    %1358 = vmatpush1.msra.mxu0 0.0
    %1359 = vmatprep.subr.mxu0 0.0
    %1360 = vmatpush1.msra.mxu0 0.0
    %1361 = vmatprep.subr.mxu0 0.0
    %1362 = vmatpush1.msra.mxu0 0.0
    %1363 = vmatprep.subr.mxu0 0.0
    %1364 = vmatpush1.msra.mxu0 0.0
    %1365 = vmatprep.subr.mxu0 0.0
    %1366 = vmatpush1.msra.mxu0 0.0
    %1367 = vmatprep.subr.mxu0 0.0
    %1368 = vmatpush1.msra.mxu0 0.0
    %1369 = vmatprep.subr.mxu0 0.0
    %1370 = vmatpush1.msra.mxu0 0.0
    %1371 = vmatprep.subr.mxu0 0.0
    %1372 = vmatpush1.msra.mxu0 0.0
    %1373 = vmatprep.subr.mxu0 0.0
    %1374 = vmatpush1.msra.mxu0 0.0
    %1375 = vmatprep.subr.mxu0 0.0
    %1376 = vmatpush1.msra.mxu0 0.0
    %1377 = vmatprep.subr.mxu0 0.0
    %1378 = vmatpush1.msra.mxu0 0.0
    %1379 = vmatprep.subr.mxu0 0.0
    %1380 = vmatpush1.msra.mxu0 0.0
    %1381 = vmatprep.subr.mxu0 0.0
    %1382 = vmatpush1.msra.mxu0 0.0
    %1383 = vmatprep.subr.mxu0 0.0
    %1384 = vmatpush1.msra.mxu0 0.0
    %1385 = vmatprep.mubr.f32.mxu0 0.0
    %1386 = vmatmul.mubr.f32.gmra.mrb[0].mxu0 %v1319
    %v1387 = vpop.f32.mrb[0].mxu0
    %v1388 = vadd.f32 0.0, %v1387
    %v1389 = vpop.f32.mrb[0].mxu0
    %1390 = vdwg.mxu0
    %v1391 = vadd.f32 %v1315, %v1388
    %v1392 = vxor.u32 %v1391, 2147483648
    %v1393 = vmul.f32 %v1392, 1.442695
    %v1394 = vpow.pop %v1393
    %v1395 = vadd.f32 %v1394, 1.0
    %v1396 = vrcp.pop %v1395
    %v1397 = vmul.f32 1.0, %v1396
    %v1398 = vadd.f32 %v1388, %v778
    %1400 = vrot.lane.b32.xlu0 %v1398, 64
    %v1401 = vpop.permute.xlu0 %1400
    %v1403 = vmul.f32 %v1397, %v1401
    %1405 = vrot.lane.b32.xlu0 %v1403, 64
    %v1406 = vpop.permute.xlu0 %1405
    %v1408 = vadd.f32 %v1315, %v1406
    %v1409 = vtanh.pop %v1408
    %v1410 = vsub.f32 1.0, %v1397
    %1412 = vrot.lane.b32.xlu0 %v1409, 96
    %v1413 = vpop.permute.xlu0 %1412
    %v1415 = vmul.f32 %v1410, %v1413
    %v1416 = vmul.f32 %v1397, %v1314
    %v1417 = vadd.f32 %v1415, %v1416
    %v1418 = vld [vmem:[#allocation2 + $0xe] sm:$0x3]
    %1420 = vrot.lane.b32.xlu0 %v1417, 96
    %v1421 = vpop.permute.xlu0 %1420
    %v1422 = vsel %vm322, %v1421, 0
    %1424 = vmatprep.subr.mxu0 0.0
    %1425 = vmatpush1.msra.mxu0 %v678
    %1426 = vmatprep.subr.mxu0 0.0
    %1427 = vmatpush1.msra.mxu0 %v679
    %1428 = vmatprep.subr.mxu0 0.0
    %1429 = vmatpush1.msra.mxu0 %v680
    %1430 = vmatprep.subr.mxu0 0.0
    %1431 = vmatpush1.msra.mxu0 %v681
    %1432 = vmatprep.subr.mxu0 0.0
    %1433 = vmatpush1.msra.mxu0 0.0
    %1434 = vmatprep.subr.mxu0 0.0
    %1435 = vmatpush1.msra.mxu0 0.0
    %1436 = vmatprep.subr.mxu0 0.0
    %1437 = vmatpush1.msra.mxu0 0.0
    %1438 = vmatprep.subr.mxu0 0.0
    %1439 = vmatpush1.msra.mxu0 0.0
    %1440 = vmatprep.subr.mxu0 0.0
    %1441 = vmatpush1.msra.mxu0 0.0
    %1442 = vmatprep.subr.mxu0 0.0
    %1443 = vmatpush1.msra.mxu0 0.0
    %1444 = vmatprep.subr.mxu0 0.0
    %1445 = vmatpush1.msra.mxu0 0.0
    %1446 = vmatprep.subr.mxu0 0.0
    %1447 = vmatpush1.msra.mxu0 0.0
    %1448 = vmatprep.subr.mxu0 0.0
    %1449 = vmatpush1.msra.mxu0 0.0
    %1450 = vmatprep.subr.mxu0 0.0
    %1451 = vmatpush1.msra.mxu0 0.0
    %1452 = vmatprep.subr.mxu0 0.0
    %1453 = vmatpush1.msra.mxu0 0.0
    %1454 = vmatprep.subr.mxu0 0.0
    %1455 = vmatpush1.msra.mxu0 0.0
    %1456 = vmatprep.subr.mxu0 0.0
    %1457 = vmatpush1.msra.mxu0 0.0
    %1458 = vmatprep.subr.mxu0 0.0
    %1459 = vmatpush1.msra.mxu0 0.0
    %1460 = vmatprep.subr.mxu0 0.0
    %1461 = vmatpush1.msra.mxu0 0.0
    %1462 = vmatprep.subr.mxu0 0.0
    %1463 = vmatpush1.msra.mxu0 0.0
    %1464 = vmatprep.subr.mxu0 0.0
    %1465 = vmatpush1.msra.mxu0 0.0
    %1466 = vmatprep.subr.mxu0 0.0
    %1467 = vmatpush1.msra.mxu0 0.0
    %1468 = vmatprep.subr.mxu0 0.0
    %1469 = vmatpush1.msra.mxu0 0.0
    %1470 = vmatprep.subr.mxu0 0.0
    %1471 = vmatpush1.msra.mxu0 0.0
    %1472 = vmatprep.subr.mxu0 0.0
    %1473 = vmatpush1.msra.mxu0 0.0
    %1474 = vmatprep.subr.mxu0 0.0
    %1475 = vmatpush1.msra.mxu0 0.0
    %1476 = vmatprep.subr.mxu0 0.0
    %1477 = vmatpush1.msra.mxu0 0.0
    %1478 = vmatprep.subr.mxu0 0.0
    %1479 = vmatpush1.msra.mxu0 0.0
    %1480 = vmatprep.subr.mxu0 0.0
    %1481 = vmatpush1.msra.mxu0 0.0
    %1482 = vmatprep.subr.mxu0 0.0
    %1483 = vmatpush1.msra.mxu0 0.0
    %1484 = vmatprep.subr.mxu0 0.0
    %1485 = vmatpush1.msra.mxu0 0.0
    %1486 = vmatprep.subr.mxu0 0.0
    %1487 = vmatpush1.msra.mxu0 0.0
    %1488 = vmatprep.mubr.f32.mxu0 0.0
    %1489 = vmatmul.mubr.f32.gmra.mrb[0].mxu0 %v1422
    %v1490 = vpop.f32.mrb[0].mxu0
    %v1491 = vadd.f32 0.0, %v1490
    %v1492 = vpop.f32.mrb[0].mxu0
    %1493 = vdwg.mxu0
    %v1494 = vadd.f32 %v1418, %v1491
    %v1495 = vxor.u32 %v1494, 2147483648
    %v1496 = vmul.f32 %v1495, 1.442695
    %v1497 = vpow.pop %v1496
    %v1498 = vadd.f32 %v1497, 1.0
    %v1499 = vrcp.pop %v1498
    %v1500 = vmul.f32 1.0, %v1499
    %v1501 = vadd.f32 %v1491, %v778
    %1503 = vrot.lane.b32.xlu0 %v1501, 64
    %v1504 = vpop.permute.xlu0 %1503
    %v1506 = vmul.f32 %v1500, %v1504
    %1508 = vrot.lane.b32.xlu0 %v1506, 64
    %v1509 = vpop.permute.xlu0 %1508
    %v1511 = vadd.f32 %v1418, %v1509
    %v1512 = vtanh.pop %v1511
    %v1513 = vsub.f32 1.0, %v1500
    %1515 = vrot.lane.b32.xlu0 %v1512, 96
    %v1516 = vpop.permute.xlu0 %1515
    %v1518 = vmul.f32 %v1513, %v1516
    %v1519 = vmul.f32 %v1500, %v1417
    %v1520 = vadd.f32 %v1518, %v1519
    %v1521 = vld [vmem:[#allocation2 + $0x10] sm:$0x3]
    %1523 = vrot.lane.b32.xlu0 %v1520, 96
    %v1524 = vpop.permute.xlu0 %1523
    %v1525 = vsel %vm322, %v1524, 0
    %1527 = vmatprep.subr.mxu0 0.0
    %1528 = vmatpush1.msra.mxu0 %v678
    %1529 = vmatprep.subr.mxu0 0.0
    %1530 = vmatpush1.msra.mxu0 %v679
    %1531 = vmatprep.subr.mxu0 0.0
    %1532 = vmatpush1.msra.mxu0 %v680
    %1533 = vmatprep.subr.mxu0 0.0
    %1534 = vmatpush1.msra.mxu0 %v681
    %1535 = vmatprep.subr.mxu0 0.0
    %1536 = vmatpush1.msra.mxu0 0.0
    %1537 = vmatprep.subr.mxu0 0.0
    %1538 = vmatpush1.msra.mxu0 0.0
    %1539 = vmatprep.subr.mxu0 0.0
    %1540 = vmatpush1.msra.mxu0 0.0
    %1541 = vmatprep.subr.mxu0 0.0
    %1542 = vmatpush1.msra.mxu0 0.0
    %1543 = vmatprep.subr.mxu0 0.0
    %1544 = vmatpush1.msra.mxu0 0.0
    %1545 = vmatprep.subr.mxu0 0.0
    %1546 = vmatpush1.msra.mxu0 0.0
    %1547 = vmatprep.subr.mxu0 0.0
    %1548 = vmatpush1.msra.mxu0 0.0
    %1549 = vmatprep.subr.mxu0 0.0
    %1550 = vmatpush1.msra.mxu0 0.0
    %1551 = vmatprep.subr.mxu0 0.0
    %1552 = vmatpush1.msra.mxu0 0.0
    %1553 = vmatprep.subr.mxu0 0.0
    %1554 = vmatpush1.msra.mxu0 0.0
    %1555 = vmatprep.subr.mxu0 0.0
    %1556 = vmatpush1.msra.mxu0 0.0
    %1557 = vmatprep.subr.mxu0 0.0
    %1558 = vmatpush1.msra.mxu0 0.0
    %1559 = vmatprep.subr.mxu0 0.0
    %1560 = vmatpush1.msra.mxu0 0.0
    %1561 = vmatprep.subr.mxu0 0.0
    %1562 = vmatpush1.msra.mxu0 0.0
    %1563 = vmatprep.subr.mxu0 0.0
    %1564 = vmatpush1.msra.mxu0 0.0
    %1565 = vmatprep.subr.mxu0 0.0
    %1566 = vmatpush1.msra.mxu0 0.0
    %1567 = vmatprep.subr.mxu0 0.0
    %1568 = vmatpush1.msra.mxu0 0.0
    %1569 = vmatprep.subr.mxu0 0.0
    %1570 = vmatpush1.msra.mxu0 0.0
    %1571 = vmatprep.subr.mxu0 0.0
    %1572 = vmatpush1.msra.mxu0 0.0
    %1573 = vmatprep.subr.mxu0 0.0
    %1574 = vmatpush1.msra.mxu0 0.0
    %1575 = vmatprep.subr.mxu0 0.0
    %1576 = vmatpush1.msra.mxu0 0.0
    %1577 = vmatprep.subr.mxu0 0.0
    %1578 = vmatpush1.msra.mxu0 0.0
    %1579 = vmatprep.subr.mxu0 0.0
    %1580 = vmatpush1.msra.mxu0 0.0
    %1581 = vmatprep.subr.mxu0 0.0
    %1582 = vmatpush1.msra.mxu0 0.0
    %1583 = vmatprep.subr.mxu0 0.0
    %1584 = vmatpush1.msra.mxu0 0.0
    %1585 = vmatprep.subr.mxu0 0.0
    %1586 = vmatpush1.msra.mxu0 0.0
    %1587 = vmatprep.subr.mxu0 0.0
    %1588 = vmatpush1.msra.mxu0 0.0
    %1589 = vmatprep.subr.mxu0 0.0
    %1590 = vmatpush1.msra.mxu0 0.0
    %1591 = vmatprep.mubr.f32.mxu0 0.0
    %1592 = vmatmul.mubr.f32.gmra.mrb[0].mxu0 %v1525
    %v1593 = vpop.f32.mrb[0].mxu0
    %v1594 = vadd.f32 0.0, %v1593
    %v1595 = vpop.f32.mrb[0].mxu0
    %1596 = vdwg.mxu0
    %v1597 = vadd.f32 %v1521, %v1594
    %v1598 = vxor.u32 %v1597, 2147483648
    %v1599 = vmul.f32 %v1598, 1.442695
    %v1600 = vpow.pop %v1599
    %v1601 = vadd.f32 %v1600, 1.0
    %v1602 = vrcp.pop %v1601
    %v1603 = vmul.f32 1.0, %v1602
    %v1604 = vadd.f32 %v1594, %v778
    %1606 = vrot.lane.b32.xlu0 %v1604, 64
    %v1607 = vpop.permute.xlu0 %1606
    %v1609 = vmul.f32 %v1603, %v1607
    %1611 = vrot.lane.b32.xlu0 %v1609, 64
    %v1612 = vpop.permute.xlu0 %1611
    %v1614 = vadd.f32 %v1521, %v1612
    %v1615 = vtanh.pop %v1614
    %v1616 = vsub.f32 1.0, %v1603
    %1618 = vrot.lane.b32.xlu0 %v1615, 96
    %v1619 = vpop.permute.xlu0 %1618
    %v1621 = vmul.f32 %v1616, %v1619
    %v1622 = vmul.f32 %v1603, %v1520
    %v1623 = vadd.f32 %v1621, %v1622
    %v1624 = vld [vmem:[#allocation2 + $0x12] sm:$0x3]
    %1626 = vrot.lane.b32.xlu0 %v1623, 96
    %v1627 = vpop.permute.xlu0 %1626
    %v1628 = vsel %vm322, %v1627, 0
    %1630 = vmatprep.subr.mxu0 0.0
    %1631 = vmatpush1.msra.mxu0 %v678
    %1632 = vmatprep.subr.mxu0 0.0
    %1633 = vmatpush1.msra.mxu0 %v679
    %1634 = vmatprep.subr.mxu0 0.0
    %1635 = vmatpush1.msra.mxu0 %v680
    %1636 = vmatprep.subr.mxu0 0.0
    %1637 = vmatpush1.msra.mxu0 %v681
    %1638 = vmatprep.subr.mxu0 0.0
    %1639 = vmatpush1.msra.mxu0 0.0
    %1640 = vmatprep.subr.mxu0 0.0
    %1641 = vmatpush1.msra.mxu0 0.0
    %1642 = vmatprep.subr.mxu0 0.0
    %1643 = vmatpush1.msra.mxu0 0.0
    %1644 = vmatprep.subr.mxu0 0.0
    %1645 = vmatpush1.msra.mxu0 0.0
    %1646 = vmatprep.subr.mxu0 0.0
    %1647 = vmatpush1.msra.mxu0 0.0
    %1648 = vmatprep.subr.mxu0 0.0
    %1649 = vmatpush1.msra.mxu0 0.0
    %1650 = vmatprep.subr.mxu0 0.0
    %1651 = vmatpush1.msra.mxu0 0.0
    %1652 = vmatprep.subr.mxu0 0.0
    %1653 = vmatpush1.msra.mxu0 0.0
    %1654 = vmatprep.subr.mxu0 0.0
    %1655 = vmatpush1.msra.mxu0 0.0
    %1656 = vmatprep.subr.mxu0 0.0
    %1657 = vmatpush1.msra.mxu0 0.0
    %1658 = vmatprep.subr.mxu0 0.0
    %1659 = vmatpush1.msra.mxu0 0.0
    %1660 = vmatprep.subr.mxu0 0.0
    %1661 = vmatpush1.msra.mxu0 0.0
    %1662 = vmatprep.subr.mxu0 0.0
    %1663 = vmatpush1.msra.mxu0 0.0
    %1664 = vmatprep.subr.mxu0 0.0
    %1665 = vmatpush1.msra.mxu0 0.0
    %1666 = vmatprep.subr.mxu0 0.0
    %1667 = vmatpush1.msra.mxu0 0.0
    %1668 = vmatprep.subr.mxu0 0.0
    %1669 = vmatpush1.msra.mxu0 0.0
    %1670 = vmatprep.subr.mxu0 0.0
    %1671 = vmatpush1.msra.mxu0 0.0
    %1672 = vmatprep.subr.mxu0 0.0
    %1673 = vmatpush1.msra.mxu0 0.0
    %1674 = vmatprep.subr.mxu0 0.0
    %1675 = vmatpush1.msra.mxu0 0.0
    %1676 = vmatprep.subr.mxu0 0.0
    %1677 = vmatpush1.msra.mxu0 0.0
    %1678 = vmatprep.subr.mxu0 0.0
    %1679 = vmatpush1.msra.mxu0 0.0
    %1680 = vmatprep.subr.mxu0 0.0
    %1681 = vmatpush1.msra.mxu0 0.0
    %1682 = vmatprep.subr.mxu0 0.0
    %1683 = vmatpush1.msra.mxu0 0.0
    %1684 = vmatprep.subr.mxu0 0.0
    %1685 = vmatpush1.msra.mxu0 0.0
    %1686 = vmatprep.subr.mxu0 0.0
    %1687 = vmatpush1.msra.mxu0 0.0
    %1688 = vmatprep.subr.mxu0 0.0
    %1689 = vmatpush1.msra.mxu0 0.0
    %1690 = vmatprep.subr.mxu0 0.0
    %1691 = vmatpush1.msra.mxu0 0.0
    %1692 = vmatprep.subr.mxu0 0.0
    %1693 = vmatpush1.msra.mxu0 0.0
    %1694 = vmatprep.mubr.f32.mxu0 0.0
    %1695 = vmatmul.mubr.f32.gmra.mrb[0].mxu0 %v1628
    %v1696 = vpop.f32.mrb[0].mxu0
    %v1697 = vadd.f32 0.0, %v1696
    %v1698 = vpop.f32.mrb[0].mxu0
    %1699 = vdwg.mxu0
    %v1700 = vadd.f32 %v1624, %v1697
    %v1701 = vxor.u32 %v1700, 2147483648
    %v1702 = vmul.f32 %v1701, 1.442695
    %v1703 = vpow.pop %v1702
    %v1704 = vadd.f32 %v1703, 1.0
    %v1705 = vrcp.pop %v1704
    %v1706 = vmul.f32 1.0, %v1705
    %v1707 = vadd.f32 %v1697, %v778
    %1709 = vrot.lane.b32.xlu0 %v1707, 64
    %v1710 = vpop.permute.xlu0 %1709
    %v1712 = vmul.f32 %v1706, %v1710
    %1714 = vrot.lane.b32.xlu0 %v1712, 64
    %v1715 = vpop.permute.xlu0 %1714
    %v1717 = vadd.f32 %v1624, %v1715
    %v1718 = vtanh.pop %v1717
    %v1719 = vsub.f32 1.0, %v1706
    %1721 = vrot.lane.b32.xlu0 %v1718, 96
    %v1722 = vpop.permute.xlu0 %1721
    %v1724 = vmul.f32 %v1719, %v1722
    %v1725 = vmul.f32 %v1706, %v1623
    %v1726 = vadd.f32 %v1724, %v1725
    %v1727 = vld [vmem:[#allocation2 + $0x14] sm:$0x3]
    %1729 = vrot.lane.b32.xlu0 %v1726, 96
    %v1730 = vpop.permute.xlu0 %1729
    %v1731 = vsel %vm322, %v1730, 0
    %1733 = vmatprep.subr.mxu0 0.0
    %1734 = vmatpush1.msra.mxu0 %v678
    %1735 = vmatprep.subr.mxu0 0.0
    %1736 = vmatpush1.msra.mxu0 %v679
    %1737 = vmatprep.subr.mxu0 0.0
    %1738 = vmatpush1.msra.mxu0 %v680
    %1739 = vmatprep.subr.mxu0 0.0
    %1740 = vmatpush1.msra.mxu0 %v681
    %1741 = vmatprep.subr.mxu0 0.0
    %1742 = vmatpush1.msra.mxu0 0.0
    %1743 = vmatprep.subr.mxu0 0.0
    %1744 = vmatpush1.msra.mxu0 0.0
    %1745 = vmatprep.subr.mxu0 0.0
    %1746 = vmatpush1.msra.mxu0 0.0
    %1747 = vmatprep.subr.mxu0 0.0
    %1748 = vmatpush1.msra.mxu0 0.0
    %1749 = vmatprep.subr.mxu0 0.0
    %1750 = vmatpush1.msra.mxu0 0.0
    %1751 = vmatprep.subr.mxu0 0.0
    %1752 = vmatpush1.msra.mxu0 0.0
    %1753 = vmatprep.subr.mxu0 0.0
    %1754 = vmatpush1.msra.mxu0 0.0
    %1755 = vmatprep.subr.mxu0 0.0
    %1756 = vmatpush1.msra.mxu0 0.0
    %1757 = vmatprep.subr.mxu0 0.0
    %1758 = vmatpush1.msra.mxu0 0.0
    %1759 = vmatprep.subr.mxu0 0.0
    %1760 = vmatpush1.msra.mxu0 0.0
    %1761 = vmatprep.subr.mxu0 0.0
    %1762 = vmatpush1.msra.mxu0 0.0
    %1763 = vmatprep.subr.mxu0 0.0
    %1764 = vmatpush1.msra.mxu0 0.0
    %1765 = vmatprep.subr.mxu0 0.0
    %1766 = vmatpush1.msra.mxu0 0.0
    %1767 = vmatprep.subr.mxu0 0.0
    %1768 = vmatpush1.msra.mxu0 0.0
    %1769 = vmatprep.subr.mxu0 0.0
    %1770 = vmatpush1.msra.mxu0 0.0
    %1771 = vmatprep.subr.mxu0 0.0
    %1772 = vmatpush1.msra.mxu0 0.0
    %1773 = vmatprep.subr.mxu0 0.0
    %1774 = vmatpush1.msra.mxu0 0.0
    %1775 = vmatprep.subr.mxu0 0.0
    %1776 = vmatpush1.msra.mxu0 0.0
    %1777 = vmatprep.subr.mxu0 0.0
    %1778 = vmatpush1.msra.mxu0 0.0
    %1779 = vmatprep.subr.mxu0 0.0
    %1780 = vmatpush1.msra.mxu0 0.0
    %1781 = vmatprep.subr.mxu0 0.0
    %1782 = vmatpush1.msra.mxu0 0.0
    %1783 = vmatprep.subr.mxu0 0.0
    %1784 = vmatpush1.msra.mxu0 0.0
    %1785 = vmatprep.subr.mxu0 0.0
    %1786 = vmatpush1.msra.mxu0 0.0
    %1787 = vmatprep.subr.mxu0 0.0
    %1788 = vmatpush1.msra.mxu0 0.0
    %1789 = vmatprep.subr.mxu0 0.0
    %1790 = vmatpush1.msra.mxu0 0.0
    %1791 = vmatprep.subr.mxu0 0.0
    %1792 = vmatpush1.msra.mxu0 0.0
    %1793 = vmatprep.subr.mxu0 0.0
    %1794 = vmatpush1.msra.mxu0 0.0
    %1795 = vmatprep.subr.mxu0 0.0
    %1796 = vmatpush1.msra.mxu0 0.0
    %1797 = vmatprep.mubr.f32.mxu0 0.0
    %1798 = vmatmul.mubr.f32.gmra.mrb[0].mxu0 %v1731
    %v1799 = vpop.f32.mrb[0].mxu0
    %v1800 = vadd.f32 0.0, %v1799
    %v1801 = vpop.f32.mrb[0].mxu0
    %1802 = vdwg.mxu0
    %v1803 = vadd.f32 %v1727, %v1800
    %v1804 = vxor.u32 %v1803, 2147483648
    %v1805 = vmul.f32 %v1804, 1.442695
    %v1806 = vpow.pop %v1805
    %v1807 = vadd.f32 %v1806, 1.0
    %v1808 = vrcp.pop %v1807
    %v1809 = vmul.f32 1.0, %v1808
    %v1810 = vadd.f32 %v1800, %v778
    %1812 = vrot.lane.b32.xlu0 %v1810, 64
    %v1813 = vpop.permute.xlu0 %1812
    %v1815 = vmul.f32 %v1809, %v1813
    %1817 = vrot.lane.b32.xlu0 %v1815, 64
    %v1818 = vpop.permute.xlu0 %1817
    %v1820 = vadd.f32 %v1727, %v1818
    %v1821 = vtanh.pop %v1820
    %v1822 = vsub.f32 1.0, %v1809
    %1824 = vrot.lane.b32.xlu0 %v1821, 96
    %v1825 = vpop.permute.xlu0 %1824
    %v1827 = vmul.f32 %v1822, %v1825
    %v1828 = vmul.f32 %v1809, %v1726
    %v1829 = vadd.f32 %v1827, %v1828
    %v1830 = vld [vmem:[#allocation2 + $0x16] sm:$0x3]
    %1832 = vrot.lane.b32.xlu0 %v1829, 96
    %v1833 = vpop.permute.xlu0 %1832
    %v1834 = vsel %vm322, %v1833, 0
    %1836 = vmatprep.subr.mxu0 0.0
    %1837 = vmatpush1.msra.mxu0 %v678
    %1838 = vmatprep.subr.mxu0 0.0
    %1839 = vmatpush1.msra.mxu0 %v679
    %1840 = vmatprep.subr.mxu0 0.0
    %1841 = vmatpush1.msra.mxu0 %v680
    %1842 = vmatprep.subr.mxu0 0.0
    %1843 = vmatpush1.msra.mxu0 %v681
    %1844 = vmatprep.subr.mxu0 0.0
    %1845 = vmatpush1.msra.mxu0 0.0
    %1846 = vmatprep.subr.mxu0 0.0
    %1847 = vmatpush1.msra.mxu0 0.0
    %1848 = vmatprep.subr.mxu0 0.0
    %1849 = vmatpush1.msra.mxu0 0.0
    %1850 = vmatprep.subr.mxu0 0.0
    %1851 = vmatpush1.msra.mxu0 0.0
    %1852 = vmatprep.subr.mxu0 0.0
    %1853 = vmatpush1.msra.mxu0 0.0
    %1854 = vmatprep.subr.mxu0 0.0
    %1855 = vmatpush1.msra.mxu0 0.0
    %1856 = vmatprep.subr.mxu0 0.0
    %1857 = vmatpush1.msra.mxu0 0.0
    %1858 = vmatprep.subr.mxu0 0.0
    %1859 = vmatpush1.msra.mxu0 0.0
    %1860 = vmatprep.subr.mxu0 0.0
    %1861 = vmatpush1.msra.mxu0 0.0
    %1862 = vmatprep.subr.mxu0 0.0
    %1863 = vmatpush1.msra.mxu0 0.0
    %1864 = vmatprep.subr.mxu0 0.0
    %1865 = vmatpush1.msra.mxu0 0.0
    %1866 = vmatprep.subr.mxu0 0.0
    %1867 = vmatpush1.msra.mxu0 0.0
    %1868 = vmatprep.subr.mxu0 0.0
    %1869 = vmatpush1.msra.mxu0 0.0
    %1870 = vmatprep.subr.mxu0 0.0
    %1871 = vmatpush1.msra.mxu0 0.0
    %1872 = vmatprep.subr.mxu0 0.0
    %1873 = vmatpush1.msra.mxu0 0.0
    %1874 = vmatprep.subr.mxu0 0.0
    %1875 = vmatpush1.msra.mxu0 0.0
    %1876 = vmatprep.subr.mxu0 0.0
    %1877 = vmatpush1.msra.mxu0 0.0
    %1878 = vmatprep.subr.mxu0 0.0
    %1879 = vmatpush1.msra.mxu0 0.0
    %1880 = vmatprep.subr.mxu0 0.0
    %1881 = vmatpush1.msra.mxu0 0.0
    %1882 = vmatprep.subr.mxu0 0.0
    %1883 = vmatpush1.msra.mxu0 0.0
    %1884 = vmatprep.subr.mxu0 0.0
    %1885 = vmatpush1.msra.mxu0 0.0
    %1886 = vmatprep.subr.mxu0 0.0
    %1887 = vmatpush1.msra.mxu0 0.0
    %1888 = vmatprep.subr.mxu0 0.0
    %1889 = vmatpush1.msra.mxu0 0.0
    %1890 = vmatprep.subr.mxu0 0.0
    %1891 = vmatpush1.msra.mxu0 0.0
    %1892 = vmatprep.subr.mxu0 0.0
    %1893 = vmatpush1.msra.mxu0 0.0
    %1894 = vmatprep.subr.mxu0 0.0
    %1895 = vmatpush1.msra.mxu0 0.0
    %1896 = vmatprep.subr.mxu0 0.0
    %1897 = vmatpush1.msra.mxu0 0.0
    %1898 = vmatprep.subr.mxu0 0.0
    %1899 = vmatpush1.msra.mxu0 0.0
    %1900 = vmatprep.mubr.f32.mxu0 0.0
    %1901 = vmatmul.mubr.f32.gmra.mrb[0].mxu0 %v1834
    %v1902 = vpop.f32.mrb[0].mxu0
    %v1903 = vadd.f32 0.0, %v1902
    %v1904 = vpop.f32.mrb[0].mxu0
    %1905 = vdwg.mxu0
    %v1906 = vadd.f32 %v1830, %v1903
    %v1907 = vxor.u32 %v1906, 2147483648
    %v1908 = vmul.f32 %v1907, 1.442695
    %v1909 = vpow.pop %v1908
    %v1910 = vadd.f32 %v1909, 1.0
    %v1911 = vrcp.pop %v1910
    %v1912 = vmul.f32 1.0, %v1911
    %v1913 = vadd.f32 %v1903, %v778
    %1915 = vrot.lane.b32.xlu0 %v1913, 64
    %v1916 = vpop.permute.xlu0 %1915
    %v1918 = vmul.f32 %v1912, %v1916
    %1920 = vrot.lane.b32.xlu0 %v1918, 64
    %v1921 = vpop.permute.xlu0 %1920
    %v1923 = vadd.f32 %v1830, %v1921
    %v1924 = vtanh.pop %v1923
    %v1925 = vsub.f32 1.0, %v1912
    %1927 = vrot.lane.b32.xlu0 %v1924, 96
    %v1928 = vpop.permute.xlu0 %1927
    %v1930 = vmul.f32 %v1925, %v1928
    %v1931 = vmul.f32 %v1912, %v1829
    %v1932 = vadd.f32 %v1930, %v1931
    %v1933 = vld [vmem:[#allocation3 + $0xa] sm:$0xff]
    %v1934 = vld [vmem:[#allocation3 + $0x12] sm:$0x3f]
    %vm1935 = vcmask 130048
    %v1936 = vsel %vm1935, 0.0, 0
    %1938 = vmatprep.subr.mxu0 0.0
    %1939 = vmatpush1.msra.mxu0 %v682
    %1940 = vmatprep.subr.mxu0 0.0
    %1941 = vmatpush1.msra.mxu0 %v683
    %1942 = vmatprep.subr.mxu0 0.0
    %1943 = vmatpush1.msra.mxu0 0.0
    %1944 = vmatprep.subr.mxu0 0.0
    %1945 = vmatpush1.msra.mxu0 0.0
    %1946 = vmatprep.subr.mxu0 0.0
    %1947 = vmatpush1.msra.mxu0 0.0
    %1948 = vmatprep.subr.mxu0 0.0
    %1949 = vmatpush1.msra.mxu0 0.0
    %1950 = vmatprep.subr.mxu0 0.0
    %1951 = vmatpush1.msra.mxu0 0.0
    %1952 = vmatprep.subr.mxu0 0.0
    %1953 = vmatpush1.msra.mxu0 0.0
    %1954 = vmatprep.subr.mxu0 0.0
    %1955 = vmatpush1.msra.mxu0 0.0
    %1956 = vmatprep.subr.mxu0 0.0
    %1957 = vmatpush1.msra.mxu0 0.0
    %1958 = vmatprep.subr.mxu0 0.0
    %1959 = vmatpush1.msra.mxu0 0.0
    %1960 = vmatprep.subr.mxu0 0.0
    %1961 = vmatpush1.msra.mxu0 0.0
    %1962 = vmatprep.subr.mxu0 0.0
    %1963 = vmatpush1.msra.mxu0 0.0
    %1964 = vmatprep.subr.mxu0 0.0
    %1965 = vmatpush1.msra.mxu0 0.0
    %1966 = vmatprep.subr.mxu0 0.0
    %1967 = vmatpush1.msra.mxu0 0.0
    %1968 = vmatprep.subr.mxu0 0.0
    %1969 = vmatpush1.msra.mxu0 0.0
    %1970 = vmatprep.subr.mxu0 0.0
    %1971 = vmatpush1.msra.mxu0 0.0
    %1972 = vmatprep.subr.mxu0 0.0
    %1973 = vmatpush1.msra.mxu0 0.0
    %1974 = vmatprep.subr.mxu0 0.0
    %1975 = vmatpush1.msra.mxu0 0.0
    %1976 = vmatprep.subr.mxu0 0.0
    %1977 = vmatpush1.msra.mxu0 0.0
    %1978 = vmatprep.subr.mxu0 0.0
    %1979 = vmatpush1.msra.mxu0 0.0
    %1980 = vmatprep.subr.mxu0 0.0
    %1981 = vmatpush1.msra.mxu0 0.0
    %1982 = vmatprep.subr.mxu0 0.0
    %1983 = vmatpush1.msra.mxu0 0.0
    %1984 = vmatprep.subr.mxu0 0.0
    %1985 = vmatpush1.msra.mxu0 0.0
    %1986 = vmatprep.subr.mxu0 0.0
    %1987 = vmatpush1.msra.mxu0 0.0
    %1988 = vmatprep.subr.mxu0 0.0
    %1989 = vmatpush1.msra.mxu0 0.0
    %1990 = vmatprep.subr.mxu0 0.0
    %1991 = vmatpush1.msra.mxu0 0.0
    %1992 = vmatprep.subr.mxu0 0.0
    %1993 = vmatpush1.msra.mxu0 0.0
    %1994 = vmatprep.subr.mxu0 0.0
    %1995 = vmatpush1.msra.mxu0 0.0
    %1996 = vmatprep.subr.mxu0 0.0
    %1997 = vmatpush1.msra.mxu0 0.0
    %1998 = vmatprep.subr.mxu0 0.0
    %1999 = vmatpush1.msra.mxu0 0.0
    %2000 = vmatprep.subr.mxu0 0.0
    %2001 = vmatpush1.msra.mxu0 0.0
    %2002 = vmatprep.mubr.f32.mxu0 0.0
    %2003 = vmatmul.mubr.f32.gmra.mrb[0].mxu0 %v1936
    %v2004 = vpop.f32.mrb[0].mxu0
    %v2005 = vadd.f32 0.0, %v2004
    %v2006 = vpop.f32.mrb[0].mxu0
    %2007 = vmatprep.mubr.f32.mxu0 0.0
    %2008 = vmatmul.mubr.f32.gmra.mrb[0].mxu0 %v1936
    %v2009 = vpop.f32.mrb[0].mxu0
    %v2010 = vadd.f32 0.0, %v2009
    %v2011 = vpop.f32.mrb[0].mxu0
    %2012 = vdwg.mxu0
    %v2013 = vadd.f32 %v1933, %v2005
    %v2014 = vadd.f32 %v1934, %v2010
    %v2015 = vxor.u32 %v2013, 2147483648
    %v2016 = vxor.u32 %v2014, 2147483648
    %v2017 = vmul.f32 %v2015, 1.442695
    %v2018 = vpow.pop %v2017
    %v2019 = vmul.f32 %v2016, 1.442695
    %v2020 = vpow.pop %v2019
    %v2021 = vadd.f32 %v2018, 1.0
    %v2022 = vadd.f32 %v2020, 1.0
    %v2023 = vrcp.pop %v2021
    %v2024 = vmul.f32 1.0, %v2023
    %v2025 = vrcp.pop %v2022
    %v2026 = vmul.f32 1.0, %v2025
    %2027 = vrot.lane.b32.xlu0 %v695, 32
    %v2028 = vpop.permute.xlu0 %2027
    %v2030 = vadd.f32 %v2005, %v2028
    %v2031 = vadd.f32 %v2010, %v2028
    %2034 = vrot.lane.b32.xlu0 %v2030, 96
    %v2035 = vpop.permute.xlu0 %2034
    %2036 = vrot.lane.b32.xlu0 %v2031, 96
    %v2037 = vpop.permute.xlu0 %2036
    %v2040 = vmul.f32 %v2024, %v2035
    %v2041 = vmul.f32 %v2026, %v2037
    %2044 = vrot.lane.b32.xlu0 %v2040, 32
    %v2045 = vpop.permute.xlu0 %2044
    %2046 = vrot.lane.b32.xlu0 %v2041, 32
    %v2047 = vpop.permute.xlu0 %2046
    %v2050 = vadd.f32 %v1933, %v2045
    %v2051 = vadd.f32 %v1934, %v2047
    %v2052 = vtanh.pop %v2050
    %v2053 = vtanh.pop %v2051
    %v2054 = vsub.f32 1.0, %v2024
    %v2055 = vsub.f32 1.0, %v2026
    %2058 = vrot.lane.b32.xlu0 %v2052, 112
    %v2059 = vpop.permute.xlu0 %2058
    %2060 = vrot.lane.b32.xlu0 %v2053, 112
    %v2061 = vpop.permute.xlu0 %2060
    %v2064 = vmul.f32 %v2054, %v2059
    %v2065 = vmul.f32 %v2055, %v2061
    %v2066 = vmul.f32 %v2024, 0.0
    %v2067 = vmul.f32 %v2026, 0.0
    %v2068 = vadd.f32 %v2064, %v2066
    %v2069 = vadd.f32 %v2065, %v2067
    %v2070 = vld [vmem:[#allocation2 + $0x18] sm:$0x3]
    %2072 = vrot.lane.b32.xlu0 %v1932, 96
    %v2073 = vpop.permute.xlu0 %2072
    %v2074 = vsel %vm322, %v2073, 0
    %2076 = vmatprep.subr.mxu0 0.0
    %2077 = vmatpush1.msra.mxu0 %v678
    %2078 = vmatprep.subr.mxu0 0.0
    %2079 = vmatpush1.msra.mxu0 %v679
    %2080 = vmatprep.subr.mxu0 0.0
    %2081 = vmatpush1.msra.mxu0 %v680
    %2082 = vmatprep.subr.mxu0 0.0
    %2083 = vmatpush1.msra.mxu0 %v681
    %2084 = vmatprep.subr.mxu0 0.0
    %2085 = vmatpush1.msra.mxu0 0.0
    %2086 = vmatprep.subr.mxu0 0.0
    %2087 = vmatpush1.msra.mxu0 0.0
    %2088 = vmatprep.subr.mxu0 0.0
    %2089 = vmatpush1.msra.mxu0 0.0
    %2090 = vmatprep.subr.mxu0 0.0
    %2091 = vmatpush1.msra.mxu0 0.0
    %2092 = vmatprep.subr.mxu0 0.0
    %2093 = vmatpush1.msra.mxu0 0.0
    %2094 = vmatprep.subr.mxu0 0.0
    %2095 = vmatpush1.msra.mxu0 0.0
    %2096 = vmatprep.subr.mxu0 0.0
    %2097 = vmatpush1.msra.mxu0 0.0
    %2098 = vmatprep.subr.mxu0 0.0
    %2099 = vmatpush1.msra.mxu0 0.0
    %2100 = vmatprep.subr.mxu0 0.0
    %2101 = vmatpush1.msra.mxu0 0.0
    %2102 = vmatprep.subr.mxu0 0.0
    %2103 = vmatpush1.msra.mxu0 0.0
    %2104 = vmatprep.subr.mxu0 0.0
    %2105 = vmatpush1.msra.mxu0 0.0
    %2106 = vmatprep.subr.mxu0 0.0
    %2107 = vmatpush1.msra.mxu0 0.0
    %2108 = vmatprep.subr.mxu0 0.0
    %2109 = vmatpush1.msra.mxu0 0.0
    %2110 = vmatprep.subr.mxu0 0.0
    %2111 = vmatpush1.msra.mxu0 0.0
    %2112 = vmatprep.subr.mxu0 0.0
    %2113 = vmatpush1.msra.mxu0 0.0
    %2114 = vmatprep.subr.mxu0 0.0
    %2115 = vmatpush1.msra.mxu0 0.0
    %2116 = vmatprep.subr.mxu0 0.0
    %2117 = vmatpush1.msra.mxu0 0.0
    %2118 = vmatprep.subr.mxu0 0.0
    %2119 = vmatpush1.msra.mxu0 0.0
    %2120 = vmatprep.subr.mxu0 0.0
    %2121 = vmatpush1.msra.mxu0 0.0
    %2122 = vmatprep.subr.mxu0 0.0
    %2123 = vmatpush1.msra.mxu0 0.0
    %2124 = vmatprep.subr.mxu0 0.0
    %2125 = vmatpush1.msra.mxu0 0.0
    %2126 = vmatprep.subr.mxu0 0.0
    %2127 = vmatpush1.msra.mxu0 0.0
    %2128 = vmatprep.subr.mxu0 0.0
    %2129 = vmatpush1.msra.mxu0 0.0
    %2130 = vmatprep.subr.mxu0 0.0
    %2131 = vmatpush1.msra.mxu0 0.0
    %2132 = vmatprep.subr.mxu0 0.0
    %2133 = vmatpush1.msra.mxu0 0.0
    %2134 = vmatprep.subr.mxu0 0.0
    %2135 = vmatpush1.msra.mxu0 0.0
    %2136 = vmatprep.subr.mxu0 0.0
    %2137 = vmatpush1.msra.mxu0 0.0
    %2138 = vmatprep.subr.mxu0 0.0
    %2139 = vmatpush1.msra.mxu0 0.0
    %2140 = vmatprep.mubr.f32.mxu0 0.0
    %2141 = vmatmul.mubr.f32.gmra.mrb[0].mxu0 %v2074
    %v2142 = vpop.f32.mrb[0].mxu0
    %v2143 = vadd.f32 0.0, %v2142
    %v2144 = vpop.f32.mrb[0].mxu0
    %2145 = vdwg.mxu0
    %v2146 = vadd.f32 %v2070, %v2143
    %v2147 = vxor.u32 %v2146, 2147483648
    %v2148 = vmul.f32 %v2147, 1.442695
    %v2149 = vpow.pop %v2148
    %v2150 = vadd.f32 %v2149, 1.0
    %v2151 = vrcp.pop %v2150
    %v2152 = vmul.f32 1.0, %v2151
    %v2153 = vadd.f32 %v2143, %v778
    %2155 = vrot.lane.b32.xlu0 %v2153, 64
    %v2156 = vpop.permute.xlu0 %2155
    %v2158 = vmul.f32 %v2152, %v2156
    %2160 = vrot.lane.b32.xlu0 %v2158, 64
    %v2161 = vpop.permute.xlu0 %2160
    %v2163 = vadd.f32 %v2070, %v2161
    %v2164 = vtanh.pop %v2163
    %v2165 = vsub.f32 1.0, %v2152
    %2167 = vrot.lane.b32.xlu0 %v2164, 96
    %v2168 = vpop.permute.xlu0 %2167
    %v2170 = vmul.f32 %v2165, %v2168
    %v2171 = vmul.f32 %v2152, %v1932
    %v2172 = vadd.f32 %v2170, %v2171
    %v2173 = vld [vmem:[#allocation2 + $0x1a] sm:$0x3]
    %2175 = vrot.lane.b32.xlu0 %v2172, 96
    %v2176 = vpop.permute.xlu0 %2175
    %v2177 = vsel %vm322, %v2176, 0
    %2179 = vmatprep.subr.mxu0 0.0
    %2180 = vmatpush1.msra.mxu0 %v678
    %2181 = vmatprep.subr.mxu0 0.0
    %2182 = vmatpush1.msra.mxu0 %v679
    %2183 = vmatprep.subr.mxu0 0.0
    %2184 = vmatpush1.msra.mxu0 %v680
    %2185 = vmatprep.subr.mxu0 0.0
    %2186 = vmatpush1.msra.mxu0 %v681
    %2187 = vmatprep.subr.mxu0 0.0
    %2188 = vmatpush1.msra.mxu0 0.0
    %2189 = vmatprep.subr.mxu0 0.0
    %2190 = vmatpush1.msra.mxu0 0.0
    %2191 = vmatprep.subr.mxu0 0.0
    %2192 = vmatpush1.msra.mxu0 0.0
    %2193 = vmatprep.subr.mxu0 0.0
    %2194 = vmatpush1.msra.mxu0 0.0
    %2195 = vmatprep.subr.mxu0 0.0
    %2196 = vmatpush1.msra.mxu0 0.0
    %2197 = vmatprep.subr.mxu0 0.0
    %2198 = vmatpush1.msra.mxu0 0.0
    %2199 = vmatprep.subr.mxu0 0.0
    %2200 = vmatpush1.msra.mxu0 0.0
    %2201 = vmatprep.subr.mxu0 0.0
    %2202 = vmatpush1.msra.mxu0 0.0
    %2203 = vmatprep.subr.mxu0 0.0
    %2204 = vmatpush1.msra.mxu0 0.0
    %2205 = vmatprep.subr.mxu0 0.0
    %2206 = vmatpush1.msra.mxu0 0.0
    %2207 = vmatprep.subr.mxu0 0.0
    %2208 = vmatpush1.msra.mxu0 0.0
    %2209 = vmatprep.subr.mxu0 0.0
    %2210 = vmatpush1.msra.mxu0 0.0
    %2211 = vmatprep.subr.mxu0 0.0
    %2212 = vmatpush1.msra.mxu0 0.0
    %2213 = vmatprep.subr.mxu0 0.0
    %2214 = vmatpush1.msra.mxu0 0.0
    %2215 = vmatprep.subr.mxu0 0.0
    %2216 = vmatpush1.msra.mxu0 0.0
    %2217 = vmatprep.subr.mxu0 0.0
    %2218 = vmatpush1.msra.mxu0 0.0
    %2219 = vmatprep.subr.mxu0 0.0
    %2220 = vmatpush1.msra.mxu0 0.0
    %2221 = vmatprep.subr.mxu0 0.0
    %2222 = vmatpush1.msra.mxu0 0.0
    %2223 = vmatprep.subr.mxu0 0.0
    %2224 = vmatpush1.msra.mxu0 0.0
    %2225 = vmatprep.subr.mxu0 0.0
    %2226 = vmatpush1.msra.mxu0 0.0
    %2227 = vmatprep.subr.mxu0 0.0
    %2228 = vmatpush1.msra.mxu0 0.0
    %2229 = vmatprep.subr.mxu0 0.0
    %2230 = vmatpush1.msra.mxu0 0.0
    %2231 = vmatprep.subr.mxu0 0.0
    %2232 = vmatpush1.msra.mxu0 0.0
    %2233 = vmatprep.subr.mxu0 0.0
    %2234 = vmatpush1.msra.mxu0 0.0
    %2235 = vmatprep.subr.mxu0 0.0
    %2236 = vmatpush1.msra.mxu0 0.0
    %2237 = vmatprep.subr.mxu0 0.0
    %2238 = vmatpush1.msra.mxu0 0.0
    %2239 = vmatprep.subr.mxu0 0.0
    %2240 = vmatpush1.msra.mxu0 0.0
    %2241 = vmatprep.subr.mxu0 0.0
    %2242 = vmatpush1.msra.mxu0 0.0
    %2243 = vmatprep.mubr.f32.mxu0 0.0
    %2244 = vmatmul.mubr.f32.gmra.mrb[0].mxu0 %v2177
    %v2245 = vpop.f32.mrb[0].mxu0
    %v2246 = vadd.f32 0.0, %v2245
    %v2247 = vpop.f32.mrb[0].mxu0
    %2248 = vdwg.mxu0
    %v2249 = vadd.f32 %v2173, %v2246
    %v2250 = vxor.u32 %v2249, 2147483648
    %v2251 = vmul.f32 %v2250, 1.442695
    %v2252 = vpow.pop %v2251
    %v2253 = vadd.f32 %v2252, 1.0
    %v2254 = vrcp.pop %v2253
    %v2255 = vmul.f32 1.0, %v2254
    %v2256 = vadd.f32 %v2246, %v778
    %2258 = vrot.lane.b32.xlu0 %v2256, 64
    %v2259 = vpop.permute.xlu0 %2258
    %v2261 = vmul.f32 %v2255, %v2259
    %2263 = vrot.lane.b32.xlu0 %v2261, 64
    %v2264 = vpop.permute.xlu0 %2263
    %v2266 = vadd.f32 %v2173, %v2264
    %v2267 = vtanh.pop %v2266
    %v2268 = vsub.f32 1.0, %v2255
    %2270 = vrot.lane.b32.xlu0 %v2267, 96
    %v2271 = vpop.permute.xlu0 %2270
    %v2273 = vmul.f32 %v2268, %v2271
    %v2274 = vmul.f32 %v2255, %v2172
    %v2275 = vadd.f32 %v2273, %v2274
    %v2276 = vld [vmem:[#allocation2 + $0x1c] sm:$0x3]
    %2278 = vrot.lane.b32.xlu0 %v2275, 96
    %v2279 = vpop.permute.xlu0 %2278
    %v2280 = vsel %vm322, %v2279, 0
    %2282 = vmatprep.subr.mxu0 0.0
    %2283 = vmatpush1.msra.mxu0 %v678
    %2284 = vmatprep.subr.mxu0 0.0
    %2285 = vmatpush1.msra.mxu0 %v679
    %2286 = vmatprep.subr.mxu0 0.0
    %2287 = vmatpush1.msra.mxu0 %v680
    %2288 = vmatprep.subr.mxu0 0.0
    %2289 = vmatpush1.msra.mxu0 %v681
    %2290 = vmatprep.subr.mxu0 0.0
    %2291 = vmatpush1.msra.mxu0 0.0
    %2292 = vmatprep.subr.mxu0 0.0
    %2293 = vmatpush1.msra.mxu0 0.0
    %2294 = vmatprep.subr.mxu0 0.0
    %2295 = vmatpush1.msra.mxu0 0.0
    %2296 = vmatprep.subr.mxu0 0.0
    %2297 = vmatpush1.msra.mxu0 0.0
    %2298 = vmatprep.subr.mxu0 0.0
    %2299 = vmatpush1.msra.mxu0 0.0
    %2300 = vmatprep.subr.mxu0 0.0
    %2301 = vmatpush1.msra.mxu0 0.0
    %2302 = vmatprep.subr.mxu0 0.0
    %2303 = vmatpush1.msra.mxu0 0.0
    %2304 = vmatprep.subr.mxu0 0.0
    %2305 = vmatpush1.msra.mxu0 0.0
    %2306 = vmatprep.subr.mxu0 0.0
    %2307 = vmatpush1.msra.mxu0 0.0
    %2308 = vmatprep.subr.mxu0 0.0
    %2309 = vmatpush1.msra.mxu0 0.0
    %2310 = vmatprep.subr.mxu0 0.0
    %2311 = vmatpush1.msra.mxu0 0.0
    %2312 = vmatprep.subr.mxu0 0.0
    %2313 = vmatpush1.msra.mxu0 0.0
    %2314 = vmatprep.subr.mxu0 0.0
    %2315 = vmatpush1.msra.mxu0 0.0
    %2316 = vmatprep.subr.mxu0 0.0
    %2317 = vmatpush1.msra.mxu0 0.0
    %2318 = vmatprep.subr.mxu0 0.0
    %2319 = vmatpush1.msra.mxu0 0.0
    %2320 = vmatprep.subr.mxu0 0.0
    %2321 = vmatpush1.msra.mxu0 0.0
    %2322 = vmatprep.subr.mxu0 0.0
    %2323 = vmatpush1.msra.mxu0 0.0
    %2324 = vmatprep.subr.mxu0 0.0
    %2325 = vmatpush1.msra.mxu0 0.0
    %2326 = vmatprep.subr.mxu0 0.0
    %2327 = vmatpush1.msra.mxu0 0.0
    %2328 = vmatprep.subr.mxu0 0.0
    %2329 = vmatpush1.msra.mxu0 0.0
    %2330 = vmatprep.subr.mxu0 0.0
    %2331 = vmatpush1.msra.mxu0 0.0
    %2332 = vmatprep.subr.mxu0 0.0
    %2333 = vmatpush1.msra.mxu0 0.0
    %2334 = vmatprep.subr.mxu0 0.0
    %2335 = vmatpush1.msra.mxu0 0.0
    %2336 = vmatprep.subr.mxu0 0.0
    %2337 = vmatpush1.msra.mxu0 0.0
    %2338 = vmatprep.subr.mxu0 0.0
    %2339 = vmatpush1.msra.mxu0 0.0
    %2340 = vmatprep.subr.mxu0 0.0
    %2341 = vmatpush1.msra.mxu0 0.0
    %2342 = vmatprep.subr.mxu0 0.0
    %2343 = vmatpush1.msra.mxu0 0.0
    %2344 = vmatprep.subr.mxu0 0.0
    %2345 = vmatpush1.msra.mxu0 0.0
    %2346 = vmatprep.mubr.f32.mxu0 0.0
    %2347 = vmatmul.mubr.f32.gmra.mrb[0].mxu0 %v2280
    %v2348 = vpop.f32.mrb[0].mxu0
    %v2349 = vadd.f32 0.0, %v2348
    %v2350 = vpop.f32.mrb[0].mxu0
    %2351 = vdwg.mxu0
    %v2352 = vadd.f32 %v2276, %v2349
    %v2353 = vxor.u32 %v2352, 2147483648
    %v2354 = vmul.f32 %v2353, 1.442695
    %v2355 = vpow.pop %v2354
    %v2356 = vadd.f32 %v2355, 1.0
    %v2357 = vrcp.pop %v2356
    %v2358 = vmul.f32 1.0, %v2357
    %v2359 = vadd.f32 %v2349, %v778
    %2361 = vrot.lane.b32.xlu0 %v2359, 64
    %v2362 = vpop.permute.xlu0 %2361
    %v2364 = vmul.f32 %v2358, %v2362
    %2366 = vrot.lane.b32.xlu0 %v2364, 64
    %v2367 = vpop.permute.xlu0 %2366
    %v2369 = vadd.f32 %v2276, %v2367
    %v2370 = vtanh.pop %v2369
    %v2371 = vsub.f32 1.0, %v2358
    %2373 = vrot.lane.b32.xlu0 %v2370, 96
    %v2374 = vpop.permute.xlu0 %2373
    %v2376 = vmul.f32 %v2371, %v2374
    %v2377 = vmul.f32 %v2358, %v2275
    %v2378 = vadd.f32 %v2376, %v2377
    %v2379 = vld [vmem:[#allocation2 + $0x1e] sm:$0x3]
    %2381 = vrot.lane.b32.xlu0 %v2378, 96
    %v2382 = vpop.permute.xlu0 %2381
    %v2383 = vsel %vm322, %v2382, 0
    %2385 = vmatprep.subr.mxu0 0.0
    %2386 = vmatpush1.msra.mxu0 %v678
    %2387 = vmatprep.subr.mxu0 0.0
    %2388 = vmatpush1.msra.mxu0 %v679
    %2389 = vmatprep.subr.mxu0 0.0
    %2390 = vmatpush1.msra.mxu0 %v680
    %2391 = vmatprep.subr.mxu0 0.0
    %2392 = vmatpush1.msra.mxu0 %v681
    %2393 = vmatprep.subr.mxu0 0.0
    %2394 = vmatpush1.msra.mxu0 0.0
    %2395 = vmatprep.subr.mxu0 0.0
    %2396 = vmatpush1.msra.mxu0 0.0
    %2397 = vmatprep.subr.mxu0 0.0
    %2398 = vmatpush1.msra.mxu0 0.0
    %2399 = vmatprep.subr.mxu0 0.0
    %2400 = vmatpush1.msra.mxu0 0.0
    %2401 = vmatprep.subr.mxu0 0.0
    %2402 = vmatpush1.msra.mxu0 0.0
    %2403 = vmatprep.subr.mxu0 0.0
    %2404 = vmatpush1.msra.mxu0 0.0
    %2405 = vmatprep.subr.mxu0 0.0
    %2406 = vmatpush1.msra.mxu0 0.0
    %2407 = vmatprep.subr.mxu0 0.0
    %2408 = vmatpush1.msra.mxu0 0.0
    %2409 = vmatprep.subr.mxu0 0.0
    %2410 = vmatpush1.msra.mxu0 0.0
    %2411 = vmatprep.subr.mxu0 0.0
    %2412 = vmatpush1.msra.mxu0 0.0
    %2413 = vmatprep.subr.mxu0 0.0
    %2414 = vmatpush1.msra.mxu0 0.0
    %2415 = vmatprep.subr.mxu0 0.0
    %2416 = vmatpush1.msra.mxu0 0.0
    %2417 = vmatprep.subr.mxu0 0.0
    %2418 = vmatpush1.msra.mxu0 0.0
    %2419 = vmatprep.subr.mxu0 0.0
    %2420 = vmatpush1.msra.mxu0 0.0
    %2421 = vmatprep.subr.mxu0 0.0
    %2422 = vmatpush1.msra.mxu0 0.0
    %2423 = vmatprep.subr.mxu0 0.0
    %2424 = vmatpush1.msra.mxu0 0.0
    %2425 = vmatprep.subr.mxu0 0.0
    %2426 = vmatpush1.msra.mxu0 0.0
    %2427 = vmatprep.subr.mxu0 0.0
    %2428 = vmatpush1.msra.mxu0 0.0
    %2429 = vmatprep.subr.mxu0 0.0
    %2430 = vmatpush1.msra.mxu0 0.0
    %2431 = vmatprep.subr.mxu0 0.0
    %2432 = vmatpush1.msra.mxu0 0.0
    %2433 = vmatprep.subr.mxu0 0.0
    %2434 = vmatpush1.msra.mxu0 0.0
    %2435 = vmatprep.subr.mxu0 0.0
    %2436 = vmatpush1.msra.mxu0 0.0
    %2437 = vmatprep.subr.mxu0 0.0
    %2438 = vmatpush1.msra.mxu0 0.0
    %2439 = vmatprep.subr.mxu0 0.0
    %2440 = vmatpush1.msra.mxu0 0.0
    %2441 = vmatprep.subr.mxu0 0.0
    %2442 = vmatpush1.msra.mxu0 0.0
    %2443 = vmatprep.subr.mxu0 0.0
    %2444 = vmatpush1.msra.mxu0 0.0
    %2445 = vmatprep.subr.mxu0 0.0
    %2446 = vmatpush1.msra.mxu0 0.0
    %2447 = vmatprep.subr.mxu0 0.0
    %2448 = vmatpush1.msra.mxu0 0.0
    %2449 = vmatprep.mubr.f32.mxu0 0.0
    %2450 = vmatmul.mubr.f32.gmra.mrb[0].mxu0 %v2383
    %v2451 = vpop.f32.mrb[0].mxu0
    %v2452 = vadd.f32 0.0, %v2451
    %v2453 = vpop.f32.mrb[0].mxu0
    %2454 = vdwg.mxu0
    %v2455 = vadd.f32 %v2379, %v2452
    %v2456 = vxor.u32 %v2455, 2147483648
    %v2457 = vmul.f32 %v2456, 1.442695
    %v2458 = vpow.pop %v2457
    %v2459 = vadd.f32 %v2458, 1.0
    %v2460 = vrcp.pop %v2459
    %v2461 = vmul.f32 1.0, %v2460
    %v2462 = vadd.f32 %v2452, %v778
    %2464 = vrot.lane.b32.xlu0 %v2462, 64
    %v2465 = vpop.permute.xlu0 %2464
    %v2467 = vmul.f32 %v2461, %v2465
    %2469 = vrot.lane.b32.xlu0 %v2467, 64
    %v2470 = vpop.permute.xlu0 %2469
    %v2472 = vadd.f32 %v2379, %v2470
    %v2473 = vtanh.pop %v2472
    %v2474 = vsub.f32 1.0, %v2461
    %2476 = vrot.lane.b32.xlu0 %v2473, 96
    %v2477 = vpop.permute.xlu0 %2476
    %v2479 = vmul.f32 %v2474, %v2477
    %v2480 = vmul.f32 %v2461, %v2378
    %v2481 = vadd.f32 %v2479, %v2480
    %v2482 = vld [vmem:[#allocation2 + $0x20] sm:$0x3]
    %2484 = vrot.lane.b32.xlu0 %v2481, 96
    %v2485 = vpop.permute.xlu0 %2484
    %v2486 = vsel %vm322, %v2485, 0
    %2488 = vmatprep.subr.mxu0 0.0
    %2489 = vmatpush1.msra.mxu0 %v678
    %2490 = vmatprep.subr.mxu0 0.0
    %2491 = vmatpush1.msra.mxu0 %v679
    %2492 = vmatprep.subr.mxu0 0.0
    %2493 = vmatpush1.msra.mxu0 %v680
    %2494 = vmatprep.subr.mxu0 0.0
    %2495 = vmatpush1.msra.mxu0 %v681
    %2496 = vmatprep.subr.mxu0 0.0
    %2497 = vmatpush1.msra.mxu0 0.0
    %2498 = vmatprep.subr.mxu0 0.0
    %2499 = vmatpush1.msra.mxu0 0.0
    %2500 = vmatprep.subr.mxu0 0.0
    %2501 = vmatpush1.msra.mxu0 0.0
    %2502 = vmatprep.subr.mxu0 0.0
    %2503 = vmatpush1.msra.mxu0 0.0
    %2504 = vmatprep.subr.mxu0 0.0
    %2505 = vmatpush1.msra.mxu0 0.0
    %2506 = vmatprep.subr.mxu0 0.0
    %2507 = vmatpush1.msra.mxu0 0.0
    %2508 = vmatprep.subr.mxu0 0.0
    %2509 = vmatpush1.msra.mxu0 0.0
    %2510 = vmatprep.subr.mxu0 0.0
    %2511 = vmatpush1.msra.mxu0 0.0
    %2512 = vmatprep.subr.mxu0 0.0
    %2513 = vmatpush1.msra.mxu0 0.0
    %2514 = vmatprep.subr.mxu0 0.0
    %2515 = vmatpush1.msra.mxu0 0.0
    %2516 = vmatprep.subr.mxu0 0.0
    %2517 = vmatpush1.msra.mxu0 0.0
    %2518 = vmatprep.subr.mxu0 0.0
    %2519 = vmatpush1.msra.mxu0 0.0
    %2520 = vmatprep.subr.mxu0 0.0
    %2521 = vmatpush1.msra.mxu0 0.0
    %2522 = vmatprep.subr.mxu0 0.0
    %2523 = vmatpush1.msra.mxu0 0.0
    %2524 = vmatprep.subr.mxu0 0.0
    %2525 = vmatpush1.msra.mxu0 0.0
    %2526 = vmatprep.subr.mxu0 0.0
    %2527 = vmatpush1.msra.mxu0 0.0
    %2528 = vmatprep.subr.mxu0 0.0
    %2529 = vmatpush1.msra.mxu0 0.0
    %2530 = vmatprep.subr.mxu0 0.0
    %2531 = vmatpush1.msra.mxu0 0.0
    %2532 = vmatprep.subr.mxu0 0.0
    %2533 = vmatpush1.msra.mxu0 0.0
    %2534 = vmatprep.subr.mxu0 0.0
    %2535 = vmatpush1.msra.mxu0 0.0
    %2536 = vmatprep.subr.mxu0 0.0
    %2537 = vmatpush1.msra.mxu0 0.0
    %2538 = vmatprep.subr.mxu0 0.0
    %2539 = vmatpush1.msra.mxu0 0.0
    %2540 = vmatprep.subr.mxu0 0.0
    %2541 = vmatpush1.msra.mxu0 0.0
    %2542 = vmatprep.subr.mxu0 0.0
    %2543 = vmatpush1.msra.mxu0 0.0
    %2544 = vmatprep.subr.mxu0 0.0
    %2545 = vmatpush1.msra.mxu0 0.0
    %2546 = vmatprep.subr.mxu0 0.0
    %2547 = vmatpush1.msra.mxu0 0.0
    %2548 = vmatprep.subr.mxu0 0.0
    %2549 = vmatpush1.msra.mxu0 0.0
    %2550 = vmatprep.subr.mxu0 0.0
    %2551 = vmatpush1.msra.mxu0 0.0
    %2552 = vmatprep.mubr.f32.mxu0 0.0
    %2553 = vmatmul.mubr.f32.gmra.mrb[0].mxu0 %v2486
    %v2554 = vpop.f32.mrb[0].mxu0
    %v2555 = vadd.f32 0.0, %v2554
    %v2556 = vpop.f32.mrb[0].mxu0
    %2557 = vdwg.mxu0
    %v2558 = vadd.f32 %v2482, %v2555
    %v2559 = vxor.u32 %v2558, 2147483648
    %v2560 = vmul.f32 %v2559, 1.442695
    %v2561 = vpow.pop %v2560
    %v2562 = vadd.f32 %v2561, 1.0
    %v2563 = vrcp.pop %v2562
    %v2564 = vmul.f32 1.0, %v2563
    %v2565 = vadd.f32 %v2555, %v778
    %2567 = vrot.lane.b32.xlu0 %v2565, 64
    %v2568 = vpop.permute.xlu0 %2567
    %v2570 = vmul.f32 %v2564, %v2568
    %2572 = vrot.lane.b32.xlu0 %v2570, 64
    %v2573 = vpop.permute.xlu0 %2572
    %v2575 = vadd.f32 %v2482, %v2573
    %v2576 = vtanh.pop %v2575
    %v2577 = vsub.f32 1.0, %v2564
    %2579 = vrot.lane.b32.xlu0 %v2576, 96
    %v2580 = vpop.permute.xlu0 %2579
    %v2582 = vmul.f32 %v2577, %v2580
    %v2583 = vmul.f32 %v2564, %v2481
    %v2584 = vadd.f32 %v2582, %v2583
    %v2585 = vld [vmem:[#allocation2 + $0x22] sm:$0x3]
    %2587 = vrot.lane.b32.xlu0 %v2584, 96
    %v2588 = vpop.permute.xlu0 %2587
    %v2589 = vsel %vm322, %v2588, 0
    %2591 = vmatprep.subr.mxu0 0.0
    %2592 = vmatpush1.msra.mxu0 %v678
    %2593 = vmatprep.subr.mxu0 0.0
    %2594 = vmatpush1.msra.mxu0 %v679
    %2595 = vmatprep.subr.mxu0 0.0
    %2596 = vmatpush1.msra.mxu0 %v680
    %2597 = vmatprep.subr.mxu0 0.0
    %2598 = vmatpush1.msra.mxu0 %v681
    %2599 = vmatprep.subr.mxu0 0.0
    %2600 = vmatpush1.msra.mxu0 0.0
    %2601 = vmatprep.subr.mxu0 0.0
    %2602 = vmatpush1.msra.mxu0 0.0
    %2603 = vmatprep.subr.mxu0 0.0
    %2604 = vmatpush1.msra.mxu0 0.0
    %2605 = vmatprep.subr.mxu0 0.0
    %2606 = vmatpush1.msra.mxu0 0.0
    %2607 = vmatprep.subr.mxu0 0.0
    %2608 = vmatpush1.msra.mxu0 0.0
    %2609 = vmatprep.subr.mxu0 0.0
    %2610 = vmatpush1.msra.mxu0 0.0
    %2611 = vmatprep.subr.mxu0 0.0
    %2612 = vmatpush1.msra.mxu0 0.0
    %2613 = vmatprep.subr.mxu0 0.0
    %2614 = vmatpush1.msra.mxu0 0.0
    %2615 = vmatprep.subr.mxu0 0.0
    %2616 = vmatpush1.msra.mxu0 0.0
    %2617 = vmatprep.subr.mxu0 0.0
    %2618 = vmatpush1.msra.mxu0 0.0
    %2619 = vmatprep.subr.mxu0 0.0
    %2620 = vmatpush1.msra.mxu0 0.0
    %2621 = vmatprep.subr.mxu0 0.0
    %2622 = vmatpush1.msra.mxu0 0.0
    %2623 = vmatprep.subr.mxu0 0.0
    %2624 = vmatpush1.msra.mxu0 0.0
    %2625 = vmatprep.subr.mxu0 0.0
    %2626 = vmatpush1.msra.mxu0 0.0
    %2627 = vmatprep.subr.mxu0 0.0
    %2628 = vmatpush1.msra.mxu0 0.0
    %2629 = vmatprep.subr.mxu0 0.0
    %2630 = vmatpush1.msra.mxu0 0.0
    %2631 = vmatprep.subr.mxu0 0.0
    %2632 = vmatpush1.msra.mxu0 0.0
    %2633 = vmatprep.subr.mxu0 0.0
    %2634 = vmatpush1.msra.mxu0 0.0
    %2635 = vmatprep.subr.mxu0 0.0
    %2636 = vmatpush1.msra.mxu0 0.0
    %2637 = vmatprep.subr.mxu0 0.0
    %2638 = vmatpush1.msra.mxu0 0.0
    %2639 = vmatprep.subr.mxu0 0.0
    %2640 = vmatpush1.msra.mxu0 0.0
    %2641 = vmatprep.subr.mxu0 0.0
    %2642 = vmatpush1.msra.mxu0 0.0
    %2643 = vmatprep.subr.mxu0 0.0
    %2644 = vmatpush1.msra.mxu0 0.0
    %2645 = vmatprep.subr.mxu0 0.0
    %2646 = vmatpush1.msra.mxu0 0.0
    %2647 = vmatprep.subr.mxu0 0.0
    %2648 = vmatpush1.msra.mxu0 0.0
    %2649 = vmatprep.subr.mxu0 0.0
    %2650 = vmatpush1.msra.mxu0 0.0
    %2651 = vmatprep.subr.mxu0 0.0
    %2652 = vmatpush1.msra.mxu0 0.0
    %2653 = vmatprep.subr.mxu0 0.0
    %2654 = vmatpush1.msra.mxu0 0.0
    %2655 = vmatprep.mubr.f32.mxu0 0.0
    %2656 = vmatmul.mubr.f32.gmra.mrb[0].mxu0 %v2589
    %v2657 = vpop.f32.mrb[0].mxu0
    %v2658 = vadd.f32 0.0, %v2657
    %v2659 = vpop.f32.mrb[0].mxu0
    %2660 = vdwg.mxu0
    %v2661 = vadd.f32 %v2585, %v2658
    %v2662 = vxor.u32 %v2661, 2147483648
    %v2663 = vmul.f32 %v2662, 1.442695
    %v2664 = vpow.pop %v2663
    %v2665 = vadd.f32 %v2664, 1.0
    %v2666 = vrcp.pop %v2665
    %v2667 = vmul.f32 1.0, %v2666
    %v2668 = vadd.f32 %v2658, %v778
    %2670 = vrot.lane.b32.xlu0 %v2668, 64
    %v2671 = vpop.permute.xlu0 %2670
    %v2673 = vmul.f32 %v2667, %v2671
    %2675 = vrot.lane.b32.xlu0 %v2673, 64
    %v2676 = vpop.permute.xlu0 %2675
    %v2678 = vadd.f32 %v2585, %v2676
    %v2679 = vtanh.pop %v2678
    %v2680 = vsub.f32 1.0, %v2667
    %2682 = vrot.lane.b32.xlu0 %v2679, 96
    %v2683 = vpop.permute.xlu0 %2682
    %v2685 = vmul.f32 %v2680, %v2683
    %v2686 = vmul.f32 %v2667, %v2584
    %v2687 = vadd.f32 %v2685, %v2686
    %v2688 = vld [vmem:[#allocation2 + $0x24] sm:$0x3]
    %2690 = vrot.lane.b32.xlu0 %v2687, 96
    %v2691 = vpop.permute.xlu0 %2690
    %v2692 = vsel %vm322, %v2691, 0
    %2694 = vmatprep.subr.mxu0 0.0
    %2695 = vmatpush1.msra.mxu0 %v678
    %2696 = vmatprep.subr.mxu0 0.0
    %2697 = vmatpush1.msra.mxu0 %v679
    %2698 = vmatprep.subr.mxu0 0.0
    %2699 = vmatpush1.msra.mxu0 %v680
    %2700 = vmatprep.subr.mxu0 0.0
    %2701 = vmatpush1.msra.mxu0 %v681
    %2702 = vmatprep.subr.mxu0 0.0
    %2703 = vmatpush1.msra.mxu0 0.0
    %2704 = vmatprep.subr.mxu0 0.0
    %2705 = vmatpush1.msra.mxu0 0.0
    %2706 = vmatprep.subr.mxu0 0.0
    %2707 = vmatpush1.msra.mxu0 0.0
    %2708 = vmatprep.subr.mxu0 0.0
    %2709 = vmatpush1.msra.mxu0 0.0
    %2710 = vmatprep.subr.mxu0 0.0
    %2711 = vmatpush1.msra.mxu0 0.0
    %2712 = vmatprep.subr.mxu0 0.0
    %2713 = vmatpush1.msra.mxu0 0.0
    %2714 = vmatprep.subr.mxu0 0.0
    %2715 = vmatpush1.msra.mxu0 0.0
    %2716 = vmatprep.subr.mxu0 0.0
    %2717 = vmatpush1.msra.mxu0 0.0
    %2718 = vmatprep.subr.mxu0 0.0
    %2719 = vmatpush1.msra.mxu0 0.0
    %2720 = vmatprep.subr.mxu0 0.0
    %2721 = vmatpush1.msra.mxu0 0.0
    %2722 = vmatprep.subr.mxu0 0.0
    %2723 = vmatpush1.msra.mxu0 0.0
    %2724 = vmatprep.subr.mxu0 0.0
    %2725 = vmatpush1.msra.mxu0 0.0
    %2726 = vmatprep.subr.mxu0 0.0
    %2727 = vmatpush1.msra.mxu0 0.0
    %2728 = vmatprep.subr.mxu0 0.0
    %2729 = vmatpush1.msra.mxu0 0.0
    %2730 = vmatprep.subr.mxu0 0.0
    %2731 = vmatpush1.msra.mxu0 0.0
    %2732 = vmatprep.subr.mxu0 0.0
    %2733 = vmatpush1.msra.mxu0 0.0
    %2734 = vmatprep.subr.mxu0 0.0
    %2735 = vmatpush1.msra.mxu0 0.0
    %2736 = vmatprep.subr.mxu0 0.0
    %2737 = vmatpush1.msra.mxu0 0.0
    %2738 = vmatprep.subr.mxu0 0.0
    %2739 = vmatpush1.msra.mxu0 0.0
    %2740 = vmatprep.subr.mxu0 0.0
    %2741 = vmatpush1.msra.mxu0 0.0
    %2742 = vmatprep.subr.mxu0 0.0
    %2743 = vmatpush1.msra.mxu0 0.0
    %2744 = vmatprep.subr.mxu0 0.0
    %2745 = vmatpush1.msra.mxu0 0.0
    %2746 = vmatprep.subr.mxu0 0.0
    %2747 = vmatpush1.msra.mxu0 0.0
    %2748 = vmatprep.subr.mxu0 0.0
    %2749 = vmatpush1.msra.mxu0 0.0
    %2750 = vmatprep.subr.mxu0 0.0
    %2751 = vmatpush1.msra.mxu0 0.0
    %2752 = vmatprep.subr.mxu0 0.0
    %2753 = vmatpush1.msra.mxu0 0.0
    %2754 = vmatprep.subr.mxu0 0.0
    %2755 = vmatpush1.msra.mxu0 0.0
    %2756 = vmatprep.subr.mxu0 0.0
    %2757 = vmatpush1.msra.mxu0 0.0
    %2758 = vmatprep.mubr.f32.mxu0 0.0
    %2759 = vmatmul.mubr.f32.gmra.mrb[0].mxu0 %v2692
    %v2760 = vpop.f32.mrb[0].mxu0
    %v2761 = vadd.f32 0.0, %v2760
    %v2762 = vpop.f32.mrb[0].mxu0
    %2763 = vdwg.mxu0
    %v2764 = vadd.f32 %v2688, %v2761
    %v2765 = vxor.u32 %v2764, 2147483648
    %v2766 = vmul.f32 %v2765, 1.442695
    %v2767 = vpow.pop %v2766
    %v2768 = vadd.f32 %v2767, 1.0
    %v2769 = vrcp.pop %v2768
    %v2770 = vmul.f32 1.0, %v2769
    %v2771 = vadd.f32 %v2761, %v778
    %2773 = vrot.lane.b32.xlu0 %v2771, 64
    %v2774 = vpop.permute.xlu0 %2773
    %v2776 = vmul.f32 %v2770, %v2774
    %2778 = vrot.lane.b32.xlu0 %v2776, 64
    %v2779 = vpop.permute.xlu0 %2778
    %v2781 = vadd.f32 %v2688, %v2779
    %v2782 = vtanh.pop %v2781
    %v2783 = vsub.f32 1.0, %v2770
    %2785 = vrot.lane.b32.xlu0 %v2782, 96
    %v2786 = vpop.permute.xlu0 %2785
    %v2788 = vmul.f32 %v2783, %v2786
    %v2789 = vmul.f32 %v2770, %v2687
    %v2790 = vadd.f32 %v2788, %v2789
    %v2791 = vld [vmem:[#allocation3 + $0x18] sm:$0xff]
    %v2792 = vld [vmem:[#allocation3 + $0x20] sm:$0x3f]
    %2795 = vrot.lane.b32.xlu0 %v2068, 112
    %v2796 = vpop.permute.xlu0 %2795
    %2797 = vrot.lane.b32.xlu0 %v2069, 112
    %v2798 = vpop.permute.xlu0 %2797
    %v2799 = vsel %vm1935, %v2796, 0
    %v2801 = vsel %vm1935, %v2798, 0
    %2803 = vmatprep.subr.mxu0 0.0
    %2804 = vmatpush1.msra.mxu0 %v682
    %2805 = vmatprep.subr.mxu0 0.0
    %2806 = vmatpush1.msra.mxu0 %v683
    %2807 = vmatprep.subr.mxu0 0.0
    %2808 = vmatpush1.msra.mxu0 0.0
    %2809 = vmatprep.subr.mxu0 0.0
    %2810 = vmatpush1.msra.mxu0 0.0
    %2811 = vmatprep.subr.mxu0 0.0
    %2812 = vmatpush1.msra.mxu0 0.0
    %2813 = vmatprep.subr.mxu0 0.0
    %2814 = vmatpush1.msra.mxu0 0.0
    %2815 = vmatprep.subr.mxu0 0.0
    %2816 = vmatpush1.msra.mxu0 0.0
    %2817 = vmatprep.subr.mxu0 0.0
    %2818 = vmatpush1.msra.mxu0 0.0
    %2819 = vmatprep.subr.mxu0 0.0
    %2820 = vmatpush1.msra.mxu0 0.0
    %2821 = vmatprep.subr.mxu0 0.0
    %2822 = vmatpush1.msra.mxu0 0.0
    %2823 = vmatprep.subr.mxu0 0.0
    %2824 = vmatpush1.msra.mxu0 0.0
    %2825 = vmatprep.subr.mxu0 0.0
    %2826 = vmatpush1.msra.mxu0 0.0
    %2827 = vmatprep.subr.mxu0 0.0
    %2828 = vmatpush1.msra.mxu0 0.0
    %2829 = vmatprep.subr.mxu0 0.0
    %2830 = vmatpush1.msra.mxu0 0.0
    %2831 = vmatprep.subr.mxu0 0.0
    %2832 = vmatpush1.msra.mxu0 0.0
    %2833 = vmatprep.subr.mxu0 0.0
    %2834 = vmatpush1.msra.mxu0 0.0
    %2835 = vmatprep.subr.mxu0 0.0
    %2836 = vmatpush1.msra.mxu0 0.0
    %2837 = vmatprep.subr.mxu0 0.0
    %2838 = vmatpush1.msra.mxu0 0.0
    %2839 = vmatprep.subr.mxu0 0.0
    %2840 = vmatpush1.msra.mxu0 0.0
    %2841 = vmatprep.subr.mxu0 0.0
    %2842 = vmatpush1.msra.mxu0 0.0
    %2843 = vmatprep.subr.mxu0 0.0
    %2844 = vmatpush1.msra.mxu0 0.0
    %2845 = vmatprep.subr.mxu0 0.0
    %2846 = vmatpush1.msra.mxu0 0.0
    %2847 = vmatprep.subr.mxu0 0.0
    %2848 = vmatpush1.msra.mxu0 0.0
    %2849 = vmatprep.subr.mxu0 0.0
    %2850 = vmatpush1.msra.mxu0 0.0
    %2851 = vmatprep.subr.mxu0 0.0
    %2852 = vmatpush1.msra.mxu0 0.0
    %2853 = vmatprep.subr.mxu0 0.0
    %2854 = vmatpush1.msra.mxu0 0.0
    %2855 = vmatprep.subr.mxu0 0.0
    %2856 = vmatpush1.msra.mxu0 0.0
    %2857 = vmatprep.subr.mxu0 0.0
    %2858 = vmatpush1.msra.mxu0 0.0
    %2859 = vmatprep.subr.mxu0 0.0
    %2860 = vmatpush1.msra.mxu0 0.0
    %2861 = vmatprep.subr.mxu0 0.0
    %2862 = vmatpush1.msra.mxu0 0.0
    %2863 = vmatprep.subr.mxu0 0.0
    %2864 = vmatpush1.msra.mxu0 0.0
    %2865 = vmatprep.subr.mxu0 0.0
    %2866 = vmatpush1.msra.mxu0 0.0
    %2867 = vmatprep.mubr.f32.mxu0 0.0
    %2868 = vmatmul.mubr.f32.gmra.mrb[0].mxu0 %v2799
    %v2869 = vpop.f32.mrb[0].mxu0
    %v2870 = vadd.f32 0.0, %v2869
    %v2871 = vpop.f32.mrb[0].mxu0
    %2872 = vmatprep.mubr.f32.mxu0 0.0
    %2873 = vmatmul.mubr.f32.gmra.mrb[0].mxu0 %v2801
    %v2874 = vpop.f32.mrb[0].mxu0
    %v2875 = vadd.f32 0.0, %v2874
    %v2876 = vpop.f32.mrb[0].mxu0
    %2877 = vdwg.mxu0
    %v2878 = vadd.f32 %v2791, %v2870
    %v2879 = vadd.f32 %v2792, %v2875
    %v2880 = vxor.u32 %v2878, 2147483648
    %v2881 = vxor.u32 %v2879, 2147483648
    %v2882 = vmul.f32 %v2880, 1.442695
    %v2883 = vpow.pop %v2882
    %v2884 = vmul.f32 %v2881, 1.442695
    %v2885 = vpow.pop %v2884
    %v2886 = vadd.f32 %v2883, 1.0
    %v2887 = vadd.f32 %v2885, 1.0
    %v2888 = vrcp.pop %v2886
    %v2889 = vmul.f32 1.0, %v2888
    %v2890 = vrcp.pop %v2887
    %v2891 = vmul.f32 1.0, %v2890
    %v2892 = vadd.f32 %v2870, %v2028
    %v2893 = vadd.f32 %v2875, %v2028
    %2896 = vrot.lane.b32.xlu0 %v2892, 96
    %v2897 = vpop.permute.xlu0 %2896
    %2898 = vrot.lane.b32.xlu0 %v2893, 96
    %v2899 = vpop.permute.xlu0 %2898
    %v2902 = vmul.f32 %v2889, %v2897
    %v2903 = vmul.f32 %v2891, %v2899
    %2906 = vrot.lane.b32.xlu0 %v2902, 32
    %v2907 = vpop.permute.xlu0 %2906
    %2908 = vrot.lane.b32.xlu0 %v2903, 32
    %v2909 = vpop.permute.xlu0 %2908
    %v2912 = vadd.f32 %v2791, %v2907
    %v2913 = vadd.f32 %v2792, %v2909
    %v2914 = vtanh.pop %v2912
    %v2915 = vtanh.pop %v2913
    %v2916 = vsub.f32 1.0, %v2889
    %v2917 = vsub.f32 1.0, %v2891
    %2920 = vrot.lane.b32.xlu0 %v2914, 112
    %v2921 = vpop.permute.xlu0 %2920
    %2922 = vrot.lane.b32.xlu0 %v2915, 112
    %v2923 = vpop.permute.xlu0 %2922
    %v2926 = vmul.f32 %v2916, %v2921
    %v2927 = vmul.f32 %v2917, %v2923
    %v2928 = vmul.f32 %v2889, %v2068
    %v2929 = vmul.f32 %v2891, %v2069
    %v2930 = vadd.f32 %v2926, %v2928
    %v2931 = vadd.f32 %v2927, %v2929
    %v2932 = vld [vmem:[#allocation2 + $0x26] sm:$0x3]
    %2934 = vrot.lane.b32.xlu0 %v2790, 96
    %v2935 = vpop.permute.xlu0 %2934
    %v2936 = vsel %vm322, %v2935, 0
    %2938 = vmatprep.subr.mxu0 0.0
    %2939 = vmatpush1.msra.mxu0 %v678
    %2940 = vmatprep.subr.mxu0 0.0
    %2941 = vmatpush1.msra.mxu0 %v679
    %2942 = vmatprep.subr.mxu0 0.0
    %2943 = vmatpush1.msra.mxu0 %v680
    %2944 = vmatprep.subr.mxu0 0.0
    %2945 = vmatpush1.msra.mxu0 %v681
    %2946 = vmatprep.subr.mxu0 0.0
    %2947 = vmatpush1.msra.mxu0 0.0
    %2948 = vmatprep.subr.mxu0 0.0
    %2949 = vmatpush1.msra.mxu0 0.0
    %2950 = vmatprep.subr.mxu0 0.0
    %2951 = vmatpush1.msra.mxu0 0.0
    %2952 = vmatprep.subr.mxu0 0.0
    %2953 = vmatpush1.msra.mxu0 0.0
    %2954 = vmatprep.subr.mxu0 0.0
    %2955 = vmatpush1.msra.mxu0 0.0
    %2956 = vmatprep.subr.mxu0 0.0
    %2957 = vmatpush1.msra.mxu0 0.0
    %2958 = vmatprep.subr.mxu0 0.0
    %2959 = vmatpush1.msra.mxu0 0.0
    %2960 = vmatprep.subr.mxu0 0.0
    %2961 = vmatpush1.msra.mxu0 0.0
    %2962 = vmatprep.subr.mxu0 0.0
    %2963 = vmatpush1.msra.mxu0 0.0
    %2964 = vmatprep.subr.mxu0 0.0
    %2965 = vmatpush1.msra.mxu0 0.0
    %2966 = vmatprep.subr.mxu0 0.0
    %2967 = vmatpush1.msra.mxu0 0.0
    %2968 = vmatprep.subr.mxu0 0.0
    %2969 = vmatpush1.msra.mxu0 0.0
    %2970 = vmatprep.subr.mxu0 0.0
    %2971 = vmatpush1.msra.mxu0 0.0
    %2972 = vmatprep.subr.mxu0 0.0
    %2973 = vmatpush1.msra.mxu0 0.0
    %2974 = vmatprep.subr.mxu0 0.0
    %2975 = vmatpush1.msra.mxu0 0.0
    %2976 = vmatprep.subr.mxu0 0.0
    %2977 = vmatpush1.msra.mxu0 0.0
    %2978 = vmatprep.subr.mxu0 0.0
    %2979 = vmatpush1.msra.mxu0 0.0
    %2980 = vmatprep.subr.mxu0 0.0
    %2981 = vmatpush1.msra.mxu0 0.0
    %2982 = vmatprep.subr.mxu0 0.0
    %2983 = vmatpush1.msra.mxu0 0.0
    %2984 = vmatprep.subr.mxu0 0.0
    %2985 = vmatpush1.msra.mxu0 0.0
    %2986 = vmatprep.subr.mxu0 0.0
    %2987 = vmatpush1.msra.mxu0 0.0
    %2988 = vmatprep.subr.mxu0 0.0
    %2989 = vmatpush1.msra.mxu0 0.0
    %2990 = vmatprep.subr.mxu0 0.0
    %2991 = vmatpush1.msra.mxu0 0.0
    %2992 = vmatprep.subr.mxu0 0.0
    %2993 = vmatpush1.msra.mxu0 0.0
    %2994 = vmatprep.subr.mxu0 0.0
    %2995 = vmatpush1.msra.mxu0 0.0
    %2996 = vmatprep.subr.mxu0 0.0
    %2997 = vmatpush1.msra.mxu0 0.0
    %2998 = vmatprep.subr.mxu0 0.0
    %2999 = vmatpush1.msra.mxu0 0.0
    %3000 = vmatprep.subr.mxu0 0.0
    %3001 = vmatpush1.msra.mxu0 0.0
    %3002 = vmatprep.mubr.f32.mxu0 0.0
    %3003 = vmatmul.mubr.f32.gmra.mrb[0].mxu0 %v2936
    %v3004 = vpop.f32.mrb[0].mxu0
    %v3005 = vadd.f32 0.0, %v3004
    %v3006 = vpop.f32.mrb[0].mxu0
    %3007 = vdwg.mxu0
    %v3008 = vadd.f32 %v2932, %v3005
    %v3009 = vxor.u32 %v3008, 2147483648
    %v3010 = vmul.f32 %v3009, 1.442695
    %v3011 = vpow.pop %v3010
    %v3012 = vadd.f32 %v3011, 1.0
    %v3013 = vrcp.pop %v3012
    %v3014 = vmul.f32 1.0, %v3013
    %v3015 = vadd.f32 %v3005, %v778
    %3017 = vrot.lane.b32.xlu0 %v3015, 64
    %v3018 = vpop.permute.xlu0 %3017
    %v3020 = vmul.f32 %v3014, %v3018
    %3022 = vrot.lane.b32.xlu0 %v3020, 64
    %v3023 = vpop.permute.xlu0 %3022
    %v3025 = vadd.f32 %v2932, %v3023
    %v3026 = vtanh.pop %v3025
    %v3027 = vsub.f32 1.0, %v3014
    %3029 = vrot.lane.b32.xlu0 %v3026, 96
    %v3030 = vpop.permute.xlu0 %3029
    %v3032 = vmul.f32 %v3027, %v3030
    %v3033 = vmul.f32 %v3014, %v2790
    %v3034 = vadd.f32 %v3032, %v3033
    %v3035 = vld [vmem:[#allocation2 + $0x28] sm:$0x3]
    %3037 = vrot.lane.b32.xlu0 %v3034, 96
    %v3038 = vpop.permute.xlu0 %3037
    %v3039 = vsel %vm322, %v3038, 0
    %3041 = vmatprep.subr.mxu0 0.0
    %3042 = vmatpush1.msra.mxu0 %v678
    %3043 = vmatprep.subr.mxu0 0.0
    %3044 = vmatpush1.msra.mxu0 %v679
    %3045 = vmatprep.subr.mxu0 0.0
    %3046 = vmatpush1.msra.mxu0 %v680
    %3047 = vmatprep.subr.mxu0 0.0
    %3048 = vmatpush1.msra.mxu0 %v681
    %3049 = vmatprep.subr.mxu0 0.0
    %3050 = vmatpush1.msra.mxu0 0.0
    %3051 = vmatprep.subr.mxu0 0.0
    %3052 = vmatpush1.msra.mxu0 0.0
    %3053 = vmatprep.subr.mxu0 0.0
    %3054 = vmatpush1.msra.mxu0 0.0
    %3055 = vmatprep.subr.mxu0 0.0
    %3056 = vmatpush1.msra.mxu0 0.0
    %3057 = vmatprep.subr.mxu0 0.0
    %3058 = vmatpush1.msra.mxu0 0.0
    %3059 = vmatprep.subr.mxu0 0.0
    %3060 = vmatpush1.msra.mxu0 0.0
    %3061 = vmatprep.subr.mxu0 0.0
    %3062 = vmatpush1.msra.mxu0 0.0
    %3063 = vmatprep.subr.mxu0 0.0
    %3064 = vmatpush1.msra.mxu0 0.0
    %3065 = vmatprep.subr.mxu0 0.0
    %3066 = vmatpush1.msra.mxu0 0.0
    %3067 = vmatprep.subr.mxu0 0.0
    %3068 = vmatpush1.msra.mxu0 0.0
    %3069 = vmatprep.subr.mxu0 0.0
    %3070 = vmatpush1.msra.mxu0 0.0
    %3071 = vmatprep.subr.mxu0 0.0
    %3072 = vmatpush1.msra.mxu0 0.0
    %3073 = vmatprep.subr.mxu0 0.0
    %3074 = vmatpush1.msra.mxu0 0.0
    %3075 = vmatprep.subr.mxu0 0.0
    %3076 = vmatpush1.msra.mxu0 0.0
    %3077 = vmatprep.subr.mxu0 0.0
    %3078 = vmatpush1.msra.mxu0 0.0
    %3079 = vmatprep.subr.mxu0 0.0
    %3080 = vmatpush1.msra.mxu0 0.0
    %3081 = vmatprep.subr.mxu0 0.0
    %3082 = vmatpush1.msra.mxu0 0.0
    %3083 = vmatprep.subr.mxu0 0.0
    %3084 = vmatpush1.msra.mxu0 0.0
    %3085 = vmatprep.subr.mxu0 0.0
    %3086 = vmatpush1.msra.mxu0 0.0
    %3087 = vmatprep.subr.mxu0 0.0
    %3088 = vmatpush1.msra.mxu0 0.0
    %3089 = vmatprep.subr.mxu0 0.0
    %3090 = vmatpush1.msra.mxu0 0.0
    %3091 = vmatprep.subr.mxu0 0.0
    %3092 = vmatpush1.msra.mxu0 0.0
    %3093 = vmatprep.subr.mxu0 0.0
    %3094 = vmatpush1.msra.mxu0 0.0
    %3095 = vmatprep.subr.mxu0 0.0
    %3096 = vmatpush1.msra.mxu0 0.0
    %3097 = vmatprep.subr.mxu0 0.0
    %3098 = vmatpush1.msra.mxu0 0.0
    %3099 = vmatprep.subr.mxu0 0.0
    %3100 = vmatpush1.msra.mxu0 0.0
    %3101 = vmatprep.subr.mxu0 0.0
    %3102 = vmatpush1.msra.mxu0 0.0
    %3103 = vmatprep.subr.mxu0 0.0
    %3104 = vmatpush1.msra.mxu0 0.0
    %3105 = vmatprep.mubr.f32.mxu0 0.0
    %3106 = vmatmul.mubr.f32.gmra.mrb[0].mxu0 %v3039
    %v3107 = vpop.f32.mrb[0].mxu0
    %v3108 = vadd.f32 0.0, %v3107
    %v3109 = vpop.f32.mrb[0].mxu0
    %3110 = vdwg.mxu0
    %v3111 = vadd.f32 %v3035, %v3108
    %v3112 = vxor.u32 %v3111, 2147483648
    %v3113 = vmul.f32 %v3112, 1.442695
    %v3114 = vpow.pop %v3113
    %v3115 = vadd.f32 %v3114, 1.0
    %v3116 = vrcp.pop %v3115
    %v3117 = vmul.f32 1.0, %v3116
    %v3118 = vadd.f32 %v3108, %v778
    %3120 = vrot.lane.b32.xlu0 %v3118, 64
    %v3121 = vpop.permute.xlu0 %3120
    %v3123 = vmul.f32 %v3117, %v3121
    %3125 = vrot.lane.b32.xlu0 %v3123, 64
    %v3126 = vpop.permute.xlu0 %3125
    %v3128 = vadd.f32 %v3035, %v3126
    %v3129 = vtanh.pop %v3128
    %v3130 = vsub.f32 1.0, %v3117
    %3132 = vrot.lane.b32.xlu0 %v3129, 96
    %v3133 = vpop.permute.xlu0 %3132
    %v3135 = vmul.f32 %v3130, %v3133
    %v3136 = vmul.f32 %v3117, %v3034
    %v3137 = vadd.f32 %v3135, %v3136
    %v3138 = vld [vmem:[#allocation2 + $0x2a] sm:$0x3]
    %3140 = vrot.lane.b32.xlu0 %v3137, 96
    %v3141 = vpop.permute.xlu0 %3140
    %v3142 = vsel %vm322, %v3141, 0
    %3144 = vmatprep.subr.mxu0 0.0
    %3145 = vmatpush1.msra.mxu0 %v678
    %3146 = vmatprep.subr.mxu0 0.0
    %3147 = vmatpush1.msra.mxu0 %v679
    %3148 = vmatprep.subr.mxu0 0.0
    %3149 = vmatpush1.msra.mxu0 %v680
    %3150 = vmatprep.subr.mxu0 0.0
    %3151 = vmatpush1.msra.mxu0 %v681
    %3152 = vmatprep.subr.mxu0 0.0
    %3153 = vmatpush1.msra.mxu0 0.0
    %3154 = vmatprep.subr.mxu0 0.0
    %3155 = vmatpush1.msra.mxu0 0.0
    %3156 = vmatprep.subr.mxu0 0.0
    %3157 = vmatpush1.msra.mxu0 0.0
    %3158 = vmatprep.subr.mxu0 0.0
    %3159 = vmatpush1.msra.mxu0 0.0
    %3160 = vmatprep.subr.mxu0 0.0
    %3161 = vmatpush1.msra.mxu0 0.0
    %3162 = vmatprep.subr.mxu0 0.0
    %3163 = vmatpush1.msra.mxu0 0.0
    %3164 = vmatprep.subr.mxu0 0.0
    %3165 = vmatpush1.msra.mxu0 0.0
    %3166 = vmatprep.subr.mxu0 0.0
    %3167 = vmatpush1.msra.mxu0 0.0
    %3168 = vmatprep.subr.mxu0 0.0
    %3169 = vmatpush1.msra.mxu0 0.0
    %3170 = vmatprep.subr.mxu0 0.0
    %3171 = vmatpush1.msra.mxu0 0.0
    %3172 = vmatprep.subr.mxu0 0.0
    %3173 = vmatpush1.msra.mxu0 0.0
    %3174 = vmatprep.subr.mxu0 0.0
    %3175 = vmatpush1.msra.mxu0 0.0
    %3176 = vmatprep.subr.mxu0 0.0
    %3177 = vmatpush1.msra.mxu0 0.0
    %3178 = vmatprep.subr.mxu0 0.0
    %3179 = vmatpush1.msra.mxu0 0.0
    %3180 = vmatprep.subr.mxu0 0.0
    %3181 = vmatpush1.msra.mxu0 0.0
    %3182 = vmatprep.subr.mxu0 0.0
    %3183 = vmatpush1.msra.mxu0 0.0
    %3184 = vmatprep.subr.mxu0 0.0
    %3185 = vmatpush1.msra.mxu0 0.0
    %3186 = vmatprep.subr.mxu0 0.0
    %3187 = vmatpush1.msra.mxu0 0.0
    %3188 = vmatprep.subr.mxu0 0.0
    %3189 = vmatpush1.msra.mxu0 0.0
    %3190 = vmatprep.subr.mxu0 0.0
    %3191 = vmatpush1.msra.mxu0 0.0
    %3192 = vmatprep.subr.mxu0 0.0
    %3193 = vmatpush1.msra.mxu0 0.0
    %3194 = vmatprep.subr.mxu0 0.0
    %3195 = vmatpush1.msra.mxu0 0.0
    %3196 = vmatprep.subr.mxu0 0.0
    %3197 = vmatpush1.msra.mxu0 0.0
    %3198 = vmatprep.subr.mxu0 0.0
    %3199 = vmatpush1.msra.mxu0 0.0
    %3200 = vmatprep.subr.mxu0 0.0
    %3201 = vmatpush1.msra.mxu0 0.0
    %3202 = vmatprep.subr.mxu0 0.0
    %3203 = vmatpush1.msra.mxu0 0.0
    %3204 = vmatprep.subr.mxu0 0.0
    %3205 = vmatpush1.msra.mxu0 0.0
    %3206 = vmatprep.subr.mxu0 0.0
    %3207 = vmatpush1.msra.mxu0 0.0
    %3208 = vmatprep.mubr.f32.mxu0 0.0
    %3209 = vmatmul.mubr.f32.gmra.mrb[0].mxu0 %v3142
    %v3210 = vpop.f32.mrb[0].mxu0
    %v3211 = vadd.f32 0.0, %v3210
    %v3212 = vpop.f32.mrb[0].mxu0
    %3213 = vdwg.mxu0
    %v3214 = vadd.f32 %v3138, %v3211
    %v3215 = vxor.u32 %v3214, 2147483648
    %v3216 = vmul.f32 %v3215, 1.442695
    %v3217 = vpow.pop %v3216
    %v3218 = vadd.f32 %v3217, 1.0
    %v3219 = vrcp.pop %v3218
    %v3220 = vmul.f32 1.0, %v3219
    %v3221 = vadd.f32 %v3211, %v778
    %3223 = vrot.lane.b32.xlu0 %v3221, 64
    %v3224 = vpop.permute.xlu0 %3223
    %v3226 = vmul.f32 %v3220, %v3224
    %3228 = vrot.lane.b32.xlu0 %v3226, 64
    %v3229 = vpop.permute.xlu0 %3228
    %v3231 = vadd.f32 %v3138, %v3229
    %v3232 = vtanh.pop %v3231
    %v3233 = vsub.f32 1.0, %v3220
    %3235 = vrot.lane.b32.xlu0 %v3232, 96
    %v3236 = vpop.permute.xlu0 %3235
    %v3238 = vmul.f32 %v3233, %v3236
    %v3239 = vmul.f32 %v3220, %v3137
    %v3240 = vadd.f32 %v3238, %v3239
    %v3241 = vld [vmem:[#allocation2 + $0x2c] sm:$0x3]
    %3243 = vrot.lane.b32.xlu0 %v3240, 96
    %v3244 = vpop.permute.xlu0 %3243
    %v3245 = vsel %vm322, %v3244, 0
    %3247 = vmatprep.subr.mxu0 0.0
    %3248 = vmatpush1.msra.mxu0 %v678
    %3249 = vmatprep.subr.mxu0 0.0
    %3250 = vmatpush1.msra.mxu0 %v679
    %3251 = vmatprep.subr.mxu0 0.0
    %3252 = vmatpush1.msra.mxu0 %v680
    %3253 = vmatprep.subr.mxu0 0.0
    %3254 = vmatpush1.msra.mxu0 %v681
    %3255 = vmatprep.subr.mxu0 0.0
    %3256 = vmatpush1.msra.mxu0 0.0
    %3257 = vmatprep.subr.mxu0 0.0
    %3258 = vmatpush1.msra.mxu0 0.0
    %3259 = vmatprep.subr.mxu0 0.0
    %3260 = vmatpush1.msra.mxu0 0.0
    %3261 = vmatprep.subr.mxu0 0.0
    %3262 = vmatpush1.msra.mxu0 0.0
    %3263 = vmatprep.subr.mxu0 0.0
    %3264 = vmatpush1.msra.mxu0 0.0
    %3265 = vmatprep.subr.mxu0 0.0
    %3266 = vmatpush1.msra.mxu0 0.0
    %3267 = vmatprep.subr.mxu0 0.0
    %3268 = vmatpush1.msra.mxu0 0.0
    %3269 = vmatprep.subr.mxu0 0.0
    %3270 = vmatpush1.msra.mxu0 0.0
    %3271 = vmatprep.subr.mxu0 0.0
    %3272 = vmatpush1.msra.mxu0 0.0
    %3273 = vmatprep.subr.mxu0 0.0
    %3274 = vmatpush1.msra.mxu0 0.0
    %3275 = vmatprep.subr.mxu0 0.0
    %3276 = vmatpush1.msra.mxu0 0.0
    %3277 = vmatprep.subr.mxu0 0.0
    %3278 = vmatpush1.msra.mxu0 0.0
    %3279 = vmatprep.subr.mxu0 0.0
    %3280 = vmatpush1.msra.mxu0 0.0
    %3281 = vmatprep.subr.mxu0 0.0
    %3282 = vmatpush1.msra.mxu0 0.0
    %3283 = vmatprep.subr.mxu0 0.0
    %3284 = vmatpush1.msra.mxu0 0.0
    %3285 = vmatprep.subr.mxu0 0.0
    %3286 = vmatpush1.msra.mxu0 0.0
    %3287 = vmatprep.subr.mxu0 0.0
    %3288 = vmatpush1.msra.mxu0 0.0
    %3289 = vmatprep.subr.mxu0 0.0
    %3290 = vmatpush1.msra.mxu0 0.0
    %3291 = vmatprep.subr.mxu0 0.0
    %3292 = vmatpush1.msra.mxu0 0.0
    %3293 = vmatprep.subr.mxu0 0.0
    %3294 = vmatpush1.msra.mxu0 0.0
    %3295 = vmatprep.subr.mxu0 0.0
    %3296 = vmatpush1.msra.mxu0 0.0
    %3297 = vmatprep.subr.mxu0 0.0
    %3298 = vmatpush1.msra.mxu0 0.0
    %3299 = vmatprep.subr.mxu0 0.0
    %3300 = vmatpush1.msra.mxu0 0.0
    %3301 = vmatprep.subr.mxu0 0.0
    %3302 = vmatpush1.msra.mxu0 0.0
    %3303 = vmatprep.subr.mxu0 0.0
    %3304 = vmatpush1.msra.mxu0 0.0
    %3305 = vmatprep.subr.mxu0 0.0
    %3306 = vmatpush1.msra.mxu0 0.0
    %3307 = vmatprep.subr.mxu0 0.0
    %3308 = vmatpush1.msra.mxu0 0.0
    %3309 = vmatprep.subr.mxu0 0.0
    %3310 = vmatpush1.msra.mxu0 0.0
    %3311 = vmatprep.mubr.f32.mxu0 0.0
    %3312 = vmatmul.mubr.f32.gmra.mrb[0].mxu0 %v3245
    %v3313 = vpop.f32.mrb[0].mxu0
    %v3314 = vadd.f32 0.0, %v3313
    %v3315 = vpop.f32.mrb[0].mxu0
    %3316 = vdwg.mxu0
    %v3317 = vadd.f32 %v3241, %v3314
    %v3318 = vxor.u32 %v3317, 2147483648
    %v3319 = vmul.f32 %v3318, 1.442695
    %v3320 = vpow.pop %v3319
    %v3321 = vadd.f32 %v3320, 1.0
    %v3322 = vrcp.pop %v3321
    %v3323 = vmul.f32 1.0, %v3322
    %v3324 = vadd.f32 %v3314, %v778
    %3326 = vrot.lane.b32.xlu0 %v3324, 64
    %v3327 = vpop.permute.xlu0 %3326
    %v3329 = vmul.f32 %v3323, %v3327
    %3331 = vrot.lane.b32.xlu0 %v3329, 64
    %v3332 = vpop.permute.xlu0 %3331
    %v3334 = vadd.f32 %v3241, %v3332
    %v3335 = vtanh.pop %v3334
    %v3336 = vsub.f32 1.0, %v3323
    %3338 = vrot.lane.b32.xlu0 %v3335, 96
    %v3339 = vpop.permute.xlu0 %3338
    %v3341 = vmul.f32 %v3336, %v3339
    %v3342 = vmul.f32 %v3323, %v3240
    %v3343 = vadd.f32 %v3341, %v3342
    %v3344 = vld [vmem:[#allocation2 + $0x2e] sm:$0x3]
    %3346 = vrot.lane.b32.xlu0 %v3343, 96
    %v3347 = vpop.permute.xlu0 %3346
    %v3348 = vsel %vm322, %v3347, 0
    %3350 = vmatprep.subr.mxu0 0.0
    %3351 = vmatpush1.msra.mxu0 %v678
    %3352 = vmatprep.subr.mxu0 0.0
    %3353 = vmatpush1.msra.mxu0 %v679
    %3354 = vmatprep.subr.mxu0 0.0
    %3355 = vmatpush1.msra.mxu0 %v680
    %3356 = vmatprep.subr.mxu0 0.0
    %3357 = vmatpush1.msra.mxu0 %v681
    %3358 = vmatprep.subr.mxu0 0.0
    %3359 = vmatpush1.msra.mxu0 0.0
    %3360 = vmatprep.subr.mxu0 0.0
    %3361 = vmatpush1.msra.mxu0 0.0
    %3362 = vmatprep.subr.mxu0 0.0
    %3363 = vmatpush1.msra.mxu0 0.0
    %3364 = vmatprep.subr.mxu0 0.0
    %3365 = vmatpush1.msra.mxu0 0.0
    %3366 = vmatprep.subr.mxu0 0.0
    %3367 = vmatpush1.msra.mxu0 0.0
    %3368 = vmatprep.subr.mxu0 0.0
    %3369 = vmatpush1.msra.mxu0 0.0
    %3370 = vmatprep.subr.mxu0 0.0
    %3371 = vmatpush1.msra.mxu0 0.0
    %3372 = vmatprep.subr.mxu0 0.0
    %3373 = vmatpush1.msra.mxu0 0.0
    %3374 = vmatprep.subr.mxu0 0.0
    %3375 = vmatpush1.msra.mxu0 0.0
    %3376 = vmatprep.subr.mxu0 0.0
    %3377 = vmatpush1.msra.mxu0 0.0
    %3378 = vmatprep.subr.mxu0 0.0
    %3379 = vmatpush1.msra.mxu0 0.0
    %3380 = vmatprep.subr.mxu0 0.0
    %3381 = vmatpush1.msra.mxu0 0.0
    %3382 = vmatprep.subr.mxu0 0.0
    %3383 = vmatpush1.msra.mxu0 0.0
    %3384 = vmatprep.subr.mxu0 0.0
    %3385 = vmatpush1.msra.mxu0 0.0
    %3386 = vmatprep.subr.mxu0 0.0
    %3387 = vmatpush1.msra.mxu0 0.0
    %3388 = vmatprep.subr.mxu0 0.0
    %3389 = vmatpush1.msra.mxu0 0.0
    %3390 = vmatprep.subr.mxu0 0.0
    %3391 = vmatpush1.msra.mxu0 0.0
    %3392 = vmatprep.subr.mxu0 0.0
    %3393 = vmatpush1.msra.mxu0 0.0
    %3394 = vmatprep.subr.mxu0 0.0
    %3395 = vmatpush1.msra.mxu0 0.0
    %3396 = vmatprep.subr.mxu0 0.0
    %3397 = vmatpush1.msra.mxu0 0.0
    %3398 = vmatprep.subr.mxu0 0.0
    %3399 = vmatpush1.msra.mxu0 0.0
    %3400 = vmatprep.subr.mxu0 0.0
    %3401 = vmatpush1.msra.mxu0 0.0
    %3402 = vmatprep.subr.mxu0 0.0
    %3403 = vmatpush1.msra.mxu0 0.0
    %3404 = vmatprep.subr.mxu0 0.0
    %3405 = vmatpush1.msra.mxu0 0.0
    %3406 = vmatprep.subr.mxu0 0.0
    %3407 = vmatpush1.msra.mxu0 0.0
    %3408 = vmatprep.subr.mxu0 0.0
    %3409 = vmatpush1.msra.mxu0 0.0
    %3410 = vmatprep.subr.mxu0 0.0
    %3411 = vmatpush1.msra.mxu0 0.0
    %3412 = vmatprep.subr.mxu0 0.0
    %3413 = vmatpush1.msra.mxu0 0.0
    %3414 = vmatprep.mubr.f32.mxu0 0.0
    %3415 = vmatmul.mubr.f32.gmra.mrb[0].mxu0 %v3348
    %v3416 = vpop.f32.mrb[0].mxu0
    %v3417 = vadd.f32 0.0, %v3416
    %v3418 = vpop.f32.mrb[0].mxu0
    %3419 = vdwg.mxu0
    %v3420 = vadd.f32 %v3344, %v3417
    %v3421 = vxor.u32 %v3420, 2147483648
    %v3422 = vmul.f32 %v3421, 1.442695
    %v3423 = vpow.pop %v3422
    %v3424 = vadd.f32 %v3423, 1.0
    %v3425 = vrcp.pop %v3424
    %v3426 = vmul.f32 1.0, %v3425
    %v3427 = vadd.f32 %v3417, %v778
    %3429 = vrot.lane.b32.xlu0 %v3427, 64
    %v3430 = vpop.permute.xlu0 %3429
    %v3432 = vmul.f32 %v3426, %v3430
    %3434 = vrot.lane.b32.xlu0 %v3432, 64
    %v3435 = vpop.permute.xlu0 %3434
    %v3437 = vadd.f32 %v3344, %v3435
    %v3438 = vtanh.pop %v3437
    %v3439 = vsub.f32 1.0, %v3426
    %3441 = vrot.lane.b32.xlu0 %v3438, 96
    %v3442 = vpop.permute.xlu0 %3441
    %v3444 = vmul.f32 %v3439, %v3442
    %v3445 = vmul.f32 %v3426, %v3343
    %v3446 = vadd.f32 %v3444, %v3445
    %v3447 = vld [vmem:[#allocation2 + $0x30] sm:$0x3]
    %3449 = vrot.lane.b32.xlu0 %v3446, 96
    %v3450 = vpop.permute.xlu0 %3449
    %v3451 = vsel %vm322, %v3450, 0
    %3453 = vmatprep.subr.mxu0 0.0
    %3454 = vmatpush1.msra.mxu0 %v678
    %3455 = vmatprep.subr.mxu0 0.0
    %3456 = vmatpush1.msra.mxu0 %v679
    %3457 = vmatprep.subr.mxu0 0.0
    %3458 = vmatpush1.msra.mxu0 %v680
    %3459 = vmatprep.subr.mxu0 0.0
    %3460 = vmatpush1.msra.mxu0 %v681
    %3461 = vmatprep.subr.mxu0 0.0
    %3462 = vmatpush1.msra.mxu0 0.0
    %3463 = vmatprep.subr.mxu0 0.0
    %3464 = vmatpush1.msra.mxu0 0.0
    %3465 = vmatprep.subr.mxu0 0.0
    %3466 = vmatpush1.msra.mxu0 0.0
    %3467 = vmatprep.subr.mxu0 0.0
    %3468 = vmatpush1.msra.mxu0 0.0
    %3469 = vmatprep.subr.mxu0 0.0
    %3470 = vmatpush1.msra.mxu0 0.0
    %3471 = vmatprep.subr.mxu0 0.0
    %3472 = vmatpush1.msra.mxu0 0.0
    %3473 = vmatprep.subr.mxu0 0.0
    %3474 = vmatpush1.msra.mxu0 0.0
    %3475 = vmatprep.subr.mxu0 0.0
    %3476 = vmatpush1.msra.mxu0 0.0
    %3477 = vmatprep.subr.mxu0 0.0
    %3478 = vmatpush1.msra.mxu0 0.0
    %3479 = vmatprep.subr.mxu0 0.0
    %3480 = vmatpush1.msra.mxu0 0.0
    %3481 = vmatprep.subr.mxu0 0.0
    %3482 = vmatpush1.msra.mxu0 0.0
    %3483 = vmatprep.subr.mxu0 0.0
    %3484 = vmatpush1.msra.mxu0 0.0
    %3485 = vmatprep.subr.mxu0 0.0
    %3486 = vmatpush1.msra.mxu0 0.0
    %3487 = vmatprep.subr.mxu0 0.0
    %3488 = vmatpush1.msra.mxu0 0.0
    %3489 = vmatprep.subr.mxu0 0.0
    %3490 = vmatpush1.msra.mxu0 0.0
    %3491 = vmatprep.subr.mxu0 0.0
    %3492 = vmatpush1.msra.mxu0 0.0
    %3493 = vmatprep.subr.mxu0 0.0
    %3494 = vmatpush1.msra.mxu0 0.0
    %3495 = vmatprep.subr.mxu0 0.0
    %3496 = vmatpush1.msra.mxu0 0.0
    %3497 = vmatprep.subr.mxu0 0.0
    %3498 = vmatpush1.msra.mxu0 0.0
    %3499 = vmatprep.subr.mxu0 0.0
    %3500 = vmatpush1.msra.mxu0 0.0
    %3501 = vmatprep.subr.mxu0 0.0
    %3502 = vmatpush1.msra.mxu0 0.0
    %3503 = vmatprep.subr.mxu0 0.0
    %3504 = vmatpush1.msra.mxu0 0.0
    %3505 = vmatprep.subr.mxu0 0.0
    %3506 = vmatpush1.msra.mxu0 0.0
    %3507 = vmatprep.subr.mxu0 0.0
    %3508 = vmatpush1.msra.mxu0 0.0
    %3509 = vmatprep.subr.mxu0 0.0
    %3510 = vmatpush1.msra.mxu0 0.0
    %3511 = vmatprep.subr.mxu0 0.0
    %3512 = vmatpush1.msra.mxu0 0.0
    %3513 = vmatprep.subr.mxu0 0.0
    %3514 = vmatpush1.msra.mxu0 0.0
    %3515 = vmatprep.subr.mxu0 0.0
    %3516 = vmatpush1.msra.mxu0 0.0
    %3517 = vmatprep.mubr.f32.mxu0 0.0
    %3518 = vmatmul.mubr.f32.gmra.mrb[0].mxu0 %v3451
    %v3519 = vpop.f32.mrb[0].mxu0
    %v3520 = vadd.f32 0.0, %v3519
    %v3521 = vpop.f32.mrb[0].mxu0
    %3522 = vdwg.mxu0
    %v3523 = vadd.f32 %v3447, %v3520
    %v3524 = vxor.u32 %v3523, 2147483648
    %v3525 = vmul.f32 %v3524, 1.442695
    %v3526 = vpow.pop %v3525
    %v3527 = vadd.f32 %v3526, 1.0
    %v3528 = vrcp.pop %v3527
    %v3529 = vmul.f32 1.0, %v3528
    %v3530 = vadd.f32 %v3520, %v778
    %3532 = vrot.lane.b32.xlu0 %v3530, 64
    %v3533 = vpop.permute.xlu0 %3532
    %v3535 = vmul.f32 %v3529, %v3533
    %3537 = vrot.lane.b32.xlu0 %v3535, 64
    %v3538 = vpop.permute.xlu0 %3537
    %v3540 = vadd.f32 %v3447, %v3538
    %v3541 = vtanh.pop %v3540
    %v3542 = vsub.f32 1.0, %v3529
    %3544 = vrot.lane.b32.xlu0 %v3541, 96
    %v3545 = vpop.permute.xlu0 %3544
    %v3547 = vmul.f32 %v3542, %v3545
    %v3548 = vmul.f32 %v3529, %v3446
    %v3549 = vadd.f32 %v3547, %v3548
    %v3550 = vld [vmem:[#allocation2 + $0x32] sm:$0x3]
    %3552 = vrot.lane.b32.xlu0 %v3549, 96
    %v3553 = vpop.permute.xlu0 %3552
    %v3554 = vsel %vm322, %v3553, 0
    %3556 = vmatprep.subr.mxu0 0.0
    %3557 = vmatpush1.msra.mxu0 %v678
    %3558 = vmatprep.subr.mxu0 0.0
    %3559 = vmatpush1.msra.mxu0 %v679
    %3560 = vmatprep.subr.mxu0 0.0
    %3561 = vmatpush1.msra.mxu0 %v680
    %3562 = vmatprep.subr.mxu0 0.0
    %3563 = vmatpush1.msra.mxu0 %v681
    %3564 = vmatprep.subr.mxu0 0.0
    %3565 = vmatpush1.msra.mxu0 0.0
    %3566 = vmatprep.subr.mxu0 0.0
    %3567 = vmatpush1.msra.mxu0 0.0
    %3568 = vmatprep.subr.mxu0 0.0
    %3569 = vmatpush1.msra.mxu0 0.0
    %3570 = vmatprep.subr.mxu0 0.0
    %3571 = vmatpush1.msra.mxu0 0.0
    %3572 = vmatprep.subr.mxu0 0.0
    %3573 = vmatpush1.msra.mxu0 0.0
    %3574 = vmatprep.subr.mxu0 0.0
    %3575 = vmatpush1.msra.mxu0 0.0
    %3576 = vmatprep.subr.mxu0 0.0
    %3577 = vmatpush1.msra.mxu0 0.0
    %3578 = vmatprep.subr.mxu0 0.0
    %3579 = vmatpush1.msra.mxu0 0.0
    %3580 = vmatprep.subr.mxu0 0.0
    %3581 = vmatpush1.msra.mxu0 0.0
    %3582 = vmatprep.subr.mxu0 0.0
    %3583 = vmatpush1.msra.mxu0 0.0
    %3584 = vmatprep.subr.mxu0 0.0
    %3585 = vmatpush1.msra.mxu0 0.0
    %3586 = vmatprep.subr.mxu0 0.0
    %3587 = vmatpush1.msra.mxu0 0.0
    %3588 = vmatprep.subr.mxu0 0.0
    %3589 = vmatpush1.msra.mxu0 0.0
    %3590 = vmatprep.subr.mxu0 0.0
    %3591 = vmatpush1.msra.mxu0 0.0
    %3592 = vmatprep.subr.mxu0 0.0
    %3593 = vmatpush1.msra.mxu0 0.0
    %3594 = vmatprep.subr.mxu0 0.0
    %3595 = vmatpush1.msra.mxu0 0.0
    %3596 = vmatprep.subr.mxu0 0.0
    %3597 = vmatpush1.msra.mxu0 0.0
    %3598 = vmatprep.subr.mxu0 0.0
    %3599 = vmatpush1.msra.mxu0 0.0
    %3600 = vmatprep.subr.mxu0 0.0
    %3601 = vmatpush1.msra.mxu0 0.0
    %3602 = vmatprep.subr.mxu0 0.0
    %3603 = vmatpush1.msra.mxu0 0.0
    %3604 = vmatprep.subr.mxu0 0.0
    %3605 = vmatpush1.msra.mxu0 0.0
    %3606 = vmatprep.subr.mxu0 0.0
    %3607 = vmatpush1.msra.mxu0 0.0
    %3608 = vmatprep.subr.mxu0 0.0
    %3609 = vmatpush1.msra.mxu0 0.0
    %3610 = vmatprep.subr.mxu0 0.0
    %3611 = vmatpush1.msra.mxu0 0.0
    %3612 = vmatprep.subr.mxu0 0.0
    %3613 = vmatpush1.msra.mxu0 0.0
    %3614 = vmatprep.subr.mxu0 0.0
    %3615 = vmatpush1.msra.mxu0 0.0
    %3616 = vmatprep.subr.mxu0 0.0
    %3617 = vmatpush1.msra.mxu0 0.0
    %3618 = vmatprep.subr.mxu0 0.0
    %3619 = vmatpush1.msra.mxu0 0.0
    %3620 = vmatprep.mubr.f32.mxu0 0.0
    %3621 = vmatmul.mubr.f32.gmra.mrb[0].mxu0 %v3554
    %v3622 = vpop.f32.mrb[0].mxu0
    %v3623 = vadd.f32 0.0, %v3622
    %v3624 = vpop.f32.mrb[0].mxu0
    %3625 = vdwg.mxu0
    %v3626 = vadd.f32 %v3550, %v3623
    %v3627 = vxor.u32 %v3626, 2147483648
    %v3628 = vmul.f32 %v3627, 1.442695
    %v3629 = vpow.pop %v3628
    %v3630 = vadd.f32 %v3629, 1.0
    %v3631 = vrcp.pop %v3630
    %v3632 = vmul.f32 1.0, %v3631
    %v3633 = vadd.f32 %v3623, %v778
    %3635 = vrot.lane.b32.xlu0 %v3633, 64
    %v3636 = vpop.permute.xlu0 %3635
    %v3638 = vmul.f32 %v3632, %v3636
    %3640 = vrot.lane.b32.xlu0 %v3638, 64
    %v3641 = vpop.permute.xlu0 %3640
    %v3643 = vadd.f32 %v3550, %v3641
    %v3644 = vtanh.pop %v3643
    %v3645 = vsub.f32 1.0, %v3632
    %3647 = vrot.lane.b32.xlu0 %v3644, 96
    %v3648 = vpop.permute.xlu0 %3647
    %v3650 = vmul.f32 %v3645, %v3648
    %v3651 = vmul.f32 %v3632, %v3549
    %v3652 = vadd.f32 %v3650, %v3651
    %v3653 = vld [vmem:[#allocation3 + $0x26] sm:$0xff]
    %v3654 = vld [vmem:[#allocation3 + $0x2e] sm:$0x3f]
    %3657 = vrot.lane.b32.xlu0 %v2930, 112
    %v3658 = vpop.permute.xlu0 %3657
    %3659 = vrot.lane.b32.xlu0 %v2931, 112
    %v3660 = vpop.permute.xlu0 %3659
    %v3661 = vsel %vm1935, %v3658, 0
    %v3663 = vsel %vm1935, %v3660, 0
    %3665 = vmatprep.subr.mxu0 0.0
    %3666 = vmatpush1.msra.mxu0 %v682
    %3667 = vmatprep.subr.mxu0 0.0
    %3668 = vmatpush1.msra.mxu0 %v683
    %3669 = vmatprep.subr.mxu0 0.0
    %3670 = vmatpush1.msra.mxu0 0.0
    %3671 = vmatprep.subr.mxu0 0.0
    %3672 = vmatpush1.msra.mxu0 0.0
    %3673 = vmatprep.subr.mxu0 0.0
    %3674 = vmatpush1.msra.mxu0 0.0
    %3675 = vmatprep.subr.mxu0 0.0
    %3676 = vmatpush1.msra.mxu0 0.0
    %3677 = vmatprep.subr.mxu0 0.0
    %3678 = vmatpush1.msra.mxu0 0.0
    %3679 = vmatprep.subr.mxu0 0.0
    %3680 = vmatpush1.msra.mxu0 0.0
    %3681 = vmatprep.subr.mxu0 0.0
    %3682 = vmatpush1.msra.mxu0 0.0
    %3683 = vmatprep.subr.mxu0 0.0
    %3684 = vmatpush1.msra.mxu0 0.0
    %3685 = vmatprep.subr.mxu0 0.0
    %3686 = vmatpush1.msra.mxu0 0.0
    %3687 = vmatprep.subr.mxu0 0.0
    %3688 = vmatpush1.msra.mxu0 0.0
    %3689 = vmatprep.subr.mxu0 0.0
    %3690 = vmatpush1.msra.mxu0 0.0
    %3691 = vmatprep.subr.mxu0 0.0
    %3692 = vmatpush1.msra.mxu0 0.0
    %3693 = vmatprep.subr.mxu0 0.0
    %3694 = vmatpush1.msra.mxu0 0.0
    %3695 = vmatprep.subr.mxu0 0.0
    %3696 = vmatpush1.msra.mxu0 0.0
    %3697 = vmatprep.subr.mxu0 0.0
    %3698 = vmatpush1.msra.mxu0 0.0
    %3699 = vmatprep.subr.mxu0 0.0
    %3700 = vmatpush1.msra.mxu0 0.0
    %3701 = vmatprep.subr.mxu0 0.0
    %3702 = vmatpush1.msra.mxu0 0.0
    %3703 = vmatprep.subr.mxu0 0.0
    %3704 = vmatpush1.msra.mxu0 0.0
    %3705 = vmatprep.subr.mxu0 0.0
    %3706 = vmatpush1.msra.mxu0 0.0
    %3707 = vmatprep.subr.mxu0 0.0
    %3708 = vmatpush1.msra.mxu0 0.0
    %3709 = vmatprep.subr.mxu0 0.0
    %3710 = vmatpush1.msra.mxu0 0.0
    %3711 = vmatprep.subr.mxu0 0.0
    %3712 = vmatpush1.msra.mxu0 0.0
    %3713 = vmatprep.subr.mxu0 0.0
    %3714 = vmatpush1.msra.mxu0 0.0
    %3715 = vmatprep.subr.mxu0 0.0
    %3716 = vmatpush1.msra.mxu0 0.0
    %3717 = vmatprep.subr.mxu0 0.0
    %3718 = vmatpush1.msra.mxu0 0.0
    %3719 = vmatprep.subr.mxu0 0.0
    %3720 = vmatpush1.msra.mxu0 0.0
    %3721 = vmatprep.subr.mxu0 0.0
    %3722 = vmatpush1.msra.mxu0 0.0
    %3723 = vmatprep.subr.mxu0 0.0
    %3724 = vmatpush1.msra.mxu0 0.0
    %3725 = vmatprep.subr.mxu0 0.0
    %3726 = vmatpush1.msra.mxu0 0.0
    %3727 = vmatprep.subr.mxu0 0.0
    %3728 = vmatpush1.msra.mxu0 0.0
    %3729 = vmatprep.mubr.f32.mxu0 0.0
    %3730 = vmatmul.mubr.f32.gmra.mrb[0].mxu0 %v3661
    %v3731 = vpop.f32.mrb[0].mxu0
    %v3732 = vadd.f32 0.0, %v3731
    %v3733 = vpop.f32.mrb[0].mxu0
    %3734 = vmatprep.mubr.f32.mxu0 0.0
    %3735 = vmatmul.mubr.f32.gmra.mrb[0].mxu0 %v3663
    %v3736 = vpop.f32.mrb[0].mxu0
    %v3737 = vadd.f32 0.0, %v3736
    %v3738 = vpop.f32.mrb[0].mxu0
    %3739 = vdwg.mxu0
    %v3740 = vadd.f32 %v3653, %v3732
    %v3741 = vadd.f32 %v3654, %v3737
    %v3742 = vxor.u32 %v3740, 2147483648
    %v3743 = vxor.u32 %v3741, 2147483648
    %v3744 = vmul.f32 %v3742, 1.442695
    %v3745 = vpow.pop %v3744
    %v3746 = vmul.f32 %v3743, 1.442695
    %v3747 = vpow.pop %v3746
    %v3748 = vadd.f32 %v3745, 1.0
    %v3749 = vadd.f32 %v3747, 1.0
    %v3750 = vrcp.pop %v3748
    %v3751 = vmul.f32 1.0, %v3750
    %v3752 = vrcp.pop %v3749
    %v3753 = vmul.f32 1.0, %v3752
    %v3754 = vadd.f32 %v3732, %v2028
    %v3755 = vadd.f32 %v3737, %v2028
    %3758 = vrot.lane.b32.xlu0 %v3754, 96
    %v3759 = vpop.permute.xlu0 %3758
    %3760 = vrot.lane.b32.xlu0 %v3755, 96
    %v3761 = vpop.permute.xlu0 %3760
    %v3764 = vmul.f32 %v3751, %v3759
    %v3765 = vmul.f32 %v3753, %v3761
    %3768 = vrot.lane.b32.xlu0 %v3764, 32
    %v3769 = vpop.permute.xlu0 %3768
    %3770 = vrot.lane.b32.xlu0 %v3765, 32
    %v3771 = vpop.permute.xlu0 %3770
    %v3774 = vadd.f32 %v3653, %v3769
    %v3775 = vadd.f32 %v3654, %v3771
    %v3776 = vtanh.pop %v3774
    %v3777 = vtanh.pop %v3775
    %v3778 = vsub.f32 1.0, %v3751
    %v3779 = vsub.f32 1.0, %v3753
    %3782 = vrot.lane.b32.xlu0 %v3776, 112
    %v3783 = vpop.permute.xlu0 %3782
    %3784 = vrot.lane.b32.xlu0 %v3777, 112
    %v3785 = vpop.permute.xlu0 %3784
    %v3788 = vmul.f32 %v3778, %v3783
    %v3789 = vmul.f32 %v3779, %v3785
    %v3790 = vmul.f32 %v3751, %v2930
    %v3791 = vmul.f32 %v3753, %v2931
    %v3792 = vadd.f32 %v3788, %v3790
    %v3793 = vadd.f32 %v3789, %v3791
    %v3794 = vld [vmem:[#allocation2 + $0x34] sm:$0x3]
    %3796 = vrot.lane.b32.xlu0 %v3652, 96
    %v3797 = vpop.permute.xlu0 %3796
    %v3798 = vsel %vm322, %v3797, 0
    %3800 = vmatprep.subr.mxu0 0.0
    %3801 = vmatpush1.msra.mxu0 %v678
    %3802 = vmatprep.subr.mxu0 0.0
    %3803 = vmatpush1.msra.mxu0 %v679
    %3804 = vmatprep.subr.mxu0 0.0
    %3805 = vmatpush1.msra.mxu0 %v680
    %3806 = vmatprep.subr.mxu0 0.0
    %3807 = vmatpush1.msra.mxu0 %v681
    %3808 = vmatprep.subr.mxu0 0.0
    %3809 = vmatpush1.msra.mxu0 0.0
    %3810 = vmatprep.subr.mxu0 0.0
    %3811 = vmatpush1.msra.mxu0 0.0
    %3812 = vmatprep.subr.mxu0 0.0
    %3813 = vmatpush1.msra.mxu0 0.0
    %3814 = vmatprep.subr.mxu0 0.0
    %3815 = vmatpush1.msra.mxu0 0.0
    %3816 = vmatprep.subr.mxu0 0.0
    %3817 = vmatpush1.msra.mxu0 0.0
    %3818 = vmatprep.subr.mxu0 0.0
    %3819 = vmatpush1.msra.mxu0 0.0
    %3820 = vmatprep.subr.mxu0 0.0
    %3821 = vmatpush1.msra.mxu0 0.0
    %3822 = vmatprep.subr.mxu0 0.0
    %3823 = vmatpush1.msra.mxu0 0.0
    %3824 = vmatprep.subr.mxu0 0.0
    %3825 = vmatpush1.msra.mxu0 0.0
    %3826 = vmatprep.subr.mxu0 0.0
    %3827 = vmatpush1.msra.mxu0 0.0
    %3828 = vmatprep.subr.mxu0 0.0
    %3829 = vmatpush1.msra.mxu0 0.0
    %3830 = vmatprep.subr.mxu0 0.0
    %3831 = vmatpush1.msra.mxu0 0.0
    %3832 = vmatprep.subr.mxu0 0.0
    %3833 = vmatpush1.msra.mxu0 0.0
    %3834 = vmatprep.subr.mxu0 0.0
    %3835 = vmatpush1.msra.mxu0 0.0
    %3836 = vmatprep.subr.mxu0 0.0
    %3837 = vmatpush1.msra.mxu0 0.0
    %3838 = vmatprep.subr.mxu0 0.0
    %3839 = vmatpush1.msra.mxu0 0.0
    %3840 = vmatprep.subr.mxu0 0.0
    %3841 = vmatpush1.msra.mxu0 0.0
    %3842 = vmatprep.subr.mxu0 0.0
    %3843 = vmatpush1.msra.mxu0 0.0
    %3844 = vmatprep.subr.mxu0 0.0
    %3845 = vmatpush1.msra.mxu0 0.0
    %3846 = vmatprep.subr.mxu0 0.0
    %3847 = vmatpush1.msra.mxu0 0.0
    %3848 = vmatprep.subr.mxu0 0.0
    %3849 = vmatpush1.msra.mxu0 0.0
    %3850 = vmatprep.subr.mxu0 0.0
    %3851 = vmatpush1.msra.mxu0 0.0
    %3852 = vmatprep.subr.mxu0 0.0
    %3853 = vmatpush1.msra.mxu0 0.0
    %3854 = vmatprep.subr.mxu0 0.0
    %3855 = vmatpush1.msra.mxu0 0.0
    %3856 = vmatprep.subr.mxu0 0.0
    %3857 = vmatpush1.msra.mxu0 0.0
    %3858 = vmatprep.subr.mxu0 0.0
    %3859 = vmatpush1.msra.mxu0 0.0
    %3860 = vmatprep.subr.mxu0 0.0
    %3861 = vmatpush1.msra.mxu0 0.0
    %3862 = vmatprep.subr.mxu0 0.0
    %3863 = vmatpush1.msra.mxu0 0.0
    %3864 = vmatprep.mubr.f32.mxu0 0.0
    %3865 = vmatmul.mubr.f32.gmra.mrb[0].mxu0 %v3798
    %v3866 = vpop.f32.mrb[0].mxu0
    %v3867 = vadd.f32 0.0, %v3866
    %v3868 = vpop.f32.mrb[0].mxu0
    %3869 = vdwg.mxu0
    %v3870 = vadd.f32 %v3794, %v3867
    %v3871 = vxor.u32 %v3870, 2147483648
    %v3872 = vmul.f32 %v3871, 1.442695
    %v3873 = vpow.pop %v3872
    %v3874 = vadd.f32 %v3873, 1.0
    %v3875 = vrcp.pop %v3874
    %v3876 = vmul.f32 1.0, %v3875
    %v3877 = vadd.f32 %v3867, %v778
    %3879 = vrot.lane.b32.xlu0 %v3877, 64
    %v3880 = vpop.permute.xlu0 %3879
    %v3882 = vmul.f32 %v3876, %v3880
    %3884 = vrot.lane.b32.xlu0 %v3882, 64
    %v3885 = vpop.permute.xlu0 %3884
    %v3887 = vadd.f32 %v3794, %v3885
    %v3888 = vtanh.pop %v3887
    %v3889 = vsub.f32 1.0, %v3876
    %3891 = vrot.lane.b32.xlu0 %v3888, 96
    %v3892 = vpop.permute.xlu0 %3891
    %v3894 = vmul.f32 %v3889, %v3892
    %v3895 = vmul.f32 %v3876, %v3652
    %v3896 = vadd.f32 %v3894, %v3895
    %v3897 = vld [vmem:[#allocation2 + $0x36] sm:$0x3]
    %3899 = vrot.lane.b32.xlu0 %v3896, 96
    %v3900 = vpop.permute.xlu0 %3899
    %v3901 = vsel %vm322, %v3900, 0
    %3903 = vmatprep.subr.mxu0 0.0
    %3904 = vmatpush1.msra.mxu0 %v678
    %3905 = vmatprep.subr.mxu0 0.0
    %3906 = vmatpush1.msra.mxu0 %v679
    %3907 = vmatprep.subr.mxu0 0.0
    %3908 = vmatpush1.msra.mxu0 %v680
    %3909 = vmatprep.subr.mxu0 0.0
    %3910 = vmatpush1.msra.mxu0 %v681
    %3911 = vmatprep.subr.mxu0 0.0
    %3912 = vmatpush1.msra.mxu0 0.0
    %3913 = vmatprep.subr.mxu0 0.0
    %3914 = vmatpush1.msra.mxu0 0.0
    %3915 = vmatprep.subr.mxu0 0.0
    %3916 = vmatpush1.msra.mxu0 0.0
    %3917 = vmatprep.subr.mxu0 0.0
    %3918 = vmatpush1.msra.mxu0 0.0
    %3919 = vmatprep.subr.mxu0 0.0
    %3920 = vmatpush1.msra.mxu0 0.0
    %3921 = vmatprep.subr.mxu0 0.0
    %3922 = vmatpush1.msra.mxu0 0.0
    %3923 = vmatprep.subr.mxu0 0.0
    %3924 = vmatpush1.msra.mxu0 0.0
    %3925 = vmatprep.subr.mxu0 0.0
    %3926 = vmatpush1.msra.mxu0 0.0
    %3927 = vmatprep.subr.mxu0 0.0
    %3928 = vmatpush1.msra.mxu0 0.0
    %3929 = vmatprep.subr.mxu0 0.0
    %3930 = vmatpush1.msra.mxu0 0.0
    %3931 = vmatprep.subr.mxu0 0.0
    %3932 = vmatpush1.msra.mxu0 0.0
    %3933 = vmatprep.subr.mxu0 0.0
    %3934 = vmatpush1.msra.mxu0 0.0
    %3935 = vmatprep.subr.mxu0 0.0
    %3936 = vmatpush1.msra.mxu0 0.0
    %3937 = vmatprep.subr.mxu0 0.0
    %3938 = vmatpush1.msra.mxu0 0.0
    %3939 = vmatprep.subr.mxu0 0.0
    %3940 = vmatpush1.msra.mxu0 0.0
    %3941 = vmatprep.subr.mxu0 0.0
    %3942 = vmatpush1.msra.mxu0 0.0
    %3943 = vmatprep.subr.mxu0 0.0
    %3944 = vmatpush1.msra.mxu0 0.0
    %3945 = vmatprep.subr.mxu0 0.0
    %3946 = vmatpush1.msra.mxu0 0.0
    %3947 = vmatprep.subr.mxu0 0.0
    %3948 = vmatpush1.msra.mxu0 0.0
    %3949 = vmatprep.subr.mxu0 0.0
    %3950 = vmatpush1.msra.mxu0 0.0
    %3951 = vmatprep.subr.mxu0 0.0
    %3952 = vmatpush1.msra.mxu0 0.0
    %3953 = vmatprep.subr.mxu0 0.0
    %3954 = vmatpush1.msra.mxu0 0.0
    %3955 = vmatprep.subr.mxu0 0.0
    %3956 = vmatpush1.msra.mxu0 0.0
    %3957 = vmatprep.subr.mxu0 0.0
    %3958 = vmatpush1.msra.mxu0 0.0
    %3959 = vmatprep.subr.mxu0 0.0
    %3960 = vmatpush1.msra.mxu0 0.0
    %3961 = vmatprep.subr.mxu0 0.0
    %3962 = vmatpush1.msra.mxu0 0.0
    %3963 = vmatprep.subr.mxu0 0.0
    %3964 = vmatpush1.msra.mxu0 0.0
    %3965 = vmatprep.subr.mxu0 0.0
    %3966 = vmatpush1.msra.mxu0 0.0
    %3967 = vmatprep.mubr.f32.mxu0 0.0
    %3968 = vmatmul.mubr.f32.gmra.mrb[0].mxu0 %v3901
    %v3969 = vpop.f32.mrb[0].mxu0
    %v3970 = vadd.f32 0.0, %v3969
    %v3971 = vpop.f32.mrb[0].mxu0
    %3972 = vdwg.mxu0
    %v3973 = vadd.f32 %v3897, %v3970
    %v3974 = vxor.u32 %v3973, 2147483648
    %v3975 = vmul.f32 %v3974, 1.442695
    %v3976 = vpow.pop %v3975
    %v3977 = vadd.f32 %v3976, 1.0
    %v3978 = vrcp.pop %v3977
    %v3979 = vmul.f32 1.0, %v3978
    %v3980 = vadd.f32 %v3970, %v778
    %3982 = vrot.lane.b32.xlu0 %v3980, 64
    %v3983 = vpop.permute.xlu0 %3982
    %v3985 = vmul.f32 %v3979, %v3983
    %3987 = vrot.lane.b32.xlu0 %v3985, 64
    %v3988 = vpop.permute.xlu0 %3987
    %v3990 = vadd.f32 %v3897, %v3988
    %v3991 = vtanh.pop %v3990
    %v3992 = vsub.f32 1.0, %v3979
    %3994 = vrot.lane.b32.xlu0 %v3991, 96
    %v3995 = vpop.permute.xlu0 %3994
    %v3997 = vmul.f32 %v3992, %v3995
    %v3998 = vmul.f32 %v3979, %v3896
    %v3999 = vadd.f32 %v3997, %v3998
    %v4000 = vld [vmem:[#allocation2 + $0x38] sm:$0x3]
    %4002 = vrot.lane.b32.xlu0 %v3999, 96
    %v4003 = vpop.permute.xlu0 %4002
    %v4004 = vsel %vm322, %v4003, 0
    %4006 = vmatprep.subr.mxu0 0.0
    %4007 = vmatpush1.msra.mxu0 %v678
    %4008 = vmatprep.subr.mxu0 0.0
    %4009 = vmatpush1.msra.mxu0 %v679
    %4010 = vmatprep.subr.mxu0 0.0
    %4011 = vmatpush1.msra.mxu0 %v680
    %4012 = vmatprep.subr.mxu0 0.0
    %4013 = vmatpush1.msra.mxu0 %v681
    %4014 = vmatprep.subr.mxu0 0.0
    %4015 = vmatpush1.msra.mxu0 0.0
    %4016 = vmatprep.subr.mxu0 0.0
    %4017 = vmatpush1.msra.mxu0 0.0
    %4018 = vmatprep.subr.mxu0 0.0
    %4019 = vmatpush1.msra.mxu0 0.0
    %4020 = vmatprep.subr.mxu0 0.0
    %4021 = vmatpush1.msra.mxu0 0.0
    %4022 = vmatprep.subr.mxu0 0.0
    %4023 = vmatpush1.msra.mxu0 0.0
    %4024 = vmatprep.subr.mxu0 0.0
    %4025 = vmatpush1.msra.mxu0 0.0
    %4026 = vmatprep.subr.mxu0 0.0
    %4027 = vmatpush1.msra.mxu0 0.0
    %4028 = vmatprep.subr.mxu0 0.0
    %4029 = vmatpush1.msra.mxu0 0.0
    %4030 = vmatprep.subr.mxu0 0.0
    %4031 = vmatpush1.msra.mxu0 0.0
    %4032 = vmatprep.subr.mxu0 0.0
    %4033 = vmatpush1.msra.mxu0 0.0
    %4034 = vmatprep.subr.mxu0 0.0
    %4035 = vmatpush1.msra.mxu0 0.0
    %4036 = vmatprep.subr.mxu0 0.0
    %4037 = vmatpush1.msra.mxu0 0.0
    %4038 = vmatprep.subr.mxu0 0.0
    %4039 = vmatpush1.msra.mxu0 0.0
    %4040 = vmatprep.subr.mxu0 0.0
    %4041 = vmatpush1.msra.mxu0 0.0
    %4042 = vmatprep.subr.mxu0 0.0
    %4043 = vmatpush1.msra.mxu0 0.0
    %4044 = vmatprep.subr.mxu0 0.0
    %4045 = vmatpush1.msra.mxu0 0.0
    %4046 = vmatprep.subr.mxu0 0.0
    %4047 = vmatpush1.msra.mxu0 0.0
    %4048 = vmatprep.subr.mxu0 0.0
    %4049 = vmatpush1.msra.mxu0 0.0
    %4050 = vmatprep.subr.mxu0 0.0
    %4051 = vmatpush1.msra.mxu0 0.0
    %4052 = vmatprep.subr.mxu0 0.0
    %4053 = vmatpush1.msra.mxu0 0.0
    %4054 = vmatprep.subr.mxu0 0.0
    %4055 = vmatpush1.msra.mxu0 0.0
    %4056 = vmatprep.subr.mxu0 0.0
    %4057 = vmatpush1.msra.mxu0 0.0
    %4058 = vmatprep.subr.mxu0 0.0
    %4059 = vmatpush1.msra.mxu0 0.0
    %4060 = vmatprep.subr.mxu0 0.0
    %4061 = vmatpush1.msra.mxu0 0.0
    %4062 = vmatprep.subr.mxu0 0.0
    %4063 = vmatpush1.msra.mxu0 0.0
    %4064 = vmatprep.subr.mxu0 0.0
    %4065 = vmatpush1.msra.mxu0 0.0
    %4066 = vmatprep.subr.mxu0 0.0
    %4067 = vmatpush1.msra.mxu0 0.0
    %4068 = vmatprep.subr.mxu0 0.0
    %4069 = vmatpush1.msra.mxu0 0.0
    %4070 = vmatprep.mubr.f32.mxu0 0.0
    %4071 = vmatmul.mubr.f32.gmra.mrb[0].mxu0 %v4004
    %v4072 = vpop.f32.mrb[0].mxu0
    %v4073 = vadd.f32 0.0, %v4072
    %v4074 = vpop.f32.mrb[0].mxu0
    %4075 = vdwg.mxu0
    %v4076 = vadd.f32 %v4000, %v4073
    %v4077 = vxor.u32 %v4076, 2147483648
    %v4078 = vmul.f32 %v4077, 1.442695
    %v4079 = vpow.pop %v4078
    %v4080 = vadd.f32 %v4079, 1.0
    %v4081 = vrcp.pop %v4080
    %v4082 = vmul.f32 1.0, %v4081
    %v4083 = vadd.f32 %v4073, %v778
    %4085 = vrot.lane.b32.xlu0 %v4083, 64
    %v4086 = vpop.permute.xlu0 %4085
    %v4088 = vmul.f32 %v4082, %v4086
    %4090 = vrot.lane.b32.xlu0 %v4088, 64
    %v4091 = vpop.permute.xlu0 %4090
    %v4093 = vadd.f32 %v4000, %v4091
    %v4094 = vtanh.pop %v4093
    %v4095 = vsub.f32 1.0, %v4082
    %4097 = vrot.lane.b32.xlu0 %v4094, 96
    %v4098 = vpop.permute.xlu0 %4097
    %v4100 = vmul.f32 %v4095, %v4098
    %v4101 = vmul.f32 %v4082, %v3999
    %v4102 = vadd.f32 %v4100, %v4101
    %v4103 = vld [vmem:[#allocation2 + $0x3a] sm:$0x3]
    %4105 = vrot.lane.b32.xlu0 %v4102, 96
    %v4106 = vpop.permute.xlu0 %4105
    %v4107 = vsel %vm322, %v4106, 0
    %4109 = vmatprep.subr.mxu0 0.0
    %4110 = vmatpush1.msra.mxu0 %v678
    %4111 = vmatprep.subr.mxu0 0.0
    %4112 = vmatpush1.msra.mxu0 %v679
    %4113 = vmatprep.subr.mxu0 0.0
    %4114 = vmatpush1.msra.mxu0 %v680
    %4115 = vmatprep.subr.mxu0 0.0
    %4116 = vmatpush1.msra.mxu0 %v681
    %4117 = vmatprep.subr.mxu0 0.0
    %4118 = vmatpush1.msra.mxu0 0.0
    %4119 = vmatprep.subr.mxu0 0.0
    %4120 = vmatpush1.msra.mxu0 0.0
    %4121 = vmatprep.subr.mxu0 0.0
    %4122 = vmatpush1.msra.mxu0 0.0
    %4123 = vmatprep.subr.mxu0 0.0
    %4124 = vmatpush1.msra.mxu0 0.0
    %4125 = vmatprep.subr.mxu0 0.0
    %4126 = vmatpush1.msra.mxu0 0.0
    %4127 = vmatprep.subr.mxu0 0.0
    %4128 = vmatpush1.msra.mxu0 0.0
    %4129 = vmatprep.subr.mxu0 0.0
    %4130 = vmatpush1.msra.mxu0 0.0
    %4131 = vmatprep.subr.mxu0 0.0
    %4132 = vmatpush1.msra.mxu0 0.0
    %4133 = vmatprep.subr.mxu0 0.0
    %4134 = vmatpush1.msra.mxu0 0.0
    %4135 = vmatprep.subr.mxu0 0.0
    %4136 = vmatpush1.msra.mxu0 0.0
    %4137 = vmatprep.subr.mxu0 0.0
    %4138 = vmatpush1.msra.mxu0 0.0
    %4139 = vmatprep.subr.mxu0 0.0
    %4140 = vmatpush1.msra.mxu0 0.0
    %4141 = vmatprep.subr.mxu0 0.0
    %4142 = vmatpush1.msra.mxu0 0.0
    %4143 = vmatprep.subr.mxu0 0.0
    %4144 = vmatpush1.msra.mxu0 0.0
    %4145 = vmatprep.subr.mxu0 0.0
    %4146 = vmatpush1.msra.mxu0 0.0
    %4147 = vmatprep.subr.mxu0 0.0
    %4148 = vmatpush1.msra.mxu0 0.0
    %4149 = vmatprep.subr.mxu0 0.0
    %4150 = vmatpush1.msra.mxu0 0.0
    %4151 = vmatprep.subr.mxu0 0.0
    %4152 = vmatpush1.msra.mxu0 0.0
    %4153 = vmatprep.subr.mxu0 0.0
    %4154 = vmatpush1.msra.mxu0 0.0
    %4155 = vmatprep.subr.mxu0 0.0
    %4156 = vmatpush1.msra.mxu0 0.0
    %4157 = vmatprep.subr.mxu0 0.0
    %4158 = vmatpush1.msra.mxu0 0.0
    %4159 = vmatprep.subr.mxu0 0.0
    %4160 = vmatpush1.msra.mxu0 0.0
    %4161 = vmatprep.subr.mxu0 0.0
    %4162 = vmatpush1.msra.mxu0 0.0
    %4163 = vmatprep.subr.mxu0 0.0
    %4164 = vmatpush1.msra.mxu0 0.0
    %4165 = vmatprep.subr.mxu0 0.0
    %4166 = vmatpush1.msra.mxu0 0.0
    %4167 = vmatprep.subr.mxu0 0.0
    %4168 = vmatpush1.msra.mxu0 0.0
    %4169 = vmatprep.subr.mxu0 0.0
    %4170 = vmatpush1.msra.mxu0 0.0
    %4171 = vmatprep.subr.mxu0 0.0
    %4172 = vmatpush1.msra.mxu0 0.0
    %4173 = vmatprep.mubr.f32.mxu0 0.0
    %4174 = vmatmul.mubr.f32.gmra.mrb[0].mxu0 %v4107
    %v4175 = vpop.f32.mrb[0].mxu0
    %v4176 = vadd.f32 0.0, %v4175
    %v4177 = vpop.f32.mrb[0].mxu0
    %4178 = vdwg.mxu0
    %v4179 = vadd.f32 %v4103, %v4176
    %v4180 = vxor.u32 %v4179, 2147483648
    %v4181 = vmul.f32 %v4180, 1.442695
    %v4182 = vpow.pop %v4181
    %v4183 = vadd.f32 %v4182, 1.0
    %v4184 = vrcp.pop %v4183
    %v4185 = vmul.f32 1.0, %v4184
    %v4186 = vadd.f32 %v4176, %v778
    %4188 = vrot.lane.b32.xlu0 %v4186, 64
    %v4189 = vpop.permute.xlu0 %4188
    %v4191 = vmul.f32 %v4185, %v4189
    %4193 = vrot.lane.b32.xlu0 %v4191, 64
    %v4194 = vpop.permute.xlu0 %4193
    %v4196 = vadd.f32 %v4103, %v4194
    %v4197 = vtanh.pop %v4196
    %v4198 = vsub.f32 1.0, %v4185
    %4200 = vrot.lane.b32.xlu0 %v4197, 96
    %v4201 = vpop.permute.xlu0 %4200
    %v4203 = vmul.f32 %v4198, %v4201
    %v4204 = vmul.f32 %v4185, %v4102
    %v4205 = vadd.f32 %v4203, %v4204
    %v4206 = vld [vmem:[#allocation2 + $0x3c] sm:$0x3]
    %4208 = vrot.lane.b32.xlu0 %v4205, 96
    %v4209 = vpop.permute.xlu0 %4208
    %v4210 = vsel %vm322, %v4209, 0
    %4212 = vmatprep.subr.mxu0 0.0
    %4213 = vmatpush1.msra.mxu0 %v678
    %4214 = vmatprep.subr.mxu0 0.0
    %4215 = vmatpush1.msra.mxu0 %v679
    %4216 = vmatprep.subr.mxu0 0.0
    %4217 = vmatpush1.msra.mxu0 %v680
    %4218 = vmatprep.subr.mxu0 0.0
    %4219 = vmatpush1.msra.mxu0 %v681
    %4220 = vmatprep.subr.mxu0 0.0
    %4221 = vmatpush1.msra.mxu0 0.0
    %4222 = vmatprep.subr.mxu0 0.0
    %4223 = vmatpush1.msra.mxu0 0.0
    %4224 = vmatprep.subr.mxu0 0.0
    %4225 = vmatpush1.msra.mxu0 0.0
    %4226 = vmatprep.subr.mxu0 0.0
    %4227 = vmatpush1.msra.mxu0 0.0
    %4228 = vmatprep.subr.mxu0 0.0
    %4229 = vmatpush1.msra.mxu0 0.0
    %4230 = vmatprep.subr.mxu0 0.0
    %4231 = vmatpush1.msra.mxu0 0.0
    %4232 = vmatprep.subr.mxu0 0.0
    %4233 = vmatpush1.msra.mxu0 0.0
    %4234 = vmatprep.subr.mxu0 0.0
    %4235 = vmatpush1.msra.mxu0 0.0
    %4236 = vmatprep.subr.mxu0 0.0
    %4237 = vmatpush1.msra.mxu0 0.0
    %4238 = vmatprep.subr.mxu0 0.0
    %4239 = vmatpush1.msra.mxu0 0.0
    %4240 = vmatprep.subr.mxu0 0.0
    %4241 = vmatpush1.msra.mxu0 0.0
    %4242 = vmatprep.subr.mxu0 0.0
    %4243 = vmatpush1.msra.mxu0 0.0
    %4244 = vmatprep.subr.mxu0 0.0
    %4245 = vmatpush1.msra.mxu0 0.0
    %4246 = vmatprep.subr.mxu0 0.0
    %4247 = vmatpush1.msra.mxu0 0.0
    %4248 = vmatprep.subr.mxu0 0.0
    %4249 = vmatpush1.msra.mxu0 0.0
    %4250 = vmatprep.subr.mxu0 0.0
    %4251 = vmatpush1.msra.mxu0 0.0
    %4252 = vmatprep.subr.mxu0 0.0
    %4253 = vmatpush1.msra.mxu0 0.0
    %4254 = vmatprep.subr.mxu0 0.0
    %4255 = vmatpush1.msra.mxu0 0.0
    %4256 = vmatprep.subr.mxu0 0.0
    %4257 = vmatpush1.msra.mxu0 0.0
    %4258 = vmatprep.subr.mxu0 0.0
    %4259 = vmatpush1.msra.mxu0 0.0
    %4260 = vmatprep.subr.mxu0 0.0
    %4261 = vmatpush1.msra.mxu0 0.0
    %4262 = vmatprep.subr.mxu0 0.0
    %4263 = vmatpush1.msra.mxu0 0.0
    %4264 = vmatprep.subr.mxu0 0.0
    %4265 = vmatpush1.msra.mxu0 0.0
    %4266 = vmatprep.subr.mxu0 0.0
    %4267 = vmatpush1.msra.mxu0 0.0
    %4268 = vmatprep.subr.mxu0 0.0
    %4269 = vmatpush1.msra.mxu0 0.0
    %4270 = vmatprep.subr.mxu0 0.0
    %4271 = vmatpush1.msra.mxu0 0.0
    %4272 = vmatprep.subr.mxu0 0.0
    %4273 = vmatpush1.msra.mxu0 0.0
    %4274 = vmatprep.subr.mxu0 0.0
    %4275 = vmatpush1.msra.mxu0 0.0
    %4276 = vmatprep.mubr.f32.mxu0 0.0
    %4277 = vmatmul.mubr.f32.gmra.mrb[0].mxu0 %v4210
    %v4278 = vpop.f32.mrb[0].mxu0
    %v4279 = vadd.f32 0.0, %v4278
    %v4280 = vpop.f32.mrb[0].mxu0
    %4281 = vdwg.mxu0
    %v4282 = vadd.f32 %v4206, %v4279
    %v4283 = vxor.u32 %v4282, 2147483648
    %v4284 = vmul.f32 %v4283, 1.442695
    %v4285 = vpow.pop %v4284
    %v4286 = vadd.f32 %v4285, 1.0
    %v4287 = vrcp.pop %v4286
    %v4288 = vmul.f32 1.0, %v4287
    %v4289 = vadd.f32 %v4279, %v778
    %4291 = vrot.lane.b32.xlu0 %v4289, 64
    %v4292 = vpop.permute.xlu0 %4291
    %v4294 = vmul.f32 %v4288, %v4292
    %4296 = vrot.lane.b32.xlu0 %v4294, 64
    %v4297 = vpop.permute.xlu0 %4296
    %v4299 = vadd.f32 %v4206, %v4297
    %v4300 = vtanh.pop %v4299
    %v4301 = vsub.f32 1.0, %v4288
    %4303 = vrot.lane.b32.xlu0 %v4300, 96
    %v4304 = vpop.permute.xlu0 %4303
    %v4306 = vmul.f32 %v4301, %v4304
    %v4307 = vmul.f32 %v4288, %v4205
    %v4308 = vadd.f32 %v4306, %v4307
    %v4309 = vld [vmem:[#allocation2 + $0x3e] sm:$0x3]
    %4311 = vrot.lane.b32.xlu0 %v4308, 96
    %v4312 = vpop.permute.xlu0 %4311
    %v4313 = vsel %vm322, %v4312, 0
    %4315 = vmatprep.subr.mxu0 0.0
    %4316 = vmatpush1.msra.mxu0 %v678
    %4317 = vmatprep.subr.mxu0 0.0
    %4318 = vmatpush1.msra.mxu0 %v679
    %4319 = vmatprep.subr.mxu0 0.0
    %4320 = vmatpush1.msra.mxu0 %v680
    %4321 = vmatprep.subr.mxu0 0.0
    %4322 = vmatpush1.msra.mxu0 %v681
    %4323 = vmatprep.subr.mxu0 0.0
    %4324 = vmatpush1.msra.mxu0 0.0
    %4325 = vmatprep.subr.mxu0 0.0
    %4326 = vmatpush1.msra.mxu0 0.0
    %4327 = vmatprep.subr.mxu0 0.0
    %4328 = vmatpush1.msra.mxu0 0.0
    %4329 = vmatprep.subr.mxu0 0.0
    %4330 = vmatpush1.msra.mxu0 0.0
    %4331 = vmatprep.subr.mxu0 0.0
    %4332 = vmatpush1.msra.mxu0 0.0
    %4333 = vmatprep.subr.mxu0 0.0
    %4334 = vmatpush1.msra.mxu0 0.0
    %4335 = vmatprep.subr.mxu0 0.0
    %4336 = vmatpush1.msra.mxu0 0.0
    %4337 = vmatprep.subr.mxu0 0.0
    %4338 = vmatpush1.msra.mxu0 0.0
    %4339 = vmatprep.subr.mxu0 0.0
    %4340 = vmatpush1.msra.mxu0 0.0
    %4341 = vmatprep.subr.mxu0 0.0
    %4342 = vmatpush1.msra.mxu0 0.0
    %4343 = vmatprep.subr.mxu0 0.0
    %4344 = vmatpush1.msra.mxu0 0.0
    %4345 = vmatprep.subr.mxu0 0.0
    %4346 = vmatpush1.msra.mxu0 0.0
    %4347 = vmatprep.subr.mxu0 0.0
    %4348 = vmatpush1.msra.mxu0 0.0
    %4349 = vmatprep.subr.mxu0 0.0
    %4350 = vmatpush1.msra.mxu0 0.0
    %4351 = vmatprep.subr.mxu0 0.0
    %4352 = vmatpush1.msra.mxu0 0.0
    %4353 = vmatprep.subr.mxu0 0.0
    %4354 = vmatpush1.msra.mxu0 0.0
    %4355 = vmatprep.subr.mxu0 0.0
    %4356 = vmatpush1.msra.mxu0 0.0
    %4357 = vmatprep.subr.mxu0 0.0
    %4358 = vmatpush1.msra.mxu0 0.0
    %4359 = vmatprep.subr.mxu0 0.0
    %4360 = vmatpush1.msra.mxu0 0.0
    %4361 = vmatprep.subr.mxu0 0.0
    %4362 = vmatpush1.msra.mxu0 0.0
    %4363 = vmatprep.subr.mxu0 0.0
    %4364 = vmatpush1.msra.mxu0 0.0
    %4365 = vmatprep.subr.mxu0 0.0
    %4366 = vmatpush1.msra.mxu0 0.0
    %4367 = vmatprep.subr.mxu0 0.0
    %4368 = vmatpush1.msra.mxu0 0.0
    %4369 = vmatprep.subr.mxu0 0.0
    %4370 = vmatpush1.msra.mxu0 0.0
    %4371 = vmatprep.subr.mxu0 0.0
    %4372 = vmatpush1.msra.mxu0 0.0
    %4373 = vmatprep.subr.mxu0 0.0
    %4374 = vmatpush1.msra.mxu0 0.0
    %4375 = vmatprep.subr.mxu0 0.0
    %4376 = vmatpush1.msra.mxu0 0.0
    %4377 = vmatprep.subr.mxu0 0.0
    %4378 = vmatpush1.msra.mxu0 0.0
    %4379 = vmatprep.mubr.f32.mxu0 0.0
    %4380 = vmatmul.mubr.f32.gmra.mrb[0].mxu0 %v4313
    %v4381 = vpop.f32.mrb[0].mxu0
    %v4382 = vadd.f32 0.0, %v4381
    %v4383 = vpop.f32.mrb[0].mxu0
    %4384 = vdwg.mxu0
    %v4385 = vadd.f32 %v4309, %v4382
    %v4386 = vxor.u32 %v4385, 2147483648
    %v4387 = vmul.f32 %v4386, 1.442695
    %v4388 = vpow.pop %v4387
    %v4389 = vadd.f32 %v4388, 1.0
    %v4390 = vrcp.pop %v4389
    %v4391 = vmul.f32 1.0, %v4390
    %v4392 = vadd.f32 %v4382, %v778
    %4394 = vrot.lane.b32.xlu0 %v4392, 64
    %v4395 = vpop.permute.xlu0 %4394
    %v4397 = vmul.f32 %v4391, %v4395
    %4399 = vrot.lane.b32.xlu0 %v4397, 64
    %v4400 = vpop.permute.xlu0 %4399
    %v4402 = vadd.f32 %v4309, %v4400
    %v4403 = vtanh.pop %v4402
    %v4404 = vsub.f32 1.0, %v4391
    %4406 = vrot.lane.b32.xlu0 %v4403, 96
    %v4407 = vpop.permute.xlu0 %4406
    %v4409 = vmul.f32 %v4404, %v4407
    %v4410 = vmul.f32 %v4391, %v4308
    %v4411 = vadd.f32 %v4409, %v4410
    %v4412 = vld [vmem:[#allocation2 + $0x40] sm:$0x3]
    %4414 = vrot.lane.b32.xlu0 %v4411, 96
    %v4415 = vpop.permute.xlu0 %4414
    %v4416 = vsel %vm322, %v4415, 0
    %4418 = vmatprep.subr.mxu0 0.0
    %4419 = vmatpush1.msra.mxu0 %v678
    %4420 = vmatprep.subr.mxu0 0.0
    %4421 = vmatpush1.msra.mxu0 %v679
    %4422 = vmatprep.subr.mxu0 0.0
    %4423 = vmatpush1.msra.mxu0 %v680
    %4424 = vmatprep.subr.mxu0 0.0
    %4425 = vmatpush1.msra.mxu0 %v681
    %4426 = vmatprep.subr.mxu0 0.0
    %4427 = vmatpush1.msra.mxu0 0.0
    %4428 = vmatprep.subr.mxu0 0.0
    %4429 = vmatpush1.msra.mxu0 0.0
    %4430 = vmatprep.subr.mxu0 0.0
    %4431 = vmatpush1.msra.mxu0 0.0
    %4432 = vmatprep.subr.mxu0 0.0
    %4433 = vmatpush1.msra.mxu0 0.0
    %4434 = vmatprep.subr.mxu0 0.0
    %4435 = vmatpush1.msra.mxu0 0.0
    %4436 = vmatprep.subr.mxu0 0.0
    %4437 = vmatpush1.msra.mxu0 0.0
    %4438 = vmatprep.subr.mxu0 0.0
    %4439 = vmatpush1.msra.mxu0 0.0
    %4440 = vmatprep.subr.mxu0 0.0
    %4441 = vmatpush1.msra.mxu0 0.0
    %4442 = vmatprep.subr.mxu0 0.0
    %4443 = vmatpush1.msra.mxu0 0.0
    %4444 = vmatprep.subr.mxu0 0.0
    %4445 = vmatpush1.msra.mxu0 0.0
    %4446 = vmatprep.subr.mxu0 0.0
    %4447 = vmatpush1.msra.mxu0 0.0
    %4448 = vmatprep.subr.mxu0 0.0
    %4449 = vmatpush1.msra.mxu0 0.0
    %4450 = vmatprep.subr.mxu0 0.0
    %4451 = vmatpush1.msra.mxu0 0.0
    %4452 = vmatprep.subr.mxu0 0.0
    %4453 = vmatpush1.msra.mxu0 0.0
    %4454 = vmatprep.subr.mxu0 0.0
    %4455 = vmatpush1.msra.mxu0 0.0
    %4456 = vmatprep.subr.mxu0 0.0
    %4457 = vmatpush1.msra.mxu0 0.0
    %4458 = vmatprep.subr.mxu0 0.0
    %4459 = vmatpush1.msra.mxu0 0.0
    %4460 = vmatprep.subr.mxu0 0.0
    %4461 = vmatpush1.msra.mxu0 0.0
    %4462 = vmatprep.subr.mxu0 0.0
    %4463 = vmatpush1.msra.mxu0 0.0
    %4464 = vmatprep.subr.mxu0 0.0
    %4465 = vmatpush1.msra.mxu0 0.0
    %4466 = vmatprep.subr.mxu0 0.0
    %4467 = vmatpush1.msra.mxu0 0.0
    %4468 = vmatprep.subr.mxu0 0.0
    %4469 = vmatpush1.msra.mxu0 0.0
    %4470 = vmatprep.subr.mxu0 0.0
    %4471 = vmatpush1.msra.mxu0 0.0
    %4472 = vmatprep.subr.mxu0 0.0
    %4473 = vmatpush1.msra.mxu0 0.0
    %4474 = vmatprep.subr.mxu0 0.0
    %4475 = vmatpush1.msra.mxu0 0.0
    %4476 = vmatprep.subr.mxu0 0.0
    %4477 = vmatpush1.msra.mxu0 0.0
    %4478 = vmatprep.subr.mxu0 0.0
    %4479 = vmatpush1.msra.mxu0 0.0
    %4480 = vmatprep.subr.mxu0 0.0
    %4481 = vmatpush1.msra.mxu0 0.0
    %4482 = vmatprep.mubr.f32.mxu0 0.0
    %4483 = vmatmul.mubr.f32.gmra.mrb[0].mxu0 %v4416
    %v4484 = vpop.f32.mrb[0].mxu0
    %v4485 = vadd.f32 0.0, %v4484
    %v4486 = vpop.f32.mrb[0].mxu0
    %4487 = vdwg.mxu0
    %v4488 = vadd.f32 %v4412, %v4485
    %v4489 = vxor.u32 %v4488, 2147483648
    %v4490 = vmul.f32 %v4489, 1.442695
    %v4491 = vpow.pop %v4490
    %v4492 = vadd.f32 %v4491, 1.0
    %v4493 = vrcp.pop %v4492
    %v4494 = vmul.f32 1.0, %v4493
    %v4495 = vadd.f32 %v4485, %v778
    %4497 = vrot.lane.b32.xlu0 %v4495, 64
    %v4498 = vpop.permute.xlu0 %4497
    %v4500 = vmul.f32 %v4494, %v4498
    %4502 = vrot.lane.b32.xlu0 %v4500, 64
    %v4503 = vpop.permute.xlu0 %4502
    %v4505 = vadd.f32 %v4412, %v4503
    %v4506 = vtanh.pop %v4505
    %v4507 = vsub.f32 1.0, %v4494
    %4509 = vrot.lane.b32.xlu0 %v4506, 96
    %v4510 = vpop.permute.xlu0 %4509
    %v4512 = vmul.f32 %v4507, %v4510
    %v4513 = vmul.f32 %v4494, %v4411
    %v4514 = vadd.f32 %v4512, %v4513
    %v4515 = vld [vmem:[#allocation3 + $0x34] sm:$0xff]
    %v4516 = vld [vmem:[#allocation3 + $0x3c] sm:$0x3f]
    %4519 = vrot.lane.b32.xlu0 %v3792, 112
    %v4520 = vpop.permute.xlu0 %4519
    %4521 = vrot.lane.b32.xlu0 %v3793, 112
    %v4522 = vpop.permute.xlu0 %4521
    %v4523 = vsel %vm1935, %v4520, 0
    %v4525 = vsel %vm1935, %v4522, 0
    %4527 = vmatprep.subr.mxu0 0.0
    %4528 = vmatpush1.msra.mxu0 %v682
    %4529 = vmatprep.subr.mxu0 0.0
    %4530 = vmatpush1.msra.mxu0 %v683
    %4531 = vmatprep.subr.mxu0 0.0
    %4532 = vmatpush1.msra.mxu0 0.0
    %4533 = vmatprep.subr.mxu0 0.0
    %4534 = vmatpush1.msra.mxu0 0.0
    %4535 = vmatprep.subr.mxu0 0.0
    %4536 = vmatpush1.msra.mxu0 0.0
    %4537 = vmatprep.subr.mxu0 0.0
    %4538 = vmatpush1.msra.mxu0 0.0
    %4539 = vmatprep.subr.mxu0 0.0
    %4540 = vmatpush1.msra.mxu0 0.0
    %4541 = vmatprep.subr.mxu0 0.0
    %4542 = vmatpush1.msra.mxu0 0.0
    %4543 = vmatprep.subr.mxu0 0.0
    %4544 = vmatpush1.msra.mxu0 0.0
    %4545 = vmatprep.subr.mxu0 0.0
    %4546 = vmatpush1.msra.mxu0 0.0
    %4547 = vmatprep.subr.mxu0 0.0
    %4548 = vmatpush1.msra.mxu0 0.0
    %4549 = vmatprep.subr.mxu0 0.0
    %4550 = vmatpush1.msra.mxu0 0.0
    %4551 = vmatprep.subr.mxu0 0.0
    %4552 = vmatpush1.msra.mxu0 0.0
    %4553 = vmatprep.subr.mxu0 0.0
    %4554 = vmatpush1.msra.mxu0 0.0
    %4555 = vmatprep.subr.mxu0 0.0
    %4556 = vmatpush1.msra.mxu0 0.0
    %4557 = vmatprep.subr.mxu0 0.0
    %4558 = vmatpush1.msra.mxu0 0.0
    %4559 = vmatprep.subr.mxu0 0.0
    %4560 = vmatpush1.msra.mxu0 0.0
    %4561 = vmatprep.subr.mxu0 0.0
    %4562 = vmatpush1.msra.mxu0 0.0
    %4563 = vmatprep.subr.mxu0 0.0
    %4564 = vmatpush1.msra.mxu0 0.0
    %4565 = vmatprep.subr.mxu0 0.0
    %4566 = vmatpush1.msra.mxu0 0.0
    %4567 = vmatprep.subr.mxu0 0.0
    %4568 = vmatpush1.msra.mxu0 0.0
    %4569 = vmatprep.subr.mxu0 0.0
    %4570 = vmatpush1.msra.mxu0 0.0
    %4571 = vmatprep.subr.mxu0 0.0
    %4572 = vmatpush1.msra.mxu0 0.0
    %4573 = vmatprep.subr.mxu0 0.0
    %4574 = vmatpush1.msra.mxu0 0.0
    %4575 = vmatprep.subr.mxu0 0.0
    %4576 = vmatpush1.msra.mxu0 0.0
    %4577 = vmatprep.subr.mxu0 0.0
    %4578 = vmatpush1.msra.mxu0 0.0
    %4579 = vmatprep.subr.mxu0 0.0
    %4580 = vmatpush1.msra.mxu0 0.0
    %4581 = vmatprep.subr.mxu0 0.0
    %4582 = vmatpush1.msra.mxu0 0.0
    %4583 = vmatprep.subr.mxu0 0.0
    %4584 = vmatpush1.msra.mxu0 0.0
    %4585 = vmatprep.subr.mxu0 0.0
    %4586 = vmatpush1.msra.mxu0 0.0
    %4587 = vmatprep.subr.mxu0 0.0
    %4588 = vmatpush1.msra.mxu0 0.0
    %4589 = vmatprep.subr.mxu0 0.0
    %4590 = vmatpush1.msra.mxu0 0.0
    %4591 = vmatprep.mubr.f32.mxu0 0.0
    %4592 = vmatmul.mubr.f32.gmra.mrb[0].mxu0 %v4523
    %v4593 = vpop.f32.mrb[0].mxu0
    %v4594 = vadd.f32 0.0, %v4593
    %v4595 = vpop.f32.mrb[0].mxu0
    %4596 = vmatprep.mubr.f32.mxu0 0.0
    %4597 = vmatmul.mubr.f32.gmra.mrb[0].mxu0 %v4525
    %v4598 = vpop.f32.mrb[0].mxu0
    %v4599 = vadd.f32 0.0, %v4598
    %v4600 = vpop.f32.mrb[0].mxu0
    %4601 = vdwg.mxu0
    %v4602 = vadd.f32 %v4515, %v4594
    %v4603 = vadd.f32 %v4516, %v4599
    %v4604 = vxor.u32 %v4602, 2147483648
    %v4605 = vxor.u32 %v4603, 2147483648
    %v4606 = vmul.f32 %v4604, 1.442695
    %v4607 = vpow.pop %v4606
    %v4608 = vmul.f32 %v4605, 1.442695
    %v4609 = vpow.pop %v4608
    %v4610 = vadd.f32 %v4607, 1.0
    %v4611 = vadd.f32 %v4609, 1.0
    %v4612 = vrcp.pop %v4610
    %v4613 = vmul.f32 1.0, %v4612
    %v4614 = vrcp.pop %v4611
    %v4615 = vmul.f32 1.0, %v4614
    %v4616 = vadd.f32 %v4594, %v2028
    %v4617 = vadd.f32 %v4599, %v2028
    %4620 = vrot.lane.b32.xlu0 %v4616, 96
    %v4621 = vpop.permute.xlu0 %4620
    %4622 = vrot.lane.b32.xlu0 %v4617, 96
    %v4623 = vpop.permute.xlu0 %4622
    %v4626 = vmul.f32 %v4613, %v4621
    %v4627 = vmul.f32 %v4615, %v4623
    %4630 = vrot.lane.b32.xlu0 %v4626, 32
    %v4631 = vpop.permute.xlu0 %4630
    %4632 = vrot.lane.b32.xlu0 %v4627, 32
    %v4633 = vpop.permute.xlu0 %4632
    %v4636 = vadd.f32 %v4515, %v4631
    %v4637 = vadd.f32 %v4516, %v4633
    %v4638 = vtanh.pop %v4636
    %v4639 = vtanh.pop %v4637
    %v4640 = vsub.f32 1.0, %v4613
    %v4641 = vsub.f32 1.0, %v4615
    %4644 = vrot.lane.b32.xlu0 %v4638, 112
    %v4645 = vpop.permute.xlu0 %4644
    %4646 = vrot.lane.b32.xlu0 %v4639, 112
    %v4647 = vpop.permute.xlu0 %4646
    %v4650 = vmul.f32 %v4640, %v4645
    %v4651 = vmul.f32 %v4641, %v4647
    %v4652 = vmul.f32 %v4613, %v3792
    %v4653 = vmul.f32 %v4615, %v3793
    %v4654 = vadd.f32 %v4650, %v4652
    %v4655 = vadd.f32 %v4651, %v4653
    %v4656 = vld [vmem:[#allocation2 + $0x42] sm:$0x3]
    %4658 = vrot.lane.b32.xlu0 %v4514, 96
    %v4659 = vpop.permute.xlu0 %4658
    %v4660 = vsel %vm322, %v4659, 0
    %4662 = vmatprep.subr.mxu0 0.0
    %4663 = vmatpush1.msra.mxu0 %v678
    %4664 = vmatprep.subr.mxu0 0.0
    %4665 = vmatpush1.msra.mxu0 %v679
    %4666 = vmatprep.subr.mxu0 0.0
    %4667 = vmatpush1.msra.mxu0 %v680
    %4668 = vmatprep.subr.mxu0 0.0
    %4669 = vmatpush1.msra.mxu0 %v681
    %4670 = vmatprep.subr.mxu0 0.0
    %4671 = vmatpush1.msra.mxu0 0.0
    %4672 = vmatprep.subr.mxu0 0.0
    %4673 = vmatpush1.msra.mxu0 0.0
    %4674 = vmatprep.subr.mxu0 0.0
    %4675 = vmatpush1.msra.mxu0 0.0
    %4676 = vmatprep.subr.mxu0 0.0
    %4677 = vmatpush1.msra.mxu0 0.0
    %4678 = vmatprep.subr.mxu0 0.0
    %4679 = vmatpush1.msra.mxu0 0.0
    %4680 = vmatprep.subr.mxu0 0.0
    %4681 = vmatpush1.msra.mxu0 0.0
    %4682 = vmatprep.subr.mxu0 0.0
    %4683 = vmatpush1.msra.mxu0 0.0
    %4684 = vmatprep.subr.mxu0 0.0
    %4685 = vmatpush1.msra.mxu0 0.0
    %4686 = vmatprep.subr.mxu0 0.0
    %4687 = vmatpush1.msra.mxu0 0.0
    %4688 = vmatprep.subr.mxu0 0.0
    %4689 = vmatpush1.msra.mxu0 0.0
    %4690 = vmatprep.subr.mxu0 0.0
    %4691 = vmatpush1.msra.mxu0 0.0
    %4692 = vmatprep.subr.mxu0 0.0
    %4693 = vmatpush1.msra.mxu0 0.0
    %4694 = vmatprep.subr.mxu0 0.0
    %4695 = vmatpush1.msra.mxu0 0.0
    %4696 = vmatprep.subr.mxu0 0.0
    %4697 = vmatpush1.msra.mxu0 0.0
    %4698 = vmatprep.subr.mxu0 0.0
    %4699 = vmatpush1.msra.mxu0 0.0
    %4700 = vmatprep.subr.mxu0 0.0
    %4701 = vmatpush1.msra.mxu0 0.0
    %4702 = vmatprep.subr.mxu0 0.0
    %4703 = vmatpush1.msra.mxu0 0.0
    %4704 = vmatprep.subr.mxu0 0.0
    %4705 = vmatpush1.msra.mxu0 0.0
    %4706 = vmatprep.subr.mxu0 0.0
    %4707 = vmatpush1.msra.mxu0 0.0
    %4708 = vmatprep.subr.mxu0 0.0
    %4709 = vmatpush1.msra.mxu0 0.0
    %4710 = vmatprep.subr.mxu0 0.0
    %4711 = vmatpush1.msra.mxu0 0.0
    %4712 = vmatprep.subr.mxu0 0.0
    %4713 = vmatpush1.msra.mxu0 0.0
    %4714 = vmatprep.subr.mxu0 0.0
    %4715 = vmatpush1.msra.mxu0 0.0
    %4716 = vmatprep.subr.mxu0 0.0
    %4717 = vmatpush1.msra.mxu0 0.0
    %4718 = vmatprep.subr.mxu0 0.0
    %4719 = vmatpush1.msra.mxu0 0.0
    %4720 = vmatprep.subr.mxu0 0.0
    %4721 = vmatpush1.msra.mxu0 0.0
    %4722 = vmatprep.subr.mxu0 0.0
    %4723 = vmatpush1.msra.mxu0 0.0
    %4724 = vmatprep.subr.mxu0 0.0
    %4725 = vmatpush1.msra.mxu0 0.0
    %4726 = vmatprep.mubr.f32.mxu0 0.0
    %4727 = vmatmul.mubr.f32.gmra.mrb[0].mxu0 %v4660
    %v4728 = vpop.f32.mrb[0].mxu0
    %v4729 = vadd.f32 0.0, %v4728
    %v4730 = vpop.f32.mrb[0].mxu0
    %4731 = vdwg.mxu0
    %v4732 = vadd.f32 %v4656, %v4729
    %v4733 = vxor.u32 %v4732, 2147483648
    %v4734 = vmul.f32 %v4733, 1.442695
    %v4735 = vpow.pop %v4734
    %v4736 = vadd.f32 %v4735, 1.0
    %v4737 = vrcp.pop %v4736
    %v4738 = vmul.f32 1.0, %v4737
    %v4739 = vadd.f32 %v4729, %v778
    %4741 = vrot.lane.b32.xlu0 %v4739, 64
    %v4742 = vpop.permute.xlu0 %4741
    %v4744 = vmul.f32 %v4738, %v4742
    %4746 = vrot.lane.b32.xlu0 %v4744, 64
    %v4747 = vpop.permute.xlu0 %4746
    %v4749 = vadd.f32 %v4656, %v4747
    %v4750 = vtanh.pop %v4749
    %v4751 = vsub.f32 1.0, %v4738
    %4753 = vrot.lane.b32.xlu0 %v4750, 96
    %v4754 = vpop.permute.xlu0 %4753
    %v4756 = vmul.f32 %v4751, %v4754
    %v4757 = vmul.f32 %v4738, %v4514
    %v4758 = vadd.f32 %v4756, %v4757
    %v4759 = vld [vmem:[#allocation2 + $0x44] sm:$0x3]
    %4761 = vrot.lane.b32.xlu0 %v4758, 96
    %v4762 = vpop.permute.xlu0 %4761
    %v4763 = vsel %vm322, %v4762, 0
    %4765 = vmatprep.subr.mxu0 0.0
    %4766 = vmatpush1.msra.mxu0 %v678
    %4767 = vmatprep.subr.mxu0 0.0
    %4768 = vmatpush1.msra.mxu0 %v679
    %4769 = vmatprep.subr.mxu0 0.0
    %4770 = vmatpush1.msra.mxu0 %v680
    %4771 = vmatprep.subr.mxu0 0.0
    %4772 = vmatpush1.msra.mxu0 %v681
    %4773 = vmatprep.subr.mxu0 0.0
    %4774 = vmatpush1.msra.mxu0 0.0
    %4775 = vmatprep.subr.mxu0 0.0
    %4776 = vmatpush1.msra.mxu0 0.0
    %4777 = vmatprep.subr.mxu0 0.0
    %4778 = vmatpush1.msra.mxu0 0.0
    %4779 = vmatprep.subr.mxu0 0.0
    %4780 = vmatpush1.msra.mxu0 0.0
    %4781 = vmatprep.subr.mxu0 0.0
    %4782 = vmatpush1.msra.mxu0 0.0
    %4783 = vmatprep.subr.mxu0 0.0
    %4784 = vmatpush1.msra.mxu0 0.0
    %4785 = vmatprep.subr.mxu0 0.0
    %4786 = vmatpush1.msra.mxu0 0.0
    %4787 = vmatprep.subr.mxu0 0.0
    %4788 = vmatpush1.msra.mxu0 0.0
    %4789 = vmatprep.subr.mxu0 0.0
    %4790 = vmatpush1.msra.mxu0 0.0
    %4791 = vmatprep.subr.mxu0 0.0
    %4792 = vmatpush1.msra.mxu0 0.0
    %4793 = vmatprep.subr.mxu0 0.0
    %4794 = vmatpush1.msra.mxu0 0.0
    %4795 = vmatprep.subr.mxu0 0.0
    %4796 = vmatpush1.msra.mxu0 0.0
    %4797 = vmatprep.subr.mxu0 0.0
    %4798 = vmatpush1.msra.mxu0 0.0
    %4799 = vmatprep.subr.mxu0 0.0
    %4800 = vmatpush1.msra.mxu0 0.0
    %4801 = vmatprep.subr.mxu0 0.0
    %4802 = vmatpush1.msra.mxu0 0.0
    %4803 = vmatprep.subr.mxu0 0.0
    %4804 = vmatpush1.msra.mxu0 0.0
    %4805 = vmatprep.subr.mxu0 0.0
    %4806 = vmatpush1.msra.mxu0 0.0
    %4807 = vmatprep.subr.mxu0 0.0
    %4808 = vmatpush1.msra.mxu0 0.0
    %4809 = vmatprep.subr.mxu0 0.0
    %4810 = vmatpush1.msra.mxu0 0.0
    %4811 = vmatprep.subr.mxu0 0.0
    %4812 = vmatpush1.msra.mxu0 0.0
    %4813 = vmatprep.subr.mxu0 0.0
    %4814 = vmatpush1.msra.mxu0 0.0
    %4815 = vmatprep.subr.mxu0 0.0
    %4816 = vmatpush1.msra.mxu0 0.0
    %4817 = vmatprep.subr.mxu0 0.0
    %4818 = vmatpush1.msra.mxu0 0.0
    %4819 = vmatprep.subr.mxu0 0.0
    %4820 = vmatpush1.msra.mxu0 0.0
    %4821 = vmatprep.subr.mxu0 0.0
    %4822 = vmatpush1.msra.mxu0 0.0
    %4823 = vmatprep.subr.mxu0 0.0
    %4824 = vmatpush1.msra.mxu0 0.0
    %4825 = vmatprep.subr.mxu0 0.0
    %4826 = vmatpush1.msra.mxu0 0.0
    %4827 = vmatprep.subr.mxu0 0.0
    %4828 = vmatpush1.msra.mxu0 0.0
    %4829 = vmatprep.mubr.f32.mxu0 0.0
    %4830 = vmatmul.mubr.f32.gmra.mrb[0].mxu0 %v4763
    %v4831 = vpop.f32.mrb[0].mxu0
    %v4832 = vadd.f32 0.0, %v4831
    %v4833 = vpop.f32.mrb[0].mxu0
    %4834 = vdwg.mxu0
    %v4835 = vadd.f32 %v4759, %v4832
    %v4836 = vxor.u32 %v4835, 2147483648
    %v4837 = vmul.f32 %v4836, 1.442695
    %v4838 = vpow.pop %v4837
    %v4839 = vadd.f32 %v4838, 1.0
    %v4840 = vrcp.pop %v4839
    %v4841 = vmul.f32 1.0, %v4840
    %v4842 = vadd.f32 %v4832, %v778
    %4844 = vrot.lane.b32.xlu0 %v4842, 64
    %v4845 = vpop.permute.xlu0 %4844
    %v4847 = vmul.f32 %v4841, %v4845
    %4849 = vrot.lane.b32.xlu0 %v4847, 64
    %v4850 = vpop.permute.xlu0 %4849
    %v4852 = vadd.f32 %v4759, %v4850
    %v4853 = vtanh.pop %v4852
    %v4854 = vsub.f32 1.0, %v4841
    %4856 = vrot.lane.b32.xlu0 %v4853, 96
    %v4857 = vpop.permute.xlu0 %4856
    %v4859 = vmul.f32 %v4854, %v4857
    %v4860 = vmul.f32 %v4841, %v4758
    %v4861 = vadd.f32 %v4859, %v4860
    %v4862 = vld [vmem:[#allocation2 + $0x46] sm:$0x3]
    %4864 = vrot.lane.b32.xlu0 %v4861, 96
    %v4865 = vpop.permute.xlu0 %4864
    %v4866 = vsel %vm322, %v4865, 0
    %4868 = vmatprep.subr.mxu0 0.0
    %4869 = vmatpush1.msra.mxu0 %v678
    %4870 = vmatprep.subr.mxu0 0.0
    %4871 = vmatpush1.msra.mxu0 %v679
    %4872 = vmatprep.subr.mxu0 0.0
    %4873 = vmatpush1.msra.mxu0 %v680
    %4874 = vmatprep.subr.mxu0 0.0
    %4875 = vmatpush1.msra.mxu0 %v681
    %4876 = vmatprep.subr.mxu0 0.0
    %4877 = vmatpush1.msra.mxu0 0.0
    %4878 = vmatprep.subr.mxu0 0.0
    %4879 = vmatpush1.msra.mxu0 0.0
    %4880 = vmatprep.subr.mxu0 0.0
    %4881 = vmatpush1.msra.mxu0 0.0
    %4882 = vmatprep.subr.mxu0 0.0
    %4883 = vmatpush1.msra.mxu0 0.0
    %4884 = vmatprep.subr.mxu0 0.0
    %4885 = vmatpush1.msra.mxu0 0.0
    %4886 = vmatprep.subr.mxu0 0.0
    %4887 = vmatpush1.msra.mxu0 0.0
    %4888 = vmatprep.subr.mxu0 0.0
    %4889 = vmatpush1.msra.mxu0 0.0
    %4890 = vmatprep.subr.mxu0 0.0
    %4891 = vmatpush1.msra.mxu0 0.0
    %4892 = vmatprep.subr.mxu0 0.0
    %4893 = vmatpush1.msra.mxu0 0.0
    %4894 = vmatprep.subr.mxu0 0.0
    %4895 = vmatpush1.msra.mxu0 0.0
    %4896 = vmatprep.subr.mxu0 0.0
    %4897 = vmatpush1.msra.mxu0 0.0
    %4898 = vmatprep.subr.mxu0 0.0
    %4899 = vmatpush1.msra.mxu0 0.0
    %4900 = vmatprep.subr.mxu0 0.0
    %4901 = vmatpush1.msra.mxu0 0.0
    %4902 = vmatprep.subr.mxu0 0.0
    %4903 = vmatpush1.msra.mxu0 0.0
    %4904 = vmatprep.subr.mxu0 0.0
    %4905 = vmatpush1.msra.mxu0 0.0
    %4906 = vmatprep.subr.mxu0 0.0
    %4907 = vmatpush1.msra.mxu0 0.0
    %4908 = vmatprep.subr.mxu0 0.0
    %4909 = vmatpush1.msra.mxu0 0.0
    %4910 = vmatprep.subr.mxu0 0.0
    %4911 = vmatpush1.msra.mxu0 0.0
    %4912 = vmatprep.subr.mxu0 0.0
    %4913 = vmatpush1.msra.mxu0 0.0
    %4914 = vmatprep.subr.mxu0 0.0
    %4915 = vmatpush1.msra.mxu0 0.0
    %4916 = vmatprep.subr.mxu0 0.0
    %4917 = vmatpush1.msra.mxu0 0.0
    %4918 = vmatprep.subr.mxu0 0.0
    %4919 = vmatpush1.msra.mxu0 0.0
    %4920 = vmatprep.subr.mxu0 0.0
    %4921 = vmatpush1.msra.mxu0 0.0
    %4922 = vmatprep.subr.mxu0 0.0
    %4923 = vmatpush1.msra.mxu0 0.0
    %4924 = vmatprep.subr.mxu0 0.0
    %4925 = vmatpush1.msra.mxu0 0.0
    %4926 = vmatprep.subr.mxu0 0.0
    %4927 = vmatpush1.msra.mxu0 0.0
    %4928 = vmatprep.subr.mxu0 0.0
    %4929 = vmatpush1.msra.mxu0 0.0
    %4930 = vmatprep.subr.mxu0 0.0
    %4931 = vmatpush1.msra.mxu0 0.0
    %4932 = vmatprep.mubr.f32.mxu0 0.0
    %4933 = vmatmul.mubr.f32.gmra.mrb[0].mxu0 %v4866
    %v4934 = vpop.f32.mrb[0].mxu0
    %v4935 = vadd.f32 0.0, %v4934
    %v4936 = vpop.f32.mrb[0].mxu0
    %4937 = vdwg.mxu0
    %v4938 = vadd.f32 %v4862, %v4935
    %v4939 = vxor.u32 %v4938, 2147483648
    %v4940 = vmul.f32 %v4939, 1.442695
    %v4941 = vpow.pop %v4940
    %v4942 = vadd.f32 %v4941, 1.0
    %v4943 = vrcp.pop %v4942
    %v4944 = vmul.f32 1.0, %v4943
    %v4945 = vadd.f32 %v4935, %v778
    %4947 = vrot.lane.b32.xlu0 %v4945, 64
    %v4948 = vpop.permute.xlu0 %4947
    %v4950 = vmul.f32 %v4944, %v4948
    %4952 = vrot.lane.b32.xlu0 %v4950, 64
    %v4953 = vpop.permute.xlu0 %4952
    %v4955 = vadd.f32 %v4862, %v4953
    %v4956 = vtanh.pop %v4955
    %v4957 = vsub.f32 1.0, %v4944
    %4959 = vrot.lane.b32.xlu0 %v4956, 96
    %v4960 = vpop.permute.xlu0 %4959
    %v4962 = vmul.f32 %v4957, %v4960
    %v4963 = vmul.f32 %v4944, %v4861
    %v4964 = vadd.f32 %v4962, %v4963
    %v4965 = vld [vmem:[#allocation2 + $0x48] sm:$0x3]
    %4967 = vrot.lane.b32.xlu0 %v4964, 96
    %v4968 = vpop.permute.xlu0 %4967
    %v4969 = vsel %vm322, %v4968, 0
    %4971 = vmatprep.subr.mxu0 0.0
    %4972 = vmatpush1.msra.mxu0 %v678
    %4973 = vmatprep.subr.mxu0 0.0
    %4974 = vmatpush1.msra.mxu0 %v679
    %4975 = vmatprep.subr.mxu0 0.0
    %4976 = vmatpush1.msra.mxu0 %v680
    %4977 = vmatprep.subr.mxu0 0.0
    %4978 = vmatpush1.msra.mxu0 %v681
    %4979 = vmatprep.subr.mxu0 0.0
    %4980 = vmatpush1.msra.mxu0 0.0
    %4981 = vmatprep.subr.mxu0 0.0
    %4982 = vmatpush1.msra.mxu0 0.0
    %4983 = vmatprep.subr.mxu0 0.0
    %4984 = vmatpush1.msra.mxu0 0.0
    %4985 = vmatprep.subr.mxu0 0.0
    %4986 = vmatpush1.msra.mxu0 0.0
    %4987 = vmatprep.subr.mxu0 0.0
    %4988 = vmatpush1.msra.mxu0 0.0
    %4989 = vmatprep.subr.mxu0 0.0
    %4990 = vmatpush1.msra.mxu0 0.0
    %4991 = vmatprep.subr.mxu0 0.0
    %4992 = vmatpush1.msra.mxu0 0.0
    %4993 = vmatprep.subr.mxu0 0.0
    %4994 = vmatpush1.msra.mxu0 0.0
    %4995 = vmatprep.subr.mxu0 0.0
    %4996 = vmatpush1.msra.mxu0 0.0
    %4997 = vmatprep.subr.mxu0 0.0
    %4998 = vmatpush1.msra.mxu0 0.0
    %4999 = vmatprep.subr.mxu0 0.0
    %5000 = vmatpush1.msra.mxu0 0.0
    %5001 = vmatprep.subr.mxu0 0.0
    %5002 = vmatpush1.msra.mxu0 0.0
    %5003 = vmatprep.subr.mxu0 0.0
    %5004 = vmatpush1.msra.mxu0 0.0
    %5005 = vmatprep.subr.mxu0 0.0
    %5006 = vmatpush1.msra.mxu0 0.0
    %5007 = vmatprep.subr.mxu0 0.0
    %5008 = vmatpush1.msra.mxu0 0.0
    %5009 = vmatprep.subr.mxu0 0.0
    %5010 = vmatpush1.msra.mxu0 0.0
    %5011 = vmatprep.subr.mxu0 0.0
    %5012 = vmatpush1.msra.mxu0 0.0
    %5013 = vmatprep.subr.mxu0 0.0
    %5014 = vmatpush1.msra.mxu0 0.0
    %5015 = vmatprep.subr.mxu0 0.0
    %5016 = vmatpush1.msra.mxu0 0.0
    %5017 = vmatprep.subr.mxu0 0.0
    %5018 = vmatpush1.msra.mxu0 0.0
    %5019 = vmatprep.subr.mxu0 0.0
    %5020 = vmatpush1.msra.mxu0 0.0
    %5021 = vmatprep.subr.mxu0 0.0
    %5022 = vmatpush1.msra.mxu0 0.0
    %5023 = vmatprep.subr.mxu0 0.0
    %5024 = vmatpush1.msra.mxu0 0.0
    %5025 = vmatprep.subr.mxu0 0.0
    %5026 = vmatpush1.msra.mxu0 0.0
    %5027 = vmatprep.subr.mxu0 0.0
    %5028 = vmatpush1.msra.mxu0 0.0
    %5029 = vmatprep.subr.mxu0 0.0
    %5030 = vmatpush1.msra.mxu0 0.0
    %5031 = vmatprep.subr.mxu0 0.0
    %5032 = vmatpush1.msra.mxu0 0.0
    %5033 = vmatprep.subr.mxu0 0.0
    %5034 = vmatpush1.msra.mxu0 0.0
    %5035 = vmatprep.mubr.f32.mxu0 0.0
    %5036 = vmatmul.mubr.f32.gmra.mrb[0].mxu0 %v4969
    %v5037 = vpop.f32.mrb[0].mxu0
    %v5038 = vadd.f32 0.0, %v5037
    %v5039 = vpop.f32.mrb[0].mxu0
    %5040 = vdwg.mxu0
    %v5041 = vadd.f32 %v4965, %v5038
    %v5042 = vxor.u32 %v5041, 2147483648
    %v5043 = vmul.f32 %v5042, 1.442695
    %v5044 = vpow.pop %v5043
    %v5045 = vadd.f32 %v5044, 1.0
    %v5046 = vrcp.pop %v5045
    %v5047 = vmul.f32 1.0, %v5046
    %v5048 = vadd.f32 %v5038, %v778
    %5050 = vrot.lane.b32.xlu0 %v5048, 64
    %v5051 = vpop.permute.xlu0 %5050
    %v5053 = vmul.f32 %v5047, %v5051
    %5055 = vrot.lane.b32.xlu0 %v5053, 64
    %v5056 = vpop.permute.xlu0 %5055
    %v5058 = vadd.f32 %v4965, %v5056
    %v5059 = vtanh.pop %v5058
    %v5060 = vsub.f32 1.0, %v5047
    %5062 = vrot.lane.b32.xlu0 %v5059, 96
    %v5063 = vpop.permute.xlu0 %5062
    %v5065 = vmul.f32 %v5060, %v5063
    %v5066 = vmul.f32 %v5047, %v4964
    %v5067 = vadd.f32 %v5065, %v5066
    %v5068 = vld [vmem:[#allocation2 + $0x4a] sm:$0x3]
    %5070 = vrot.lane.b32.xlu0 %v5067, 96
    %v5071 = vpop.permute.xlu0 %5070
    %v5072 = vsel %vm322, %v5071, 0
    %5074 = vmatprep.subr.mxu0 0.0
    %5075 = vmatpush1.msra.mxu0 %v678
    %5076 = vmatprep.subr.mxu0 0.0
    %5077 = vmatpush1.msra.mxu0 %v679
    %5078 = vmatprep.subr.mxu0 0.0
    %5079 = vmatpush1.msra.mxu0 %v680
    %5080 = vmatprep.subr.mxu0 0.0
    %5081 = vmatpush1.msra.mxu0 %v681
    %5082 = vmatprep.subr.mxu0 0.0
    %5083 = vmatpush1.msra.mxu0 0.0
    %5084 = vmatprep.subr.mxu0 0.0
    %5085 = vmatpush1.msra.mxu0 0.0
    %5086 = vmatprep.subr.mxu0 0.0
    %5087 = vmatpush1.msra.mxu0 0.0
    %5088 = vmatprep.subr.mxu0 0.0
    %5089 = vmatpush1.msra.mxu0 0.0
    %5090 = vmatprep.subr.mxu0 0.0
    %5091 = vmatpush1.msra.mxu0 0.0
    %5092 = vmatprep.subr.mxu0 0.0
    %5093 = vmatpush1.msra.mxu0 0.0
    %5094 = vmatprep.subr.mxu0 0.0
    %5095 = vmatpush1.msra.mxu0 0.0
    %5096 = vmatprep.subr.mxu0 0.0
    %5097 = vmatpush1.msra.mxu0 0.0
    %5098 = vmatprep.subr.mxu0 0.0
    %5099 = vmatpush1.msra.mxu0 0.0
    %5100 = vmatprep.subr.mxu0 0.0
    %5101 = vmatpush1.msra.mxu0 0.0
    %5102 = vmatprep.subr.mxu0 0.0
    %5103 = vmatpush1.msra.mxu0 0.0
    %5104 = vmatprep.subr.mxu0 0.0
    %5105 = vmatpush1.msra.mxu0 0.0
    %5106 = vmatprep.subr.mxu0 0.0
    %5107 = vmatpush1.msra.mxu0 0.0
    %5108 = vmatprep.subr.mxu0 0.0
    %5109 = vmatpush1.msra.mxu0 0.0
    %5110 = vmatprep.subr.mxu0 0.0
    %5111 = vmatpush1.msra.mxu0 0.0
    %5112 = vmatprep.subr.mxu0 0.0
    %5113 = vmatpush1.msra.mxu0 0.0
    %5114 = vmatprep.subr.mxu0 0.0
    %5115 = vmatpush1.msra.mxu0 0.0
    %5116 = vmatprep.subr.mxu0 0.0
    %5117 = vmatpush1.msra.mxu0 0.0
    %5118 = vmatprep.subr.mxu0 0.0
    %5119 = vmatpush1.msra.mxu0 0.0
    %5120 = vmatprep.subr.mxu0 0.0
    %5121 = vmatpush1.msra.mxu0 0.0
    %5122 = vmatprep.subr.mxu0 0.0
    %5123 = vmatpush1.msra.mxu0 0.0
    %5124 = vmatprep.subr.mxu0 0.0
    %5125 = vmatpush1.msra.mxu0 0.0
    %5126 = vmatprep.subr.mxu0 0.0
    %5127 = vmatpush1.msra.mxu0 0.0
    %5128 = vmatprep.subr.mxu0 0.0
    %5129 = vmatpush1.msra.mxu0 0.0
    %5130 = vmatprep.subr.mxu0 0.0
    %5131 = vmatpush1.msra.mxu0 0.0
    %5132 = vmatprep.subr.mxu0 0.0
    %5133 = vmatpush1.msra.mxu0 0.0
    %5134 = vmatprep.subr.mxu0 0.0
    %5135 = vmatpush1.msra.mxu0 0.0
    %5136 = vmatprep.subr.mxu0 0.0
    %5137 = vmatpush1.msra.mxu0 0.0
    %5138 = vmatprep.mubr.f32.mxu0 0.0
    %5139 = vmatmul.mubr.f32.gmra.mrb[0].mxu0 %v5072
    %v5140 = vpop.f32.mrb[0].mxu0
    %v5141 = vadd.f32 0.0, %v5140
    %v5142 = vpop.f32.mrb[0].mxu0
    %5143 = vdwg.mxu0
    %v5144 = vadd.f32 %v5068, %v5141
    %v5145 = vxor.u32 %v5144, 2147483648
    %v5146 = vmul.f32 %v5145, 1.442695
    %v5147 = vpow.pop %v5146
    %v5148 = vadd.f32 %v5147, 1.0
    %v5149 = vrcp.pop %v5148
    %v5150 = vmul.f32 1.0, %v5149
    %v5151 = vadd.f32 %v5141, %v778
    %5153 = vrot.lane.b32.xlu0 %v5151, 64
    %v5154 = vpop.permute.xlu0 %5153
    %v5156 = vmul.f32 %v5150, %v5154
    %5158 = vrot.lane.b32.xlu0 %v5156, 64
    %v5159 = vpop.permute.xlu0 %5158
    %v5161 = vadd.f32 %v5068, %v5159
    %v5162 = vtanh.pop %v5161
    %v5163 = vsub.f32 1.0, %v5150
    %5165 = vrot.lane.b32.xlu0 %v5162, 96
    %v5166 = vpop.permute.xlu0 %5165
    %v5168 = vmul.f32 %v5163, %v5166
    %v5169 = vmul.f32 %v5150, %v5067
    %v5170 = vadd.f32 %v5168, %v5169
    %v5171 = vld [vmem:[#allocation2 + $0x4c] sm:$0x3]
    %5173 = vrot.lane.b32.xlu0 %v5170, 96
    %v5174 = vpop.permute.xlu0 %5173
    %v5175 = vsel %vm322, %v5174, 0
    %5177 = vmatprep.subr.mxu0 0.0
    %5178 = vmatpush1.msra.mxu0 %v678
    %5179 = vmatprep.subr.mxu0 0.0
    %5180 = vmatpush1.msra.mxu0 %v679
    %5181 = vmatprep.subr.mxu0 0.0
    %5182 = vmatpush1.msra.mxu0 %v680
    %5183 = vmatprep.subr.mxu0 0.0
    %5184 = vmatpush1.msra.mxu0 %v681
    %5185 = vmatprep.subr.mxu0 0.0
    %5186 = vmatpush1.msra.mxu0 0.0
    %5187 = vmatprep.subr.mxu0 0.0
    %5188 = vmatpush1.msra.mxu0 0.0
    %5189 = vmatprep.subr.mxu0 0.0
    %5190 = vmatpush1.msra.mxu0 0.0
    %5191 = vmatprep.subr.mxu0 0.0
    %5192 = vmatpush1.msra.mxu0 0.0
    %5193 = vmatprep.subr.mxu0 0.0
    %5194 = vmatpush1.msra.mxu0 0.0
    %5195 = vmatprep.subr.mxu0 0.0
    %5196 = vmatpush1.msra.mxu0 0.0
    %5197 = vmatprep.subr.mxu0 0.0
    %5198 = vmatpush1.msra.mxu0 0.0
    %5199 = vmatprep.subr.mxu0 0.0
    %5200 = vmatpush1.msra.mxu0 0.0
    %5201 = vmatprep.subr.mxu0 0.0
    %5202 = vmatpush1.msra.mxu0 0.0
    %5203 = vmatprep.subr.mxu0 0.0
    %5204 = vmatpush1.msra.mxu0 0.0
    %5205 = vmatprep.subr.mxu0 0.0
    %5206 = vmatpush1.msra.mxu0 0.0
    %5207 = vmatprep.subr.mxu0 0.0
    %5208 = vmatpush1.msra.mxu0 0.0
    %5209 = vmatprep.subr.mxu0 0.0
    %5210 = vmatpush1.msra.mxu0 0.0
    %5211 = vmatprep.subr.mxu0 0.0
    %5212 = vmatpush1.msra.mxu0 0.0
    %5213 = vmatprep.subr.mxu0 0.0
    %5214 = vmatpush1.msra.mxu0 0.0
    %5215 = vmatprep.subr.mxu0 0.0
    %5216 = vmatpush1.msra.mxu0 0.0
    %5217 = vmatprep.subr.mxu0 0.0
    %5218 = vmatpush1.msra.mxu0 0.0
    %5219 = vmatprep.subr.mxu0 0.0
    %5220 = vmatpush1.msra.mxu0 0.0
    %5221 = vmatprep.subr.mxu0 0.0
    %5222 = vmatpush1.msra.mxu0 0.0
    %5223 = vmatprep.subr.mxu0 0.0
    %5224 = vmatpush1.msra.mxu0 0.0
    %5225 = vmatprep.subr.mxu0 0.0
    %5226 = vmatpush1.msra.mxu0 0.0
    %5227 = vmatprep.subr.mxu0 0.0
    %5228 = vmatpush1.msra.mxu0 0.0
    %5229 = vmatprep.subr.mxu0 0.0
    %5230 = vmatpush1.msra.mxu0 0.0
    %5231 = vmatprep.subr.mxu0 0.0
    %5232 = vmatpush1.msra.mxu0 0.0
    %5233 = vmatprep.subr.mxu0 0.0
    %5234 = vmatpush1.msra.mxu0 0.0
    %5235 = vmatprep.subr.mxu0 0.0
    %5236 = vmatpush1.msra.mxu0 0.0
    %5237 = vmatprep.subr.mxu0 0.0
    %5238 = vmatpush1.msra.mxu0 0.0
    %5239 = vmatprep.subr.mxu0 0.0
    %5240 = vmatpush1.msra.mxu0 0.0
    %5241 = vmatprep.mubr.f32.mxu0 0.0
    %5242 = vmatmul.mubr.f32.gmra.mrb[0].mxu0 %v5175
    %v5243 = vpop.f32.mrb[0].mxu0
    %v5244 = vadd.f32 0.0, %v5243
    %v5245 = vpop.f32.mrb[0].mxu0
    %5246 = vdwg.mxu0
    %v5247 = vadd.f32 %v5171, %v5244
    %v5248 = vxor.u32 %v5247, 2147483648
    %v5249 = vmul.f32 %v5248, 1.442695
    %v5250 = vpow.pop %v5249
    %v5251 = vadd.f32 %v5250, 1.0
    %v5252 = vrcp.pop %v5251
    %v5253 = vmul.f32 1.0, %v5252
    %v5254 = vadd.f32 %v5244, %v778
    %5256 = vrot.lane.b32.xlu0 %v5254, 64
    %v5257 = vpop.permute.xlu0 %5256
    %v5259 = vmul.f32 %v5253, %v5257
    %5261 = vrot.lane.b32.xlu0 %v5259, 64
    %v5262 = vpop.permute.xlu0 %5261
    %v5264 = vadd.f32 %v5171, %v5262
    %v5265 = vtanh.pop %v5264
    %v5266 = vsub.f32 1.0, %v5253
    %5268 = vrot.lane.b32.xlu0 %v5265, 96
    %v5269 = vpop.permute.xlu0 %5268
    %v5271 = vmul.f32 %v5266, %v5269
    %v5272 = vmul.f32 %v5253, %v5170
    %v5273 = vadd.f32 %v5271, %v5272
    %v5274 = vld [vmem:[#allocation2 + $0x4e] sm:$0x3]
    %5276 = vrot.lane.b32.xlu0 %v5273, 96
    %v5277 = vpop.permute.xlu0 %5276
    %v5278 = vsel %vm322, %v5277, 0
    %5280 = vmatprep.subr.mxu0 0.0
    %5281 = vmatpush1.msra.mxu0 %v678
    %5282 = vmatprep.subr.mxu0 0.0
    %5283 = vmatpush1.msra.mxu0 %v679
    %5284 = vmatprep.subr.mxu0 0.0
    %5285 = vmatpush1.msra.mxu0 %v680
    %5286 = vmatprep.subr.mxu0 0.0
    %5287 = vmatpush1.msra.mxu0 %v681
    %5288 = vmatprep.subr.mxu0 0.0
    %5289 = vmatpush1.msra.mxu0 0.0
    %5290 = vmatprep.subr.mxu0 0.0
    %5291 = vmatpush1.msra.mxu0 0.0
    %5292 = vmatprep.subr.mxu0 0.0
    %5293 = vmatpush1.msra.mxu0 0.0
    %5294 = vmatprep.subr.mxu0 0.0
    %5295 = vmatpush1.msra.mxu0 0.0
    %5296 = vmatprep.subr.mxu0 0.0
    %5297 = vmatpush1.msra.mxu0 0.0
    %5298 = vmatprep.subr.mxu0 0.0
    %5299 = vmatpush1.msra.mxu0 0.0
    %5300 = vmatprep.subr.mxu0 0.0
    %5301 = vmatpush1.msra.mxu0 0.0
    %5302 = vmatprep.subr.mxu0 0.0
    %5303 = vmatpush1.msra.mxu0 0.0
    %5304 = vmatprep.subr.mxu0 0.0
    %5305 = vmatpush1.msra.mxu0 0.0
    %5306 = vmatprep.subr.mxu0 0.0
    %5307 = vmatpush1.msra.mxu0 0.0
    %5308 = vmatprep.subr.mxu0 0.0
    %5309 = vmatpush1.msra.mxu0 0.0
    %5310 = vmatprep.subr.mxu0 0.0
    %5311 = vmatpush1.msra.mxu0 0.0
    %5312 = vmatprep.subr.mxu0 0.0
    %5313 = vmatpush1.msra.mxu0 0.0
    %5314 = vmatprep.subr.mxu0 0.0
    %5315 = vmatpush1.msra.mxu0 0.0
    %5316 = vmatprep.subr.mxu0 0.0
    %5317 = vmatpush1.msra.mxu0 0.0
    %5318 = vmatprep.subr.mxu0 0.0
    %5319 = vmatpush1.msra.mxu0 0.0
    %5320 = vmatprep.subr.mxu0 0.0
    %5321 = vmatpush1.msra.mxu0 0.0
    %5322 = vmatprep.subr.mxu0 0.0
    %5323 = vmatpush1.msra.mxu0 0.0
    %5324 = vmatprep.subr.mxu0 0.0
    %5325 = vmatpush1.msra.mxu0 0.0
    %5326 = vmatprep.subr.mxu0 0.0
    %5327 = vmatpush1.msra.mxu0 0.0
    %5328 = vmatprep.subr.mxu0 0.0
    %5329 = vmatpush1.msra.mxu0 0.0
    %5330 = vmatprep.subr.mxu0 0.0
    %5331 = vmatpush1.msra.mxu0 0.0
    %5332 = vmatprep.subr.mxu0 0.0
    %5333 = vmatpush1.msra.mxu0 0.0
    %5334 = vmatprep.subr.mxu0 0.0
    %5335 = vmatpush1.msra.mxu0 0.0
    %5336 = vmatprep.subr.mxu0 0.0
    %5337 = vmatpush1.msra.mxu0 0.0
    %5338 = vmatprep.subr.mxu0 0.0
    %5339 = vmatpush1.msra.mxu0 0.0
    %5340 = vmatprep.subr.mxu0 0.0
    %5341 = vmatpush1.msra.mxu0 0.0
    %5342 = vmatprep.subr.mxu0 0.0
    %5343 = vmatpush1.msra.mxu0 0.0
    %5344 = vmatprep.mubr.f32.mxu0 0.0
    %5345 = vmatmul.mubr.f32.gmra.mrb[0].mxu0 %v5278
    %v5346 = vpop.f32.mrb[0].mxu0
    %v5347 = vadd.f32 0.0, %v5346
    %v5348 = vpop.f32.mrb[0].mxu0
    %5349 = vdwg.mxu0
    %v5350 = vadd.f32 %v5274, %v5347
    %v5351 = vxor.u32 %v5350, 2147483648
    %v5352 = vmul.f32 %v5351, 1.442695
    %v5353 = vpow.pop %v5352
    %v5354 = vadd.f32 %v5353, 1.0
    %v5355 = vrcp.pop %v5354
    %v5356 = vmul.f32 1.0, %v5355
    %v5357 = vadd.f32 %v5347, %v778
    %5359 = vrot.lane.b32.xlu0 %v5357, 64
    %v5360 = vpop.permute.xlu0 %5359
    %v5362 = vmul.f32 %v5356, %v5360
    %5364 = vrot.lane.b32.xlu0 %v5362, 64
    %v5365 = vpop.permute.xlu0 %5364
    %v5367 = vadd.f32 %v5274, %v5365
    %v5368 = vtanh.pop %v5367
    %v5369 = vsub.f32 1.0, %v5356
    %5371 = vrot.lane.b32.xlu0 %v5368, 96
    %v5372 = vpop.permute.xlu0 %5371
    %v5374 = vmul.f32 %v5369, %v5372
    %v5375 = vmul.f32 %v5356, %v5273
    %v5376 = vadd.f32 %v5374, %v5375
    %v5377 = vld [vmem:[#allocation3 + $0x42] sm:$0xff]
    %v5378 = vld [vmem:[#allocation3 + $0x4a] sm:$0x3f]
    %5381 = vrot.lane.b32.xlu0 %v4654, 112
    %v5382 = vpop.permute.xlu0 %5381
    %5383 = vrot.lane.b32.xlu0 %v4655, 112
    %v5384 = vpop.permute.xlu0 %5383
    %v5385 = vsel %vm1935, %v5382, 0
    %v5387 = vsel %vm1935, %v5384, 0
    %5389 = vmatprep.subr.mxu0 0.0
    %5390 = vmatpush1.msra.mxu0 %v682
    %5391 = vmatprep.subr.mxu0 0.0
    %5392 = vmatpush1.msra.mxu0 %v683
    %5393 = vmatprep.subr.mxu0 0.0
    %5394 = vmatpush1.msra.mxu0 0.0
    %5395 = vmatprep.subr.mxu0 0.0
    %5396 = vmatpush1.msra.mxu0 0.0
    %5397 = vmatprep.subr.mxu0 0.0
    %5398 = vmatpush1.msra.mxu0 0.0
    %5399 = vmatprep.subr.mxu0 0.0
    %5400 = vmatpush1.msra.mxu0 0.0
    %5401 = vmatprep.subr.mxu0 0.0
    %5402 = vmatpush1.msra.mxu0 0.0
    %5403 = vmatprep.subr.mxu0 0.0
    %5404 = vmatpush1.msra.mxu0 0.0
    %5405 = vmatprep.subr.mxu0 0.0
    %5406 = vmatpush1.msra.mxu0 0.0
    %5407 = vmatprep.subr.mxu0 0.0
    %5408 = vmatpush1.msra.mxu0 0.0
    %5409 = vmatprep.subr.mxu0 0.0
    %5410 = vmatpush1.msra.mxu0 0.0
    %5411 = vmatprep.subr.mxu0 0.0
    %5412 = vmatpush1.msra.mxu0 0.0
    %5413 = vmatprep.subr.mxu0 0.0
    %5414 = vmatpush1.msra.mxu0 0.0
    %5415 = vmatprep.subr.mxu0 0.0
    %5416 = vmatpush1.msra.mxu0 0.0
    %5417 = vmatprep.subr.mxu0 0.0
    %5418 = vmatpush1.msra.mxu0 0.0
    %5419 = vmatprep.subr.mxu0 0.0
    %5420 = vmatpush1.msra.mxu0 0.0
    %5421 = vmatprep.subr.mxu0 0.0
    %5422 = vmatpush1.msra.mxu0 0.0
    %5423 = vmatprep.subr.mxu0 0.0
    %5424 = vmatpush1.msra.mxu0 0.0
    %5425 = vmatprep.subr.mxu0 0.0
    %5426 = vmatpush1.msra.mxu0 0.0
    %5427 = vmatprep.subr.mxu0 0.0
    %5428 = vmatpush1.msra.mxu0 0.0
    %5429 = vmatprep.subr.mxu0 0.0
    %5430 = vmatpush1.msra.mxu0 0.0
    %5431 = vmatprep.subr.mxu0 0.0
    %5432 = vmatpush1.msra.mxu0 0.0
    %5433 = vmatprep.subr.mxu0 0.0
    %5434 = vmatpush1.msra.mxu0 0.0
    %5435 = vmatprep.subr.mxu0 0.0
    %5436 = vmatpush1.msra.mxu0 0.0
    %5437 = vmatprep.subr.mxu0 0.0
    %5438 = vmatpush1.msra.mxu0 0.0
    %5439 = vmatprep.subr.mxu0 0.0
    %5440 = vmatpush1.msra.mxu0 0.0
    %5441 = vmatprep.subr.mxu0 0.0
    %5442 = vmatpush1.msra.mxu0 0.0
    %5443 = vmatprep.subr.mxu0 0.0
    %5444 = vmatpush1.msra.mxu0 0.0
    %5445 = vmatprep.subr.mxu0 0.0
    %5446 = vmatpush1.msra.mxu0 0.0
    %5447 = vmatprep.subr.mxu0 0.0
    %5448 = vmatpush1.msra.mxu0 0.0
    %5449 = vmatprep.subr.mxu0 0.0
    %5450 = vmatpush1.msra.mxu0 0.0
    %5451 = vmatprep.subr.mxu0 0.0
    %5452 = vmatpush1.msra.mxu0 0.0
    %5453 = vmatprep.mubr.f32.mxu0 0.0
    %5454 = vmatmul.mubr.f32.gmra.mrb[0].mxu0 %v5385
    %v5455 = vpop.f32.mrb[0].mxu0
    %v5456 = vadd.f32 0.0, %v5455
    %v5457 = vpop.f32.mrb[0].mxu0
    %5458 = vmatprep.mubr.f32.mxu0 0.0
    %5459 = vmatmul.mubr.f32.gmra.mrb[0].mxu0 %v5387
    %v5460 = vpop.f32.mrb[0].mxu0
    %v5461 = vadd.f32 0.0, %v5460
    %v5462 = vpop.f32.mrb[0].mxu0
    %5463 = vdwg.mxu0
    %v5464 = vadd.f32 %v5377, %v5456
    %v5465 = vadd.f32 %v5378, %v5461
    %v5466 = vxor.u32 %v5464, 2147483648
    %v5467 = vxor.u32 %v5465, 2147483648
    %v5468 = vmul.f32 %v5466, 1.442695
    %v5469 = vpow.pop %v5468
    %v5470 = vmul.f32 %v5467, 1.442695
    %v5471 = vpow.pop %v5470
    %v5472 = vadd.f32 %v5469, 1.0
    %v5473 = vadd.f32 %v5471, 1.0
    %v5474 = vrcp.pop %v5472
    %v5475 = vmul.f32 1.0, %v5474
    %v5476 = vrcp.pop %v5473
    %v5477 = vmul.f32 1.0, %v5476
    %v5478 = vadd.f32 %v5456, %v2028
    %v5479 = vadd.f32 %v5461, %v2028
    %5482 = vrot.lane.b32.xlu0 %v5478, 96
    %v5483 = vpop.permute.xlu0 %5482
    %5484 = vrot.lane.b32.xlu0 %v5479, 96
    %v5485 = vpop.permute.xlu0 %5484
    %v5488 = vmul.f32 %v5475, %v5483
    %v5489 = vmul.f32 %v5477, %v5485
    %5492 = vrot.lane.b32.xlu0 %v5488, 32
    %v5493 = vpop.permute.xlu0 %5492
    %5494 = vrot.lane.b32.xlu0 %v5489, 32
    %v5495 = vpop.permute.xlu0 %5494
    %v5498 = vadd.f32 %v5377, %v5493
    %v5499 = vadd.f32 %v5378, %v5495
    %v5500 = vtanh.pop %v5498
    %v5501 = vtanh.pop %v5499
    %v5502 = vsub.f32 1.0, %v5475
    %v5503 = vsub.f32 1.0, %v5477
    %5506 = vrot.lane.b32.xlu0 %v5500, 112
    %v5507 = vpop.permute.xlu0 %5506
    %5508 = vrot.lane.b32.xlu0 %v5501, 112
    %v5509 = vpop.permute.xlu0 %5508
    %v5512 = vmul.f32 %v5502, %v5507
    %v5513 = vmul.f32 %v5503, %v5509
    %v5514 = vmul.f32 %v5475, %v4654
    %v5515 = vmul.f32 %v5477, %v4655
    %v5516 = vadd.f32 %v5512, %v5514
    %v5517 = vadd.f32 %v5513, %v5515
    %v5518 = vld [vmem:[#allocation2 + $0x50] sm:$0x3]
    %5520 = vrot.lane.b32.xlu0 %v5376, 96
    %v5521 = vpop.permute.xlu0 %5520
    %v5522 = vsel %vm322, %v5521, 0
    %5524 = vmatprep.subr.mxu0 0.0
    %5525 = vmatpush1.msra.mxu0 %v678
    %5526 = vmatprep.subr.mxu0 0.0
    %5527 = vmatpush1.msra.mxu0 %v679
    %5528 = vmatprep.subr.mxu0 0.0
    %5529 = vmatpush1.msra.mxu0 %v680
    %5530 = vmatprep.subr.mxu0 0.0
    %5531 = vmatpush1.msra.mxu0 %v681
    %5532 = vmatprep.subr.mxu0 0.0
    %5533 = vmatpush1.msra.mxu0 0.0
    %5534 = vmatprep.subr.mxu0 0.0
    %5535 = vmatpush1.msra.mxu0 0.0
    %5536 = vmatprep.subr.mxu0 0.0
    %5537 = vmatpush1.msra.mxu0 0.0
    %5538 = vmatprep.subr.mxu0 0.0
    %5539 = vmatpush1.msra.mxu0 0.0
    %5540 = vmatprep.subr.mxu0 0.0
    %5541 = vmatpush1.msra.mxu0 0.0
    %5542 = vmatprep.subr.mxu0 0.0
    %5543 = vmatpush1.msra.mxu0 0.0
    %5544 = vmatprep.subr.mxu0 0.0
    %5545 = vmatpush1.msra.mxu0 0.0
    %5546 = vmatprep.subr.mxu0 0.0
    %5547 = vmatpush1.msra.mxu0 0.0
    %5548 = vmatprep.subr.mxu0 0.0
    %5549 = vmatpush1.msra.mxu0 0.0
    %5550 = vmatprep.subr.mxu0 0.0
    %5551 = vmatpush1.msra.mxu0 0.0
    %5552 = vmatprep.subr.mxu0 0.0
    %5553 = vmatpush1.msra.mxu0 0.0
    %5554 = vmatprep.subr.mxu0 0.0
    %5555 = vmatpush1.msra.mxu0 0.0
    %5556 = vmatprep.subr.mxu0 0.0
    %5557 = vmatpush1.msra.mxu0 0.0
    %5558 = vmatprep.subr.mxu0 0.0
    %5559 = vmatpush1.msra.mxu0 0.0
    %5560 = vmatprep.subr.mxu0 0.0
    %5561 = vmatpush1.msra.mxu0 0.0
    %5562 = vmatprep.subr.mxu0 0.0
    %5563 = vmatpush1.msra.mxu0 0.0
    %5564 = vmatprep.subr.mxu0 0.0
    %5565 = vmatpush1.msra.mxu0 0.0
    %5566 = vmatprep.subr.mxu0 0.0
    %5567 = vmatpush1.msra.mxu0 0.0
    %5568 = vmatprep.subr.mxu0 0.0
    %5569 = vmatpush1.msra.mxu0 0.0
    %5570 = vmatprep.subr.mxu0 0.0
    %5571 = vmatpush1.msra.mxu0 0.0
    %5572 = vmatprep.subr.mxu0 0.0
    %5573 = vmatpush1.msra.mxu0 0.0
    %5574 = vmatprep.subr.mxu0 0.0
    %5575 = vmatpush1.msra.mxu0 0.0
    %5576 = vmatprep.subr.mxu0 0.0
    %5577 = vmatpush1.msra.mxu0 0.0
    %5578 = vmatprep.subr.mxu0 0.0
    %5579 = vmatpush1.msra.mxu0 0.0
    %5580 = vmatprep.subr.mxu0 0.0
    %5581 = vmatpush1.msra.mxu0 0.0
    %5582 = vmatprep.subr.mxu0 0.0
    %5583 = vmatpush1.msra.mxu0 0.0
    %5584 = vmatprep.subr.mxu0 0.0
    %5585 = vmatpush1.msra.mxu0 0.0
    %5586 = vmatprep.subr.mxu0 0.0
    %5587 = vmatpush1.msra.mxu0 0.0
    %5588 = vmatprep.mubr.f32.mxu0 0.0
    %5589 = vmatmul.mubr.f32.gmra.mrb[0].mxu0 %v5522
    %v5590 = vpop.f32.mrb[0].mxu0
    %v5591 = vadd.f32 0.0, %v5590
    %v5592 = vpop.f32.mrb[0].mxu0
    %5593 = vdwg.mxu0
    %v5594 = vadd.f32 %v5518, %v5591
    %v5595 = vxor.u32 %v5594, 2147483648
    %v5596 = vmul.f32 %v5595, 1.442695
    %v5597 = vpow.pop %v5596
    %v5598 = vadd.f32 %v5597, 1.0
    %v5599 = vrcp.pop %v5598
    %v5600 = vmul.f32 1.0, %v5599
    %v5601 = vadd.f32 %v5591, %v778
    %5603 = vrot.lane.b32.xlu0 %v5601, 64
    %v5604 = vpop.permute.xlu0 %5603
    %v5606 = vmul.f32 %v5600, %v5604
    %5608 = vrot.lane.b32.xlu0 %v5606, 64
    %v5609 = vpop.permute.xlu0 %5608
    %v5611 = vadd.f32 %v5518, %v5609
    %v5612 = vtanh.pop %v5611
    %v5613 = vsub.f32 1.0, %v5600
    %5615 = vrot.lane.b32.xlu0 %v5612, 96
    %v5616 = vpop.permute.xlu0 %5615
    %v5618 = vmul.f32 %v5613, %v5616
    %v5619 = vmul.f32 %v5600, %v5376
    %v5620 = vadd.f32 %v5618, %v5619
    %v5621 = vld [vmem:[#allocation2 + $0x52] sm:$0x3]
    %5623 = vrot.lane.b32.xlu0 %v5620, 96
    %v5624 = vpop.permute.xlu0 %5623
    %v5625 = vsel %vm322, %v5624, 0
    %5627 = vmatprep.subr.mxu0 0.0
    %5628 = vmatpush1.msra.mxu0 %v678
    %5629 = vmatprep.subr.mxu0 0.0
    %5630 = vmatpush1.msra.mxu0 %v679
    %5631 = vmatprep.subr.mxu0 0.0
    %5632 = vmatpush1.msra.mxu0 %v680
    %5633 = vmatprep.subr.mxu0 0.0
    %5634 = vmatpush1.msra.mxu0 %v681
    %5635 = vmatprep.subr.mxu0 0.0
    %5636 = vmatpush1.msra.mxu0 0.0
    %5637 = vmatprep.subr.mxu0 0.0
    %5638 = vmatpush1.msra.mxu0 0.0
    %5639 = vmatprep.subr.mxu0 0.0
    %5640 = vmatpush1.msra.mxu0 0.0
    %5641 = vmatprep.subr.mxu0 0.0
    %5642 = vmatpush1.msra.mxu0 0.0
    %5643 = vmatprep.subr.mxu0 0.0
    %5644 = vmatpush1.msra.mxu0 0.0
    %5645 = vmatprep.subr.mxu0 0.0
    %5646 = vmatpush1.msra.mxu0 0.0
    %5647 = vmatprep.subr.mxu0 0.0
    %5648 = vmatpush1.msra.mxu0 0.0
    %5649 = vmatprep.subr.mxu0 0.0
    %5650 = vmatpush1.msra.mxu0 0.0
    %5651 = vmatprep.subr.mxu0 0.0
    %5652 = vmatpush1.msra.mxu0 0.0
    %5653 = vmatprep.subr.mxu0 0.0
    %5654 = vmatpush1.msra.mxu0 0.0
    %5655 = vmatprep.subr.mxu0 0.0
    %5656 = vmatpush1.msra.mxu0 0.0
    %5657 = vmatprep.subr.mxu0 0.0
    %5658 = vmatpush1.msra.mxu0 0.0
    %5659 = vmatprep.subr.mxu0 0.0
    %5660 = vmatpush1.msra.mxu0 0.0
    %5661 = vmatprep.subr.mxu0 0.0
    %5662 = vmatpush1.msra.mxu0 0.0
    %5663 = vmatprep.subr.mxu0 0.0
    %5664 = vmatpush1.msra.mxu0 0.0
    %5665 = vmatprep.subr.mxu0 0.0
    %5666 = vmatpush1.msra.mxu0 0.0
    %5667 = vmatprep.subr.mxu0 0.0
    %5668 = vmatpush1.msra.mxu0 0.0
    %5669 = vmatprep.subr.mxu0 0.0
    %5670 = vmatpush1.msra.mxu0 0.0
    %5671 = vmatprep.subr.mxu0 0.0
    %5672 = vmatpush1.msra.mxu0 0.0
    %5673 = vmatprep.subr.mxu0 0.0
    %5674 = vmatpush1.msra.mxu0 0.0
    %5675 = vmatprep.subr.mxu0 0.0
    %5676 = vmatpush1.msra.mxu0 0.0
    %5677 = vmatprep.subr.mxu0 0.0
    %5678 = vmatpush1.msra.mxu0 0.0
    %5679 = vmatprep.subr.mxu0 0.0
    %5680 = vmatpush1.msra.mxu0 0.0
    %5681 = vmatprep.subr.mxu0 0.0
    %5682 = vmatpush1.msra.mxu0 0.0
    %5683 = vmatprep.subr.mxu0 0.0
    %5684 = vmatpush1.msra.mxu0 0.0
    %5685 = vmatprep.subr.mxu0 0.0
    %5686 = vmatpush1.msra.mxu0 0.0
    %5687 = vmatprep.subr.mxu0 0.0
    %5688 = vmatpush1.msra.mxu0 0.0
    %5689 = vmatprep.subr.mxu0 0.0
    %5690 = vmatpush1.msra.mxu0 0.0
    %5691 = vmatprep.mubr.f32.mxu0 0.0
    %5692 = vmatmul.mubr.f32.gmra.mrb[0].mxu0 %v5625
    %v5693 = vpop.f32.mrb[0].mxu0
    %v5694 = vadd.f32 0.0, %v5693
    %v5695 = vpop.f32.mrb[0].mxu0
    %5696 = vdwg.mxu0
    %v5697 = vadd.f32 %v5621, %v5694
    %v5698 = vxor.u32 %v5697, 2147483648
    %v5699 = vmul.f32 %v5698, 1.442695
    %v5700 = vpow.pop %v5699
    %v5701 = vadd.f32 %v5700, 1.0
    %v5702 = vrcp.pop %v5701
    %v5703 = vmul.f32 1.0, %v5702
    %v5704 = vadd.f32 %v5694, %v778
    %5706 = vrot.lane.b32.xlu0 %v5704, 64
    %v5707 = vpop.permute.xlu0 %5706
    %v5709 = vmul.f32 %v5703, %v5707
    %5711 = vrot.lane.b32.xlu0 %v5709, 64
    %v5712 = vpop.permute.xlu0 %5711
    %v5714 = vadd.f32 %v5621, %v5712
    %v5715 = vtanh.pop %v5714
    %v5716 = vsub.f32 1.0, %v5703
    %5718 = vrot.lane.b32.xlu0 %v5715, 96
    %v5719 = vpop.permute.xlu0 %5718
    %v5721 = vmul.f32 %v5716, %v5719
    %v5722 = vmul.f32 %v5703, %v5620
    %v5723 = vadd.f32 %v5721, %v5722
    %v5724 = vld [vmem:[#allocation2 + $0x54] sm:$0x3]
    %5726 = vrot.lane.b32.xlu0 %v5723, 96
    %v5727 = vpop.permute.xlu0 %5726
    %v5728 = vsel %vm322, %v5727, 0
    %5730 = vmatprep.subr.mxu0 0.0
    %5731 = vmatpush1.msra.mxu0 %v678
    %5732 = vmatprep.subr.mxu0 0.0
    %5733 = vmatpush1.msra.mxu0 %v679
    %5734 = vmatprep.subr.mxu0 0.0
    %5735 = vmatpush1.msra.mxu0 %v680
    %5736 = vmatprep.subr.mxu0 0.0
    %5737 = vmatpush1.msra.mxu0 %v681
    %5738 = vmatprep.subr.mxu0 0.0
    %5739 = vmatpush1.msra.mxu0 0.0
    %5740 = vmatprep.subr.mxu0 0.0
    %5741 = vmatpush1.msra.mxu0 0.0
    %5742 = vmatprep.subr.mxu0 0.0
    %5743 = vmatpush1.msra.mxu0 0.0
    %5744 = vmatprep.subr.mxu0 0.0
    %5745 = vmatpush1.msra.mxu0 0.0
    %5746 = vmatprep.subr.mxu0 0.0
    %5747 = vmatpush1.msra.mxu0 0.0
    %5748 = vmatprep.subr.mxu0 0.0
    %5749 = vmatpush1.msra.mxu0 0.0
    %5750 = vmatprep.subr.mxu0 0.0
    %5751 = vmatpush1.msra.mxu0 0.0
    %5752 = vmatprep.subr.mxu0 0.0
    %5753 = vmatpush1.msra.mxu0 0.0
    %5754 = vmatprep.subr.mxu0 0.0
    %5755 = vmatpush1.msra.mxu0 0.0
    %5756 = vmatprep.subr.mxu0 0.0
    %5757 = vmatpush1.msra.mxu0 0.0
    %5758 = vmatprep.subr.mxu0 0.0
    %5759 = vmatpush1.msra.mxu0 0.0
    %5760 = vmatprep.subr.mxu0 0.0
    %5761 = vmatpush1.msra.mxu0 0.0
    %5762 = vmatprep.subr.mxu0 0.0
    %5763 = vmatpush1.msra.mxu0 0.0
    %5764 = vmatprep.subr.mxu0 0.0
    %5765 = vmatpush1.msra.mxu0 0.0
    %5766 = vmatprep.subr.mxu0 0.0
    %5767 = vmatpush1.msra.mxu0 0.0
    %5768 = vmatprep.subr.mxu0 0.0
    %5769 = vmatpush1.msra.mxu0 0.0
    %5770 = vmatprep.subr.mxu0 0.0
    %5771 = vmatpush1.msra.mxu0 0.0
    %5772 = vmatprep.subr.mxu0 0.0
    %5773 = vmatpush1.msra.mxu0 0.0
    %5774 = vmatprep.subr.mxu0 0.0
    %5775 = vmatpush1.msra.mxu0 0.0
    %5776 = vmatprep.subr.mxu0 0.0
    %5777 = vmatpush1.msra.mxu0 0.0
    %5778 = vmatprep.subr.mxu0 0.0
    %5779 = vmatpush1.msra.mxu0 0.0
    %5780 = vmatprep.subr.mxu0 0.0
    %5781 = vmatpush1.msra.mxu0 0.0
    %5782 = vmatprep.subr.mxu0 0.0
    %5783 = vmatpush1.msra.mxu0 0.0
    %5784 = vmatprep.subr.mxu0 0.0
    %5785 = vmatpush1.msra.mxu0 0.0
    %5786 = vmatprep.subr.mxu0 0.0
    %5787 = vmatpush1.msra.mxu0 0.0
    %5788 = vmatprep.subr.mxu0 0.0
    %5789 = vmatpush1.msra.mxu0 0.0
    %5790 = vmatprep.subr.mxu0 0.0
    %5791 = vmatpush1.msra.mxu0 0.0
    %5792 = vmatprep.subr.mxu0 0.0
    %5793 = vmatpush1.msra.mxu0 0.0
    %5794 = vmatprep.mubr.f32.mxu0 0.0
    %5795 = vmatmul.mubr.f32.gmra.mrb[0].mxu0 %v5728
    %v5796 = vpop.f32.mrb[0].mxu0
    %v5797 = vadd.f32 0.0, %v5796
    %v5798 = vpop.f32.mrb[0].mxu0
    %5799 = vdwg.mxu0
    %v5800 = vadd.f32 %v5724, %v5797
    %v5801 = vxor.u32 %v5800, 2147483648
    %v5802 = vmul.f32 %v5801, 1.442695
    %v5803 = vpow.pop %v5802
    %v5804 = vadd.f32 %v5803, 1.0
    %v5805 = vrcp.pop %v5804
    %v5806 = vmul.f32 1.0, %v5805
    %v5807 = vadd.f32 %v5797, %v778
    %5809 = vrot.lane.b32.xlu0 %v5807, 64
    %v5810 = vpop.permute.xlu0 %5809
    %v5812 = vmul.f32 %v5806, %v5810
    %5814 = vrot.lane.b32.xlu0 %v5812, 64
    %v5815 = vpop.permute.xlu0 %5814
    %v5817 = vadd.f32 %v5724, %v5815
    %v5818 = vtanh.pop %v5817
    %v5819 = vsub.f32 1.0, %v5806
    %5821 = vrot.lane.b32.xlu0 %v5818, 96
    %v5822 = vpop.permute.xlu0 %5821
    %v5824 = vmul.f32 %v5819, %v5822
    %v5825 = vmul.f32 %v5806, %v5723
    %v5826 = vadd.f32 %v5824, %v5825
    %v5827 = vld [vmem:[#allocation2 + $0x56] sm:$0x3]
    %5829 = vrot.lane.b32.xlu0 %v5826, 96
    %v5830 = vpop.permute.xlu0 %5829
    %v5831 = vsel %vm322, %v5830, 0
    %5833 = vmatprep.subr.mxu0 0.0
    %5834 = vmatpush1.msra.mxu0 %v678
    %5835 = vmatprep.subr.mxu0 0.0
    %5836 = vmatpush1.msra.mxu0 %v679
    %5837 = vmatprep.subr.mxu0 0.0
    %5838 = vmatpush1.msra.mxu0 %v680
    %5839 = vmatprep.subr.mxu0 0.0
    %5840 = vmatpush1.msra.mxu0 %v681
    %5841 = vmatprep.subr.mxu0 0.0
    %5842 = vmatpush1.msra.mxu0 0.0
    %5843 = vmatprep.subr.mxu0 0.0
    %5844 = vmatpush1.msra.mxu0 0.0
    %5845 = vmatprep.subr.mxu0 0.0
    %5846 = vmatpush1.msra.mxu0 0.0
    %5847 = vmatprep.subr.mxu0 0.0
    %5848 = vmatpush1.msra.mxu0 0.0
    %5849 = vmatprep.subr.mxu0 0.0
    %5850 = vmatpush1.msra.mxu0 0.0
    %5851 = vmatprep.subr.mxu0 0.0
    %5852 = vmatpush1.msra.mxu0 0.0
    %5853 = vmatprep.subr.mxu0 0.0
    %5854 = vmatpush1.msra.mxu0 0.0
    %5855 = vmatprep.subr.mxu0 0.0
    %5856 = vmatpush1.msra.mxu0 0.0
    %5857 = vmatprep.subr.mxu0 0.0
    %5858 = vmatpush1.msra.mxu0 0.0
    %5859 = vmatprep.subr.mxu0 0.0
    %5860 = vmatpush1.msra.mxu0 0.0
    %5861 = vmatprep.subr.mxu0 0.0
    %5862 = vmatpush1.msra.mxu0 0.0
    %5863 = vmatprep.subr.mxu0 0.0
    %5864 = vmatpush1.msra.mxu0 0.0
    %5865 = vmatprep.subr.mxu0 0.0
    %5866 = vmatpush1.msra.mxu0 0.0
    %5867 = vmatprep.subr.mxu0 0.0
    %5868 = vmatpush1.msra.mxu0 0.0
    %5869 = vmatprep.subr.mxu0 0.0
    %5870 = vmatpush1.msra.mxu0 0.0
    %5871 = vmatprep.subr.mxu0 0.0
    %5872 = vmatpush1.msra.mxu0 0.0
    %5873 = vmatprep.subr.mxu0 0.0
    %5874 = vmatpush1.msra.mxu0 0.0
    %5875 = vmatprep.subr.mxu0 0.0
    %5876 = vmatpush1.msra.mxu0 0.0
    %5877 = vmatprep.subr.mxu0 0.0
    %5878 = vmatpush1.msra.mxu0 0.0
    %5879 = vmatprep.subr.mxu0 0.0
    %5880 = vmatpush1.msra.mxu0 0.0
    %5881 = vmatprep.subr.mxu0 0.0
    %5882 = vmatpush1.msra.mxu0 0.0
    %5883 = vmatprep.subr.mxu0 0.0
    %5884 = vmatpush1.msra.mxu0 0.0
    %5885 = vmatprep.subr.mxu0 0.0
    %5886 = vmatpush1.msra.mxu0 0.0
    %5887 = vmatprep.subr.mxu0 0.0
    %5888 = vmatpush1.msra.mxu0 0.0
    %5889 = vmatprep.subr.mxu0 0.0
    %5890 = vmatpush1.msra.mxu0 0.0
    %5891 = vmatprep.subr.mxu0 0.0
    %5892 = vmatpush1.msra.mxu0 0.0
    %5893 = vmatprep.subr.mxu0 0.0
    %5894 = vmatpush1.msra.mxu0 0.0
    %5895 = vmatprep.subr.mxu0 0.0
    %5896 = vmatpush1.msra.mxu0 0.0
    %5897 = vmatprep.mubr.f32.mxu0 0.0
    %5898 = vmatmul.mubr.f32.gmra.mrb[0].mxu0 %v5831
    %v5899 = vpop.f32.mrb[0].mxu0
    %v5900 = vadd.f32 0.0, %v5899
    %v5901 = vpop.f32.mrb[0].mxu0
    %5902 = vdwg.mxu0
    %v5903 = vadd.f32 %v5827, %v5900
    %v5904 = vxor.u32 %v5903, 2147483648
    %v5905 = vmul.f32 %v5904, 1.442695
    %v5906 = vpow.pop %v5905
    %v5907 = vadd.f32 %v5906, 1.0
    %v5908 = vrcp.pop %v5907
    %v5909 = vmul.f32 1.0, %v5908
    %v5910 = vadd.f32 %v5900, %v778
    %5912 = vrot.lane.b32.xlu0 %v5910, 64
    %v5913 = vpop.permute.xlu0 %5912
    %v5915 = vmul.f32 %v5909, %v5913
    %5917 = vrot.lane.b32.xlu0 %v5915, 64
    %v5918 = vpop.permute.xlu0 %5917
    %v5920 = vadd.f32 %v5827, %v5918
    %v5921 = vtanh.pop %v5920
    %v5922 = vsub.f32 1.0, %v5909
    %5924 = vrot.lane.b32.xlu0 %v5921, 96
    %v5925 = vpop.permute.xlu0 %5924
    %v5927 = vmul.f32 %v5922, %v5925
    %v5928 = vmul.f32 %v5909, %v5826
    %v5929 = vadd.f32 %v5927, %v5928
    %v5930 = vld [vmem:[#allocation2 + $0x58] sm:$0x3]
    %5932 = vrot.lane.b32.xlu0 %v5929, 96
    %v5933 = vpop.permute.xlu0 %5932
    %v5934 = vsel %vm322, %v5933, 0
    %5936 = vmatprep.subr.mxu0 0.0
    %5937 = vmatpush1.msra.mxu0 %v678
    %5938 = vmatprep.subr.mxu0 0.0
    %5939 = vmatpush1.msra.mxu0 %v679
    %5940 = vmatprep.subr.mxu0 0.0
    %5941 = vmatpush1.msra.mxu0 %v680
    %5942 = vmatprep.subr.mxu0 0.0
    %5943 = vmatpush1.msra.mxu0 %v681
    %5944 = vmatprep.subr.mxu0 0.0
    %5945 = vmatpush1.msra.mxu0 0.0
    %5946 = vmatprep.subr.mxu0 0.0
    %5947 = vmatpush1.msra.mxu0 0.0
    %5948 = vmatprep.subr.mxu0 0.0
    %5949 = vmatpush1.msra.mxu0 0.0
    %5950 = vmatprep.subr.mxu0 0.0
    %5951 = vmatpush1.msra.mxu0 0.0
    %5952 = vmatprep.subr.mxu0 0.0
    %5953 = vmatpush1.msra.mxu0 0.0
    %5954 = vmatprep.subr.mxu0 0.0
    %5955 = vmatpush1.msra.mxu0 0.0
    %5956 = vmatprep.subr.mxu0 0.0
    %5957 = vmatpush1.msra.mxu0 0.0
    %5958 = vmatprep.subr.mxu0 0.0
    %5959 = vmatpush1.msra.mxu0 0.0
    %5960 = vmatprep.subr.mxu0 0.0
    %5961 = vmatpush1.msra.mxu0 0.0
    %5962 = vmatprep.subr.mxu0 0.0
    %5963 = vmatpush1.msra.mxu0 0.0
    %5964 = vmatprep.subr.mxu0 0.0
    %5965 = vmatpush1.msra.mxu0 0.0
    %5966 = vmatprep.subr.mxu0 0.0
    %5967 = vmatpush1.msra.mxu0 0.0
    %5968 = vmatprep.subr.mxu0 0.0
    %5969 = vmatpush1.msra.mxu0 0.0
    %5970 = vmatprep.subr.mxu0 0.0
    %5971 = vmatpush1.msra.mxu0 0.0
    %5972 = vmatprep.subr.mxu0 0.0
    %5973 = vmatpush1.msra.mxu0 0.0
    %5974 = vmatprep.subr.mxu0 0.0
    %5975 = vmatpush1.msra.mxu0 0.0
    %5976 = vmatprep.subr.mxu0 0.0
    %5977 = vmatpush1.msra.mxu0 0.0
    %5978 = vmatprep.subr.mxu0 0.0
    %5979 = vmatpush1.msra.mxu0 0.0
    %5980 = vmatprep.subr.mxu0 0.0
    %5981 = vmatpush1.msra.mxu0 0.0
    %5982 = vmatprep.subr.mxu0 0.0
    %5983 = vmatpush1.msra.mxu0 0.0
    %5984 = vmatprep.subr.mxu0 0.0
    %5985 = vmatpush1.msra.mxu0 0.0
    %5986 = vmatprep.subr.mxu0 0.0
    %5987 = vmatpush1.msra.mxu0 0.0
    %5988 = vmatprep.subr.mxu0 0.0
    %5989 = vmatpush1.msra.mxu0 0.0
    %5990 = vmatprep.subr.mxu0 0.0
    %5991 = vmatpush1.msra.mxu0 0.0
    %5992 = vmatprep.subr.mxu0 0.0
    %5993 = vmatpush1.msra.mxu0 0.0
    %5994 = vmatprep.subr.mxu0 0.0
    %5995 = vmatpush1.msra.mxu0 0.0
    %5996 = vmatprep.subr.mxu0 0.0
    %5997 = vmatpush1.msra.mxu0 0.0
    %5998 = vmatprep.subr.mxu0 0.0
    %5999 = vmatpush1.msra.mxu0 0.0
    %6000 = vmatprep.mubr.f32.mxu0 0.0
    %6001 = vmatmul.mubr.f32.gmra.mrb[0].mxu0 %v5934
    %v6002 = vpop.f32.mrb[0].mxu0
    %v6003 = vadd.f32 0.0, %v6002
    %v6004 = vpop.f32.mrb[0].mxu0
    %6005 = vdwg.mxu0
    %v6006 = vadd.f32 %v5930, %v6003
    %v6007 = vxor.u32 %v6006, 2147483648
    %v6008 = vmul.f32 %v6007, 1.442695
    %v6009 = vpow.pop %v6008
    %v6010 = vadd.f32 %v6009, 1.0
    %v6011 = vrcp.pop %v6010
    %v6012 = vmul.f32 1.0, %v6011
    %v6013 = vadd.f32 %v6003, %v778
    %6015 = vrot.lane.b32.xlu0 %v6013, 64
    %v6016 = vpop.permute.xlu0 %6015
    %v6018 = vmul.f32 %v6012, %v6016
    %6020 = vrot.lane.b32.xlu0 %v6018, 64
    %v6021 = vpop.permute.xlu0 %6020
    %v6023 = vadd.f32 %v5930, %v6021
    %v6024 = vtanh.pop %v6023
    %v6025 = vsub.f32 1.0, %v6012
    %6027 = vrot.lane.b32.xlu0 %v6024, 96
    %v6028 = vpop.permute.xlu0 %6027
    %v6030 = vmul.f32 %v6025, %v6028
    %v6031 = vmul.f32 %v6012, %v5929
    %v6032 = vadd.f32 %v6030, %v6031
    %v6033 = vld [vmem:[#allocation2 + $0x5a] sm:$0x3]
    %6035 = vrot.lane.b32.xlu0 %v6032, 96
    %v6036 = vpop.permute.xlu0 %6035
    %v6037 = vsel %vm322, %v6036, 0
    %6039 = vmatprep.subr.mxu0 0.0
    %6040 = vmatpush1.msra.mxu0 %v678
    %6041 = vmatprep.subr.mxu0 0.0
    %6042 = vmatpush1.msra.mxu0 %v679
    %6043 = vmatprep.subr.mxu0 0.0
    %6044 = vmatpush1.msra.mxu0 %v680
    %6045 = vmatprep.subr.mxu0 0.0
    %6046 = vmatpush1.msra.mxu0 %v681
    %6047 = vmatprep.subr.mxu0 0.0
    %6048 = vmatpush1.msra.mxu0 0.0
    %6049 = vmatprep.subr.mxu0 0.0
    %6050 = vmatpush1.msra.mxu0 0.0
    %6051 = vmatprep.subr.mxu0 0.0
    %6052 = vmatpush1.msra.mxu0 0.0
    %6053 = vmatprep.subr.mxu0 0.0
    %6054 = vmatpush1.msra.mxu0 0.0
    %6055 = vmatprep.subr.mxu0 0.0
    %6056 = vmatpush1.msra.mxu0 0.0
    %6057 = vmatprep.subr.mxu0 0.0
    %6058 = vmatpush1.msra.mxu0 0.0
    %6059 = vmatprep.subr.mxu0 0.0
    %6060 = vmatpush1.msra.mxu0 0.0
    %6061 = vmatprep.subr.mxu0 0.0
    %6062 = vmatpush1.msra.mxu0 0.0
    %6063 = vmatprep.subr.mxu0 0.0
    %6064 = vmatpush1.msra.mxu0 0.0
    %6065 = vmatprep.subr.mxu0 0.0
    %6066 = vmatpush1.msra.mxu0 0.0
    %6067 = vmatprep.subr.mxu0 0.0
    %6068 = vmatpush1.msra.mxu0 0.0
    %6069 = vmatprep.subr.mxu0 0.0
    %6070 = vmatpush1.msra.mxu0 0.0
    %6071 = vmatprep.subr.mxu0 0.0
    %6072 = vmatpush1.msra.mxu0 0.0
    %6073 = vmatprep.subr.mxu0 0.0
    %6074 = vmatpush1.msra.mxu0 0.0
    %6075 = vmatprep.subr.mxu0 0.0
    %6076 = vmatpush1.msra.mxu0 0.0
    %6077 = vmatprep.subr.mxu0 0.0
    %6078 = vmatpush1.msra.mxu0 0.0
    %6079 = vmatprep.subr.mxu0 0.0
    %6080 = vmatpush1.msra.mxu0 0.0
    %6081 = vmatprep.subr.mxu0 0.0
    %6082 = vmatpush1.msra.mxu0 0.0
    %6083 = vmatprep.subr.mxu0 0.0
    %6084 = vmatpush1.msra.mxu0 0.0
    %6085 = vmatprep.subr.mxu0 0.0
    %6086 = vmatpush1.msra.mxu0 0.0
    %6087 = vmatprep.subr.mxu0 0.0
    %6088 = vmatpush1.msra.mxu0 0.0
    %6089 = vmatprep.subr.mxu0 0.0
    %6090 = vmatpush1.msra.mxu0 0.0
    %6091 = vmatprep.subr.mxu0 0.0
    %6092 = vmatpush1.msra.mxu0 0.0
    %6093 = vmatprep.subr.mxu0 0.0
    %6094 = vmatpush1.msra.mxu0 0.0
    %6095 = vmatprep.subr.mxu0 0.0
    %6096 = vmatpush1.msra.mxu0 0.0
    %6097 = vmatprep.subr.mxu0 0.0
    %6098 = vmatpush1.msra.mxu0 0.0
    %6099 = vmatprep.subr.mxu0 0.0
    %6100 = vmatpush1.msra.mxu0 0.0
    %6101 = vmatprep.subr.mxu0 0.0
    %6102 = vmatpush1.msra.mxu0 0.0
    %6103 = vmatprep.mubr.f32.mxu0 0.0
    %6104 = vmatmul.mubr.f32.gmra.mrb[0].mxu0 %v6037
    %v6105 = vpop.f32.mrb[0].mxu0
    %v6106 = vadd.f32 0.0, %v6105
    %v6107 = vpop.f32.mrb[0].mxu0
    %6108 = vdwg.mxu0
    %v6109 = vadd.f32 %v6033, %v6106
    %v6110 = vxor.u32 %v6109, 2147483648
    %v6111 = vmul.f32 %v6110, 1.442695
    %v6112 = vpow.pop %v6111
    %v6113 = vadd.f32 %v6112, 1.0
    %v6114 = vrcp.pop %v6113
    %v6115 = vmul.f32 1.0, %v6114
    %v6116 = vadd.f32 %v6106, %v778
    %6118 = vrot.lane.b32.xlu0 %v6116, 64
    %v6119 = vpop.permute.xlu0 %6118
    %v6121 = vmul.f32 %v6115, %v6119
    %6123 = vrot.lane.b32.xlu0 %v6121, 64
    %v6124 = vpop.permute.xlu0 %6123
    %v6126 = vadd.f32 %v6033, %v6124
    %v6127 = vtanh.pop %v6126
    %v6128 = vsub.f32 1.0, %v6115
    %6130 = vrot.lane.b32.xlu0 %v6127, 96
    %v6131 = vpop.permute.xlu0 %6130
    %v6133 = vmul.f32 %v6128, %v6131
    %v6134 = vmul.f32 %v6115, %v6032
    %v6135 = vadd.f32 %v6133, %v6134
    %v6136 = vld [vmem:[#allocation2 + $0x5c] sm:$0x3]
    %6138 = vrot.lane.b32.xlu0 %v6135, 96
    %v6139 = vpop.permute.xlu0 %6138
    %v6140 = vsel %vm322, %v6139, 0
    %6142 = vmatprep.subr.mxu0 0.0
    %6143 = vmatpush1.msra.mxu0 %v678
    %6144 = vmatprep.subr.mxu0 0.0
    %6145 = vmatpush1.msra.mxu0 %v679
    %6146 = vmatprep.subr.mxu0 0.0
    %6147 = vmatpush1.msra.mxu0 %v680
    %6148 = vmatprep.subr.mxu0 0.0
    %6149 = vmatpush1.msra.mxu0 %v681
    %6150 = vmatprep.subr.mxu0 0.0
    %6151 = vmatpush1.msra.mxu0 0.0
    %6152 = vmatprep.subr.mxu0 0.0
    %6153 = vmatpush1.msra.mxu0 0.0
    %6154 = vmatprep.subr.mxu0 0.0
    %6155 = vmatpush1.msra.mxu0 0.0
    %6156 = vmatprep.subr.mxu0 0.0
    %6157 = vmatpush1.msra.mxu0 0.0
    %6158 = vmatprep.subr.mxu0 0.0
    %6159 = vmatpush1.msra.mxu0 0.0
    %6160 = vmatprep.subr.mxu0 0.0
    %6161 = vmatpush1.msra.mxu0 0.0
    %6162 = vmatprep.subr.mxu0 0.0
    %6163 = vmatpush1.msra.mxu0 0.0
    %6164 = vmatprep.subr.mxu0 0.0
    %6165 = vmatpush1.msra.mxu0 0.0
    %6166 = vmatprep.subr.mxu0 0.0
    %6167 = vmatpush1.msra.mxu0 0.0
    %6168 = vmatprep.subr.mxu0 0.0
    %6169 = vmatpush1.msra.mxu0 0.0
    %6170 = vmatprep.subr.mxu0 0.0
    %6171 = vmatpush1.msra.mxu0 0.0
    %6172 = vmatprep.subr.mxu0 0.0
    %6173 = vmatpush1.msra.mxu0 0.0
    %6174 = vmatprep.subr.mxu0 0.0
    %6175 = vmatpush1.msra.mxu0 0.0
    %6176 = vmatprep.subr.mxu0 0.0
    %6177 = vmatpush1.msra.mxu0 0.0
    %6178 = vmatprep.subr.mxu0 0.0
    %6179 = vmatpush1.msra.mxu0 0.0
    %6180 = vmatprep.subr.mxu0 0.0
    %6181 = vmatpush1.msra.mxu0 0.0
    %6182 = vmatprep.subr.mxu0 0.0
    %6183 = vmatpush1.msra.mxu0 0.0
    %6184 = vmatprep.subr.mxu0 0.0
    %6185 = vmatpush1.msra.mxu0 0.0
    %6186 = vmatprep.subr.mxu0 0.0
    %6187 = vmatpush1.msra.mxu0 0.0
    %6188 = vmatprep.subr.mxu0 0.0
    %6189 = vmatpush1.msra.mxu0 0.0
    %6190 = vmatprep.subr.mxu0 0.0
    %6191 = vmatpush1.msra.mxu0 0.0
    %6192 = vmatprep.subr.mxu0 0.0
    %6193 = vmatpush1.msra.mxu0 0.0
    %6194 = vmatprep.subr.mxu0 0.0
    %6195 = vmatpush1.msra.mxu0 0.0
    %6196 = vmatprep.subr.mxu0 0.0
    %6197 = vmatpush1.msra.mxu0 0.0
    %6198 = vmatprep.subr.mxu0 0.0
    %6199 = vmatpush1.msra.mxu0 0.0
    %6200 = vmatprep.subr.mxu0 0.0
    %6201 = vmatpush1.msra.mxu0 0.0
    %6202 = vmatprep.subr.mxu0 0.0
    %6203 = vmatpush1.msra.mxu0 0.0
    %6204 = vmatprep.subr.mxu0 0.0
    %6205 = vmatpush1.msra.mxu0 0.0
    %6206 = vmatprep.mubr.f32.mxu0 0.0
    %6207 = vmatmul.mubr.f32.gmra.mrb[0].mxu0 %v6140
    %v6208 = vpop.f32.mrb[0].mxu0
    %v6209 = vadd.f32 0.0, %v6208
    %v6210 = vpop.f32.mrb[0].mxu0
    %6211 = vdwg.mxu0
    %v6212 = vadd.f32 %v6136, %v6209
    %v6213 = vxor.u32 %v6212, 2147483648
    %v6214 = vmul.f32 %v6213, 1.442695
    %v6215 = vpow.pop %v6214
    %v6216 = vadd.f32 %v6215, 1.0
    %v6217 = vrcp.pop %v6216
    %v6218 = vmul.f32 1.0, %v6217
    %v6219 = vadd.f32 %v6209, %v778
    %6221 = vrot.lane.b32.xlu0 %v6219, 64
    %v6222 = vpop.permute.xlu0 %6221
    %v6224 = vmul.f32 %v6218, %v6222
    %6226 = vrot.lane.b32.xlu0 %v6224, 64
    %v6227 = vpop.permute.xlu0 %6226
    %v6229 = vadd.f32 %v6136, %v6227
    %v6230 = vtanh.pop %v6229
    %v6231 = vsub.f32 1.0, %v6218
    %6233 = vrot.lane.b32.xlu0 %v6230, 96
    %v6234 = vpop.permute.xlu0 %6233
    %v6236 = vmul.f32 %v6231, %v6234
    %v6237 = vmul.f32 %v6218, %v6135
    %v6238 = vadd.f32 %v6236, %v6237
    %v6239 = vld [vmem:[#allocation3 + $0x50] sm:$0xff]
    %v6240 = vld [vmem:[#allocation3 + $0x58] sm:$0x3f]
    %6243 = vrot.lane.b32.xlu0 %v5516, 112
    %v6244 = vpop.permute.xlu0 %6243
    %6245 = vrot.lane.b32.xlu0 %v5517, 112
    %v6246 = vpop.permute.xlu0 %6245
    %v6247 = vsel %vm1935, %v6244, 0
    %v6249 = vsel %vm1935, %v6246, 0
    %6251 = vmatprep.subr.mxu0 0.0
    %6252 = vmatpush1.msra.mxu0 %v682
    %6253 = vmatprep.subr.mxu0 0.0
    %6254 = vmatpush1.msra.mxu0 %v683
    %6255 = vmatprep.subr.mxu0 0.0
    %6256 = vmatpush1.msra.mxu0 0.0
    %6257 = vmatprep.subr.mxu0 0.0
    %6258 = vmatpush1.msra.mxu0 0.0
    %6259 = vmatprep.subr.mxu0 0.0
    %6260 = vmatpush1.msra.mxu0 0.0
    %6261 = vmatprep.subr.mxu0 0.0
    %6262 = vmatpush1.msra.mxu0 0.0
    %6263 = vmatprep.subr.mxu0 0.0
    %6264 = vmatpush1.msra.mxu0 0.0
    %6265 = vmatprep.subr.mxu0 0.0
    %6266 = vmatpush1.msra.mxu0 0.0
    %6267 = vmatprep.subr.mxu0 0.0
    %6268 = vmatpush1.msra.mxu0 0.0
    %6269 = vmatprep.subr.mxu0 0.0
    %6270 = vmatpush1.msra.mxu0 0.0
    %6271 = vmatprep.subr.mxu0 0.0
    %6272 = vmatpush1.msra.mxu0 0.0
    %6273 = vmatprep.subr.mxu0 0.0
    %6274 = vmatpush1.msra.mxu0 0.0
    %6275 = vmatprep.subr.mxu0 0.0
    %6276 = vmatpush1.msra.mxu0 0.0
    %6277 = vmatprep.subr.mxu0 0.0
    %6278 = vmatpush1.msra.mxu0 0.0
    %6279 = vmatprep.subr.mxu0 0.0
    %6280 = vmatpush1.msra.mxu0 0.0
    %6281 = vmatprep.subr.mxu0 0.0
    %6282 = vmatpush1.msra.mxu0 0.0
    %6283 = vmatprep.subr.mxu0 0.0
    %6284 = vmatpush1.msra.mxu0 0.0
    %6285 = vmatprep.subr.mxu0 0.0
    %6286 = vmatpush1.msra.mxu0 0.0
    %6287 = vmatprep.subr.mxu0 0.0
    %6288 = vmatpush1.msra.mxu0 0.0
    %6289 = vmatprep.subr.mxu0 0.0
    %6290 = vmatpush1.msra.mxu0 0.0
    %6291 = vmatprep.subr.mxu0 0.0
    %6292 = vmatpush1.msra.mxu0 0.0
    %6293 = vmatprep.subr.mxu0 0.0
    %6294 = vmatpush1.msra.mxu0 0.0
    %6295 = vmatprep.subr.mxu0 0.0
    %6296 = vmatpush1.msra.mxu0 0.0
    %6297 = vmatprep.subr.mxu0 0.0
    %6298 = vmatpush1.msra.mxu0 0.0
    %6299 = vmatprep.subr.mxu0 0.0
    %6300 = vmatpush1.msra.mxu0 0.0
    %6301 = vmatprep.subr.mxu0 0.0
    %6302 = vmatpush1.msra.mxu0 0.0
    %6303 = vmatprep.subr.mxu0 0.0
    %6304 = vmatpush1.msra.mxu0 0.0
    %6305 = vmatprep.subr.mxu0 0.0
    %6306 = vmatpush1.msra.mxu0 0.0
    %6307 = vmatprep.subr.mxu0 0.0
    %6308 = vmatpush1.msra.mxu0 0.0
    %6309 = vmatprep.subr.mxu0 0.0
    %6310 = vmatpush1.msra.mxu0 0.0
    %6311 = vmatprep.subr.mxu0 0.0
    %6312 = vmatpush1.msra.mxu0 0.0
    %6313 = vmatprep.subr.mxu0 0.0
    %6314 = vmatpush1.msra.mxu0 0.0
    %6315 = vmatprep.mubr.f32.mxu0 0.0
    %6316 = vmatmul.mubr.f32.gmra.mrb[0].mxu0 %v6247
    %v6317 = vpop.f32.mrb[0].mxu0
    %v6318 = vadd.f32 0.0, %v6317
    %v6319 = vpop.f32.mrb[0].mxu0
    %6320 = vmatprep.mubr.f32.mxu0 0.0
    %6321 = vmatmul.mubr.f32.gmra.mrb[0].mxu0 %v6249
    %v6322 = vpop.f32.mrb[0].mxu0
    %v6323 = vadd.f32 0.0, %v6322
    %v6324 = vpop.f32.mrb[0].mxu0
    %6325 = vdwg.mxu0
    %v6326 = vadd.f32 %v6239, %v6318
    %v6327 = vadd.f32 %v6240, %v6323
    %v6328 = vxor.u32 %v6326, 2147483648
    %v6329 = vxor.u32 %v6327, 2147483648
    %v6330 = vmul.f32 %v6328, 1.442695
    %v6331 = vpow.pop %v6330
    %v6332 = vmul.f32 %v6329, 1.442695
    %v6333 = vpow.pop %v6332
    %v6334 = vadd.f32 %v6331, 1.0
    %v6335 = vadd.f32 %v6333, 1.0
    %v6336 = vrcp.pop %v6334
    %v6337 = vmul.f32 1.0, %v6336
    %v6338 = vrcp.pop %v6335
    %v6339 = vmul.f32 1.0, %v6338
    %v6340 = vadd.f32 %v6318, %v2028
    %v6341 = vadd.f32 %v6323, %v2028
    %6344 = vrot.lane.b32.xlu0 %v6340, 96
    %v6345 = vpop.permute.xlu0 %6344
    %6346 = vrot.lane.b32.xlu0 %v6341, 96
    %v6347 = vpop.permute.xlu0 %6346
    %v6350 = vmul.f32 %v6337, %v6345
    %v6351 = vmul.f32 %v6339, %v6347
    %6354 = vrot.lane.b32.xlu0 %v6350, 32
    %v6355 = vpop.permute.xlu0 %6354
    %6356 = vrot.lane.b32.xlu0 %v6351, 32
    %v6357 = vpop.permute.xlu0 %6356
    %v6360 = vadd.f32 %v6239, %v6355
    %v6361 = vadd.f32 %v6240, %v6357
    %v6362 = vtanh.pop %v6360
    %v6363 = vtanh.pop %v6361
    %v6364 = vsub.f32 1.0, %v6337
    %v6365 = vsub.f32 1.0, %v6339
    %6368 = vrot.lane.b32.xlu0 %v6362, 112
    %v6369 = vpop.permute.xlu0 %6368
    %6370 = vrot.lane.b32.xlu0 %v6363, 112
    %v6371 = vpop.permute.xlu0 %6370
    %v6374 = vmul.f32 %v6364, %v6369
    %v6375 = vmul.f32 %v6365, %v6371
    %v6376 = vmul.f32 %v6337, %v5516
    %v6377 = vmul.f32 %v6339, %v5517
    %v6378 = vadd.f32 %v6374, %v6376
    %v6379 = vadd.f32 %v6375, %v6377
    %v6380 = vld [vmem:[#allocation2 + $0x5e] sm:$0x3]
    %6382 = vrot.lane.b32.xlu0 %v6238, 96
    %v6383 = vpop.permute.xlu0 %6382
    %v6384 = vsel %vm322, %v6383, 0
    %6386 = vmatprep.subr.mxu0 0.0
    %6387 = vmatpush1.msra.mxu0 %v678
    %6388 = vmatprep.subr.mxu0 0.0
    %6389 = vmatpush1.msra.mxu0 %v679
    %6390 = vmatprep.subr.mxu0 0.0
    %6391 = vmatpush1.msra.mxu0 %v680
    %6392 = vmatprep.subr.mxu0 0.0
    %6393 = vmatpush1.msra.mxu0 %v681
    %6394 = vmatprep.subr.mxu0 0.0
    %6395 = vmatpush1.msra.mxu0 0.0
    %6396 = vmatprep.subr.mxu0 0.0
    %6397 = vmatpush1.msra.mxu0 0.0
    %6398 = vmatprep.subr.mxu0 0.0
    %6399 = vmatpush1.msra.mxu0 0.0
    %6400 = vmatprep.subr.mxu0 0.0
    %6401 = vmatpush1.msra.mxu0 0.0
    %6402 = vmatprep.subr.mxu0 0.0
    %6403 = vmatpush1.msra.mxu0 0.0
    %6404 = vmatprep.subr.mxu0 0.0
    %6405 = vmatpush1.msra.mxu0 0.0
    %6406 = vmatprep.subr.mxu0 0.0
    %6407 = vmatpush1.msra.mxu0 0.0
    %6408 = vmatprep.subr.mxu0 0.0
    %6409 = vmatpush1.msra.mxu0 0.0
    %6410 = vmatprep.subr.mxu0 0.0
    %6411 = vmatpush1.msra.mxu0 0.0
    %6412 = vmatprep.subr.mxu0 0.0
    %6413 = vmatpush1.msra.mxu0 0.0
    %6414 = vmatprep.subr.mxu0 0.0
    %6415 = vmatpush1.msra.mxu0 0.0
    %6416 = vmatprep.subr.mxu0 0.0
    %6417 = vmatpush1.msra.mxu0 0.0
    %6418 = vmatprep.subr.mxu0 0.0
    %6419 = vmatpush1.msra.mxu0 0.0
    %6420 = vmatprep.subr.mxu0 0.0
    %6421 = vmatpush1.msra.mxu0 0.0
    %6422 = vmatprep.subr.mxu0 0.0
    %6423 = vmatpush1.msra.mxu0 0.0
    %6424 = vmatprep.subr.mxu0 0.0
    %6425 = vmatpush1.msra.mxu0 0.0
    %6426 = vmatprep.subr.mxu0 0.0
    %6427 = vmatpush1.msra.mxu0 0.0
    %6428 = vmatprep.subr.mxu0 0.0
    %6429 = vmatpush1.msra.mxu0 0.0
    %6430 = vmatprep.subr.mxu0 0.0
    %6431 = vmatpush1.msra.mxu0 0.0
    %6432 = vmatprep.subr.mxu0 0.0
    %6433 = vmatpush1.msra.mxu0 0.0
    %6434 = vmatprep.subr.mxu0 0.0
    %6435 = vmatpush1.msra.mxu0 0.0
    %6436 = vmatprep.subr.mxu0 0.0
    %6437 = vmatpush1.msra.mxu0 0.0
    %6438 = vmatprep.subr.mxu0 0.0
    %6439 = vmatpush1.msra.mxu0 0.0
    %6440 = vmatprep.subr.mxu0 0.0
    %6441 = vmatpush1.msra.mxu0 0.0
    %6442 = vmatprep.subr.mxu0 0.0
    %6443 = vmatpush1.msra.mxu0 0.0
    %6444 = vmatprep.subr.mxu0 0.0
    %6445 = vmatpush1.msra.mxu0 0.0
    %6446 = vmatprep.subr.mxu0 0.0
    %6447 = vmatpush1.msra.mxu0 0.0
    %6448 = vmatprep.subr.mxu0 0.0
    %6449 = vmatpush1.msra.mxu0 0.0
    %6450 = vmatprep.mubr.f32.mxu0 0.0
    %6451 = vmatmul.mubr.f32.gmra.mrb[0].mxu0 %v6384
    %v6452 = vpop.f32.mrb[0].mxu0
    %v6453 = vadd.f32 0.0, %v6452
    %v6454 = vpop.f32.mrb[0].mxu0
    %6455 = vdwg.mxu0
    %v6456 = vadd.f32 %v6380, %v6453
    %v6457 = vxor.u32 %v6456, 2147483648
    %v6458 = vmul.f32 %v6457, 1.442695
    %v6459 = vpow.pop %v6458
    %v6460 = vadd.f32 %v6459, 1.0
    %v6461 = vrcp.pop %v6460
    %v6462 = vmul.f32 1.0, %v6461
    %v6463 = vadd.f32 %v6453, %v778
    %6465 = vrot.lane.b32.xlu0 %v6463, 64
    %v6466 = vpop.permute.xlu0 %6465
    %v6468 = vmul.f32 %v6462, %v6466
    %6470 = vrot.lane.b32.xlu0 %v6468, 64
    %v6471 = vpop.permute.xlu0 %6470
    %v6473 = vadd.f32 %v6380, %v6471
    %v6474 = vtanh.pop %v6473
    %v6475 = vsub.f32 1.0, %v6462
    %6477 = vrot.lane.b32.xlu0 %v6474, 96
    %v6478 = vpop.permute.xlu0 %6477
    %v6480 = vmul.f32 %v6475, %v6478
    %v6481 = vmul.f32 %v6462, %v6238
    %v6482 = vadd.f32 %v6480, %v6481
    %v6483 = vld [vmem:[#allocation2 + $0x60] sm:$0x3]
    %6485 = vrot.lane.b32.xlu0 %v6482, 96
    %v6486 = vpop.permute.xlu0 %6485
    %v6487 = vsel %vm322, %v6486, 0
    %6489 = vmatprep.subr.mxu0 0.0
    %6490 = vmatpush1.msra.mxu0 %v678
    %6491 = vmatprep.subr.mxu0 0.0
    %6492 = vmatpush1.msra.mxu0 %v679
    %6493 = vmatprep.subr.mxu0 0.0
    %6494 = vmatpush1.msra.mxu0 %v680
    %6495 = vmatprep.subr.mxu0 0.0
    %6496 = vmatpush1.msra.mxu0 %v681
    %6497 = vmatprep.subr.mxu0 0.0
    %6498 = vmatpush1.msra.mxu0 0.0
    %6499 = vmatprep.subr.mxu0 0.0
    %6500 = vmatpush1.msra.mxu0 0.0
    %6501 = vmatprep.subr.mxu0 0.0
    %6502 = vmatpush1.msra.mxu0 0.0
    %6503 = vmatprep.subr.mxu0 0.0
    %6504 = vmatpush1.msra.mxu0 0.0
    %6505 = vmatprep.subr.mxu0 0.0
    %6506 = vmatpush1.msra.mxu0 0.0
    %6507 = vmatprep.subr.mxu0 0.0
    %6508 = vmatpush1.msra.mxu0 0.0
    %6509 = vmatprep.subr.mxu0 0.0
    %6510 = vmatpush1.msra.mxu0 0.0
    %6511 = vmatprep.subr.mxu0 0.0
    %6512 = vmatpush1.msra.mxu0 0.0
    %6513 = vmatprep.subr.mxu0 0.0
    %6514 = vmatpush1.msra.mxu0 0.0
    %6515 = vmatprep.subr.mxu0 0.0
    %6516 = vmatpush1.msra.mxu0 0.0
    %6517 = vmatprep.subr.mxu0 0.0
    %6518 = vmatpush1.msra.mxu0 0.0
    %6519 = vmatprep.subr.mxu0 0.0
    %6520 = vmatpush1.msra.mxu0 0.0
    %6521 = vmatprep.subr.mxu0 0.0
    %6522 = vmatpush1.msra.mxu0 0.0
    %6523 = vmatprep.subr.mxu0 0.0
    %6524 = vmatpush1.msra.mxu0 0.0
    %6525 = vmatprep.subr.mxu0 0.0
    %6526 = vmatpush1.msra.mxu0 0.0
    %6527 = vmatprep.subr.mxu0 0.0
    %6528 = vmatpush1.msra.mxu0 0.0
    %6529 = vmatprep.subr.mxu0 0.0
    %6530 = vmatpush1.msra.mxu0 0.0
    %6531 = vmatprep.subr.mxu0 0.0
    %6532 = vmatpush1.msra.mxu0 0.0
    %6533 = vmatprep.subr.mxu0 0.0
    %6534 = vmatpush1.msra.mxu0 0.0
    %6535 = vmatprep.subr.mxu0 0.0
    %6536 = vmatpush1.msra.mxu0 0.0
    %6537 = vmatprep.subr.mxu0 0.0
    %6538 = vmatpush1.msra.mxu0 0.0
    %6539 = vmatprep.subr.mxu0 0.0
    %6540 = vmatpush1.msra.mxu0 0.0
    %6541 = vmatprep.subr.mxu0 0.0
    %6542 = vmatpush1.msra.mxu0 0.0
    %6543 = vmatprep.subr.mxu0 0.0
    %6544 = vmatpush1.msra.mxu0 0.0
    %6545 = vmatprep.subr.mxu0 0.0
    %6546 = vmatpush1.msra.mxu0 0.0
    %6547 = vmatprep.subr.mxu0 0.0
    %6548 = vmatpush1.msra.mxu0 0.0
    %6549 = vmatprep.subr.mxu0 0.0
    %6550 = vmatpush1.msra.mxu0 0.0
    %6551 = vmatprep.subr.mxu0 0.0
    %6552 = vmatpush1.msra.mxu0 0.0
    %6553 = vmatprep.mubr.f32.mxu0 0.0
    %6554 = vmatmul.mubr.f32.gmra.mrb[0].mxu0 %v6487
    %v6555 = vpop.f32.mrb[0].mxu0
    %v6556 = vadd.f32 0.0, %v6555
    %v6557 = vpop.f32.mrb[0].mxu0
    %6558 = vdwg.mxu0
    %v6559 = vadd.f32 %v6483, %v6556
    %v6560 = vxor.u32 %v6559, 2147483648
    %v6561 = vmul.f32 %v6560, 1.442695
    %v6562 = vpow.pop %v6561
    %v6563 = vadd.f32 %v6562, 1.0
    %v6564 = vrcp.pop %v6563
    %v6565 = vmul.f32 1.0, %v6564
    %v6566 = vadd.f32 %v6556, %v778
    %6568 = vrot.lane.b32.xlu0 %v6566, 64
    %v6569 = vpop.permute.xlu0 %6568
    %v6571 = vmul.f32 %v6565, %v6569
    %6573 = vrot.lane.b32.xlu0 %v6571, 64
    %v6574 = vpop.permute.xlu0 %6573
    %v6576 = vadd.f32 %v6483, %v6574
    %v6577 = vtanh.pop %v6576
    %v6578 = vsub.f32 1.0, %v6565
    %6580 = vrot.lane.b32.xlu0 %v6577, 96
    %v6581 = vpop.permute.xlu0 %6580
    %v6583 = vmul.f32 %v6578, %v6581
    %v6584 = vmul.f32 %v6565, %v6482
    %v6585 = vadd.f32 %v6583, %v6584
    %v6586 = vld [vmem:[#allocation2 + $0x62] sm:$0x3]
    %6588 = vrot.lane.b32.xlu0 %v6585, 96
    %v6589 = vpop.permute.xlu0 %6588
    %v6590 = vsel %vm322, %v6589, 0
    %6592 = vmatprep.subr.mxu0 0.0
    %6593 = vmatpush1.msra.mxu0 %v678
    %6594 = vmatprep.subr.mxu0 0.0
    %6595 = vmatpush1.msra.mxu0 %v679
    %6596 = vmatprep.subr.mxu0 0.0
    %6597 = vmatpush1.msra.mxu0 %v680
    %6598 = vmatprep.subr.mxu0 0.0
    %6599 = vmatpush1.msra.mxu0 %v681
    %6600 = vmatprep.subr.mxu0 0.0
    %6601 = vmatpush1.msra.mxu0 0.0
    %6602 = vmatprep.subr.mxu0 0.0
    %6603 = vmatpush1.msra.mxu0 0.0
    %6604 = vmatprep.subr.mxu0 0.0
    %6605 = vmatpush1.msra.mxu0 0.0
    %6606 = vmatprep.subr.mxu0 0.0
    %6607 = vmatpush1.msra.mxu0 0.0
    %6608 = vmatprep.subr.mxu0 0.0
    %6609 = vmatpush1.msra.mxu0 0.0
    %6610 = vmatprep.subr.mxu0 0.0
    %6611 = vmatpush1.msra.mxu0 0.0
    %6612 = vmatprep.subr.mxu0 0.0
    %6613 = vmatpush1.msra.mxu0 0.0
    %6614 = vmatprep.subr.mxu0 0.0
    %6615 = vmatpush1.msra.mxu0 0.0
    %6616 = vmatprep.subr.mxu0 0.0
    %6617 = vmatpush1.msra.mxu0 0.0
    %6618 = vmatprep.subr.mxu0 0.0
    %6619 = vmatpush1.msra.mxu0 0.0
    %6620 = vmatprep.subr.mxu0 0.0
    %6621 = vmatpush1.msra.mxu0 0.0
    %6622 = vmatprep.subr.mxu0 0.0
    %6623 = vmatpush1.msra.mxu0 0.0
    %6624 = vmatprep.subr.mxu0 0.0
    %6625 = vmatpush1.msra.mxu0 0.0
    %6626 = vmatprep.subr.mxu0 0.0
    %6627 = vmatpush1.msra.mxu0 0.0
    %6628 = vmatprep.subr.mxu0 0.0
    %6629 = vmatpush1.msra.mxu0 0.0
    %6630 = vmatprep.subr.mxu0 0.0
    %6631 = vmatpush1.msra.mxu0 0.0
    %6632 = vmatprep.subr.mxu0 0.0
    %6633 = vmatpush1.msra.mxu0 0.0
    %6634 = vmatprep.subr.mxu0 0.0
    %6635 = vmatpush1.msra.mxu0 0.0
    %6636 = vmatprep.subr.mxu0 0.0
    %6637 = vmatpush1.msra.mxu0 0.0
    %6638 = vmatprep.subr.mxu0 0.0
    %6639 = vmatpush1.msra.mxu0 0.0
    %6640 = vmatprep.subr.mxu0 0.0
    %6641 = vmatpush1.msra.mxu0 0.0
    %6642 = vmatprep.subr.mxu0 0.0
    %6643 = vmatpush1.msra.mxu0 0.0
    %6644 = vmatprep.subr.mxu0 0.0
    %6645 = vmatpush1.msra.mxu0 0.0
    %6646 = vmatprep.subr.mxu0 0.0
    %6647 = vmatpush1.msra.mxu0 0.0
    %6648 = vmatprep.subr.mxu0 0.0
    %6649 = vmatpush1.msra.mxu0 0.0
    %6650 = vmatprep.subr.mxu0 0.0
    %6651 = vmatpush1.msra.mxu0 0.0
    %6652 = vmatprep.subr.mxu0 0.0
    %6653 = vmatpush1.msra.mxu0 0.0
    %6654 = vmatprep.subr.mxu0 0.0
    %6655 = vmatpush1.msra.mxu0 0.0
    %6656 = vmatprep.mubr.f32.mxu0 0.0
    %6657 = vmatmul.mubr.f32.gmra.mrb[0].mxu0 %v6590
    %v6658 = vpop.f32.mrb[0].mxu0
    %v6659 = vadd.f32 0.0, %v6658
    %v6660 = vpop.f32.mrb[0].mxu0
    %6661 = vdwg.mxu0
    %v6662 = vadd.f32 %v6586, %v6659
    %v6663 = vxor.u32 %v6662, 2147483648
    %v6664 = vmul.f32 %v6663, 1.442695
    %v6665 = vpow.pop %v6664
    %v6666 = vadd.f32 %v6665, 1.0
    %v6667 = vrcp.pop %v6666
    %v6668 = vmul.f32 1.0, %v6667
    %v6669 = vadd.f32 %v6659, %v778
    %6671 = vrot.lane.b32.xlu0 %v6669, 64
    %v6672 = vpop.permute.xlu0 %6671
    %v6674 = vmul.f32 %v6668, %v6672
    %6676 = vrot.lane.b32.xlu0 %v6674, 64
    %v6677 = vpop.permute.xlu0 %6676
    %v6679 = vadd.f32 %v6586, %v6677
    %v6680 = vtanh.pop %v6679
    %v6681 = vsub.f32 1.0, %v6668
    %6683 = vrot.lane.b32.xlu0 %v6680, 96
    %v6684 = vpop.permute.xlu0 %6683
    %v6686 = vmul.f32 %v6681, %v6684
    %v6687 = vmul.f32 %v6668, %v6585
    %v6688 = vadd.f32 %v6686, %v6687
    %v6689 = vld [vmem:[#allocation2 + $0x64] sm:$0x3]
    %6691 = vrot.lane.b32.xlu0 %v6688, 96
    %v6692 = vpop.permute.xlu0 %6691
    %v6693 = vsel %vm322, %v6692, 0
    %6695 = vmatprep.subr.mxu0 0.0
    %6696 = vmatpush1.msra.mxu0 %v678
    %6697 = vmatprep.subr.mxu0 0.0
    %6698 = vmatpush1.msra.mxu0 %v679
    %6699 = vmatprep.subr.mxu0 0.0
    %6700 = vmatpush1.msra.mxu0 %v680
    %6701 = vmatprep.subr.mxu0 0.0
    %6702 = vmatpush1.msra.mxu0 %v681
    %6703 = vmatprep.subr.mxu0 0.0
    %6704 = vmatpush1.msra.mxu0 0.0
    %6705 = vmatprep.subr.mxu0 0.0
    %6706 = vmatpush1.msra.mxu0 0.0
    %6707 = vmatprep.subr.mxu0 0.0
    %6708 = vmatpush1.msra.mxu0 0.0
    %6709 = vmatprep.subr.mxu0 0.0
    %6710 = vmatpush1.msra.mxu0 0.0
    %6711 = vmatprep.subr.mxu0 0.0
    %6712 = vmatpush1.msra.mxu0 0.0
    %6713 = vmatprep.subr.mxu0 0.0
    %6714 = vmatpush1.msra.mxu0 0.0
    %6715 = vmatprep.subr.mxu0 0.0
    %6716 = vmatpush1.msra.mxu0 0.0
    %6717 = vmatprep.subr.mxu0 0.0
    %6718 = vmatpush1.msra.mxu0 0.0
    %6719 = vmatprep.subr.mxu0 0.0
    %6720 = vmatpush1.msra.mxu0 0.0
    %6721 = vmatprep.subr.mxu0 0.0
    %6722 = vmatpush1.msra.mxu0 0.0
    %6723 = vmatprep.subr.mxu0 0.0
    %6724 = vmatpush1.msra.mxu0 0.0
    %6725 = vmatprep.subr.mxu0 0.0
    %6726 = vmatpush1.msra.mxu0 0.0
    %6727 = vmatprep.subr.mxu0 0.0
    %6728 = vmatpush1.msra.mxu0 0.0
    %6729 = vmatprep.subr.mxu0 0.0
    %6730 = vmatpush1.msra.mxu0 0.0
    %6731 = vmatprep.subr.mxu0 0.0
    %6732 = vmatpush1.msra.mxu0 0.0
    %6733 = vmatprep.subr.mxu0 0.0
    %6734 = vmatpush1.msra.mxu0 0.0
    %6735 = vmatprep.subr.mxu0 0.0
    %6736 = vmatpush1.msra.mxu0 0.0
    %6737 = vmatprep.subr.mxu0 0.0
    %6738 = vmatpush1.msra.mxu0 0.0
    %6739 = vmatprep.subr.mxu0 0.0
    %6740 = vmatpush1.msra.mxu0 0.0
    %6741 = vmatprep.subr.mxu0 0.0
    %6742 = vmatpush1.msra.mxu0 0.0
    %6743 = vmatprep.subr.mxu0 0.0
    %6744 = vmatpush1.msra.mxu0 0.0
    %6745 = vmatprep.subr.mxu0 0.0
    %6746 = vmatpush1.msra.mxu0 0.0
    %6747 = vmatprep.subr.mxu0 0.0
    %6748 = vmatpush1.msra.mxu0 0.0
    %6749 = vmatprep.subr.mxu0 0.0
    %6750 = vmatpush1.msra.mxu0 0.0
    %6751 = vmatprep.subr.mxu0 0.0
    %6752 = vmatpush1.msra.mxu0 0.0
    %6753 = vmatprep.subr.mxu0 0.0
    %6754 = vmatpush1.msra.mxu0 0.0
    %6755 = vmatprep.subr.mxu0 0.0
    %6756 = vmatpush1.msra.mxu0 0.0
    %6757 = vmatprep.subr.mxu0 0.0
    %6758 = vmatpush1.msra.mxu0 0.0
    %6759 = vmatprep.mubr.f32.mxu0 0.0
    %6760 = vmatmul.mubr.f32.gmra.mrb[0].mxu0 %v6693
    %v6761 = vpop.f32.mrb[0].mxu0
    %v6762 = vadd.f32 0.0, %v6761
    %v6763 = vpop.f32.mrb[0].mxu0
    %6764 = vdwg.mxu0
    %v6765 = vadd.f32 %v6689, %v6762
    %v6766 = vxor.u32 %v6765, 2147483648
    %v6767 = vmul.f32 %v6766, 1.442695
    %v6768 = vpow.pop %v6767
    %v6769 = vadd.f32 %v6768, 1.0
    %v6770 = vrcp.pop %v6769
    %v6771 = vmul.f32 1.0, %v6770
    %v6772 = vadd.f32 %v6762, %v778
    %6774 = vrot.lane.b32.xlu0 %v6772, 64
    %v6775 = vpop.permute.xlu0 %6774
    %v6777 = vmul.f32 %v6771, %v6775
    %6779 = vrot.lane.b32.xlu0 %v6777, 64
    %v6780 = vpop.permute.xlu0 %6779
    %v6782 = vadd.f32 %v6689, %v6780
    %v6783 = vtanh.pop %v6782
    %v6784 = vsub.f32 1.0, %v6771
    %6786 = vrot.lane.b32.xlu0 %v6783, 96
    %v6787 = vpop.permute.xlu0 %6786
    %v6789 = vmul.f32 %v6784, %v6787
    %v6790 = vmul.f32 %v6771, %v6688
    %v6791 = vadd.f32 %v6789, %v6790
    %v6792 = vld [vmem:[#allocation2 + $0x66] sm:$0x3]
    %6794 = vrot.lane.b32.xlu0 %v6791, 96
    %v6795 = vpop.permute.xlu0 %6794
    %v6796 = vsel %vm322, %v6795, 0
    %6798 = vmatprep.subr.mxu0 0.0
    %6799 = vmatpush1.msra.mxu0 %v678
    %6800 = vmatprep.subr.mxu0 0.0
    %6801 = vmatpush1.msra.mxu0 %v679
    %6802 = vmatprep.subr.mxu0 0.0
    %6803 = vmatpush1.msra.mxu0 %v680
    %6804 = vmatprep.subr.mxu0 0.0
    %6805 = vmatpush1.msra.mxu0 %v681
    %6806 = vmatprep.subr.mxu0 0.0
    %6807 = vmatpush1.msra.mxu0 0.0
    %6808 = vmatprep.subr.mxu0 0.0
    %6809 = vmatpush1.msra.mxu0 0.0
    %6810 = vmatprep.subr.mxu0 0.0
    %6811 = vmatpush1.msra.mxu0 0.0
    %6812 = vmatprep.subr.mxu0 0.0
    %6813 = vmatpush1.msra.mxu0 0.0
    %6814 = vmatprep.subr.mxu0 0.0
    %6815 = vmatpush1.msra.mxu0 0.0
    %6816 = vmatprep.subr.mxu0 0.0
    %6817 = vmatpush1.msra.mxu0 0.0
    %6818 = vmatprep.subr.mxu0 0.0
    %6819 = vmatpush1.msra.mxu0 0.0
    %6820 = vmatprep.subr.mxu0 0.0
    %6821 = vmatpush1.msra.mxu0 0.0
    %6822 = vmatprep.subr.mxu0 0.0
    %6823 = vmatpush1.msra.mxu0 0.0
    %6824 = vmatprep.subr.mxu0 0.0
    %6825 = vmatpush1.msra.mxu0 0.0
    %6826 = vmatprep.subr.mxu0 0.0
    %6827 = vmatpush1.msra.mxu0 0.0
    %6828 = vmatprep.subr.mxu0 0.0
    %6829 = vmatpush1.msra.mxu0 0.0
    %6830 = vmatprep.subr.mxu0 0.0
    %6831 = vmatpush1.msra.mxu0 0.0
    %6832 = vmatprep.subr.mxu0 0.0
    %6833 = vmatpush1.msra.mxu0 0.0
    %6834 = vmatprep.subr.mxu0 0.0
    %6835 = vmatpush1.msra.mxu0 0.0
    %6836 = vmatprep.subr.mxu0 0.0
    %6837 = vmatpush1.msra.mxu0 0.0
    %6838 = vmatprep.subr.mxu0 0.0
    %6839 = vmatpush1.msra.mxu0 0.0
    %6840 = vmatprep.subr.mxu0 0.0
    %6841 = vmatpush1.msra.mxu0 0.0
    %6842 = vmatprep.subr.mxu0 0.0
    %6843 = vmatpush1.msra.mxu0 0.0
    %6844 = vmatprep.subr.mxu0 0.0
    %6845 = vmatpush1.msra.mxu0 0.0
    %6846 = vmatprep.subr.mxu0 0.0
    %6847 = vmatpush1.msra.mxu0 0.0
    %6848 = vmatprep.subr.mxu0 0.0
    %6849 = vmatpush1.msra.mxu0 0.0
    %6850 = vmatprep.subr.mxu0 0.0
    %6851 = vmatpush1.msra.mxu0 0.0
    %6852 = vmatprep.subr.mxu0 0.0
    %6853 = vmatpush1.msra.mxu0 0.0
    %6854 = vmatprep.subr.mxu0 0.0
    %6855 = vmatpush1.msra.mxu0 0.0
    %6856 = vmatprep.subr.mxu0 0.0
    %6857 = vmatpush1.msra.mxu0 0.0
    %6858 = vmatprep.subr.mxu0 0.0
    %6859 = vmatpush1.msra.mxu0 0.0
    %6860 = vmatprep.subr.mxu0 0.0
    %6861 = vmatpush1.msra.mxu0 0.0
    %6862 = vmatprep.mubr.f32.mxu0 0.0
    %6863 = vmatmul.mubr.f32.gmra.mrb[0].mxu0 %v6796
    %v6864 = vpop.f32.mrb[0].mxu0
    %v6865 = vadd.f32 0.0, %v6864
    %v6866 = vpop.f32.mrb[0].mxu0
    %6867 = vdwg.mxu0
    %v6868 = vadd.f32 %v6792, %v6865
    %v6869 = vxor.u32 %v6868, 2147483648
    %v6870 = vmul.f32 %v6869, 1.442695
    %v6871 = vpow.pop %v6870
    %v6872 = vadd.f32 %v6871, 1.0
    %v6873 = vrcp.pop %v6872
    %v6874 = vmul.f32 1.0, %v6873
    %v6875 = vadd.f32 %v6865, %v778
    %6877 = vrot.lane.b32.xlu0 %v6875, 64
    %v6878 = vpop.permute.xlu0 %6877
    %v6880 = vmul.f32 %v6874, %v6878
    %6882 = vrot.lane.b32.xlu0 %v6880, 64
    %v6883 = vpop.permute.xlu0 %6882
    %v6885 = vadd.f32 %v6792, %v6883
    %v6886 = vtanh.pop %v6885
    %v6887 = vsub.f32 1.0, %v6874
    %6889 = vrot.lane.b32.xlu0 %v6886, 96
    %v6890 = vpop.permute.xlu0 %6889
    %v6892 = vmul.f32 %v6887, %v6890
    %v6893 = vmul.f32 %v6874, %v6791
    %v6894 = vadd.f32 %v6892, %v6893
    %v6895 = vld [vmem:[#allocation2 + $0x68] sm:$0x3]
    %6897 = vrot.lane.b32.xlu0 %v6894, 96
    %v6898 = vpop.permute.xlu0 %6897
    %v6899 = vsel %vm322, %v6898, 0
    %6901 = vmatprep.subr.mxu0 0.0
    %6902 = vmatpush1.msra.mxu0 %v678
    %6903 = vmatprep.subr.mxu0 0.0
    %6904 = vmatpush1.msra.mxu0 %v679
    %6905 = vmatprep.subr.mxu0 0.0
    %6906 = vmatpush1.msra.mxu0 %v680
    %6907 = vmatprep.subr.mxu0 0.0
    %6908 = vmatpush1.msra.mxu0 %v681
    %6909 = vmatprep.subr.mxu0 0.0
    %6910 = vmatpush1.msra.mxu0 0.0
    %6911 = vmatprep.subr.mxu0 0.0
    %6912 = vmatpush1.msra.mxu0 0.0
    %6913 = vmatprep.subr.mxu0 0.0
    %6914 = vmatpush1.msra.mxu0 0.0
    %6915 = vmatprep.subr.mxu0 0.0
    %6916 = vmatpush1.msra.mxu0 0.0
    %6917 = vmatprep.subr.mxu0 0.0
    %6918 = vmatpush1.msra.mxu0 0.0
    %6919 = vmatprep.subr.mxu0 0.0
    %6920 = vmatpush1.msra.mxu0 0.0
    %6921 = vmatprep.subr.mxu0 0.0
    %6922 = vmatpush1.msra.mxu0 0.0
    %6923 = vmatprep.subr.mxu0 0.0
    %6924 = vmatpush1.msra.mxu0 0.0
    %6925 = vmatprep.subr.mxu0 0.0
    %6926 = vmatpush1.msra.mxu0 0.0
    %6927 = vmatprep.subr.mxu0 0.0
    %6928 = vmatpush1.msra.mxu0 0.0
    %6929 = vmatprep.subr.mxu0 0.0
    %6930 = vmatpush1.msra.mxu0 0.0
    %6931 = vmatprep.subr.mxu0 0.0
    %6932 = vmatpush1.msra.mxu0 0.0
    %6933 = vmatprep.subr.mxu0 0.0
    %6934 = vmatpush1.msra.mxu0 0.0
    %6935 = vmatprep.subr.mxu0 0.0
    %6936 = vmatpush1.msra.mxu0 0.0
    %6937 = vmatprep.subr.mxu0 0.0
    %6938 = vmatpush1.msra.mxu0 0.0
    %6939 = vmatprep.subr.mxu0 0.0
    %6940 = vmatpush1.msra.mxu0 0.0
    %6941 = vmatprep.subr.mxu0 0.0
    %6942 = vmatpush1.msra.mxu0 0.0
    %6943 = vmatprep.subr.mxu0 0.0
    %6944 = vmatpush1.msra.mxu0 0.0
    %6945 = vmatprep.subr.mxu0 0.0
    %6946 = vmatpush1.msra.mxu0 0.0
    %6947 = vmatprep.subr.mxu0 0.0
    %6948 = vmatpush1.msra.mxu0 0.0
    %6949 = vmatprep.subr.mxu0 0.0
    %6950 = vmatpush1.msra.mxu0 0.0
    %6951 = vmatprep.subr.mxu0 0.0
    %6952 = vmatpush1.msra.mxu0 0.0
    %6953 = vmatprep.subr.mxu0 0.0
    %6954 = vmatpush1.msra.mxu0 0.0
    %6955 = vmatprep.subr.mxu0 0.0
    %6956 = vmatpush1.msra.mxu0 0.0
    %6957 = vmatprep.subr.mxu0 0.0
    %6958 = vmatpush1.msra.mxu0 0.0
    %6959 = vmatprep.subr.mxu0 0.0
    %6960 = vmatpush1.msra.mxu0 0.0
    %6961 = vmatprep.subr.mxu0 0.0
    %6962 = vmatpush1.msra.mxu0 0.0
    %6963 = vmatprep.subr.mxu0 0.0
    %6964 = vmatpush1.msra.mxu0 0.0
    %6965 = vmatprep.mubr.f32.mxu0 0.0
    %6966 = vmatmul.mubr.f32.gmra.mrb[0].mxu0 %v6899
    %v6967 = vpop.f32.mrb[0].mxu0
    %v6968 = vadd.f32 0.0, %v6967
    %v6969 = vpop.f32.mrb[0].mxu0
    %6970 = vdwg.mxu0
    %v6971 = vadd.f32 %v6895, %v6968
    %v6972 = vxor.u32 %v6971, 2147483648
    %v6973 = vmul.f32 %v6972, 1.442695
    %v6974 = vpow.pop %v6973
    %v6975 = vadd.f32 %v6974, 1.0
    %v6976 = vrcp.pop %v6975
    %v6977 = vmul.f32 1.0, %v6976
    %v6978 = vadd.f32 %v6968, %v778
    %6980 = vrot.lane.b32.xlu0 %v6978, 64
    %v6981 = vpop.permute.xlu0 %6980
    %v6983 = vmul.f32 %v6977, %v6981
    %6985 = vrot.lane.b32.xlu0 %v6983, 64
    %v6986 = vpop.permute.xlu0 %6985
    %v6988 = vadd.f32 %v6895, %v6986
    %v6989 = vtanh.pop %v6988
    %v6990 = vsub.f32 1.0, %v6977
    %6992 = vrot.lane.b32.xlu0 %v6989, 96
    %v6993 = vpop.permute.xlu0 %6992
    %v6995 = vmul.f32 %v6990, %v6993
    %v6996 = vmul.f32 %v6977, %v6894
    %v6997 = vadd.f32 %v6995, %v6996
    %v6998 = vld [vmem:[#allocation2 + $0x6a] sm:$0x3]
    %7000 = vrot.lane.b32.xlu0 %v6997, 96
    %v7001 = vpop.permute.xlu0 %7000
    %v7002 = vsel %vm322, %v7001, 0
    %7004 = vmatprep.subr.mxu0 0.0
    %7005 = vmatpush1.msra.mxu0 %v678
    %7006 = vmatprep.subr.mxu0 0.0
    %7007 = vmatpush1.msra.mxu0 %v679
    %7008 = vmatprep.subr.mxu0 0.0
    %7009 = vmatpush1.msra.mxu0 %v680
    %7010 = vmatprep.subr.mxu0 0.0
    %7011 = vmatpush1.msra.mxu0 %v681
    %7012 = vmatprep.subr.mxu0 0.0
    %7013 = vmatpush1.msra.mxu0 0.0
    %7014 = vmatprep.subr.mxu0 0.0
    %7015 = vmatpush1.msra.mxu0 0.0
    %7016 = vmatprep.subr.mxu0 0.0
    %7017 = vmatpush1.msra.mxu0 0.0
    %7018 = vmatprep.subr.mxu0 0.0
    %7019 = vmatpush1.msra.mxu0 0.0
    %7020 = vmatprep.subr.mxu0 0.0
    %7021 = vmatpush1.msra.mxu0 0.0
    %7022 = vmatprep.subr.mxu0 0.0
    %7023 = vmatpush1.msra.mxu0 0.0
    %7024 = vmatprep.subr.mxu0 0.0
    %7025 = vmatpush1.msra.mxu0 0.0
    %7026 = vmatprep.subr.mxu0 0.0
    %7027 = vmatpush1.msra.mxu0 0.0
    %7028 = vmatprep.subr.mxu0 0.0
    %7029 = vmatpush1.msra.mxu0 0.0
    %7030 = vmatprep.subr.mxu0 0.0
    %7031 = vmatpush1.msra.mxu0 0.0
    %7032 = vmatprep.subr.mxu0 0.0
    %7033 = vmatpush1.msra.mxu0 0.0
    %7034 = vmatprep.subr.mxu0 0.0
    %7035 = vmatpush1.msra.mxu0 0.0
    %7036 = vmatprep.subr.mxu0 0.0
    %7037 = vmatpush1.msra.mxu0 0.0
    %7038 = vmatprep.subr.mxu0 0.0
    %7039 = vmatpush1.msra.mxu0 0.0
    %7040 = vmatprep.subr.mxu0 0.0
    %7041 = vmatpush1.msra.mxu0 0.0
    %7042 = vmatprep.subr.mxu0 0.0
    %7043 = vmatpush1.msra.mxu0 0.0
    %7044 = vmatprep.subr.mxu0 0.0
    %7045 = vmatpush1.msra.mxu0 0.0
    %7046 = vmatprep.subr.mxu0 0.0
    %7047 = vmatpush1.msra.mxu0 0.0
    %7048 = vmatprep.subr.mxu0 0.0
    %7049 = vmatpush1.msra.mxu0 0.0
    %7050 = vmatprep.subr.mxu0 0.0
    %7051 = vmatpush1.msra.mxu0 0.0
    %7052 = vmatprep.subr.mxu0 0.0
    %7053 = vmatpush1.msra.mxu0 0.0
    %7054 = vmatprep.subr.mxu0 0.0
    %7055 = vmatpush1.msra.mxu0 0.0
    %7056 = vmatprep.subr.mxu0 0.0
    %7057 = vmatpush1.msra.mxu0 0.0
    %7058 = vmatprep.subr.mxu0 0.0
    %7059 = vmatpush1.msra.mxu0 0.0
    %7060 = vmatprep.subr.mxu0 0.0
    %7061 = vmatpush1.msra.mxu0 0.0
    %7062 = vmatprep.subr.mxu0 0.0
    %7063 = vmatpush1.msra.mxu0 0.0
    %7064 = vmatprep.subr.mxu0 0.0
    %7065 = vmatpush1.msra.mxu0 0.0
    %7066 = vmatprep.subr.mxu0 0.0
    %7067 = vmatpush1.msra.mxu0 0.0
    %7068 = vmatprep.mubr.f32.mxu0 0.0
    %7069 = vmatmul.mubr.f32.gmra.mrb[0].mxu0 %v7002
    %v7070 = vpop.f32.mrb[0].mxu0
    %v7071 = vadd.f32 0.0, %v7070
    %v7072 = vpop.f32.mrb[0].mxu0
    %7073 = vdwg.mxu0
    %v7074 = vadd.f32 %v6998, %v7071
    %v7075 = vxor.u32 %v7074, 2147483648
    %v7076 = vmul.f32 %v7075, 1.442695
    %v7077 = vpow.pop %v7076
    %v7078 = vadd.f32 %v7077, 1.0
    %v7079 = vrcp.pop %v7078
    %v7080 = vmul.f32 1.0, %v7079
    %v7081 = vadd.f32 %v7071, %v778
    %7083 = vrot.lane.b32.xlu0 %v7081, 64
    %v7084 = vpop.permute.xlu0 %7083
    %v7086 = vmul.f32 %v7080, %v7084
    %7088 = vrot.lane.b32.xlu0 %v7086, 64
    %v7089 = vpop.permute.xlu0 %7088
    %v7091 = vadd.f32 %v6998, %v7089
    %v7092 = vtanh.pop %v7091
    %v7093 = vsub.f32 1.0, %v7080
    %7095 = vrot.lane.b32.xlu0 %v7092, 96
    %v7096 = vpop.permute.xlu0 %7095
    %v7098 = vmul.f32 %v7093, %v7096
    %v7099 = vmul.f32 %v7080, %v6997
    %v7100 = vadd.f32 %v7098, %v7099
    %v7101 = vld [vmem:[#allocation3 + $0x5e] sm:$0xff]
    %v7102 = vld [vmem:[#allocation3 + $0x66] sm:$0x3f]
    %7105 = vrot.lane.b32.xlu0 %v6378, 112
    %v7106 = vpop.permute.xlu0 %7105
    %7107 = vrot.lane.b32.xlu0 %v6379, 112
    %v7108 = vpop.permute.xlu0 %7107
    %v7109 = vsel %vm1935, %v7106, 0
    %v7111 = vsel %vm1935, %v7108, 0
    %7113 = vmatprep.subr.mxu0 0.0
    %7114 = vmatpush1.msra.mxu0 %v682
    %7115 = vmatprep.subr.mxu0 0.0
    %7116 = vmatpush1.msra.mxu0 %v683
    %7117 = vmatprep.subr.mxu0 0.0
    %7118 = vmatpush1.msra.mxu0 0.0
    %7119 = vmatprep.subr.mxu0 0.0
    %7120 = vmatpush1.msra.mxu0 0.0
    %7121 = vmatprep.subr.mxu0 0.0
    %7122 = vmatpush1.msra.mxu0 0.0
    %7123 = vmatprep.subr.mxu0 0.0
    %7124 = vmatpush1.msra.mxu0 0.0
    %7125 = vmatprep.subr.mxu0 0.0
    %7126 = vmatpush1.msra.mxu0 0.0
    %7127 = vmatprep.subr.mxu0 0.0
    %7128 = vmatpush1.msra.mxu0 0.0
    %7129 = vmatprep.subr.mxu0 0.0
    %7130 = vmatpush1.msra.mxu0 0.0
    %7131 = vmatprep.subr.mxu0 0.0
    %7132 = vmatpush1.msra.mxu0 0.0
    %7133 = vmatprep.subr.mxu0 0.0
    %7134 = vmatpush1.msra.mxu0 0.0
    %7135 = vmatprep.subr.mxu0 0.0
    %7136 = vmatpush1.msra.mxu0 0.0
    %7137 = vmatprep.subr.mxu0 0.0
    %7138 = vmatpush1.msra.mxu0 0.0
    %7139 = vmatprep.subr.mxu0 0.0
    %7140 = vmatpush1.msra.mxu0 0.0
    %7141 = vmatprep.subr.mxu0 0.0
    %7142 = vmatpush1.msra.mxu0 0.0
    %7143 = vmatprep.subr.mxu0 0.0
    %7144 = vmatpush1.msra.mxu0 0.0
    %7145 = vmatprep.subr.mxu0 0.0
    %7146 = vmatpush1.msra.mxu0 0.0
    %7147 = vmatprep.subr.mxu0 0.0
    %7148 = vmatpush1.msra.mxu0 0.0
    %7149 = vmatprep.subr.mxu0 0.0
    %7150 = vmatpush1.msra.mxu0 0.0
    %7151 = vmatprep.subr.mxu0 0.0
    %7152 = vmatpush1.msra.mxu0 0.0
    %7153 = vmatprep.subr.mxu0 0.0
    %7154 = vmatpush1.msra.mxu0 0.0
    %7155 = vmatprep.subr.mxu0 0.0
    %7156 = vmatpush1.msra.mxu0 0.0
    %7157 = vmatprep.subr.mxu0 0.0
    %7158 = vmatpush1.msra.mxu0 0.0
    %7159 = vmatprep.subr.mxu0 0.0
    %7160 = vmatpush1.msra.mxu0 0.0
    %7161 = vmatprep.subr.mxu0 0.0
    %7162 = vmatpush1.msra.mxu0 0.0
    %7163 = vmatprep.subr.mxu0 0.0
    %7164 = vmatpush1.msra.mxu0 0.0
    %7165 = vmatprep.subr.mxu0 0.0
    %7166 = vmatpush1.msra.mxu0 0.0
    %7167 = vmatprep.subr.mxu0 0.0
    %7168 = vmatpush1.msra.mxu0 0.0
    %7169 = vmatprep.subr.mxu0 0.0
    %7170 = vmatpush1.msra.mxu0 0.0
    %7171 = vmatprep.subr.mxu0 0.0
    %7172 = vmatpush1.msra.mxu0 0.0
    %7173 = vmatprep.subr.mxu0 0.0
    %7174 = vmatpush1.msra.mxu0 0.0
    %7175 = vmatprep.subr.mxu0 0.0
    %7176 = vmatpush1.msra.mxu0 0.0
    %7177 = vmatprep.mubr.f32.mxu0 0.0
    %7178 = vmatmul.mubr.f32.gmra.mrb[0].mxu0 %v7109
    %v7179 = vpop.f32.mrb[0].mxu0
    %v7180 = vadd.f32 0.0, %v7179
    %v7181 = vpop.f32.mrb[0].mxu0
    %7182 = vmatprep.mubr.f32.mxu0 0.0
    %7183 = vmatmul.mubr.f32.gmra.mrb[0].mxu0 %v7111
    %v7184 = vpop.f32.mrb[0].mxu0
    %v7185 = vadd.f32 0.0, %v7184
    %v7186 = vpop.f32.mrb[0].mxu0
    %7187 = vdwg.mxu0
    %v7188 = vadd.f32 %v7101, %v7180
    %v7189 = vadd.f32 %v7102, %v7185
    %v7190 = vxor.u32 %v7188, 2147483648
    %v7191 = vxor.u32 %v7189, 2147483648
    %v7192 = vmul.f32 %v7190, 1.442695
    %v7193 = vpow.pop %v7192
    %v7194 = vmul.f32 %v7191, 1.442695
    %v7195 = vpow.pop %v7194
    %v7196 = vadd.f32 %v7193, 1.0
    %v7197 = vadd.f32 %v7195, 1.0
    %v7198 = vrcp.pop %v7196
    %v7199 = vmul.f32 1.0, %v7198
    %v7200 = vrcp.pop %v7197
    %v7201 = vmul.f32 1.0, %v7200
    %v7202 = vadd.f32 %v7180, %v2028
    %v7203 = vadd.f32 %v7185, %v2028
    %7206 = vrot.lane.b32.xlu0 %v7202, 96
    %v7207 = vpop.permute.xlu0 %7206
    %7208 = vrot.lane.b32.xlu0 %v7203, 96
    %v7209 = vpop.permute.xlu0 %7208
    %v7212 = vmul.f32 %v7199, %v7207
    %v7213 = vmul.f32 %v7201, %v7209
    %7216 = vrot.lane.b32.xlu0 %v7212, 32
    %v7217 = vpop.permute.xlu0 %7216
    %7218 = vrot.lane.b32.xlu0 %v7213, 32
    %v7219 = vpop.permute.xlu0 %7218
    %v7222 = vadd.f32 %v7101, %v7217
    %v7223 = vadd.f32 %v7102, %v7219
    %v7224 = vtanh.pop %v7222
    %v7225 = vtanh.pop %v7223
    %v7226 = vsub.f32 1.0, %v7199
    %v7227 = vsub.f32 1.0, %v7201
    %7230 = vrot.lane.b32.xlu0 %v7224, 112
    %v7231 = vpop.permute.xlu0 %7230
    %7232 = vrot.lane.b32.xlu0 %v7225, 112
    %v7233 = vpop.permute.xlu0 %7232
    %v7236 = vmul.f32 %v7226, %v7231
    %v7237 = vmul.f32 %v7227, %v7233
    %v7238 = vmul.f32 %v7199, %v6378
    %v7239 = vmul.f32 %v7201, %v6379
    %v7240 = vadd.f32 %v7236, %v7238
    %v7241 = vadd.f32 %v7237, %v7239
    %7243 = vrot.lane.b32.xlu0 %v7240, 112
    %v7244 = vpop.permute.xlu0 %7243
    %v7246 = vrot.slane %v7240, 1
    %v7248 = vrot.slane %v7240, 2
    %7249 = vrot.lane.b32.xlu0 %v7248, 16
    %v7250 = vpop.permute.xlu0 %7249
    %v7252 = vrot.slane %v7240, 3
    %7253 = vrot.lane.b32.xlu0 %v7252, 32
    %v7254 = vpop.permute.xlu0 %7253
    %v7256 = vrot.slane %v7240, 4
    %7257 = vrot.lane.b32.xlu0 %v7256, 48
    %v7258 = vpop.permute.xlu0 %7257
    %v7260 = vrot.slane %v7240, 5
    %7261 = vrot.lane.b32.xlu0 %v7260, 64
    %v7262 = vpop.permute.xlu0 %7261
    %v7264 = vrot.slane %v7240, 6
    %7265 = vrot.lane.b32.xlu0 %v7264, 80
    %v7266 = vpop.permute.xlu0 %7265
    %v7268 = vsel %vm1935, %v7244, %v7246
    %v7269 = vsel %vm322, %v7268, %v7250
    %v7270 = vsel %vm662, %v7269, %v7254
    %v7271 = vsel %vm119, %v7270, %v7258
    %vm7272 = vcmask 654336
    %v7273 = vsel %vm7272, %v7271, %v7262
    %v7274 = vsel %vm500, %v7273, %v7266
    %v7276 = vrot.slane %v7241, 1
    %v7278 = vrot.slane %v7241, 2
    %7279 = vrot.lane.b32.xlu0 %v7278, 16
    %v7280 = vpop.permute.xlu0 %7279
    %v7282 = vrot.slane %v7241, 3
    %7283 = vrot.lane.b32.xlu0 %v7282, 32
    %v7284 = vpop.permute.xlu0 %7283
    %v7286 = vrot.slane %v7241, 4
    %7287 = vrot.lane.b32.xlu0 %v7286, 48
    %v7288 = vpop.permute.xlu0 %7287
    %v7290 = vrot.slane %v7241, 5
    %7291 = vrot.lane.b32.xlu0 %v7290, 64
    %v7292 = vpop.permute.xlu0 %7291
    %v7294 = vrot.slane %v7241, 6
    %7295 = vrot.lane.b32.xlu0 %v7294, 80
    %v7296 = vpop.permute.xlu0 %7295
    %v7298 = vsel %vm1935, %v7244, %v7276
    %v7299 = vsel %vm322, %v7298, %v7280
    %v7300 = vsel %vm662, %v7299, %v7284
    %v7301 = vsel %vm119, %v7300, %v7288
    %v7302 = vsel %vm7272, %v7301, %v7292
    %v7303 = vsel %vm500, %v7302, %v7296
    %v7305 = vrot.slane %v7303, 6
    %vm7307 = vcmask 1040384
    %v7308 = vsel %vm7307, %v7274, %v7305
    %v7309 = vld [vmem:[%s12] sm:$0xff]
    %v7310 = vld [vmem:[%s12 + $0x8] sm:$0xff]
    %v7311 = vld [vmem:[%s12 + $0x10] sm:$0xff]
    %v7312 = vld [vmem:[%s12 + $0x18] sm:$0xff]
    %v7313 = vld [vmem:[%s13] sm:$0xff]
    %v7314 = vld [vmem:[%s13 + $0x8] sm:$0xff]
    %v7315 = vld [vmem:[%s13 + $0x10] sm:$0xff]
    %v7316 = vld [vmem:[%s13 + $0x18] sm:$0xff]
    %v7317 = vld [vmem:[%s13 + $0x20] sm:$0xff]
    %v7318 = vld [vmem:[%s13 + $0x28] sm:$0xff]
    %v7319 = vld [vmem:[%s13 + $0x30] sm:$0xff]
    %v7320 = vld [vmem:[%s13 + $0x38] sm:$0xff]
    %v7321 = vld [vmem:[%s13 + $0x40] sm:$0xff]
    %v7322 = vld [vmem:[%s13 + $0x48] sm:$0xff]
    %v7323 = vld [vmem:[%s13 + $0x50] sm:$0xff]
    %v7324 = vld [vmem:[%s13 + $0x58] sm:$0xff]
    %v7325 = vld [vmem:[%s13 + $0x60] sm:$0xff]
    %v7326 = vld [vmem:[%s13 + $0x68] sm:$0xff]
    %vm7327 = vcmask 916480
    %v7329 = vsel %vm7327, %v7308, 0
    %7331 = vmatprep.subr.mxu0 0.0
    %7332 = vmatpush1.msra.mxu0 %v7313
    %7333 = vmatprep.subr.mxu0 0.0
    %7334 = vmatpush1.msra.mxu0 %v7314
    %7335 = vmatprep.subr.mxu0 0.0
    %7336 = vmatpush1.msra.mxu0 %v7315
    %7337 = vmatprep.subr.mxu0 0.0
    %7338 = vmatpush1.msra.mxu0 %v7316
    %7339 = vmatprep.subr.mxu0 0.0
    %7340 = vmatpush1.msra.mxu0 %v7317
    %7341 = vmatprep.subr.mxu0 0.0
    %7342 = vmatpush1.msra.mxu0 %v7318
    %7343 = vmatprep.subr.mxu0 0.0
    %7344 = vmatpush1.msra.mxu0 %v7319
    %7345 = vmatprep.subr.mxu0 0.0
    %7346 = vmatpush1.msra.mxu0 %v7320
    %7347 = vmatprep.subr.mxu0 0.0
    %7348 = vmatpush1.msra.mxu0 %v7321
    %7349 = vmatprep.subr.mxu0 0.0
    %7350 = vmatpush1.msra.mxu0 %v7322
    %7351 = vmatprep.subr.mxu0 0.0
    %7352 = vmatpush1.msra.mxu0 %v7323
    %7353 = vmatprep.subr.mxu0 0.0
    %7354 = vmatpush1.msra.mxu0 %v7324
    %7355 = vmatprep.subr.mxu0 0.0
    %7356 = vmatpush1.msra.mxu0 %v7325
    %7357 = vmatprep.subr.mxu0 0.0
    %7358 = vmatpush1.msra.mxu0 %v7326
    %7359 = vmatprep.subr.mxu0 0.0
    %7360 = vmatpush1.msra.mxu0 0.0
    %7361 = vmatprep.subr.mxu0 0.0
    %7362 = vmatpush1.msra.mxu0 0.0
    %7363 = vmatprep.subr.mxu0 0.0
    %7364 = vmatpush1.msra.mxu0 0.0
    %7365 = vmatprep.subr.mxu0 0.0
    %7366 = vmatpush1.msra.mxu0 0.0
    %7367 = vmatprep.subr.mxu0 0.0
    %7368 = vmatpush1.msra.mxu0 0.0
    %7369 = vmatprep.subr.mxu0 0.0
    %7370 = vmatpush1.msra.mxu0 0.0
    %7371 = vmatprep.subr.mxu0 0.0
    %7372 = vmatpush1.msra.mxu0 0.0
    %7373 = vmatprep.subr.mxu0 0.0
    %7374 = vmatpush1.msra.mxu0 0.0
    %7375 = vmatprep.subr.mxu0 0.0
    %7376 = vmatpush1.msra.mxu0 0.0
    %7377 = vmatprep.subr.mxu0 0.0
    %7378 = vmatpush1.msra.mxu0 0.0
    %7379 = vmatprep.subr.mxu0 0.0
    %7380 = vmatpush1.msra.mxu0 0.0
    %7381 = vmatprep.subr.mxu0 0.0
    %7382 = vmatpush1.msra.mxu0 0.0
    %7383 = vmatprep.subr.mxu0 0.0
    %7384 = vmatpush1.msra.mxu0 0.0
    %7385 = vmatprep.subr.mxu0 0.0
    %7386 = vmatpush1.msra.mxu0 0.0
    %7387 = vmatprep.subr.mxu0 0.0
    %7388 = vmatpush1.msra.mxu0 0.0
    %7389 = vmatprep.subr.mxu0 0.0
    %7390 = vmatpush1.msra.mxu0 0.0
    %7391 = vmatprep.subr.mxu0 0.0
    %7392 = vmatpush1.msra.mxu0 0.0
    %7393 = vmatprep.subr.mxu0 0.0
    %7394 = vmatpush1.msra.mxu0 0.0
    %7395 = vmatprep.mubr.f32.mxu0 0.0
    %7396 = vmatmul.mubr.f32.gmra.mrb[0].mxu0 %v7329
    %v7397 = vpop.f32.mrb[0].mxu0
    %v7398 = vadd.f32 0.0, %v7397
    %v7399 = vpop.f32.mrb[0].mxu0
    %7400 = vdwg.mxu0
    %7402 = vrot.lane.b32.xlu0 %v7100, 96
    %v7403 = vpop.permute.xlu0 %7402
    %v7404 = vsel %vm322, %v7403, 0
    %7406 = vmatprep.subr.mxu0 0.0
    %7407 = vmatpush1.msra.mxu0 %v7309
    %7408 = vmatprep.subr.mxu0 0.0
    %7409 = vmatpush1.msra.mxu0 %v7310
    %7410 = vmatprep.subr.mxu0 0.0
    %7411 = vmatpush1.msra.mxu0 %v7311
    %7412 = vmatprep.subr.mxu0 0.0
    %7413 = vmatpush1.msra.mxu0 %v7312
    %7414 = vmatprep.subr.mxu0 0.0
    %7415 = vmatpush1.msra.mxu0 0.0
    %7416 = vmatprep.subr.mxu0 0.0
    %7417 = vmatpush1.msra.mxu0 0.0
    %7418 = vmatprep.subr.mxu0 0.0
    %7419 = vmatpush1.msra.mxu0 0.0
    %7420 = vmatprep.subr.mxu0 0.0
    %7421 = vmatpush1.msra.mxu0 0.0
    %7422 = vmatprep.subr.mxu0 0.0
    %7423 = vmatpush1.msra.mxu0 0.0
    %7424 = vmatprep.subr.mxu0 0.0
    %7425 = vmatpush1.msra.mxu0 0.0
    %7426 = vmatprep.subr.mxu0 0.0
    %7427 = vmatpush1.msra.mxu0 0.0
    %7428 = vmatprep.subr.mxu0 0.0
    %7429 = vmatpush1.msra.mxu0 0.0
    %7430 = vmatprep.subr.mxu0 0.0
    %7431 = vmatpush1.msra.mxu0 0.0
    %7432 = vmatprep.subr.mxu0 0.0
    %7433 = vmatpush1.msra.mxu0 0.0
    %7434 = vmatprep.subr.mxu0 0.0
    %7435 = vmatpush1.msra.mxu0 0.0
    %7436 = vmatprep.subr.mxu0 0.0
    %7437 = vmatpush1.msra.mxu0 0.0
    %7438 = vmatprep.subr.mxu0 0.0
    %7439 = vmatpush1.msra.mxu0 0.0
    %7440 = vmatprep.subr.mxu0 0.0
    %7441 = vmatpush1.msra.mxu0 0.0
    %7442 = vmatprep.subr.mxu0 0.0
    %7443 = vmatpush1.msra.mxu0 0.0
    %7444 = vmatprep.subr.mxu0 0.0
    %7445 = vmatpush1.msra.mxu0 0.0
    %7446 = vmatprep.subr.mxu0 0.0
    %7447 = vmatpush1.msra.mxu0 0.0
    %7448 = vmatprep.subr.mxu0 0.0
    %7449 = vmatpush1.msra.mxu0 0.0
    %7450 = vmatprep.subr.mxu0 0.0
    %7451 = vmatpush1.msra.mxu0 0.0
    %7452 = vmatprep.subr.mxu0 0.0
    %7453 = vmatpush1.msra.mxu0 0.0
    %7454 = vmatprep.subr.mxu0 0.0
    %7455 = vmatpush1.msra.mxu0 0.0
    %7456 = vmatprep.subr.mxu0 0.0
    %7457 = vmatpush1.msra.mxu0 0.0
    %7458 = vmatprep.subr.mxu0 0.0
    %7459 = vmatpush1.msra.mxu0 0.0
    %7460 = vmatprep.subr.mxu0 0.0
    %7461 = vmatpush1.msra.mxu0 0.0
    %7462 = vmatprep.subr.mxu0 0.0
    %7463 = vmatpush1.msra.mxu0 0.0
    %7464 = vmatprep.subr.mxu0 0.0
    %7465 = vmatpush1.msra.mxu0 0.0
    %7466 = vmatprep.subr.mxu0 0.0
    %7467 = vmatpush1.msra.mxu0 0.0
    %7468 = vmatprep.subr.mxu0 0.0
    %7469 = vmatpush1.msra.mxu0 0.0
    %7470 = vmatprep.mubr.f32.mxu0 0.0
    %7471 = vmatmul.mubr.f32.gmra.mrb[0].mxu0 %v7404
    %v7472 = vpop.f32.mrb[0].mxu0
    %v7473 = vadd.f32 %v7398, %v7472
    %v7474 = vpop.f32.mrb[0].mxu0
    %7475 = vdwg.mxu0
    %v7476 = vld [vmem:[%s1] sm:$0x3]
    %v7477 = vld [vmem:[%s14] sm:$0xff]
    %v7478 = vld [vmem:[%s14 + $0x8] sm:$0xff]
    %v7479 = vld [vmem:[%s14 + $0x10] sm:$0xff]
    %v7480 = vld [vmem:[%s14 + $0x18] sm:$0xff]
    %v7481 = vld [vmem:[%s14 + $0x20] sm:$0xff]
    %v7482 = vld [vmem:[%s14 + $0x28] sm:$0xff]
    %v7483 = vld [vmem:[%s14 + $0x30] sm:$0xff]
    %v7484 = vld [vmem:[%s14 + $0x38] sm:$0xff]
    %v7485 = vld [vmem:[%s14 + $0x40] sm:$0xff]
    %v7486 = vld [vmem:[%s14 + $0x48] sm:$0xff]
    %v7487 = vld [vmem:[%s14 + $0x50] sm:$0xff]
    %v7488 = vld [vmem:[%s14 + $0x58] sm:$0xff]
    %v7489 = vld [vmem:[%s14 + $0x60] sm:$0xff]
    %v7490 = vld [vmem:[%s14 + $0x68] sm:$0x1]
    %vm7491 = vcmask 859136
    %v7493 = vsel %vm7491, %v7476, 0
    %v7496 = vsel %vm7307, %v7490, 0
    %7498 = vmatprep.subr.mxu0 0.0
    %7499 = vmatpush1.msra.mxu0 %v7477
    %7500 = vmatprep.subr.mxu0 0.0
    %7501 = vmatpush1.msra.mxu0 %v7478
    %7502 = vmatprep.subr.mxu0 0.0
    %7503 = vmatpush1.msra.mxu0 %v7479
    %7504 = vmatprep.subr.mxu0 0.0
    %7505 = vmatpush1.msra.mxu0 %v7480
    %7506 = vmatprep.subr.mxu0 0.0
    %7507 = vmatpush1.msra.mxu0 %v7481
    %7508 = vmatprep.subr.mxu0 0.0
    %7509 = vmatpush1.msra.mxu0 %v7482
    %7510 = vmatprep.subr.mxu0 0.0
    %7511 = vmatpush1.msra.mxu0 %v7483
    %7512 = vmatprep.subr.mxu0 0.0
    %7513 = vmatpush1.msra.mxu0 %v7484
    %7514 = vmatprep.subr.mxu0 0.0
    %7515 = vmatpush1.msra.mxu0 %v7485
    %7516 = vmatprep.subr.mxu0 0.0
    %7517 = vmatpush1.msra.mxu0 %v7486
    %7518 = vmatprep.subr.mxu0 0.0
    %7519 = vmatpush1.msra.mxu0 %v7487
    %7520 = vmatprep.subr.mxu0 0.0
    %7521 = vmatpush1.msra.mxu0 %v7488
    %7522 = vmatprep.subr.mxu0 0.0
    %7523 = vmatpush1.msra.mxu0 %v7489
    %7524 = vmatprep.subr.mxu0 0.0
    %7525 = vmatpush1.msra.mxu0 %v7496
    %7526 = vmatprep.subr.mxu0 0.0
    %7527 = vmatpush1.msra.mxu0 0.0
    %7528 = vmatprep.subr.mxu0 0.0
    %7529 = vmatpush1.msra.mxu0 0.0
    %7530 = vmatprep.subr.mxu0 0.0
    %7531 = vmatpush1.msra.mxu0 0.0
    %7532 = vmatprep.subr.mxu0 0.0
    %7533 = vmatpush1.msra.mxu0 0.0
    %7534 = vmatprep.subr.mxu0 0.0
    %7535 = vmatpush1.msra.mxu0 0.0
    %7536 = vmatprep.subr.mxu0 0.0
    %7537 = vmatpush1.msra.mxu0 0.0
    %7538 = vmatprep.subr.mxu0 0.0
    %7539 = vmatpush1.msra.mxu0 0.0
    %7540 = vmatprep.subr.mxu0 0.0
    %7541 = vmatpush1.msra.mxu0 0.0
    %7542 = vmatprep.subr.mxu0 0.0
    %7543 = vmatpush1.msra.mxu0 0.0
    %7544 = vmatprep.subr.mxu0 0.0
    %7545 = vmatpush1.msra.mxu0 0.0
    %7546 = vmatprep.subr.mxu0 0.0
    %7547 = vmatpush1.msra.mxu0 0.0
    %7548 = vmatprep.subr.mxu0 0.0
    %7549 = vmatpush1.msra.mxu0 0.0
    %7550 = vmatprep.subr.mxu0 0.0
    %7551 = vmatpush1.msra.mxu0 0.0
    %7552 = vmatprep.subr.mxu0 0.0
    %7553 = vmatpush1.msra.mxu0 0.0
    %7554 = vmatprep.subr.mxu0 0.0
    %7555 = vmatpush1.msra.mxu0 0.0
    %7556 = vmatprep.subr.mxu0 0.0
    %7557 = vmatpush1.msra.mxu0 0.0
    %7558 = vmatprep.subr.mxu0 0.0
    %7559 = vmatpush1.msra.mxu0 0.0
    %7560 = vmatprep.subr.mxu0 0.0
    %7561 = vmatpush1.msra.mxu0 0.0
    %7562 = vmatprep.mubr.f32.mxu0 0.0
    %7563 = vmatmul.mubr.f32.gmra.mrb[0].mxu0 %v7493
    %v7564 = vpop.f32.mrb[0].mxu0
    %v7565 = vadd.f32 0.0, %v7564
    %v7566 = vpop.f32.mrb[0].mxu0
    %7567 = vdwg.mxu0
    %v7568 = vadd.f32 %v7473, %v7565
    %v7569 = vld [vmem:[%s15] sm:$0x1]
    %v7571 = vlaneseq
    %v7572 = vshrl.u32 %v7571, 7
    %v7573 = vsub.s32 0, %v7572
    %v7574 = vrot.slane %v7569, %v7573
    %v7576 = vadd.f32 %v7568, %v7574
    %v7577 = vmax.f32 %v7576, 0.0
    %v7578 = vld [vmem:[%s16] sm:$0xff]
    %v7579 = vld [vmem:[%s16 + $0x8] sm:$0xff]
    %v7580 = vld [vmem:[%s16 + $0x10] sm:$0xff]
    %v7581 = vld [vmem:[%s16 + $0x18] sm:$0xff]
    %v7582 = vld [vmem:[%s17] sm:$0x1]
    %v7584 = vlaneseq
    %v7585 = vshrl.u32 %v7584, 7
    %v7586 = vsub.s32 0, %v7585
    %v7587 = vrot.slane %v7582, %v7586
    %v7590 = vsel %vm322, %v7577, 0
    %7592 = vmatprep.subr.mxu0 0.0
    %7593 = vmatpush1.msra.mxu0 %v7578
    %7594 = vmatprep.subr.mxu0 0.0
    %7595 = vmatpush1.msra.mxu0 %v7579
    %7596 = vmatprep.subr.mxu0 0.0
    %7597 = vmatpush1.msra.mxu0 %v7580
    %7598 = vmatprep.subr.mxu0 0.0
    %7599 = vmatpush1.msra.mxu0 %v7581
    %7600 = vmatprep.subr.mxu0 0.0
    %7601 = vmatpush1.msra.mxu0 0.0
    %7602 = vmatprep.subr.mxu0 0.0
    %7603 = vmatpush1.msra.mxu0 0.0
    %7604 = vmatprep.subr.mxu0 0.0
    %7605 = vmatpush1.msra.mxu0 0.0
    %7606 = vmatprep.subr.mxu0 0.0
    %7607 = vmatpush1.msra.mxu0 0.0
    %7608 = vmatprep.subr.mxu0 0.0
    %7609 = vmatpush1.msra.mxu0 0.0
    %7610 = vmatprep.subr.mxu0 0.0
    %7611 = vmatpush1.msra.mxu0 0.0
    %7612 = vmatprep.subr.mxu0 0.0
    %7613 = vmatpush1.msra.mxu0 0.0
    %7614 = vmatprep.subr.mxu0 0.0
    %7615 = vmatpush1.msra.mxu0 0.0
    %7616 = vmatprep.subr.mxu0 0.0
    %7617 = vmatpush1.msra.mxu0 0.0
    %7618 = vmatprep.subr.mxu0 0.0
    %7619 = vmatpush1.msra.mxu0 0.0
    %7620 = vmatprep.subr.mxu0 0.0
    %7621 = vmatpush1.msra.mxu0 0.0
    %7622 = vmatprep.subr.mxu0 0.0
    %7623 = vmatpush1.msra.mxu0 0.0
    %7624 = vmatprep.subr.mxu0 0.0
    %7625 = vmatpush1.msra.mxu0 0.0
    %7626 = vmatprep.subr.mxu0 0.0
    %7627 = vmatpush1.msra.mxu0 0.0
    %7628 = vmatprep.subr.mxu0 0.0
    %7629 = vmatpush1.msra.mxu0 0.0
    %7630 = vmatprep.subr.mxu0 0.0
    %7631 = vmatpush1.msra.mxu0 0.0
    %7632 = vmatprep.subr.mxu0 0.0
    %7633 = vmatpush1.msra.mxu0 0.0
    %7634 = vmatprep.subr.mxu0 0.0
    %7635 = vmatpush1.msra.mxu0 0.0
    %7636 = vmatprep.subr.mxu0 0.0
    %7637 = vmatpush1.msra.mxu0 0.0
    %7638 = vmatprep.subr.mxu0 0.0
    %7639 = vmatpush1.msra.mxu0 0.0
    %7640 = vmatprep.subr.mxu0 0.0
    %7641 = vmatpush1.msra.mxu0 0.0
    %7642 = vmatprep.subr.mxu0 0.0
    %7643 = vmatpush1.msra.mxu0 0.0
    %7644 = vmatprep.subr.mxu0 0.0
    %7645 = vmatpush1.msra.mxu0 0.0
    %7646 = vmatprep.subr.mxu0 0.0
    %7647 = vmatpush1.msra.mxu0 0.0
    %7648 = vmatprep.subr.mxu0 0.0
    %7649 = vmatpush1.msra.mxu0 0.0
    %7650 = vmatprep.subr.mxu0 0.0
    %7651 = vmatpush1.msra.mxu0 0.0
    %7652 = vmatprep.subr.mxu0 0.0
    %7653 = vmatpush1.msra.mxu0 0.0
    %7654 = vmatprep.subr.mxu0 0.0
    %7655 = vmatpush1.msra.mxu0 0.0
    %7656 = vmatprep.mubr.f32.mxu0 0.0
    %7657 = vmatmul.mubr.f32.gmra.mrb[0].mxu0 %v7590
    %v7658 = vpop.f32.mrb[0].mxu0
    %v7659 = vadd.f32 %v7587, %v7658
    %v7660 = vpop.f32.mrb[0].mxu0
    %7661 = vdwg.mxu0
    %vm7662 = vcmask 123904
    %7663 = vst.msk [vmem:[#allocation4] sm:$0x3] %vm7662, %v7659
    // Predicated region
    $region74: #{lstnet_forward.1} parent=1 // pred_check
      _
    $region75: #{lstnet_forward.1} parent=1 // pred_check_branch
      %7665 = sbr.rel (0) target = $region77
    $region76: #{lstnet_forward.1} parent=1 // pred_region
      %s7667 = ssub.s32 32, 32
      %7668 = vsyncadd [#allocation5], %s7667
      %s7670 = sshll.u32 [#allocation4], 4
      %s7671 = int_to_ptr.vmem [resolvable:$true] %s7670
      %7673 = dma.vmem_to_hbm [thread:$0]  %s7671, 32, %s18, [#allocation5]
    $region77: #{lstnet_forward.1} parent=1 // pred_fallthru
      _
    // Predicated region
    $region78: #{lstnet_forward.1} parent=1 // pred_check
      _
    $region79: #{lstnet_forward.1} parent=1 // pred_check_branch
      %7675 = sbr.rel (0) target = $region81
    $region80: #{lstnet_forward.1} parent=1 // pred_region
      %7676 = dma.done [#allocation5], 32
    $region81: #{lstnet_forward.1} parent=1 // pred_fallthru
      _
    %7677 = vsyncpa [#allocation5], 1

</llo_original>
